<compile_context>
chip_gen: v7x
topology: tpu7x:2x2x1
jax: 0.10.0
libtpu: 0.0.40
codegen_flags: <defaults>
</compile_context>

<pallas_src>
import functools

import jax
import jax.numpy as jnp
from jax.experimental import pallas as pl
from jax.experimental.pallas import tpu as pltpu


# ----------------------------- fused Pallas kernel -----------------------------

def fused_gru_fc_kernel(x_ref, w_ih_ref, w_hh_ref, b_ref, fc_w_ref, fc_b_ref,
                        o_ref, gi_a, gi_b, *, n_layers, T, B_pad, B, H):
    """All layers of the GRU + final FC, fully VMEM-resident, single grid point.

    x_ref    (T*B_pad, D_common) f32   time-major, batch- and feature-padded input
    w_ih_ref (L, D_common, 3H)   bf16  fused input-projection weights (gate order r|z|n)
    w_hh_ref (L, H, 3H)          bf16  fused recurrent weights
    b_ref    (L, 2, 3H)          f32   row 0: b_ih+b_hh folded for r/z, b_ih for n
                                       row 1: b_hh_n in lanes [:H], zeros elsewhere
    fc_w_ref (H, OUT) bf16, fc_b_ref (1, OUT) f32
    o_ref    (B, OUT) f32
    gi_a/gi_b (T*B_pad, 3H) f32  ping-pong scratches holding the current / next layer's
                                 hoisted input projections (biases already added)
    """
    H2, H3 = 2 * H, 3 * H
    gi_bufs = (gi_a, gi_b)

    # Layer-0 input projection: one tall matmul, biases folded in.
    x_bf = x_ref[...].astype(jnp.bfloat16)
    b0 = b_ref[0]                                                   # (2, 3H) f32
    gi_a[...] = (jnp.dot(x_bf, w_ih_ref[0], preferred_element_type=jnp.float32)
                 + b0[0:1, :])

    h = jnp.zeros((B_pad, H), jnp.float32)
    for l in range(n_layers):                                       # static unroll
        gi_cur = gi_bufs[l % 2]
        gi_nxt = gi_bufs[(l + 1) % 2]
        last_layer = (l == n_layers - 1)

        w_hh_l = w_hh_ref[l]                                        # (H, 3H) bf16
        b_l = b_ref[l]                                              # (2, 3H) f32
        b_hn_l = b_l[1:2, :H]                                       # (1, H)
        if not last_layer:
            w_ih_nxt = w_ih_ref[l + 1][:H, :]                       # (H, 3H) bf16
            b_gi_nxt = b_ref[l + 1][0:1, :]                         # (1, 3H) f32

        h = jnp.zeros((B_pad, H), jnp.float32)
        for t in range(T):                                          # static unroll (T small)
            row = t * B_pad                                         # sublane-tile aligned
            gi = gi_cur[pl.ds(row, B_pad), :]                       # (B_pad, 3H), biases in
            gh = jnp.dot(h.astype(jnp.bfloat16), w_hh_l,
                         preferred_element_type=jnp.float32)        # one fused MXU op
            rz = jax.nn.sigmoid(gi[:, :H2] + gh[:, :H2])            # one EUP op for r and z
            r = rz[:, :H]
            z = rz[:, H:]
            n = jnp.tanh(gi[:, H2:] + r * (gh[:, H2:] + b_hn_l))
            h = n + z * (h - n)                                     # == (1-z)*n + z*h
            if not last_layer:
                # Next layer's input projection for this timestep: depends only on h_t,
                # so it is off the next step's critical path (MXU filler).
                gi_nxt[pl.ds(row, B_pad), :] = (
                    jnp.dot(h.astype(jnp.bfloat16), w_ih_nxt,
                            preferred_element_type=jnp.float32) + b_gi_nxt)

    # Final Linear on the last timestep's hidden state (padded batch rows dropped).
    o = (jnp.dot(h.astype(jnp.bfloat16), fc_w_ref[...],
                 preferred_element_type=jnp.float32) + fc_b_ref[...])
    o_ref[...] = o[:B, :].astype(o_ref.dtype)


# ----------------------------- wrapper / glue -----------------------------

def pack_params(params):
    """Stack / fuse / transpose the kernel operands ONCE (not per forward call).

    Torch layout per layer: w_ih (3H, D_l), w_hh (3H, H), gate order (r, z, n).
    Emits 5 arrays total:
      w_ih (L, D_common, 3H) bf16   -- gates fused along lanes, zero-row padded to D_common
      w_hh (L, H, 3H)        bf16
      b    (L, 2, 3H)        f32    -- row 0: [b_ihr+b_hhr | b_ihz+b_hhz | b_ihn]
                                       row 1: [b_hhn | 0 | 0]   (n-gate recurrent bias)
      fc_w (H, OUT) bf16, fc_b (1, OUT) f32
    """
    H = params["gru"][0]["w_hh"].shape[1]
    D0 = params["gru"][0]["w_ih"].shape[1]
    D_common = max(D0, H)

    w_ih_all, w_hh_all, b_all = [], [], []
    for layer in params["gru"]:
        w_ih, w_hh = layer["w_ih"], layer["w_hh"]
        b_ih, b_hh = layer["b_ih"], layer["b_hh"]
        wih = jnp.concatenate([w_ih[0:H].T, w_ih[H:2 * H].T, w_ih[2 * H:].T], axis=1)
        wih = jnp.pad(wih, ((0, D_common - wih.shape[0]), (0, 0)))      # zero rows: exact
        whh = jnp.concatenate([w_hh[0:H].T, w_hh[H:2 * H].T, w_hh[2 * H:].T], axis=1)
        b_gi = jnp.concatenate([b_ih[0:H] + b_hh[0:H],
                                b_ih[H:2 * H] + b_hh[H:2 * H],
                                b_ih[2 * H:]])
        b_hn = jnp.concatenate([b_hh[2 * H:], jnp.zeros((2 * H,), jnp.float32)])
        w_ih_all.append(wih)
        w_hh_all.append(whh)
        b_all.append(jnp.stack([b_gi, b_hn]))

    return {
        "w_ih": jnp.stack(w_ih_all).astype(jnp.bfloat16),
        "w_hh": jnp.stack(w_hh_all).astype(jnp.bfloat16),
        "b": jnp.stack(b_all).astype(jnp.float32),
        "fc_w": params["fc_w"].T.astype(jnp.bfloat16),
        "fc_b": params["fc_b"][None, :].astype(jnp.float32),
    }


def gru_model_forward(x, packed):
    """Equivalent of GRUModel.forward: multi-layer GRU (h0 = 0) + fc on the last timestep."""
    B, T, D = x.shape
    L, D_common, H3 = packed["w_ih"].shape
    H = H3 // 3
    out_dim = packed["fc_w"].shape[1]
    B_pad = ((B + 7) // 8) * 8                  # pad batch to a full f32 sublane tile

    x_tm = jnp.transpose(x, (1, 0, 2)).astype(jnp.float32)          # (T, B, D) time-major
    x_tm = jnp.pad(x_tm, ((0, 0), (0, B_pad - B), (0, D_common - D)))
    x_flat = x_tm.reshape(T * B_pad, D_common)

    vmem = pl.BlockSpec(memory_space=pltpu.MemorySpace.VMEM)
    kern = functools.partial(fused_gru_fc_kernel, n_layers=L, T=T,
                             B_pad=B_pad, B=B, H=H)
    return pl.pallas_call(
        kern,
        out_shape=jax.ShapeDtypeStruct((B, out_dim), jnp.float32),
        in_specs=[vmem] * 6,
        out_specs=vmem,
        scratch_shapes=[pltpu.VMEM((T * B_pad, H3), jnp.float32)] * 2,
    )(x_flat, packed["w_ih"], packed["w_hh"], packed["b"],
      packed["fc_w"], packed["fc_b"])


# ----------------------------- params / reference -----------------------------

def init_params(key, input_dim, hidden_dim, output_dim, n_layers):
    """Deterministic init mirroring PyTorch shapes (uniform(-1/sqrt(H), 1/sqrt(H)))."""
    k = 1.0 / jnp.sqrt(jnp.float32(hidden_dim))
    params = {"gru": []}
    for layer in range(n_layers):
        d_in = input_dim if layer == 0 else hidden_dim
        key, k1, k2, k3, k4 = jax.random.split(key, 5)
        params["gru"].append({
            "w_ih": jax.random.uniform(k1, (3 * hidden_dim, d_in), jnp.float32, -k, k),
            "w_hh": jax.random.uniform(k2, (3 * hidden_dim, hidden_dim), jnp.float32, -k, k),
            "b_ih": jax.random.uniform(k3, (3 * hidden_dim,), jnp.float32, -k, k),
            "b_hh": jax.random.uniform(k4, (3 * hidden_dim,), jnp.float32, -k, k),
        })
    key, k1, k2 = jax.random.split(key, 3)
    params["fc_w"] = jax.random.uniform(k1, (output_dim, hidden_dim), jnp.float32, -k, k)
    params["fc_b"] = jax.random.uniform(k2, (output_dim,), jnp.float32, -k, k)
    return params


def gru_model_ref(x, params):
    """Pure-JAX f32 reference implementing PyTorch nn.GRU semantics (gate order r, z, n)."""
    B, T, _ = x.shape
    h_seq = x
    for layer in params["gru"]:
        w_ih, w_hh, b_ih, b_hh = layer["w_ih"], layer["w_hh"], layer["b_ih"], layer["b_hh"]
        H = w_hh.shape[1]
        h = jnp.zeros((B, H), jnp.float32)
        outs = []
        for t in range(T):
            gi = h_seq[:, t, :] @ w_ih.T + b_ih
            gh = h @ w_hh.T + b_hh
            r = jax.nn.sigmoid(gi[:, :H] + gh[:, :H])
            z = jax.nn.sigmoid(gi[:, H:2 * H] + gh[:, H:2 * H])
            n = jnp.tanh(gi[:, 2 * H:] + r * gh[:, 2 * H:])
            h = (1.0 - z) * n + z * h
            outs.append(h)
        h_seq = jnp.stack(outs, axis=1)
    return h_seq[:, -1, :] @ params["fc_w"].T + params["fc_b"]


# ----------------------------- main -----------------------------

if __name__ == "__main__":
    # Small shapes consistent with the module: batch=2, seq=8, input_dim=16,
    # hidden_dim=32, n_layers=5, output_dim=2.
    B, T, D = 2, 8, 16
    HIDDEN, N_LAYERS, OUT = 32, 5, 2

    key = jax.random.PRNGKey(0)
    key_p, key_x = jax.random.split(key)
    params = init_params(key_p, D, HIDDEN, OUT, N_LAYERS)
    packed = pack_params(params)             # weight relayout done once, outside forward
    x = jax.random.normal(key_x, (B, T, D), jnp.float32)

    fwd = jax.jit(gru_model_forward)
    out = fwd(x, packed)
    out = jax.block_until_ready(out)

    ref = gru_model_ref(x, params)
    assert out.shape == (B, OUT)
    # bf16 MXU operands => relaxed tolerance (elementwise math is still f32).
    assert jnp.allclose(out, ref, atol=5e-2, rtol=5e-2), (
        f"Pallas GRU mismatch vs reference: max|diff|={float(jnp.max(jnp.abs(out - ref)))}")

    print("KERNEL_OK")
</pallas_src>

<mosaic_0001>
module attributes {stable_mosaic.version = 11 : i64} {
  func.func @fused_gru_fc_kernel(%arg0: memref<64x32xf32, #tpu.memory_space<vmem>>, %arg1: memref<5x32x96xbf16, #tpu.memory_space<vmem>>, %arg2: memref<5x32x96xbf16, #tpu.memory_space<vmem>>, %arg3: memref<5x2x96xf32, #tpu.memory_space<vmem>>, %arg4: memref<32x2xbf16, #tpu.memory_space<vmem>>, %arg5: memref<1x2xf32, #tpu.memory_space<vmem>>, %arg6: memref<2x2xf32, #tpu.memory_space<vmem>>, %arg7: memref<64x96xf32, #tpu.memory_space<vmem>>, %arg8: memref<64x96xf32, #tpu.memory_space<vmem>>) attributes {dimension_semantics = [], scalar_prefetch = 0 : i64, scratch_operands = 2 : i64, tpu.core_type = #tpu.core_type<tc>} {
    %c0 = arith.constant 0 : index
    %c0_0 = arith.constant 0 : index
    %0 = vector.load %arg0[%c0, %c0_0] : memref<64x32xf32, #tpu.memory_space<vmem>>, vector<64x32xf32>
    %1 = arith.truncf %0 : vector<64x32xf32> to vector<64x32xbf16>
    %c0_1 = arith.constant 0 : index
    %c0_2 = arith.constant 0 : index
    %c0_3 = arith.constant 0 : index
    %2 = vector.load %arg3[%c0_1, %c0_2, %c0_3] : memref<5x2x96xf32, #tpu.memory_space<vmem>>, vector<1x2x96xf32>
    %3 = vector.shape_cast %2 : vector<1x2x96xf32> to vector<2x96xf32>
    %c0_4 = arith.constant 0 : index
    %c0_5 = arith.constant 0 : index
    %c0_6 = arith.constant 0 : index
    %4 = vector.load %arg1[%c0_4, %c0_5, %c0_6] : memref<5x32x96xbf16, #tpu.memory_space<vmem>>, vector<1x32x96xbf16>
    %5 = vector.shape_cast %4 : vector<1x32x96xbf16> to vector<32x96xbf16>
    %cst = arith.constant dense<0.000000e+00> : vector<64x96xf32>
    %6 = tpu.matmul %1, %5, %cst {dimension_numbers = #tpu.dot_dimension_numbers<[1], [0], [0], [1], [0, 0, 1, 1], [], []>} : vector<64x32xbf16>, vector<32x96xbf16>, vector<64x96xf32> -> vector<64x96xf32>
    %7 = vector.extract_strided_slice %3 {offsets = [0, 0], sizes = [1, 96], strides = [1, 1]} : vector<2x96xf32> to vector<1x96xf32>
    %8 = vector.broadcast %7 : vector<1x96xf32> to vector<64x96xf32>
    %9 = arith.addf %6, %8 : vector<64x96xf32>
    %c0_7 = arith.constant 0 : index
    %c0_8 = arith.constant 0 : index
    %10 = vector.load %arg7[%c0_7, %c0_8] : memref<64x96xf32, #tpu.memory_space<vmem>>, vector<64x96xf32>
    tpu.vector_store %arg7[%c0_7, %c0_8], %9 {strides = array<i32>} : memref<64x96xf32, #tpu.memory_space<vmem>>, vector<64x96xf32>,
    %c0_9 = arith.constant 0 : index
    %c0_10 = arith.constant 0 : index
    %c0_11 = arith.constant 0 : index
    %11 = vector.load %arg2[%c0_9, %c0_10, %c0_11] : memref<5x32x96xbf16, #tpu.memory_space<vmem>>, vector<1x32x96xbf16>
    %12 = vector.shape_cast %11 : vector<1x32x96xbf16> to vector<32x96xbf16>
    %c0_12 = arith.constant 0 : index
    %c0_13 = arith.constant 0 : index
    %c0_14 = arith.constant 0 : index
    %13 = vector.load %arg3[%c0_12, %c0_13, %c0_14] : memref<5x2x96xf32, #tpu.memory_space<vmem>>, vector<1x2x96xf32>
    %14 = vector.shape_cast %13 : vector<1x2x96xf32> to vector<2x96xf32>
    %15 = vector.extract_strided_slice %14 {offsets = [1, 0], sizes = [1, 32], strides = [1, 1]} : vector<2x96xf32> to vector<1x32xf32>
    %c1 = arith.constant 1 : index
    %c0_15 = arith.constant 0 : index
    %c0_16 = arith.constant 0 : index
    %16 = vector.load %arg1[%c1, %c0_15, %c0_16] : memref<5x32x96xbf16, #tpu.memory_space<vmem>>, vector<1x32x96xbf16>
    %17 = vector.shape_cast %16 : vector<1x32x96xbf16> to vector<32x96xbf16>
    %c1_17 = arith.constant 1 : index
    %c0_18 = arith.constant 0 : index
    %c0_19 = arith.constant 0 : index
    %18 = vector.load %arg3[%c1_17, %c0_18, %c0_19] : memref<5x2x96xf32, #tpu.memory_space<vmem>>, vector<1x2x96xf32>
    %19 = vector.shape_cast %18 : vector<1x2x96xf32> to vector<2x96xf32>
    %20 = vector.extract_strided_slice %19 {offsets = [0, 0], sizes = [1, 96], strides = [1, 1]} : vector<2x96xf32> to vector<1x96xf32>
    %cst_20 = arith.constant 0.000000e+00 : f32
    %21 = vector.broadcast %cst_20 : f32 to vector<8x32xf32>
    %c0_21 = arith.constant 0 : index
    %c0_22 = arith.constant 0 : index
    %22 = vector.load %arg7[%c0_21, %c0_22] : memref<64x96xf32, #tpu.memory_space<vmem>>, vector<8x96xf32>
    %23 = arith.truncf %21 : vector<8x32xf32> to vector<8x32xbf16>
    %cst_23 = arith.constant dense<0.000000e+00> : vector<8x96xf32>
    %24 = tpu.matmul %23, %12, %cst_23 {dimension_numbers = #tpu.dot_dimension_numbers<[1], [0], [0], [1], [0, 0, 1, 1], [], []>} : vector<8x32xbf16>, vector<32x96xbf16>, vector<8x96xf32> -> vector<8x96xf32>
    %25 = vector.extract_strided_slice %22 {offsets = [0, 0], sizes = [8, 64], strides = [1, 1]} : vector<8x96xf32> to vector<8x64xf32>
    %26 = vector.extract_strided_slice %24 {offsets = [0, 0], sizes = [8, 64], strides = [1, 1]} : vector<8x96xf32> to vector<8x64xf32>
    %27 = arith.addf %25, %26 : vector<8x64xf32>
    %28 = arith.negf %27 : vector<8x64xf32>
    %29 = math.exp %28 : vector<8x64xf32>
    %cst_24 = arith.constant 1.000000e+00 : f32
    %30 = vector.broadcast %cst_24 : f32 to vector<8x64xf32>
    %31 = arith.addf %30, %29 : vector<8x64xf32>
    %32 = arith.divf %30, %31 : vector<8x64xf32>
    %33 = vector.extract_strided_slice %32 {offsets = [0, 0], sizes = [8, 32], strides = [1, 1]} : vector<8x64xf32> to vector<8x32xf32>
    %34 = vector.extract_strided_slice %32 {offsets = [0, 32], sizes = [8, 32], strides = [1, 1]} : vector<8x64xf32> to vector<8x32xf32>
    %35 = vector.extract_strided_slice %22 {offsets = [0, 64], sizes = [8, 32], strides = [1, 1]} : vector<8x96xf32> to vector<8x32xf32>
    %36 = vector.extract_strided_slice %24 {offsets = [0, 64], sizes = [8, 32], strides = [1, 1]} : vector<8x96xf32> to vector<8x32xf32>
    %37 = vector.broadcast %15 : vector<1x32xf32> to vector<8x32xf32>
    %38 = arith.addf %36, %37 : vector<8x32xf32>
    %39 = arith.mulf %33, %38 : vector<8x32xf32>
    %40 = arith.addf %35, %39 : vector<8x32xf32>
    %41 = math.tanh %40 : vector<8x32xf32>
    %42 = arith.subf %21, %41 : vector<8x32xf32>
    %43 = arith.mulf %34, %42 : vector<8x32xf32>
    %44 = arith.addf %41, %43 : vector<8x32xf32>
    %45 = arith.truncf %44 : vector<8x32xf32> to vector<8x32xbf16>
    %cst_25 = arith.constant dense<0.000000e+00> : vector<8x96xf32>
    %46 = tpu.matmul %45, %17, %cst_25 {dimension_numbers = #tpu.dot_dimension_numbers<[1], [0], [0], [1], [0, 0, 1, 1], [], []>} : vector<8x32xbf16>, vector<32x96xbf16>, vector<8x96xf32> -> vector<8x96xf32>
    %47 = vector.broadcast %20 : vector<1x96xf32> to vector<8x96xf32>
    %48 = arith.addf %46, %47 : vector<8x96xf32>
    %c0_26 = arith.constant 0 : index
    %c0_27 = arith.constant 0 : index
    %49 = vector.load %arg8[%c0_26, %c0_27] : memref<64x96xf32, #tpu.memory_space<vmem>>, vector<8x96xf32>
    tpu.vector_store %arg8[%c0_26, %c0_27], %48 {strides = array<i32>} : memref<64x96xf32, #tpu.memory_space<vmem>>, vector<8x96xf32>,
    %c8 = arith.constant 8 : index
    %c0_28 = arith.constant 0 : index
    %50 = vector.load %arg7[%c8, %c0_28] : memref<64x96xf32, #tpu.memory_space<vmem>>, vector<8x96xf32>
    %51 = arith.truncf %44 : vector<8x32xf32> to vector<8x32xbf16>
    %cst_29 = arith.constant dense<0.000000e+00> : vector<8x96xf32>
    %52 = tpu.matmul %51, %12, %cst_29 {dimension_numbers = #tpu.dot_dimension_numbers<[1], [0], [0], [1], [0, 0, 1, 1], [], []>} : vector<8x32xbf16>, vector<32x96xbf16>, vector<8x96xf32> -> vector<8x96xf32>
    %53 = vector.extract_strided_slice %50 {offsets = [0, 0], sizes = [8, 64], strides = [1, 1]} : vector<8x96xf32> to vector<8x64xf32>
    %54 = vector.extract_strided_slice %52 {offsets = [0, 0], sizes = [8, 64], strides = [1, 1]} : vector<8x96xf32> to vector<8x64xf32>
    %55 = arith.addf %53, %54 : vector<8x64xf32>
    %56 = arith.negf %55 : vector<8x64xf32>
    %57 = math.exp %56 : vector<8x64xf32>
    %cst_30 = arith.constant 1.000000e+00 : f32
    %58 = vector.broadcast %cst_30 : f32 to vector<8x64xf32>
    %59 = arith.addf %58, %57 : vector<8x64xf32>
    %60 = arith.divf %58, %59 : vector<8x64xf32>
    %61 = vector.extract_strided_slice %60 {offsets = [0, 0], sizes = [8, 32], strides = [1, 1]} : vector<8x64xf32> to vector<8x32xf32>
    %62 = vector.extract_strided_slice %60 {offsets = [0, 32], sizes = [8, 32], strides = [1, 1]} : vector<8x64xf32> to vector<8x32xf32>
    %63 = vector.extract_strided_slice %50 {offsets = [0, 64], sizes = [8, 32], strides = [1, 1]} : vector<8x96xf32> to vector<8x32xf32>
    %64 = vector.extract_strided_slice %52 {offsets = [0, 64], sizes = [8, 32], strides = [1, 1]} : vector<8x96xf32> to vector<8x32xf32>
    %65 = vector.broadcast %15 : vector<1x32xf32> to vector<8x32xf32>
    %66 = arith.addf %64, %65 : vector<8x32xf32>
    %67 = arith.mulf %61, %66 : vector<8x32xf32>
    %68 = arith.addf %63, %67 : vector<8x32xf32>
    %69 = math.tanh %68 : vector<8x32xf32>
    %70 = arith.subf %44, %69 : vector<8x32xf32>
    %71 = arith.mulf %62, %70 : vector<8x32xf32>
    %72 = arith.addf %69, %71 : vector<8x32xf32>
    %73 = arith.truncf %72 : vector<8x32xf32> to vector<8x32xbf16>
    %cst_31 = arith.constant dense<0.000000e+00> : vector<8x96xf32>
    %74 = tpu.matmul %73, %17, %cst_31 {dimension_numbers = #tpu.dot_dimension_numbers<[1], [0], [0], [1], [0, 0, 1, 1], [], []>} : vector<8x32xbf16>, vector<32x96xbf16>, vector<8x96xf32> -> vector<8x96xf32>
    %75 = vector.broadcast %20 : vector<1x96xf32> to vector<8x96xf32>
    %76 = arith.addf %74, %75 : vector<8x96xf32>
    %c8_32 = arith.constant 8 : index
    %c0_33 = arith.constant 0 : index
    %77 = vector.load %arg8[%c8_32, %c0_33] : memref<64x96xf32, #tpu.memory_space<vmem>>, vector<8x96xf32>
    tpu.vector_store %arg8[%c8_32, %c0_33], %76 {strides = array<i32>} : memref<64x96xf32, #tpu.memory_space<vmem>>, vector<8x96xf32>,
    %c16 = arith.constant 16 : index
    %c0_34 = arith.constant 0 : index
    %78 = vector.load %arg7[%c16, %c0_34] : memref<64x96xf32, #tpu.memory_space<vmem>>, vector<8x96xf32>
    %79 = arith.truncf %72 : vector<8x32xf32> to vector<8x32xbf16>
    %cst_35 = arith.constant dense<0.000000e+00> : vector<8x96xf32>
    %80 = tpu.matmul %79, %12, %cst_35 {dimension_numbers = #tpu.dot_dimension_numbers<[1], [0], [0], [1], [0, 0, 1, 1], [], []>} : vector<8x32xbf16>, vector<32x96xbf16>, vector<8x96xf32> -> vector<8x96xf32>
    %81 = vector.extract_strided_slice %78 {offsets = [0, 0], sizes = [8, 64], strides = [1, 1]} : vector<8x96xf32> to vector<8x64xf32>
    %82 = vector.extract_strided_slice %80 {offsets = [0, 0], sizes = [8, 64], strides = [1, 1]} : vector<8x96xf32> to vector<8x64xf32>
    %83 = arith.addf %81, %82 : vector<8x64xf32>
    %84 = arith.negf %83 : vector<8x64xf32>
    %85 = math.exp %84 : vector<8x64xf32>
    %cst_36 = arith.constant 1.000000e+00 : f32
    %86 = vector.broadcast %cst_36 : f32 to vector<8x64xf32>
    %87 = arith.addf %86, %85 : vector<8x64xf32>
    %88 = arith.divf %86, %87 : vector<8x64xf32>
    %89 = vector.extract_strided_slice %88 {offsets = [0, 0], sizes = [8, 32], strides = [1, 1]} : vector<8x64xf32> to vector<8x32xf32>
    %90 = vector.extract_strided_slice %88 {offsets = [0, 32], sizes = [8, 32], strides = [1, 1]} : vector<8x64xf32> to vector<8x32xf32>
    %91 = vector.extract_strided_slice %78 {offsets = [0, 64], sizes = [8, 32], strides = [1, 1]} : vector<8x96xf32> to vector<8x32xf32>
    %92 = vector.extract_strided_slice %80 {offsets = [0, 64], sizes = [8, 32], strides = [1, 1]} : vector<8x96xf32> to vector<8x32xf32>
    %93 = vector.broadcast %15 : vector<1x32xf32> to vector<8x32xf32>
    %94 = arith.addf %92, %93 : vector<8x32xf32>
    %95 = arith.mulf %89, %94 : vector<8x32xf32>
    %96 = arith.addf %91, %95 : vector<8x32xf32>
    %97 = math.tanh %96 : vector<8x32xf32>
    %98 = arith.subf %72, %97 : vector<8x32xf32>
    %99 = arith.mulf %90, %98 : vector<8x32xf32>
    %100 = arith.addf %97, %99 : vector<8x32xf32>
    %101 = arith.truncf %100 : vector<8x32xf32> to vector<8x32xbf16>
    %cst_37 = arith.constant dense<0.000000e+00> : vector<8x96xf32>
    %102 = tpu.matmul %101, %17, %cst_37 {dimension_numbers = #tpu.dot_dimension_numbers<[1], [0], [0], [1], [0, 0, 1, 1], [], []>} : vector<8x32xbf16>, vector<32x96xbf16>, vector<8x96xf32> -> vector<8x96xf32>
    %103 = vector.broadcast %20 : vector<1x96xf32> to vector<8x96xf32>
    %104 = arith.addf %102, %103 : vector<8x96xf32>
    %c16_38 = arith.constant 16 : index
    %c0_39 = arith.constant 0 : index
    %105 = vector.load %arg8[%c16_38, %c0_39] : memref<64x96xf32, #tpu.memory_space<vmem>>, vector<8x96xf32>
    tpu.vector_store %arg8[%c16_38, %c0_39], %104 {strides = array<i32>} : memref<64x96xf32, #tpu.memory_space<vmem>>, vector<8x96xf32>,
    %c24 = arith.constant 24 : index
    %c0_40 = arith.constant 0 : index
    %106 = vector.load %arg7[%c24, %c0_40] : memref<64x96xf32, #tpu.memory_space<vmem>>, vector<8x96xf32>
    %107 = arith.truncf %100 : vector<8x32xf32> to vector<8x32xbf16>
    %cst_41 = arith.constant dense<0.000000e+00> : vector<8x96xf32>
    %108 = tpu.matmul %107, %12, %cst_41 {dimension_numbers = #tpu.dot_dimension_numbers<[1], [0], [0], [1], [0, 0, 1, 1], [], []>} : vector<8x32xbf16>, vector<32x96xbf16>, vector<8x96xf32> -> vector<8x96xf32>
    %109 = vector.extract_strided_slice %106 {offsets = [0, 0], sizes = [8, 64], strides = [1, 1]} : vector<8x96xf32> to vector<8x64xf32>
    %110 = vector.extract_strided_slice %108 {offsets = [0, 0], sizes = [8, 64], strides = [1, 1]} : vector<8x96xf32> to vector<8x64xf32>
    %111 = arith.addf %109, %110 : vector<8x64xf32>
    %112 = arith.negf %111 : vector<8x64xf32>
    %113 = math.exp %112 : vector<8x64xf32>
    %cst_42 = arith.constant 1.000000e+00 : f32
    %114 = vector.broadcast %cst_42 : f32 to vector<8x64xf32>
    %115 = arith.addf %114, %113 : vector<8x64xf32>
    %116 = arith.divf %114, %115 : vector<8x64xf32>
    %117 = vector.extract_strided_slice %116 {offsets = [0, 0], sizes = [8, 32], strides = [1, 1]} : vector<8x64xf32> to vector<8x32xf32>
    %118 = vector.extract_strided_slice %116 {offsets = [0, 32], sizes = [8, 32], strides = [1, 1]} : vector<8x64xf32> to vector<8x32xf32>
    %119 = vector.extract_strided_slice %106 {offsets = [0, 64], sizes = [8, 32], strides = [1, 1]} : vector<8x96xf32> to vector<8x32xf32>
    %120 = vector.extract_strided_slice %108 {offsets = [0, 64], sizes = [8, 32], strides = [1, 1]} : vector<8x96xf32> to vector<8x32xf32>
    %121 = vector.broadcast %15 : vector<1x32xf32> to vector<8x32xf32>
    %122 = arith.addf %120, %121 : vector<8x32xf32>
    %123 = arith.mulf %117, %122 : vector<8x32xf32>
    %124 = arith.addf %119, %123 : vector<8x32xf32>
    %125 = math.tanh %124 : vector<8x32xf32>
    %126 = arith.subf %100, %125 : vector<8x32xf32>
    %127 = arith.mulf %118, %126 : vector<8x32xf32>
    %128 = arith.addf %125, %127 : vector<8x32xf32>
    %129 = arith.truncf %128 : vector<8x32xf32> to vector<8x32xbf16>
    %cst_43 = arith.constant dense<0.000000e+00> : vector<8x96xf32>
    %130 = tpu.matmul %129, %17, %cst_43 {dimension_numbers = #tpu.dot_dimension_numbers<[1], [0], [0], [1], [0, 0, 1, 1], [], []>} : vector<8x32xbf16>, vector<32x96xbf16>, vector<8x96xf32> -> vector<8x96xf32>
    %131 = vector.broadcast %20 : vector<1x96xf32> to vector<8x96xf32>
    %132 = arith.addf %130, %131 : vector<8x96xf32>
    %c24_44 = arith.constant 24 : index
    %c0_45 = arith.constant 0 : index
    %133 = vector.load %arg8[%c24_44, %c0_45] : memref<64x96xf32, #tpu.memory_space<vmem>>, vector<8x96xf32>
    tpu.vector_store %arg8[%c24_44, %c0_45], %132 {strides = array<i32>} : memref<64x96xf32, #tpu.memory_space<vmem>>, vector<8x96xf32>,
    %c32 = arith.constant 32 : index
    %c0_46 = arith.constant 0 : index
    %134 = vector.load %arg7[%c32, %c0_46] : memref<64x96xf32, #tpu.memory_space<vmem>>, vector<8x96xf32>
    %135 = arith.truncf %128 : vector<8x32xf32> to vector<8x32xbf16>
    %cst_47 = arith.constant dense<0.000000e+00> : vector<8x96xf32>
    %136 = tpu.matmul %135, %12, %cst_47 {dimension_numbers = #tpu.dot_dimension_numbers<[1], [0], [0], [1], [0, 0, 1, 1], [], []>} : vector<8x32xbf16>, vector<32x96xbf16>, vector<8x96xf32> -> vector<8x96xf32>
    %137 = vector.extract_strided_slice %134 {offsets = [0, 0], sizes = [8, 64], strides = [1, 1]} : vector<8x96xf32> to vector<8x64xf32>
    %138 = vector.extract_strided_slice %136 {offsets = [0, 0], sizes = [8, 64], strides = [1, 1]} : vector<8x96xf32> to vector<8x64xf32>
    %139 = arith.addf %137, %138 : vector<8x64xf32>
    %140 = arith.negf %139 : vector<8x64xf32>
    %141 = math.exp %140 : vector<8x64xf32>
    %cst_48 = arith.constant 1.000000e+00 : f32
    %142 = vector.broadcast %cst_48 : f32 to vector<8x64xf32>
    %143 = arith.addf %142, %141 : vector<8x64xf32>
    %144 = arith.divf %142, %143 : vector<8x64xf32>
    %145 = vector.extract_strided_slice %144 {offsets = [0, 0], sizes = [8, 32], strides = [1, 1]} : vector<8x64xf32> to vector<8x32xf32>
    %146 = vector.extract_strided_slice %144 {offsets = [0, 32], sizes = [8, 32], strides = [1, 1]} : vector<8x64xf32> to vector<8x32xf32>
    %147 = vector.extract_strided_slice %134 {offsets = [0, 64], sizes = [8, 32], strides = [1, 1]} : vector<8x96xf32> to vector<8x32xf32>
    %148 = vector.extract_strided_slice %136 {offsets = [0, 64], sizes = [8, 32], strides = [1, 1]} : vector<8x96xf32> to vector<8x32xf32>
    %149 = vector.broadcast %15 : vector<1x32xf32> to vector<8x32xf32>
    %150 = arith.addf %148, %149 : vector<8x32xf32>
    %151 = arith.mulf %145, %150 : vector<8x32xf32>
    %152 = arith.addf %147, %151 : vector<8x32xf32>
    %153 = math.tanh %152 : vector<8x32xf32>
    %154 = arith.subf %128, %153 : vector<8x32xf32>
    %155 = arith.mulf %146, %154 : vector<8x32xf32>
    %156 = arith.addf %153, %155 : vector<8x32xf32>
    %157 = arith.truncf %156 : vector<8x32xf32> to vector<8x32xbf16>
    %cst_49 = arith.constant dense<0.000000e+00> : vector<8x96xf32>
    %158 = tpu.matmul %157, %17, %cst_49 {dimension_numbers = #tpu.dot_dimension_numbers<[1], [0], [0], [1], [0, 0, 1, 1], [], []>} : vector<8x32xbf16>, vector<32x96xbf16>, vector<8x96xf32> -> vector<8x96xf32>
    %159 = vector.broadcast %20 : vector<1x96xf32> to vector<8x96xf32>
    %160 = arith.addf %158, %159 : vector<8x96xf32>
    %c32_50 = arith.constant 32 : index
    %c0_51 = arith.constant 0 : index
    %161 = vector.load %arg8[%c32_50, %c0_51] : memref<64x96xf32, #tpu.memory_space<vmem>>, vector<8x96xf32>
    tpu.vector_store %arg8[%c32_50, %c0_51], %160 {strides = array<i32>} : memref<64x96xf32, #tpu.memory_space<vmem>>, vector<8x96xf32>,
    %c40 = arith.constant 40 : index
    %c0_52 = arith.constant 0 : index
    %162 = vector.load %arg7[%c40, %c0_52] : memref<64x96xf32, #tpu.memory_space<vmem>>, vector<8x96xf32>
    %163 = arith.truncf %156 : vector<8x32xf32> to vector<8x32xbf16>
    %cst_53 = arith.constant dense<0.000000e+00> : vector<8x96xf32>
    %164 = tpu.matmul %163, %12, %cst_53 {dimension_numbers = #tpu.dot_dimension_numbers<[1], [0], [0], [1], [0, 0, 1, 1], [], []>} : vector<8x32xbf16>, vector<32x96xbf16>, vector<8x96xf32> -> vector<8x96xf32>
    %165 = vector.extract_strided_slice %162 {offsets = [0, 0], sizes = [8, 64], strides = [1, 1]} : vector<8x96xf32> to vector<8x64xf32>
    %166 = vector.extract_strided_slice %164 {offsets = [0, 0], sizes = [8, 64], strides = [1, 1]} : vector<8x96xf32> to vector<8x64xf32>
    %167 = arith.addf %165, %166 : vector<8x64xf32>
    %168 = arith.negf %167 : vector<8x64xf32>
    %169 = math.exp %168 : vector<8x64xf32>
    %cst_54 = arith.constant 1.000000e+00 : f32
    %170 = vector.broadcast %cst_54 : f32 to vector<8x64xf32>
    %171 = arith.addf %170, %169 : vector<8x64xf32>
    %172 = arith.divf %170, %171 : vector<8x64xf32>
    %173 = vector.extract_strided_slice %172 {offsets = [0, 0], sizes = [8, 32], strides = [1, 1]} : vector<8x64xf32> to vector<8x32xf32>
    %174 = vector.extract_strided_slice %172 {offsets = [0, 32], sizes = [8, 32], strides = [1, 1]} : vector<8x64xf32> to vector<8x32xf32>
    %175 = vector.extract_strided_slice %162 {offsets = [0, 64], sizes = [8, 32], strides = [1, 1]} : vector<8x96xf32> to vector<8x32xf32>
    %176 = vector.extract_strided_slice %164 {offsets = [0, 64], sizes = [8, 32], strides = [1, 1]} : vector<8x96xf32> to vector<8x32xf32>
    %177 = vector.broadcast %15 : vector<1x32xf32> to vector<8x32xf32>
    %178 = arith.addf %176, %177 : vector<8x32xf32>
    %179 = arith.mulf %173, %178 : vector<8x32xf32>
    %180 = arith.addf %175, %179 : vector<8x32xf32>
    %181 = math.tanh %180 : vector<8x32xf32>
    %182 = arith.subf %156, %181 : vector<8x32xf32>
    %183 = arith.mulf %174, %182 : vector<8x32xf32>
    %184 = arith.addf %181, %183 : vector<8x32xf32>
    %185 = arith.truncf %184 : vector<8x32xf32> to vector<8x32xbf16>
    %cst_55 = arith.constant dense<0.000000e+00> : vector<8x96xf32>
    %186 = tpu.matmul %185, %17, %cst_55 {dimension_numbers = #tpu.dot_dimension_numbers<[1], [0], [0], [1], [0, 0, 1, 1], [], []>} : vector<8x32xbf16>, vector<32x96xbf16>, vector<8x96xf32> -> vector<8x96xf32>
    %187 = vector.broadcast %20 : vector<1x96xf32> to vector<8x96xf32>
    %188 = arith.addf %186, %187 : vector<8x96xf32>
    %c40_56 = arith.constant 40 : index
    %c0_57 = arith.constant 0 : index
    %189 = vector.load %arg8[%c40_56, %c0_57] : memref<64x96xf32, #tpu.memory_space<vmem>>, vector<8x96xf32>
    tpu.vector_store %arg8[%c40_56, %c0_57], %188 {strides = array<i32>} : memref<64x96xf32, #tpu.memory_space<vmem>>, vector<8x96xf32>,
    %c48 = arith.constant 48 : index
    %c0_58 = arith.constant 0 : index
    %190 = vector.load %arg7[%c48, %c0_58] : memref<64x96xf32, #tpu.memory_space<vmem>>, vector<8x96xf32>
    %191 = arith.truncf %184 : vector<8x32xf32> to vector<8x32xbf16>
    %cst_59 = arith.constant dense<0.000000e+00> : vector<8x96xf32>
    %192 = tpu.matmul %191, %12, %cst_59 {dimension_numbers = #tpu.dot_dimension_numbers<[1], [0], [0], [1], [0, 0, 1, 1], [], []>} : vector<8x32xbf16>, vector<32x96xbf16>, vector<8x96xf32> -> vector<8x96xf32>
    %193 = vector.extract_strided_slice %190 {offsets = [0, 0], sizes = [8, 64], strides = [1, 1]} : vector<8x96xf32> to vector<8x64xf32>
    %194 = vector.extract_strided_slice %192 {offsets = [0, 0], sizes = [8, 64], strides = [1, 1]} : vector<8x96xf32> to vector<8x64xf32>
    %195 = arith.addf %193, %194 : vector<8x64xf32>
    %196 = arith.negf %195 : vector<8x64xf32>
    %197 = math.exp %196 : vector<8x64xf32>
    %cst_60 = arith.constant 1.000000e+00 : f32
    %198 = vector.broadcast %cst_60 : f32 to vector<8x64xf32>
    %199 = arith.addf %198, %197 : vector<8x64xf32>
    %200 = arith.divf %198, %199 : vector<8x64xf32>
    %201 = vector.extract_strided_slice %200 {offsets = [0, 0], sizes = [8, 32], strides = [1, 1]} : vector<8x64xf32> to vector<8x32xf32>
    %202 = vector.extract_strided_slice %200 {offsets = [0, 32], sizes = [8, 32], strides = [1, 1]} : vector<8x64xf32> to vector<8x32xf32>
    %203 = vector.extract_strided_slice %190 {offsets = [0, 64], sizes = [8, 32], strides = [1, 1]} : vector<8x96xf32> to vector<8x32xf32>
    %204 = vector.extract_strided_slice %192 {offsets = [0, 64], sizes = [8, 32], strides = [1, 1]} : vector<8x96xf32> to vector<8x32xf32>
    %205 = vector.broadcast %15 : vector<1x32xf32> to vector<8x32xf32>
    %206 = arith.addf %204, %205 : vector<8x32xf32>
    %207 = arith.mulf %201, %206 : vector<8x32xf32>
    %208 = arith.addf %203, %207 : vector<8x32xf32>
    %209 = math.tanh %208 : vector<8x32xf32>
    %210 = arith.subf %184, %209 : vector<8x32xf32>
    %211 = arith.mulf %202, %210 : vector<8x32xf32>
    %212 = arith.addf %209, %211 : vector<8x32xf32>
    %213 = arith.truncf %212 : vector<8x32xf32> to vector<8x32xbf16>
    %cst_61 = arith.constant dense<0.000000e+00> : vector<8x96xf32>
    %214 = tpu.matmul %213, %17, %cst_61 {dimension_numbers = #tpu.dot_dimension_numbers<[1], [0], [0], [1], [0, 0, 1, 1], [], []>} : vector<8x32xbf16>, vector<32x96xbf16>, vector<8x96xf32> -> vector<8x96xf32>
    %215 = vector.broadcast %20 : vector<1x96xf32> to vector<8x96xf32>
    %216 = arith.addf %214, %215 : vector<8x96xf32>
    %c48_62 = arith.constant 48 : index
    %c0_63 = arith.constant 0 : index
    %217 = vector.load %arg8[%c48_62, %c0_63] : memref<64x96xf32, #tpu.memory_space<vmem>>, vector<8x96xf32>
    tpu.vector_store %arg8[%c48_62, %c0_63], %216 {strides = array<i32>} : memref<64x96xf32, #tpu.memory_space<vmem>>, vector<8x96xf32>,
    %c56 = arith.constant 56 : index
    %c0_64 = arith.constant 0 : index
    %218 = vector.load %arg7[%c56, %c0_64] : memref<64x96xf32, #tpu.memory_space<vmem>>, vector<8x96xf32>
    %219 = arith.truncf %212 : vector<8x32xf32> to vector<8x32xbf16>
    %cst_65 = arith.constant dense<0.000000e+00> : vector<8x96xf32>
    %220 = tpu.matmul %219, %12, %cst_65 {dimension_numbers = #tpu.dot_dimension_numbers<[1], [0], [0], [1], [0, 0, 1, 1], [], []>} : vector<8x32xbf16>, vector<32x96xbf16>, vector<8x96xf32> -> vector<8x96xf32>
    %221 = vector.extract_strided_slice %218 {offsets = [0, 0], sizes = [8, 64], strides = [1, 1]} : vector<8x96xf32> to vector<8x64xf32>
    %222 = vector.extract_strided_slice %220 {offsets = [0, 0], sizes = [8, 64], strides = [1, 1]} : vector<8x96xf32> to vector<8x64xf32>
    %223 = arith.addf %221, %222 : vector<8x64xf32>
    %224 = arith.negf %223 : vector<8x64xf32>
    %225 = math.exp %224 : vector<8x64xf32>
    %cst_66 = arith.constant 1.000000e+00 : f32
    %226 = vector.broadcast %cst_66 : f32 to vector<8x64xf32>
    %227 = arith.addf %226, %225 : vector<8x64xf32>
    %228 = arith.divf %226, %227 : vector<8x64xf32>
    %229 = vector.extract_strided_slice %228 {offsets = [0, 0], sizes = [8, 32], strides = [1, 1]} : vector<8x64xf32> to vector<8x32xf32>
    %230 = vector.extract_strided_slice %228 {offsets = [0, 32], sizes = [8, 32], strides = [1, 1]} : vector<8x64xf32> to vector<8x32xf32>
    %231 = vector.extract_strided_slice %218 {offsets = [0, 64], sizes = [8, 32], strides = [1, 1]} : vector<8x96xf32> to vector<8x32xf32>
    %232 = vector.extract_strided_slice %220 {offsets = [0, 64], sizes = [8, 32], strides = [1, 1]} : vector<8x96xf32> to vector<8x32xf32>
    %233 = vector.broadcast %15 : vector<1x32xf32> to vector<8x32xf32>
    %234 = arith.addf %232, %233 : vector<8x32xf32>
    %235 = arith.mulf %229, %234 : vector<8x32xf32>
    %236 = arith.addf %231, %235 : vector<8x32xf32>
    %237 = math.tanh %236 : vector<8x32xf32>
    %238 = arith.subf %212, %237 : vector<8x32xf32>
    %239 = arith.mulf %230, %238 : vector<8x32xf32>
    %240 = arith.addf %237, %239 : vector<8x32xf32>
    %241 = arith.truncf %240 : vector<8x32xf32> to vector<8x32xbf16>
    %cst_67 = arith.constant dense<0.000000e+00> : vector<8x96xf32>
    %242 = tpu.matmul %241, %17, %cst_67 {dimension_numbers = #tpu.dot_dimension_numbers<[1], [0], [0], [1], [0, 0, 1, 1], [], []>} : vector<8x32xbf16>, vector<32x96xbf16>, vector<8x96xf32> -> vector<8x96xf32>
    %243 = vector.broadcast %20 : vector<1x96xf32> to vector<8x96xf32>
    %244 = arith.addf %242, %243 : vector<8x96xf32>
    %c56_68 = arith.constant 56 : index
    %c0_69 = arith.constant 0 : index
    %245 = vector.load %arg8[%c56_68, %c0_69] : memref<64x96xf32, #tpu.memory_space<vmem>>, vector<8x96xf32>
    tpu.vector_store %arg8[%c56_68, %c0_69], %244 {strides = array<i32>} : memref<64x96xf32, #tpu.memory_space<vmem>>, vector<8x96xf32>,
    %c1_70 = arith.constant 1 : index
    %c0_71 = arith.constant 0 : index
    %c0_72 = arith.constant 0 : index
    %246 = vector.load %arg2[%c1_70, %c0_71, %c0_72] : memref<5x32x96xbf16, #tpu.memory_space<vmem>>, vector<1x32x96xbf16>
    %247 = vector.shape_cast %246 : vector<1x32x96xbf16> to vector<32x96xbf16>
    %c1_73 = arith.constant 1 : index
    %c0_74 = arith.constant 0 : index
    %c0_75 = arith.constant 0 : index
    %248 = vector.load %arg3[%c1_73, %c0_74, %c0_75] : memref<5x2x96xf32, #tpu.memory_space<vmem>>, vector<1x2x96xf32>
    %249 = vector.shape_cast %248 : vector<1x2x96xf32> to vector<2x96xf32>
    %250 = vector.extract_strided_slice %249 {offsets = [1, 0], sizes = [1, 32], strides = [1, 1]} : vector<2x96xf32> to vector<1x32xf32>
    %c2 = arith.constant 2 : index
    %c0_76 = arith.constant 0 : index
    %c0_77 = arith.constant 0 : index
    %251 = vector.load %arg1[%c2, %c0_76, %c0_77] : memref<5x32x96xbf16, #tpu.memory_space<vmem>>, vector<1x32x96xbf16>
    %252 = vector.shape_cast %251 : vector<1x32x96xbf16> to vector<32x96xbf16>
    %c2_78 = arith.constant 2 : index
    %c0_79 = arith.constant 0 : index
    %c0_80 = arith.constant 0 : index
    %253 = vector.load %arg3[%c2_78, %c0_79, %c0_80] : memref<5x2x96xf32, #tpu.memory_space<vmem>>, vector<1x2x96xf32>
    %254 = vector.shape_cast %253 : vector<1x2x96xf32> to vector<2x96xf32>
    %255 = vector.extract_strided_slice %254 {offsets = [0, 0], sizes = [1, 96], strides = [1, 1]} : vector<2x96xf32> to vector<1x96xf32>
    %cst_81 = arith.constant 0.000000e+00 : f32
    %256 = vector.broadcast %cst_81 : f32 to vector<8x32xf32>
    %c0_82 = arith.constant 0 : index
    %c0_83 = arith.constant 0 : index
    %257 = vector.load %arg8[%c0_82, %c0_83] : memref<64x96xf32, #tpu.memory_space<vmem>>, vector<8x96xf32>
    %258 = arith.truncf %256 : vector<8x32xf32> to vector<8x32xbf16>
    %cst_84 = arith.constant dense<0.000000e+00> : vector<8x96xf32>
    %259 = tpu.matmul %258, %247, %cst_84 {dimension_numbers = #tpu.dot_dimension_numbers<[1], [0], [0], [1], [0, 0, 1, 1], [], []>} : vector<8x32xbf16>, vector<32x96xbf16>, vector<8x96xf32> -> vector<8x96xf32>
    %260 = vector.extract_strided_slice %257 {offsets = [0, 0], sizes = [8, 64], strides = [1, 1]} : vector<8x96xf32> to vector<8x64xf32>
    %261 = vector.extract_strided_slice %259 {offsets = [0, 0], sizes = [8, 64], strides = [1, 1]} : vector<8x96xf32> to vector<8x64xf32>
    %262 = arith.addf %260, %261 : vector<8x64xf32>
    %263 = arith.negf %262 : vector<8x64xf32>
    %264 = math.exp %263 : vector<8x64xf32>
    %cst_85 = arith.constant 1.000000e+00 : f32
    %265 = vector.broadcast %cst_85 : f32 to vector<8x64xf32>
    %266 = arith.addf %265, %264 : vector<8x64xf32>
    %267 = arith.divf %265, %266 : vector<8x64xf32>
    %268 = vector.extract_strided_slice %267 {offsets = [0, 0], sizes = [8, 32], strides = [1, 1]} : vector<8x64xf32> to vector<8x32xf32>
    %269 = vector.extract_strided_slice %267 {offsets = [0, 32], sizes = [8, 32], strides = [1, 1]} : vector<8x64xf32> to vector<8x32xf32>
    %270 = vector.extract_strided_slice %257 {offsets = [0, 64], sizes = [8, 32], strides = [1, 1]} : vector<8x96xf32> to vector<8x32xf32>
    %271 = vector.extract_strided_slice %259 {offsets = [0, 64], sizes = [8, 32], strides = [1, 1]} : vector<8x96xf32> to vector<8x32xf32>
    %272 = vector.broadcast %250 : vector<1x32xf32> to vector<8x32xf32>
    %273 = arith.addf %271, %272 : vector<8x32xf32>
    %274 = arith.mulf %268, %273 : vector<8x32xf32>
    %275 = arith.addf %270, %274 : vector<8x32xf32>
    %276 = math.tanh %275 : vector<8x32xf32>
    %277 = arith.subf %256, %276 : vector<8x32xf32>
    %278 = arith.mulf %269, %277 : vector<8x32xf32>
    %279 = arith.addf %276, %278 : vector<8x32xf32>
    %280 = arith.truncf %279 : vector<8x32xf32> to vector<8x32xbf16>
    %cst_86 = arith.constant dense<0.000000e+00> : vector<8x96xf32>
    %281 = tpu.matmul %280, %252, %cst_86 {dimension_numbers = #tpu.dot_dimension_numbers<[1], [0], [0], [1], [0, 0, 1, 1], [], []>} : vector<8x32xbf16>, vector<32x96xbf16>, vector<8x96xf32> -> vector<8x96xf32>
    %282 = vector.broadcast %255 : vector<1x96xf32> to vector<8x96xf32>
    %283 = arith.addf %281, %282 : vector<8x96xf32>
    %c0_87 = arith.constant 0 : index
    %c0_88 = arith.constant 0 : index
    %284 = vector.load %arg7[%c0_87, %c0_88] : memref<64x96xf32, #tpu.memory_space<vmem>>, vector<8x96xf32>
    tpu.vector_store %arg7[%c0_87, %c0_88], %283 {strides = array<i32>} : memref<64x96xf32, #tpu.memory_space<vmem>>, vector<8x96xf32>,
    %c8_89 = arith.constant 8 : index
    %c0_90 = arith.constant 0 : index
    %285 = vector.load %arg8[%c8_89, %c0_90] : memref<64x96xf32, #tpu.memory_space<vmem>>, vector<8x96xf32>
    %286 = arith.truncf %279 : vector<8x32xf32> to vector<8x32xbf16>
    %cst_91 = arith.constant dense<0.000000e+00> : vector<8x96xf32>
    %287 = tpu.matmul %286, %247, %cst_91 {dimension_numbers = #tpu.dot_dimension_numbers<[1], [0], [0], [1], [0, 0, 1, 1], [], []>} : vector<8x32xbf16>, vector<32x96xbf16>, vector<8x96xf32> -> vector<8x96xf32>
    %288 = vector.extract_strided_slice %285 {offsets = [0, 0], sizes = [8, 64], strides = [1, 1]} : vector<8x96xf32> to vector<8x64xf32>
    %289 = vector.extract_strided_slice %287 {offsets = [0, 0], sizes = [8, 64], strides = [1, 1]} : vector<8x96xf32> to vector<8x64xf32>
    %290 = arith.addf %288, %289 : vector<8x64xf32>
    %291 = arith.negf %290 : vector<8x64xf32>
    %292 = math.exp %291 : vector<8x64xf32>
    %cst_92 = arith.constant 1.000000e+00 : f32
    %293 = vector.broadcast %cst_92 : f32 to vector<8x64xf32>
    %294 = arith.addf %293, %292 : vector<8x64xf32>
    %295 = arith.divf %293, %294 : vector<8x64xf32>
    %296 = vector.extract_strided_slice %295 {offsets = [0, 0], sizes = [8, 32], strides = [1, 1]} : vector<8x64xf32> to vector<8x32xf32>
    %297 = vector.extract_strided_slice %295 {offsets = [0, 32], sizes = [8, 32], strides = [1, 1]} : vector<8x64xf32> to vector<8x32xf32>
    %298 = vector.extract_strided_slice %285 {offsets = [0, 64], sizes = [8, 32], strides = [1, 1]} : vector<8x96xf32> to vector<8x32xf32>
    %299 = vector.extract_strided_slice %287 {offsets = [0, 64], sizes = [8, 32], strides = [1, 1]} : vector<8x96xf32> to vector<8x32xf32>
    %300 = vector.broadcast %250 : vector<1x32xf32> to vector<8x32xf32>
    %301 = arith.addf %299, %300 : vector<8x32xf32>
    %302 = arith.mulf %296, %301 : vector<8x32xf32>
    %303 = arith.addf %298, %302 : vector<8x32xf32>
    %304 = math.tanh %303 : vector<8x32xf32>
    %305 = arith.subf %279, %304 : vector<8x32xf32>
    %306 = arith.mulf %297, %305 : vector<8x32xf32>
    %307 = arith.addf %304, %306 : vector<8x32xf32>
    %308 = arith.truncf %307 : vector<8x32xf32> to vector<8x32xbf16>
    %cst_93 = arith.constant dense<0.000000e+00> : vector<8x96xf32>
    %309 = tpu.matmul %308, %252, %cst_93 {dimension_numbers = #tpu.dot_dimension_numbers<[1], [0], [0], [1], [0, 0, 1, 1], [], []>} : vector<8x32xbf16>, vector<32x96xbf16>, vector<8x96xf32> -> vector<8x96xf32>
    %310 = vector.broadcast %255 : vector<1x96xf32> to vector<8x96xf32>
    %311 = arith.addf %309, %310 : vector<8x96xf32>
    %c8_94 = arith.constant 8 : index
    %c0_95 = arith.constant 0 : index
    %312 = vector.load %arg7[%c8_94, %c0_95] : memref<64x96xf32, #tpu.memory_space<vmem>>, vector<8x96xf32>
    tpu.vector_store %arg7[%c8_94, %c0_95], %311 {strides = array<i32>} : memref<64x96xf32, #tpu.memory_space<vmem>>, vector<8x96xf32>,
    %c16_96 = arith.constant 16 : index
    %c0_97 = arith.constant 0 : index
    %313 = vector.load %arg8[%c16_96, %c0_97] : memref<64x96xf32, #tpu.memory_space<vmem>>, vector<8x96xf32>
    %314 = arith.truncf %307 : vector<8x32xf32> to vector<8x32xbf16>
    %cst_98 = arith.constant dense<0.000000e+00> : vector<8x96xf32>
    %315 = tpu.matmul %314, %247, %cst_98 {dimension_numbers = #tpu.dot_dimension_numbers<[1], [0], [0], [1], [0, 0, 1, 1], [], []>} : vector<8x32xbf16>, vector<32x96xbf16>, vector<8x96xf32> -> vector<8x96xf32>
    %316 = vector.extract_strided_slice %313 {offsets = [0, 0], sizes = [8, 64], strides = [1, 1]} : vector<8x96xf32> to vector<8x64xf32>
    %317 = vector.extract_strided_slice %315 {offsets = [0, 0], sizes = [8, 64], strides = [1, 1]} : vector<8x96xf32> to vector<8x64xf32>
    %318 = arith.addf %316, %317 : vector<8x64xf32>
    %319 = arith.negf %318 : vector<8x64xf32>
    %320 = math.exp %319 : vector<8x64xf32>
    %cst_99 = arith.constant 1.000000e+00 : f32
    %321 = vector.broadcast %cst_99 : f32 to vector<8x64xf32>
    %322 = arith.addf %321, %320 : vector<8x64xf32>
    %323 = arith.divf %321, %322 : vector<8x64xf32>
    %324 = vector.extract_strided_slice %323 {offsets = [0, 0], sizes = [8, 32], strides = [1, 1]} : vector<8x64xf32> to vector<8x32xf32>
    %325 = vector.extract_strided_slice %323 {offsets = [0, 32], sizes = [8, 32], strides = [1, 1]} : vector<8x64xf32> to vector<8x32xf32>
    %326 = vector.extract_strided_slice %313 {offsets = [0, 64], sizes = [8, 32], strides = [1, 1]} : vector<8x96xf32> to vector<8x32xf32>
    %327 = vector.extract_strided_slice %315 {offsets = [0, 64], sizes = [8, 32], strides = [1, 1]} : vector<8x96xf32> to vector<8x32xf32>
    %328 = vector.broadcast %250 : vector<1x32xf32> to vector<8x32xf32>
    %329 = arith.addf %327, %328 : vector<8x32xf32>
    %330 = arith.mulf %324, %329 : vector<8x32xf32>
    %331 = arith.addf %326, %330 : vector<8x32xf32>
    %332 = math.tanh %331 : vector<8x32xf32>
    %333 = arith.subf %307, %332 : vector<8x32xf32>
    %334 = arith.mulf %325, %333 : vector<8x32xf32>
    %335 = arith.addf %332, %334 : vector<8x32xf32>
    %336 = arith.truncf %335 : vector<8x32xf32> to vector<8x32xbf16>
    %cst_100 = arith.constant dense<0.000000e+00> : vector<8x96xf32>
    %337 = tpu.matmul %336, %252, %cst_100 {dimension_numbers = #tpu.dot_dimension_numbers<[1], [0], [0], [1], [0, 0, 1, 1], [], []>} : vector<8x32xbf16>, vector<32x96xbf16>, vector<8x96xf32> -> vector<8x96xf32>
    %338 = vector.broadcast %255 : vector<1x96xf32> to vector<8x96xf32>
    %339 = arith.addf %337, %338 : vector<8x96xf32>
    %c16_101 = arith.constant 16 : index
    %c0_102 = arith.constant 0 : index
    %340 = vector.load %arg7[%c16_101, %c0_102] : memref<64x96xf32, #tpu.memory_space<vmem>>, vector<8x96xf32>
    tpu.vector_store %arg7[%c16_101, %c0_102], %339 {strides = array<i32>} : memref<64x96xf32, #tpu.memory_space<vmem>>, vector<8x96xf32>,
    %c24_103 = arith.constant 24 : index
    %c0_104 = arith.constant 0 : index
    %341 = vector.load %arg8[%c24_103, %c0_104] : memref<64x96xf32, #tpu.memory_space<vmem>>, vector<8x96xf32>
    %342 = arith.truncf %335 : vector<8x32xf32> to vector<8x32xbf16>
    %cst_105 = arith.constant dense<0.000000e+00> : vector<8x96xf32>
    %343 = tpu.matmul %342, %247, %cst_105 {dimension_numbers = #tpu.dot_dimension_numbers<[1], [0], [0], [1], [0, 0, 1, 1], [], []>} : vector<8x32xbf16>, vector<32x96xbf16>, vector<8x96xf32> -> vector<8x96xf32>
    %344 = vector.extract_strided_slice %341 {offsets = [0, 0], sizes = [8, 64], strides = [1, 1]} : vector<8x96xf32> to vector<8x64xf32>
    %345 = vector.extract_strided_slice %343 {offsets = [0, 0], sizes = [8, 64], strides = [1, 1]} : vector<8x96xf32> to vector<8x64xf32>
    %346 = arith.addf %344, %345 : vector<8x64xf32>
    %347 = arith.negf %346 : vector<8x64xf32>
    %348 = math.exp %347 : vector<8x64xf32>
    %cst_106 = arith.constant 1.000000e+00 : f32
    %349 = vector.broadcast %cst_106 : f32 to vector<8x64xf32>
    %350 = arith.addf %349, %348 : vector<8x64xf32>
    %351 = arith.divf %349, %350 : vector<8x64xf32>
    %352 = vector.extract_strided_slice %351 {offsets = [0, 0], sizes = [8, 32], strides = [1, 1]} : vector<8x64xf32> to vector<8x32xf32>
    %353 = vector.extract_strided_slice %351 {offsets = [0, 32], sizes = [8, 32], strides = [1, 1]} : vector<8x64xf32> to vector<8x32xf32>
    %354 = vector.extract_strided_slice %341 {offsets = [0, 64], sizes = [8, 32], strides = [1, 1]} : vector<8x96xf32> to vector<8x32xf32>
    %355 = vector.extract_strided_slice %343 {offsets = [0, 64], sizes = [8, 32], strides = [1, 1]} : vector<8x96xf32> to vector<8x32xf32>
    %356 = vector.broadcast %250 : vector<1x32xf32> to vector<8x32xf32>
    %357 = arith.addf %355, %356 : vector<8x32xf32>
    %358 = arith.mulf %352, %357 : vector<8x32xf32>
    %359 = arith.addf %354, %358 : vector<8x32xf32>
    %360 = math.tanh %359 : vector<8x32xf32>
    %361 = arith.subf %335, %360 : vector<8x32xf32>
    %362 = arith.mulf %353, %361 : vector<8x32xf32>
    %363 = arith.addf %360, %362 : vector<8x32xf32>
    %364 = arith.truncf %363 : vector<8x32xf32> to vector<8x32xbf16>
    %cst_107 = arith.constant dense<0.000000e+00> : vector<8x96xf32>
    %365 = tpu.matmul %364, %252, %cst_107 {dimension_numbers = #tpu.dot_dimension_numbers<[1], [0], [0], [1], [0, 0, 1, 1], [], []>} : vector<8x32xbf16>, vector<32x96xbf16>, vector<8x96xf32> -> vector<8x96xf32>
    %366 = vector.broadcast %255 : vector<1x96xf32> to vector<8x96xf32>
    %367 = arith.addf %365, %366 : vector<8x96xf32>
    %c24_108 = arith.constant 24 : index
    %c0_109 = arith.constant 0 : index
    %368 = vector.load %arg7[%c24_108, %c0_109] : memref<64x96xf32, #tpu.memory_space<vmem>>, vector<8x96xf32>
    tpu.vector_store %arg7[%c24_108, %c0_109], %367 {strides = array<i32>} : memref<64x96xf32, #tpu.memory_space<vmem>>, vector<8x96xf32>,
    %c32_110 = arith.constant 32 : index
    %c0_111 = arith.constant 0 : index
    %369 = vector.load %arg8[%c32_110, %c0_111] : memref<64x96xf32, #tpu.memory_space<vmem>>, vector<8x96xf32>
    %370 = arith.truncf %363 : vector<8x32xf32> to vector<8x32xbf16>
    %cst_112 = arith.constant dense<0.000000e+00> : vector<8x96xf32>
    %371 = tpu.matmul %370, %247, %cst_112 {dimension_numbers = #tpu.dot_dimension_numbers<[1], [0], [0], [1], [0, 0, 1, 1], [], []>} : vector<8x32xbf16>, vector<32x96xbf16>, vector<8x96xf32> -> vector<8x96xf32>
    %372 = vector.extract_strided_slice %369 {offsets = [0, 0], sizes = [8, 64], strides = [1, 1]} : vector<8x96xf32> to vector<8x64xf32>
    %373 = vector.extract_strided_slice %371 {offsets = [0, 0], sizes = [8, 64], strides = [1, 1]} : vector<8x96xf32> to vector<8x64xf32>
    %374 = arith.addf %372, %373 : vector<8x64xf32>
    %375 = arith.negf %374 : vector<8x64xf32>
    %376 = math.exp %375 : vector<8x64xf32>
    %cst_113 = arith.constant 1.000000e+00 : f32
    %377 = vector.broadcast %cst_113 : f32 to vector<8x64xf32>
    %378 = arith.addf %377, %376 : vector<8x64xf32>
    %379 = arith.divf %377, %378 : vector<8x64xf32>
    %380 = vector.extract_strided_slice %379 {offsets = [0, 0], sizes = [8, 32], strides = [1, 1]} : vector<8x64xf32> to vector<8x32xf32>
    %381 = vector.extract_strided_slice %379 {offsets = [0, 32], sizes = [8, 32], strides = [1, 1]} : vector<8x64xf32> to vector<8x32xf32>
    %382 = vector.extract_strided_slice %369 {offsets = [0, 64], sizes = [8, 32], strides = [1, 1]} : vector<8x96xf32> to vector<8x32xf32>
    %383 = vector.extract_strided_slice %371 {offsets = [0, 64], sizes = [8, 32], strides = [1, 1]} : vector<8x96xf32> to vector<8x32xf32>
    %384 = vector.broadcast %250 : vector<1x32xf32> to vector<8x32xf32>
    %385 = arith.addf %383, %384 : vector<8x32xf32>
    %386 = arith.mulf %380, %385 : vector<8x32xf32>
    %387 = arith.addf %382, %386 : vector<8x32xf32>
    %388 = math.tanh %387 : vector<8x32xf32>
    %389 = arith.subf %363, %388 : vector<8x32xf32>
    %390 = arith.mulf %381, %389 : vector<8x32xf32>
    %391 = arith.addf %388, %390 : vector<8x32xf32>
    %392 = arith.truncf %391 : vector<8x32xf32> to vector<8x32xbf16>
    %cst_114 = arith.constant dense<0.000000e+00> : vector<8x96xf32>
    %393 = tpu.matmul %392, %252, %cst_114 {dimension_numbers = #tpu.dot_dimension_numbers<[1], [0], [0], [1], [0, 0, 1, 1], [], []>} : vector<8x32xbf16>, vector<32x96xbf16>, vector<8x96xf32> -> vector<8x96xf32>
    %394 = vector.broadcast %255 : vector<1x96xf32> to vector<8x96xf32>
    %395 = arith.addf %393, %394 : vector<8x96xf32>
    %c32_115 = arith.constant 32 : index
    %c0_116 = arith.constant 0 : index
    %396 = vector.load %arg7[%c32_115, %c0_116] : memref<64x96xf32, #tpu.memory_space<vmem>>, vector<8x96xf32>
    tpu.vector_store %arg7[%c32_115, %c0_116], %395 {strides = array<i32>} : memref<64x96xf32, #tpu.memory_space<vmem>>, vector<8x96xf32>,
    %c40_117 = arith.constant 40 : index
    %c0_118 = arith.constant 0 : index
    %397 = vector.load %arg8[%c40_117, %c0_118] : memref<64x96xf32, #tpu.memory_space<vmem>>, vector<8x96xf32>
    %398 = arith.truncf %391 : vector<8x32xf32> to vector<8x32xbf16>
    %cst_119 = arith.constant dense<0.000000e+00> : vector<8x96xf32>
    %399 = tpu.matmul %398, %247, %cst_119 {dimension_numbers = #tpu.dot_dimension_numbers<[1], [0], [0], [1], [0, 0, 1, 1], [], []>} : vector<8x32xbf16>, vector<32x96xbf16>, vector<8x96xf32> -> vector<8x96xf32>
    %400 = vector.extract_strided_slice %397 {offsets = [0, 0], sizes = [8, 64], strides = [1, 1]} : vector<8x96xf32> to vector<8x64xf32>
    %401 = vector.extract_strided_slice %399 {offsets = [0, 0], sizes = [8, 64], strides = [1, 1]} : vector<8x96xf32> to vector<8x64xf32>
    %402 = arith.addf %400, %401 : vector<8x64xf32>
    %403 = arith.negf %402 : vector<8x64xf32>
    %404 = math.exp %403 : vector<8x64xf32>
    %cst_120 = arith.constant 1.000000e+00 : f32
    %405 = vector.broadcast %cst_120 : f32 to vector<8x64xf32>
    %406 = arith.addf %405, %404 : vector<8x64xf32>
    %407 = arith.divf %405, %406 : vector<8x64xf32>
    %408 = vector.extract_strided_slice %407 {offsets = [0, 0], sizes = [8, 32], strides = [1, 1]} : vector<8x64xf32> to vector<8x32xf32>
    %409 = vector.extract_strided_slice %407 {offsets = [0, 32], sizes = [8, 32], strides = [1, 1]} : vector<8x64xf32> to vector<8x32xf32>
    %410 = vector.extract_strided_slice %397 {offsets = [0, 64], sizes = [8, 32], strides = [1, 1]} : vector<8x96xf32> to vector<8x32xf32>
    %411 = vector.extract_strided_slice %399 {offsets = [0, 64], sizes = [8, 32], strides = [1, 1]} : vector<8x96xf32> to vector<8x32xf32>
    %412 = vector.broadcast %250 : vector<1x32xf32> to vector<8x32xf32>
    %413 = arith.addf %411, %412 : vector<8x32xf32>
    %414 = arith.mulf %408, %413 : vector<8x32xf32>
    %415 = arith.addf %410, %414 : vector<8x32xf32>
    %416 = math.tanh %415 : vector<8x32xf32>
    %417 = arith.subf %391, %416 : vector<8x32xf32>
    %418 = arith.mulf %409, %417 : vector<8x32xf32>
    %419 = arith.addf %416, %418 : vector<8x32xf32>
    %420 = arith.truncf %419 : vector<8x32xf32> to vector<8x32xbf16>
    %cst_121 = arith.constant dense<0.000000e+00> : vector<8x96xf32>
    %421 = tpu.matmul %420, %252, %cst_121 {dimension_numbers = #tpu.dot_dimension_numbers<[1], [0], [0], [1], [0, 0, 1, 1], [], []>} : vector<8x32xbf16>, vector<32x96xbf16>, vector<8x96xf32> -> vector<8x96xf32>
    %422 = vector.broadcast %255 : vector<1x96xf32> to vector<8x96xf32>
    %423 = arith.addf %421, %422 : vector<8x96xf32>
    %c40_122 = arith.constant 40 : index
    %c0_123 = arith.constant 0 : index
    %424 = vector.load %arg7[%c40_122, %c0_123] : memref<64x96xf32, #tpu.memory_space<vmem>>, vector<8x96xf32>
    tpu.vector_store %arg7[%c40_122, %c0_123], %423 {strides = array<i32>} : memref<64x96xf32, #tpu.memory_space<vmem>>, vector<8x96xf32>,
    %c48_124 = arith.constant 48 : index
    %c0_125 = arith.constant 0 : index
    %425 = vector.load %arg8[%c48_124, %c0_125] : memref<64x96xf32, #tpu.memory_space<vmem>>, vector<8x96xf32>
    %426 = arith.truncf %419 : vector<8x32xf32> to vector<8x32xbf16>
    %cst_126 = arith.constant dense<0.000000e+00> : vector<8x96xf32>
    %427 = tpu.matmul %426, %247, %cst_126 {dimension_numbers = #tpu.dot_dimension_numbers<[1], [0], [0], [1], [0, 0, 1, 1], [], []>} : vector<8x32xbf16>, vector<32x96xbf16>, vector<8x96xf32> -> vector<8x96xf32>
    %428 = vector.extract_strided_slice %425 {offsets = [0, 0], sizes = [8, 64], strides = [1, 1]} : vector<8x96xf32> to vector<8x64xf32>
    %429 = vector.extract_strided_slice %427 {offsets = [0, 0], sizes = [8, 64], strides = [1, 1]} : vector<8x96xf32> to vector<8x64xf32>
    %430 = arith.addf %428, %429 : vector<8x64xf32>
    %431 = arith.negf %430 : vector<8x64xf32>
    %432 = math.exp %431 : vector<8x64xf32>
    %cst_127 = arith.constant 1.000000e+00 : f32
    %433 = vector.broadcast %cst_127 : f32 to vector<8x64xf32>
    %434 = arith.addf %433, %432 : vector<8x64xf32>
    %435 = arith.divf %433, %434 : vector<8x64xf32>
    %436 = vector.extract_strided_slice %435 {offsets = [0, 0], sizes = [8, 32], strides = [1, 1]} : vector<8x64xf32> to vector<8x32xf32>
    %437 = vector.extract_strided_slice %435 {offsets = [0, 32], sizes = [8, 32], strides = [1, 1]} : vector<8x64xf32> to vector<8x32xf32>
    %438 = vector.extract_strided_slice %425 {offsets = [0, 64], sizes = [8, 32], strides = [1, 1]} : vector<8x96xf32> to vector<8x32xf32>
    %439 = vector.extract_strided_slice %427 {offsets = [0, 64], sizes = [8, 32], strides = [1, 1]} : vector<8x96xf32> to vector<8x32xf32>
    %440 = vector.broadcast %250 : vector<1x32xf32> to vector<8x32xf32>
    %441 = arith.addf %439, %440 : vector<8x32xf32>
    %442 = arith.mulf %436, %441 : vector<8x32xf32>
    %443 = arith.addf %438, %442 : vector<8x32xf32>
    %444 = math.tanh %443 : vector<8x32xf32>
    %445 = arith.subf %419, %444 : vector<8x32xf32>
    %446 = arith.mulf %437, %445 : vector<8x32xf32>
    %447 = arith.addf %444, %446 : vector<8x32xf32>
    %448 = arith.truncf %447 : vector<8x32xf32> to vector<8x32xbf16>
    %cst_128 = arith.constant dense<0.000000e+00> : vector<8x96xf32>
    %449 = tpu.matmul %448, %252, %cst_128 {dimension_numbers = #tpu.dot_dimension_numbers<[1], [0], [0], [1], [0, 0, 1, 1], [], []>} : vector<8x32xbf16>, vector<32x96xbf16>, vector<8x96xf32> -> vector<8x96xf32>
    %450 = vector.broadcast %255 : vector<1x96xf32> to vector<8x96xf32>
    %451 = arith.addf %449, %450 : vector<8x96xf32>
    %c48_129 = arith.constant 48 : index
    %c0_130 = arith.constant 0 : index
    %452 = vector.load %arg7[%c48_129, %c0_130] : memref<64x96xf32, #tpu.memory_space<vmem>>, vector<8x96xf32>
    tpu.vector_store %arg7[%c48_129, %c0_130], %451 {strides = array<i32>} : memref<64x96xf32, #tpu.memory_space<vmem>>, vector<8x96xf32>,
    %c56_131 = arith.constant 56 : index
    %c0_132 = arith.constant 0 : index
    %453 = vector.load %arg8[%c56_131, %c0_132] : memref<64x96xf32, #tpu.memory_space<vmem>>, vector<8x96xf32>
    %454 = arith.truncf %447 : vector<8x32xf32> to vector<8x32xbf16>
    %cst_133 = arith.constant dense<0.000000e+00> : vector<8x96xf32>
    %455 = tpu.matmul %454, %247, %cst_133 {dimension_numbers = #tpu.dot_dimension_numbers<[1], [0], [0], [1], [0, 0, 1, 1], [], []>} : vector<8x32xbf16>, vector<32x96xbf16>, vector<8x96xf32> -> vector<8x96xf32>
    %456 = vector.extract_strided_slice %453 {offsets = [0, 0], sizes = [8, 64], strides = [1, 1]} : vector<8x96xf32> to vector<8x64xf32>
    %457 = vector.extract_strided_slice %455 {offsets = [0, 0], sizes = [8, 64], strides = [1, 1]} : vector<8x96xf32> to vector<8x64xf32>
    %458 = arith.addf %456, %457 : vector<8x64xf32>
    %459 = arith.negf %458 : vector<8x64xf32>
    %460 = math.exp %459 : vector<8x64xf32>
    %cst_134 = arith.constant 1.000000e+00 : f32
    %461 = vector.broadcast %cst_134 : f32 to vector<8x64xf32>
    %462 = arith.addf %461, %460 : vector<8x64xf32>
    %463 = arith.divf %461, %462 : vector<8x64xf32>
    %464 = vector.extract_strided_slice %463 {offsets = [0, 0], sizes = [8, 32], strides = [1, 1]} : vector<8x64xf32> to vector<8x32xf32>
    %465 = vector.extract_strided_slice %463 {offsets = [0, 32], sizes = [8, 32], strides = [1, 1]} : vector<8x64xf32> to vector<8x32xf32>
    %466 = vector.extract_strided_slice %453 {offsets = [0, 64], sizes = [8, 32], strides = [1, 1]} : vector<8x96xf32> to vector<8x32xf32>
    %467 = vector.extract_strided_slice %455 {offsets = [0, 64], sizes = [8, 32], strides = [1, 1]} : vector<8x96xf32> to vector<8x32xf32>
    %468 = vector.broadcast %250 : vector<1x32xf32> to vector<8x32xf32>
    %469 = arith.addf %467, %468 : vector<8x32xf32>
    %470 = arith.mulf %464, %469 : vector<8x32xf32>
    %471 = arith.addf %466, %470 : vector<8x32xf32>
    %472 = math.tanh %471 : vector<8x32xf32>
    %473 = arith.subf %447, %472 : vector<8x32xf32>
    %474 = arith.mulf %465, %473 : vector<8x32xf32>
    %475 = arith.addf %472, %474 : vector<8x32xf32>
    %476 = arith.truncf %475 : vector<8x32xf32> to vector<8x32xbf16>
    %cst_135 = arith.constant dense<0.000000e+00> : vector<8x96xf32>
    %477 = tpu.matmul %476, %252, %cst_135 {dimension_numbers = #tpu.dot_dimension_numbers<[1], [0], [0], [1], [0, 0, 1, 1], [], []>} : vector<8x32xbf16>, vector<32x96xbf16>, vector<8x96xf32> -> vector<8x96xf32>
    %478 = vector.broadcast %255 : vector<1x96xf32> to vector<8x96xf32>
    %479 = arith.addf %477, %478 : vector<8x96xf32>
    %c56_136 = arith.constant 56 : index
    %c0_137 = arith.constant 0 : index
    %480 = vector.load %arg7[%c56_136, %c0_137] : memref<64x96xf32, #tpu.memory_space<vmem>>, vector<8x96xf32>
    tpu.vector_store %arg7[%c56_136, %c0_137], %479 {strides = array<i32>} : memref<64x96xf32, #tpu.memory_space<vmem>>, vector<8x96xf32>,
    %c2_138 = arith.constant 2 : index
    %c0_139 = arith.constant 0 : index
    %c0_140 = arith.constant 0 : index
    %481 = vector.load %arg2[%c2_138, %c0_139, %c0_140] : memref<5x32x96xbf16, #tpu.memory_space<vmem>>, vector<1x32x96xbf16>
    %482 = vector.shape_cast %481 : vector<1x32x96xbf16> to vector<32x96xbf16>
    %c2_141 = arith.constant 2 : index
    %c0_142 = arith.constant 0 : index
    %c0_143 = arith.constant 0 : index
    %483 = vector.load %arg3[%c2_141, %c0_142, %c0_143] : memref<5x2x96xf32, #tpu.memory_space<vmem>>, vector<1x2x96xf32>
    %484 = vector.shape_cast %483 : vector<1x2x96xf32> to vector<2x96xf32>
    %485 = vector.extract_strided_slice %484 {offsets = [1, 0], sizes = [1, 32], strides = [1, 1]} : vector<2x96xf32> to vector<1x32xf32>
    %c3 = arith.constant 3 : index
    %c0_144 = arith.constant 0 : index
    %c0_145 = arith.constant 0 : index
    %486 = vector.load %arg1[%c3, %c0_144, %c0_145] : memref<5x32x96xbf16, #tpu.memory_space<vmem>>, vector<1x32x96xbf16>
    %487 = vector.shape_cast %486 : vector<1x32x96xbf16> to vector<32x96xbf16>
    %c3_146 = arith.constant 3 : index
    %c0_147 = arith.constant 0 : index
    %c0_148 = arith.constant 0 : index
    %488 = vector.load %arg3[%c3_146, %c0_147, %c0_148] : memref<5x2x96xf32, #tpu.memory_space<vmem>>, vector<1x2x96xf32>
    %489 = vector.shape_cast %488 : vector<1x2x96xf32> to vector<2x96xf32>
    %490 = vector.extract_strided_slice %489 {offsets = [0, 0], sizes = [1, 96], strides = [1, 1]} : vector<2x96xf32> to vector<1x96xf32>
    %cst_149 = arith.constant 0.000000e+00 : f32
    %491 = vector.broadcast %cst_149 : f32 to vector<8x32xf32>
    %c0_150 = arith.constant 0 : index
    %c0_151 = arith.constant 0 : index
    %492 = vector.load %arg7[%c0_150, %c0_151] : memref<64x96xf32, #tpu.memory_space<vmem>>, vector<8x96xf32>
    %493 = arith.truncf %491 : vector<8x32xf32> to vector<8x32xbf16>
    %cst_152 = arith.constant dense<0.000000e+00> : vector<8x96xf32>
    %494 = tpu.matmul %493, %482, %cst_152 {dimension_numbers = #tpu.dot_dimension_numbers<[1], [0], [0], [1], [0, 0, 1, 1], [], []>} : vector<8x32xbf16>, vector<32x96xbf16>, vector<8x96xf32> -> vector<8x96xf32>
    %495 = vector.extract_strided_slice %492 {offsets = [0, 0], sizes = [8, 64], strides = [1, 1]} : vector<8x96xf32> to vector<8x64xf32>
    %496 = vector.extract_strided_slice %494 {offsets = [0, 0], sizes = [8, 64], strides = [1, 1]} : vector<8x96xf32> to vector<8x64xf32>
    %497 = arith.addf %495, %496 : vector<8x64xf32>
    %498 = arith.negf %497 : vector<8x64xf32>
    %499 = math.exp %498 : vector<8x64xf32>
    %cst_153 = arith.constant 1.000000e+00 : f32
    %500 = vector.broadcast %cst_153 : f32 to vector<8x64xf32>
    %501 = arith.addf %500, %499 : vector<8x64xf32>
    %502 = arith.divf %500, %501 : vector<8x64xf32>
    %503 = vector.extract_strided_slice %502 {offsets = [0, 0], sizes = [8, 32], strides = [1, 1]} : vector<8x64xf32> to vector<8x32xf32>
    %504 = vector.extract_strided_slice %502 {offsets = [0, 32], sizes = [8, 32], strides = [1, 1]} : vector<8x64xf32> to vector<8x32xf32>
    %505 = vector.extract_strided_slice %492 {offsets = [0, 64], sizes = [8, 32], strides = [1, 1]} : vector<8x96xf32> to vector<8x32xf32>
    %506 = vector.extract_strided_slice %494 {offsets = [0, 64], sizes = [8, 32], strides = [1, 1]} : vector<8x96xf32> to vector<8x32xf32>
    %507 = vector.broadcast %485 : vector<1x32xf32> to vector<8x32xf32>
    %508 = arith.addf %506, %507 : vector<8x32xf32>
    %509 = arith.mulf %503, %508 : vector<8x32xf32>
    %510 = arith.addf %505, %509 : vector<8x32xf32>
    %511 = math.tanh %510 : vector<8x32xf32>
    %512 = arith.subf %491, %511 : vector<8x32xf32>
    %513 = arith.mulf %504, %512 : vector<8x32xf32>
    %514 = arith.addf %511, %513 : vector<8x32xf32>
    %515 = arith.truncf %514 : vector<8x32xf32> to vector<8x32xbf16>
    %cst_154 = arith.constant dense<0.000000e+00> : vector<8x96xf32>
    %516 = tpu.matmul %515, %487, %cst_154 {dimension_numbers = #tpu.dot_dimension_numbers<[1], [0], [0], [1], [0, 0, 1, 1], [], []>} : vector<8x32xbf16>, vector<32x96xbf16>, vector<8x96xf32> -> vector<8x96xf32>
    %517 = vector.broadcast %490 : vector<1x96xf32> to vector<8x96xf32>
    %518 = arith.addf %516, %517 : vector<8x96xf32>
    %c0_155 = arith.constant 0 : index
    %c0_156 = arith.constant 0 : index
    %519 = vector.load %arg8[%c0_155, %c0_156] : memref<64x96xf32, #tpu.memory_space<vmem>>, vector<8x96xf32>
    tpu.vector_store %arg8[%c0_155, %c0_156], %518 {strides = array<i32>} : memref<64x96xf32, #tpu.memory_space<vmem>>, vector<8x96xf32>,
    %c8_157 = arith.constant 8 : index
    %c0_158 = arith.constant 0 : index
    %520 = vector.load %arg7[%c8_157, %c0_158] : memref<64x96xf32, #tpu.memory_space<vmem>>, vector<8x96xf32>
    %521 = arith.truncf %514 : vector<8x32xf32> to vector<8x32xbf16>
    %cst_159 = arith.constant dense<0.000000e+00> : vector<8x96xf32>
    %522 = tpu.matmul %521, %482, %cst_159 {dimension_numbers = #tpu.dot_dimension_numbers<[1], [0], [0], [1], [0, 0, 1, 1], [], []>} : vector<8x32xbf16>, vector<32x96xbf16>, vector<8x96xf32> -> vector<8x96xf32>
    %523 = vector.extract_strided_slice %520 {offsets = [0, 0], sizes = [8, 64], strides = [1, 1]} : vector<8x96xf32> to vector<8x64xf32>
    %524 = vector.extract_strided_slice %522 {offsets = [0, 0], sizes = [8, 64], strides = [1, 1]} : vector<8x96xf32> to vector<8x64xf32>
    %525 = arith.addf %523, %524 : vector<8x64xf32>
    %526 = arith.negf %525 : vector<8x64xf32>
    %527 = math.exp %526 : vector<8x64xf32>
    %cst_160 = arith.constant 1.000000e+00 : f32
    %528 = vector.broadcast %cst_160 : f32 to vector<8x64xf32>
    %529 = arith.addf %528, %527 : vector<8x64xf32>
    %530 = arith.divf %528, %529 : vector<8x64xf32>
    %531 = vector.extract_strided_slice %530 {offsets = [0, 0], sizes = [8, 32], strides = [1, 1]} : vector<8x64xf32> to vector<8x32xf32>
    %532 = vector.extract_strided_slice %530 {offsets = [0, 32], sizes = [8, 32], strides = [1, 1]} : vector<8x64xf32> to vector<8x32xf32>
    %533 = vector.extract_strided_slice %520 {offsets = [0, 64], sizes = [8, 32], strides = [1, 1]} : vector<8x96xf32> to vector<8x32xf32>
    %534 = vector.extract_strided_slice %522 {offsets = [0, 64], sizes = [8, 32], strides = [1, 1]} : vector<8x96xf32> to vector<8x32xf32>
    %535 = vector.broadcast %485 : vector<1x32xf32> to vector<8x32xf32>
    %536 = arith.addf %534, %535 : vector<8x32xf32>
    %537 = arith.mulf %531, %536 : vector<8x32xf32>
    %538 = arith.addf %533, %537 : vector<8x32xf32>
    %539 = math.tanh %538 : vector<8x32xf32>
    %540 = arith.subf %514, %539 : vector<8x32xf32>
    %541 = arith.mulf %532, %540 : vector<8x32xf32>
    %542 = arith.addf %539, %541 : vector<8x32xf32>
    %543 = arith.truncf %542 : vector<8x32xf32> to vector<8x32xbf16>
    %cst_161 = arith.constant dense<0.000000e+00> : vector<8x96xf32>
    %544 = tpu.matmul %543, %487, %cst_161 {dimension_numbers = #tpu.dot_dimension_numbers<[1], [0], [0], [1], [0, 0, 1, 1], [], []>} : vector<8x32xbf16>, vector<32x96xbf16>, vector<8x96xf32> -> vector<8x96xf32>
    %545 = vector.broadcast %490 : vector<1x96xf32> to vector<8x96xf32>
    %546 = arith.addf %544, %545 : vector<8x96xf32>
    %c8_162 = arith.constant 8 : index
    %c0_163 = arith.constant 0 : index
    %547 = vector.load %arg8[%c8_162, %c0_163] : memref<64x96xf32, #tpu.memory_space<vmem>>, vector<8x96xf32>
    tpu.vector_store %arg8[%c8_162, %c0_163], %546 {strides = array<i32>} : memref<64x96xf32, #tpu.memory_space<vmem>>, vector<8x96xf32>,
    %c16_164 = arith.constant 16 : index
    %c0_165 = arith.constant 0 : index
    %548 = vector.load %arg7[%c16_164, %c0_165] : memref<64x96xf32, #tpu.memory_space<vmem>>, vector<8x96xf32>
    %549 = arith.truncf %542 : vector<8x32xf32> to vector<8x32xbf16>
    %cst_166 = arith.constant dense<0.000000e+00> : vector<8x96xf32>
    %550 = tpu.matmul %549, %482, %cst_166 {dimension_numbers = #tpu.dot_dimension_numbers<[1], [0], [0], [1], [0, 0, 1, 1], [], []>} : vector<8x32xbf16>, vector<32x96xbf16>, vector<8x96xf32> -> vector<8x96xf32>
    %551 = vector.extract_strided_slice %548 {offsets = [0, 0], sizes = [8, 64], strides = [1, 1]} : vector<8x96xf32> to vector<8x64xf32>
    %552 = vector.extract_strided_slice %550 {offsets = [0, 0], sizes = [8, 64], strides = [1, 1]} : vector<8x96xf32> to vector<8x64xf32>
    %553 = arith.addf %551, %552 : vector<8x64xf32>
    %554 = arith.negf %553 : vector<8x64xf32>
    %555 = math.exp %554 : vector<8x64xf32>
    %cst_167 = arith.constant 1.000000e+00 : f32
    %556 = vector.broadcast %cst_167 : f32 to vector<8x64xf32>
    %557 = arith.addf %556, %555 : vector<8x64xf32>
    %558 = arith.divf %556, %557 : vector<8x64xf32>
    %559 = vector.extract_strided_slice %558 {offsets = [0, 0], sizes = [8, 32], strides = [1, 1]} : vector<8x64xf32> to vector<8x32xf32>
    %560 = vector.extract_strided_slice %558 {offsets = [0, 32], sizes = [8, 32], strides = [1, 1]} : vector<8x64xf32> to vector<8x32xf32>
    %561 = vector.extract_strided_slice %548 {offsets = [0, 64], sizes = [8, 32], strides = [1, 1]} : vector<8x96xf32> to vector<8x32xf32>
    %562 = vector.extract_strided_slice %550 {offsets = [0, 64], sizes = [8, 32], strides = [1, 1]} : vector<8x96xf32> to vector<8x32xf32>
    %563 = vector.broadcast %485 : vector<1x32xf32> to vector<8x32xf32>
    %564 = arith.addf %562, %563 : vector<8x32xf32>
    %565 = arith.mulf %559, %564 : vector<8x32xf32>
    %566 = arith.addf %561, %565 : vector<8x32xf32>
    %567 = math.tanh %566 : vector<8x32xf32>
    %568 = arith.subf %542, %567 : vector<8x32xf32>
    %569 = arith.mulf %560, %568 : vector<8x32xf32>
    %570 = arith.addf %567, %569 : vector<8x32xf32>
    %571 = arith.truncf %570 : vector<8x32xf32> to vector<8x32xbf16>
    %cst_168 = arith.constant dense<0.000000e+00> : vector<8x96xf32>
    %572 = tpu.matmul %571, %487, %cst_168 {dimension_numbers = #tpu.dot_dimension_numbers<[1], [0], [0], [1], [0, 0, 1, 1], [], []>} : vector<8x32xbf16>, vector<32x96xbf16>, vector<8x96xf32> -> vector<8x96xf32>
    %573 = vector.broadcast %490 : vector<1x96xf32> to vector<8x96xf32>
    %574 = arith.addf %572, %573 : vector<8x96xf32>
    %c16_169 = arith.constant 16 : index
    %c0_170 = arith.constant 0 : index
    %575 = vector.load %arg8[%c16_169, %c0_170] : memref<64x96xf32, #tpu.memory_space<vmem>>, vector<8x96xf32>
    tpu.vector_store %arg8[%c16_169, %c0_170], %574 {strides = array<i32>} : memref<64x96xf32, #tpu.memory_space<vmem>>, vector<8x96xf32>,
    %c24_171 = arith.constant 24 : index
    %c0_172 = arith.constant 0 : index
    %576 = vector.load %arg7[%c24_171, %c0_172] : memref<64x96xf32, #tpu.memory_space<vmem>>, vector<8x96xf32>
    %577 = arith.truncf %570 : vector<8x32xf32> to vector<8x32xbf16>
    %cst_173 = arith.constant dense<0.000000e+00> : vector<8x96xf32>
    %578 = tpu.matmul %577, %482, %cst_173 {dimension_numbers = #tpu.dot_dimension_numbers<[1], [0], [0], [1], [0, 0, 1, 1], [], []>} : vector<8x32xbf16>, vector<32x96xbf16>, vector<8x96xf32> -> vector<8x96xf32>
    %579 = vector.extract_strided_slice %576 {offsets = [0, 0], sizes = [8, 64], strides = [1, 1]} : vector<8x96xf32> to vector<8x64xf32>
    %580 = vector.extract_strided_slice %578 {offsets = [0, 0], sizes = [8, 64], strides = [1, 1]} : vector<8x96xf32> to vector<8x64xf32>
    %581 = arith.addf %579, %580 : vector<8x64xf32>
    %582 = arith.negf %581 : vector<8x64xf32>
    %583 = math.exp %582 : vector<8x64xf32>
    %cst_174 = arith.constant 1.000000e+00 : f32
    %584 = vector.broadcast %cst_174 : f32 to vector<8x64xf32>
    %585 = arith.addf %584, %583 : vector<8x64xf32>
    %586 = arith.divf %584, %585 : vector<8x64xf32>
    %587 = vector.extract_strided_slice %586 {offsets = [0, 0], sizes = [8, 32], strides = [1, 1]} : vector<8x64xf32> to vector<8x32xf32>
    %588 = vector.extract_strided_slice %586 {offsets = [0, 32], sizes = [8, 32], strides = [1, 1]} : vector<8x64xf32> to vector<8x32xf32>
    %589 = vector.extract_strided_slice %576 {offsets = [0, 64], sizes = [8, 32], strides = [1, 1]} : vector<8x96xf32> to vector<8x32xf32>
    %590 = vector.extract_strided_slice %578 {offsets = [0, 64], sizes = [8, 32], strides = [1, 1]} : vector<8x96xf32> to vector<8x32xf32>
    %591 = vector.broadcast %485 : vector<1x32xf32> to vector<8x32xf32>
    %592 = arith.addf %590, %591 : vector<8x32xf32>
    %593 = arith.mulf %587, %592 : vector<8x32xf32>
    %594 = arith.addf %589, %593 : vector<8x32xf32>
    %595 = math.tanh %594 : vector<8x32xf32>
    %596 = arith.subf %570, %595 : vector<8x32xf32>
    %597 = arith.mulf %588, %596 : vector<8x32xf32>
    %598 = arith.addf %595, %597 : vector<8x32xf32>
    %599 = arith.truncf %598 : vector<8x32xf32> to vector<8x32xbf16>
    %cst_175 = arith.constant dense<0.000000e+00> : vector<8x96xf32>
    %600 = tpu.matmul %599, %487, %cst_175 {dimension_numbers = #tpu.dot_dimension_numbers<[1], [0], [0], [1], [0, 0, 1, 1], [], []>} : vector<8x32xbf16>, vector<32x96xbf16>, vector<8x96xf32> -> vector<8x96xf32>
    %601 = vector.broadcast %490 : vector<1x96xf32> to vector<8x96xf32>
    %602 = arith.addf %600, %601 : vector<8x96xf32>
    %c24_176 = arith.constant 24 : index
    %c0_177 = arith.constant 0 : index
    %603 = vector.load %arg8[%c24_176, %c0_177] : memref<64x96xf32, #tpu.memory_space<vmem>>, vector<8x96xf32>
    tpu.vector_store %arg8[%c24_176, %c0_177], %602 {strides = array<i32>} : memref<64x96xf32, #tpu.memory_space<vmem>>, vector<8x96xf32>,
    %c32_178 = arith.constant 32 : index
    %c0_179 = arith.constant 0 : index
    %604 = vector.load %arg7[%c32_178, %c0_179] : memref<64x96xf32, #tpu.memory_space<vmem>>, vector<8x96xf32>
    %605 = arith.truncf %598 : vector<8x32xf32> to vector<8x32xbf16>
    %cst_180 = arith.constant dense<0.000000e+00> : vector<8x96xf32>
    %606 = tpu.matmul %605, %482, %cst_180 {dimension_numbers = #tpu.dot_dimension_numbers<[1], [0], [0], [1], [0, 0, 1, 1], [], []>} : vector<8x32xbf16>, vector<32x96xbf16>, vector<8x96xf32> -> vector<8x96xf32>
    %607 = vector.extract_strided_slice %604 {offsets = [0, 0], sizes = [8, 64], strides = [1, 1]} : vector<8x96xf32> to vector<8x64xf32>
    %608 = vector.extract_strided_slice %606 {offsets = [0, 0], sizes = [8, 64], strides = [1, 1]} : vector<8x96xf32> to vector<8x64xf32>
    %609 = arith.addf %607, %608 : vector<8x64xf32>
    %610 = arith.negf %609 : vector<8x64xf32>
    %611 = math.exp %610 : vector<8x64xf32>
    %cst_181 = arith.constant 1.000000e+00 : f32
    %612 = vector.broadcast %cst_181 : f32 to vector<8x64xf32>
    %613 = arith.addf %612, %611 : vector<8x64xf32>
    %614 = arith.divf %612, %613 : vector<8x64xf32>
    %615 = vector.extract_strided_slice %614 {offsets = [0, 0], sizes = [8, 32], strides = [1, 1]} : vector<8x64xf32> to vector<8x32xf32>
    %616 = vector.extract_strided_slice %614 {offsets = [0, 32], sizes = [8, 32], strides = [1, 1]} : vector<8x64xf32> to vector<8x32xf32>
    %617 = vector.extract_strided_slice %604 {offsets = [0, 64], sizes = [8, 32], strides = [1, 1]} : vector<8x96xf32> to vector<8x32xf32>
    %618 = vector.extract_strided_slice %606 {offsets = [0, 64], sizes = [8, 32], strides = [1, 1]} : vector<8x96xf32> to vector<8x32xf32>
    %619 = vector.broadcast %485 : vector<1x32xf32> to vector<8x32xf32>
    %620 = arith.addf %618, %619 : vector<8x32xf32>
    %621 = arith.mulf %615, %620 : vector<8x32xf32>
    %622 = arith.addf %617, %621 : vector<8x32xf32>
    %623 = math.tanh %622 : vector<8x32xf32>
    %624 = arith.subf %598, %623 : vector<8x32xf32>
    %625 = arith.mulf %616, %624 : vector<8x32xf32>
    %626 = arith.addf %623, %625 : vector<8x32xf32>
    %627 = arith.truncf %626 : vector<8x32xf32> to vector<8x32xbf16>
    %cst_182 = arith.constant dense<0.000000e+00> : vector<8x96xf32>
    %628 = tpu.matmul %627, %487, %cst_182 {dimension_numbers = #tpu.dot_dimension_numbers<[1], [0], [0], [1], [0, 0, 1, 1], [], []>} : vector<8x32xbf16>, vector<32x96xbf16>, vector<8x96xf32> -> vector<8x96xf32>
    %629 = vector.broadcast %490 : vector<1x96xf32> to vector<8x96xf32>
    %630 = arith.addf %628, %629 : vector<8x96xf32>
    %c32_183 = arith.constant 32 : index
    %c0_184 = arith.constant 0 : index
    %631 = vector.load %arg8[%c32_183, %c0_184] : memref<64x96xf32, #tpu.memory_space<vmem>>, vector<8x96xf32>
    tpu.vector_store %arg8[%c32_183, %c0_184], %630 {strides = array<i32>} : memref<64x96xf32, #tpu.memory_space<vmem>>, vector<8x96xf32>,
    %c40_185 = arith.constant 40 : index
    %c0_186 = arith.constant 0 : index
    %632 = vector.load %arg7[%c40_185, %c0_186] : memref<64x96xf32, #tpu.memory_space<vmem>>, vector<8x96xf32>
    %633 = arith.truncf %626 : vector<8x32xf32> to vector<8x32xbf16>
    %cst_187 = arith.constant dense<0.000000e+00> : vector<8x96xf32>
    %634 = tpu.matmul %633, %482, %cst_187 {dimension_numbers = #tpu.dot_dimension_numbers<[1], [0], [0], [1], [0, 0, 1, 1], [], []>} : vector<8x32xbf16>, vector<32x96xbf16>, vector<8x96xf32> -> vector<8x96xf32>
    %635 = vector.extract_strided_slice %632 {offsets = [0, 0], sizes = [8, 64], strides = [1, 1]} : vector<8x96xf32> to vector<8x64xf32>
    %636 = vector.extract_strided_slice %634 {offsets = [0, 0], sizes = [8, 64], strides = [1, 1]} : vector<8x96xf32> to vector<8x64xf32>
    %637 = arith.addf %635, %636 : vector<8x64xf32>
    %638 = arith.negf %637 : vector<8x64xf32>
    %639 = math.exp %638 : vector<8x64xf32>
    %cst_188 = arith.constant 1.000000e+00 : f32
    %640 = vector.broadcast %cst_188 : f32 to vector<8x64xf32>
    %641 = arith.addf %640, %639 : vector<8x64xf32>
    %642 = arith.divf %640, %641 : vector<8x64xf32>
    %643 = vector.extract_strided_slice %642 {offsets = [0, 0], sizes = [8, 32], strides = [1, 1]} : vector<8x64xf32> to vector<8x32xf32>
    %644 = vector.extract_strided_slice %642 {offsets = [0, 32], sizes = [8, 32], strides = [1, 1]} : vector<8x64xf32> to vector<8x32xf32>
    %645 = vector.extract_strided_slice %632 {offsets = [0, 64], sizes = [8, 32], strides = [1, 1]} : vector<8x96xf32> to vector<8x32xf32>
    %646 = vector.extract_strided_slice %634 {offsets = [0, 64], sizes = [8, 32], strides = [1, 1]} : vector<8x96xf32> to vector<8x32xf32>
    %647 = vector.broadcast %485 : vector<1x32xf32> to vector<8x32xf32>
    %648 = arith.addf %646, %647 : vector<8x32xf32>
    %649 = arith.mulf %643, %648 : vector<8x32xf32>
    %650 = arith.addf %645, %649 : vector<8x32xf32>
    %651 = math.tanh %650 : vector<8x32xf32>
    %652 = arith.subf %626, %651 : vector<8x32xf32>
    %653 = arith.mulf %644, %652 : vector<8x32xf32>
    %654 = arith.addf %651, %653 : vector<8x32xf32>
    %655 = arith.truncf %654 : vector<8x32xf32> to vector<8x32xbf16>
    %cst_189 = arith.constant dense<0.000000e+00> : vector<8x96xf32>
    %656 = tpu.matmul %655, %487, %cst_189 {dimension_numbers = #tpu.dot_dimension_numbers<[1], [0], [0], [1], [0, 0, 1, 1], [], []>} : vector<8x32xbf16>, vector<32x96xbf16>, vector<8x96xf32> -> vector<8x96xf32>
    %657 = vector.broadcast %490 : vector<1x96xf32> to vector<8x96xf32>
    %658 = arith.addf %656, %657 : vector<8x96xf32>
    %c40_190 = arith.constant 40 : index
    %c0_191 = arith.constant 0 : index
    %659 = vector.load %arg8[%c40_190, %c0_191] : memref<64x96xf32, #tpu.memory_space<vmem>>, vector<8x96xf32>
    tpu.vector_store %arg8[%c40_190, %c0_191], %658 {strides = array<i32>} : memref<64x96xf32, #tpu.memory_space<vmem>>, vector<8x96xf32>,
    %c48_192 = arith.constant 48 : index
    %c0_193 = arith.constant 0 : index
    %660 = vector.load %arg7[%c48_192, %c0_193] : memref<64x96xf32, #tpu.memory_space<vmem>>, vector<8x96xf32>
    %661 = arith.truncf %654 : vector<8x32xf32> to vector<8x32xbf16>
    %cst_194 = arith.constant dense<0.000000e+00> : vector<8x96xf32>
    %662 = tpu.matmul %661, %482, %cst_194 {dimension_numbers = #tpu.dot_dimension_numbers<[1], [0], [0], [1], [0, 0, 1, 1], [], []>} : vector<8x32xbf16>, vector<32x96xbf16>, vector<8x96xf32> -> vector<8x96xf32>
    %663 = vector.extract_strided_slice %660 {offsets = [0, 0], sizes = [8, 64], strides = [1, 1]} : vector<8x96xf32> to vector<8x64xf32>
    %664 = vector.extract_strided_slice %662 {offsets = [0, 0], sizes = [8, 64], strides = [1, 1]} : vector<8x96xf32> to vector<8x64xf32>
    %665 = arith.addf %663, %664 : vector<8x64xf32>
    %666 = arith.negf %665 : vector<8x64xf32>
    %667 = math.exp %666 : vector<8x64xf32>
    %cst_195 = arith.constant 1.000000e+00 : f32
    %668 = vector.broadcast %cst_195 : f32 to vector<8x64xf32>
    %669 = arith.addf %668, %667 : vector<8x64xf32>
    %670 = arith.divf %668, %669 : vector<8x64xf32>
    %671 = vector.extract_strided_slice %670 {offsets = [0, 0], sizes = [8, 32], strides = [1, 1]} : vector<8x64xf32> to vector<8x32xf32>
    %672 = vector.extract_strided_slice %670 {offsets = [0, 32], sizes = [8, 32], strides = [1, 1]} : vector<8x64xf32> to vector<8x32xf32>
    %673 = vector.extract_strided_slice %660 {offsets = [0, 64], sizes = [8, 32], strides = [1, 1]} : vector<8x96xf32> to vector<8x32xf32>
    %674 = vector.extract_strided_slice %662 {offsets = [0, 64], sizes = [8, 32], strides = [1, 1]} : vector<8x96xf32> to vector<8x32xf32>
    %675 = vector.broadcast %485 : vector<1x32xf32> to vector<8x32xf32>
    %676 = arith.addf %674, %675 : vector<8x32xf32>
    %677 = arith.mulf %671, %676 : vector<8x32xf32>
    %678 = arith.addf %673, %677 : vector<8x32xf32>
    %679 = math.tanh %678 : vector<8x32xf32>
    %680 = arith.subf %654, %679 : vector<8x32xf32>
    %681 = arith.mulf %672, %680 : vector<8x32xf32>
    %682 = arith.addf %679, %681 : vector<8x32xf32>
    %683 = arith.truncf %682 : vector<8x32xf32> to vector<8x32xbf16>
    %cst_196 = arith.constant dense<0.000000e+00> : vector<8x96xf32>
    %684 = tpu.matmul %683, %487, %cst_196 {dimension_numbers = #tpu.dot_dimension_numbers<[1], [0], [0], [1], [0, 0, 1, 1], [], []>} : vector<8x32xbf16>, vector<32x96xbf16>, vector<8x96xf32> -> vector<8x96xf32>
    %685 = vector.broadcast %490 : vector<1x96xf32> to vector<8x96xf32>
    %686 = arith.addf %684, %685 : vector<8x96xf32>
    %c48_197 = arith.constant 48 : index
    %c0_198 = arith.constant 0 : index
    %687 = vector.load %arg8[%c48_197, %c0_198] : memref<64x96xf32, #tpu.memory_space<vmem>>, vector<8x96xf32>
    tpu.vector_store %arg8[%c48_197, %c0_198], %686 {strides = array<i32>} : memref<64x96xf32, #tpu.memory_space<vmem>>, vector<8x96xf32>,
    %c56_199 = arith.constant 56 : index
    %c0_200 = arith.constant 0 : index
    %688 = vector.load %arg7[%c56_199, %c0_200] : memref<64x96xf32, #tpu.memory_space<vmem>>, vector<8x96xf32>
    %689 = arith.truncf %682 : vector<8x32xf32> to vector<8x32xbf16>
    %cst_201 = arith.constant dense<0.000000e+00> : vector<8x96xf32>
    %690 = tpu.matmul %689, %482, %cst_201 {dimension_numbers = #tpu.dot_dimension_numbers<[1], [0], [0], [1], [0, 0, 1, 1], [], []>} : vector<8x32xbf16>, vector<32x96xbf16>, vector<8x96xf32> -> vector<8x96xf32>
    %691 = vector.extract_strided_slice %688 {offsets = [0, 0], sizes = [8, 64], strides = [1, 1]} : vector<8x96xf32> to vector<8x64xf32>
    %692 = vector.extract_strided_slice %690 {offsets = [0, 0], sizes = [8, 64], strides = [1, 1]} : vector<8x96xf32> to vector<8x64xf32>
    %693 = arith.addf %691, %692 : vector<8x64xf32>
    %694 = arith.negf %693 : vector<8x64xf32>
    %695 = math.exp %694 : vector<8x64xf32>
    %cst_202 = arith.constant 1.000000e+00 : f32
    %696 = vector.broadcast %cst_202 : f32 to vector<8x64xf32>
    %697 = arith.addf %696, %695 : vector<8x64xf32>
    %698 = arith.divf %696, %697 : vector<8x64xf32>
    %699 = vector.extract_strided_slice %698 {offsets = [0, 0], sizes = [8, 32], strides = [1, 1]} : vector<8x64xf32> to vector<8x32xf32>
    %700 = vector.extract_strided_slice %698 {offsets = [0, 32], sizes = [8, 32], strides = [1, 1]} : vector<8x64xf32> to vector<8x32xf32>
    %701 = vector.extract_strided_slice %688 {offsets = [0, 64], sizes = [8, 32], strides = [1, 1]} : vector<8x96xf32> to vector<8x32xf32>
    %702 = vector.extract_strided_slice %690 {offsets = [0, 64], sizes = [8, 32], strides = [1, 1]} : vector<8x96xf32> to vector<8x32xf32>
    %703 = vector.broadcast %485 : vector<1x32xf32> to vector<8x32xf32>
    %704 = arith.addf %702, %703 : vector<8x32xf32>
    %705 = arith.mulf %699, %704 : vector<8x32xf32>
    %706 = arith.addf %701, %705 : vector<8x32xf32>
    %707 = math.tanh %706 : vector<8x32xf32>
    %708 = arith.subf %682, %707 : vector<8x32xf32>
    %709 = arith.mulf %700, %708 : vector<8x32xf32>
    %710 = arith.addf %707, %709 : vector<8x32xf32>
    %711 = arith.truncf %710 : vector<8x32xf32> to vector<8x32xbf16>
    %cst_203 = arith.constant dense<0.000000e+00> : vector<8x96xf32>
    %712 = tpu.matmul %711, %487, %cst_203 {dimension_numbers = #tpu.dot_dimension_numbers<[1], [0], [0], [1], [0, 0, 1, 1], [], []>} : vector<8x32xbf16>, vector<32x96xbf16>, vector<8x96xf32> -> vector<8x96xf32>
    %713 = vector.broadcast %490 : vector<1x96xf32> to vector<8x96xf32>
    %714 = arith.addf %712, %713 : vector<8x96xf32>
    %c56_204 = arith.constant 56 : index
    %c0_205 = arith.constant 0 : index
    %715 = vector.load %arg8[%c56_204, %c0_205] : memref<64x96xf32, #tpu.memory_space<vmem>>, vector<8x96xf32>
    tpu.vector_store %arg8[%c56_204, %c0_205], %714 {strides = array<i32>} : memref<64x96xf32, #tpu.memory_space<vmem>>, vector<8x96xf32>,
    %c3_206 = arith.constant 3 : index
    %c0_207 = arith.constant 0 : index
    %c0_208 = arith.constant 0 : index
    %716 = vector.load %arg2[%c3_206, %c0_207, %c0_208] : memref<5x32x96xbf16, #tpu.memory_space<vmem>>, vector<1x32x96xbf16>
    %717 = vector.shape_cast %716 : vector<1x32x96xbf16> to vector<32x96xbf16>
    %c3_209 = arith.constant 3 : index
    %c0_210 = arith.constant 0 : index
    %c0_211 = arith.constant 0 : index
    %718 = vector.load %arg3[%c3_209, %c0_210, %c0_211] : memref<5x2x96xf32, #tpu.memory_space<vmem>>, vector<1x2x96xf32>
    %719 = vector.shape_cast %718 : vector<1x2x96xf32> to vector<2x96xf32>
    %720 = vector.extract_strided_slice %719 {offsets = [1, 0], sizes = [1, 32], strides = [1, 1]} : vector<2x96xf32> to vector<1x32xf32>
    %c4 = arith.constant 4 : index
    %c0_212 = arith.constant 0 : index
    %c0_213 = arith.constant 0 : index
    %721 = vector.load %arg1[%c4, %c0_212, %c0_213] : memref<5x32x96xbf16, #tpu.memory_space<vmem>>, vector<1x32x96xbf16>
    %722 = vector.shape_cast %721 : vector<1x32x96xbf16> to vector<32x96xbf16>
    %c4_214 = arith.constant 4 : index
    %c0_215 = arith.constant 0 : index
    %c0_216 = arith.constant 0 : index
    %723 = vector.load %arg3[%c4_214, %c0_215, %c0_216] : memref<5x2x96xf32, #tpu.memory_space<vmem>>, vector<1x2x96xf32>
    %724 = vector.shape_cast %723 : vector<1x2x96xf32> to vector<2x96xf32>
    %725 = vector.extract_strided_slice %724 {offsets = [0, 0], sizes = [1, 96], strides = [1, 1]} : vector<2x96xf32> to vector<1x96xf32>
    %cst_217 = arith.constant 0.000000e+00 : f32
    %726 = vector.broadcast %cst_217 : f32 to vector<8x32xf32>
    %c0_218 = arith.constant 0 : index
    %c0_219 = arith.constant 0 : index
    %727 = vector.load %arg8[%c0_218, %c0_219] : memref<64x96xf32, #tpu.memory_space<vmem>>, vector<8x96xf32>
    %728 = arith.truncf %726 : vector<8x32xf32> to vector<8x32xbf16>
    %cst_220 = arith.constant dense<0.000000e+00> : vector<8x96xf32>
    %729 = tpu.matmul %728, %717, %cst_220 {dimension_numbers = #tpu.dot_dimension_numbers<[1], [0], [0], [1], [0, 0, 1, 1], [], []>} : vector<8x32xbf16>, vector<32x96xbf16>, vector<8x96xf32> -> vector<8x96xf32>
    %730 = vector.extract_strided_slice %727 {offsets = [0, 0], sizes = [8, 64], strides = [1, 1]} : vector<8x96xf32> to vector<8x64xf32>
    %731 = vector.extract_strided_slice %729 {offsets = [0, 0], sizes = [8, 64], strides = [1, 1]} : vector<8x96xf32> to vector<8x64xf32>
    %732 = arith.addf %730, %731 : vector<8x64xf32>
    %733 = arith.negf %732 : vector<8x64xf32>
    %734 = math.exp %733 : vector<8x64xf32>
    %cst_221 = arith.constant 1.000000e+00 : f32
    %735 = vector.broadcast %cst_221 : f32 to vector<8x64xf32>
    %736 = arith.addf %735, %734 : vector<8x64xf32>
    %737 = arith.divf %735, %736 : vector<8x64xf32>
    %738 = vector.extract_strided_slice %737 {offsets = [0, 0], sizes = [8, 32], strides = [1, 1]} : vector<8x64xf32> to vector<8x32xf32>
    %739 = vector.extract_strided_slice %737 {offsets = [0, 32], sizes = [8, 32], strides = [1, 1]} : vector<8x64xf32> to vector<8x32xf32>
    %740 = vector.extract_strided_slice %727 {offsets = [0, 64], sizes = [8, 32], strides = [1, 1]} : vector<8x96xf32> to vector<8x32xf32>
    %741 = vector.extract_strided_slice %729 {offsets = [0, 64], sizes = [8, 32], strides = [1, 1]} : vector<8x96xf32> to vector<8x32xf32>
    %742 = vector.broadcast %720 : vector<1x32xf32> to vector<8x32xf32>
    %743 = arith.addf %741, %742 : vector<8x32xf32>
    %744 = arith.mulf %738, %743 : vector<8x32xf32>
    %745 = arith.addf %740, %744 : vector<8x32xf32>
    %746 = math.tanh %745 : vector<8x32xf32>
    %747 = arith.subf %726, %746 : vector<8x32xf32>
    %748 = arith.mulf %739, %747 : vector<8x32xf32>
    %749 = arith.addf %746, %748 : vector<8x32xf32>
    %750 = arith.truncf %749 : vector<8x32xf32> to vector<8x32xbf16>
    %cst_222 = arith.constant dense<0.000000e+00> : vector<8x96xf32>
    %751 = tpu.matmul %750, %722, %cst_222 {dimension_numbers = #tpu.dot_dimension_numbers<[1], [0], [0], [1], [0, 0, 1, 1], [], []>} : vector<8x32xbf16>, vector<32x96xbf16>, vector<8x96xf32> -> vector<8x96xf32>
    %752 = vector.broadcast %725 : vector<1x96xf32> to vector<8x96xf32>
    %753 = arith.addf %751, %752 : vector<8x96xf32>
    %c0_223 = arith.constant 0 : index
    %c0_224 = arith.constant 0 : index
    %754 = vector.load %arg7[%c0_223, %c0_224] : memref<64x96xf32, #tpu.memory_space<vmem>>, vector<8x96xf32>
    tpu.vector_store %arg7[%c0_223, %c0_224], %753 {strides = array<i32>} : memref<64x96xf32, #tpu.memory_space<vmem>>, vector<8x96xf32>,
    %c8_225 = arith.constant 8 : index
    %c0_226 = arith.constant 0 : index
    %755 = vector.load %arg8[%c8_225, %c0_226] : memref<64x96xf32, #tpu.memory_space<vmem>>, vector<8x96xf32>
    %756 = arith.truncf %749 : vector<8x32xf32> to vector<8x32xbf16>
    %cst_227 = arith.constant dense<0.000000e+00> : vector<8x96xf32>
    %757 = tpu.matmul %756, %717, %cst_227 {dimension_numbers = #tpu.dot_dimension_numbers<[1], [0], [0], [1], [0, 0, 1, 1], [], []>} : vector<8x32xbf16>, vector<32x96xbf16>, vector<8x96xf32> -> vector<8x96xf32>
    %758 = vector.extract_strided_slice %755 {offsets = [0, 0], sizes = [8, 64], strides = [1, 1]} : vector<8x96xf32> to vector<8x64xf32>
    %759 = vector.extract_strided_slice %757 {offsets = [0, 0], sizes = [8, 64], strides = [1, 1]} : vector<8x96xf32> to vector<8x64xf32>
    %760 = arith.addf %758, %759 : vector<8x64xf32>
    %761 = arith.negf %760 : vector<8x64xf32>
    %762 = math.exp %761 : vector<8x64xf32>
    %cst_228 = arith.constant 1.000000e+00 : f32
    %763 = vector.broadcast %cst_228 : f32 to vector<8x64xf32>
    %764 = arith.addf %763, %762 : vector<8x64xf32>
    %765 = arith.divf %763, %764 : vector<8x64xf32>
    %766 = vector.extract_strided_slice %765 {offsets = [0, 0], sizes = [8, 32], strides = [1, 1]} : vector<8x64xf32> to vector<8x32xf32>
    %767 = vector.extract_strided_slice %765 {offsets = [0, 32], sizes = [8, 32], strides = [1, 1]} : vector<8x64xf32> to vector<8x32xf32>
    %768 = vector.extract_strided_slice %755 {offsets = [0, 64], sizes = [8, 32], strides = [1, 1]} : vector<8x96xf32> to vector<8x32xf32>
    %769 = vector.extract_strided_slice %757 {offsets = [0, 64], sizes = [8, 32], strides = [1, 1]} : vector<8x96xf32> to vector<8x32xf32>
    %770 = vector.broadcast %720 : vector<1x32xf32> to vector<8x32xf32>
    %771 = arith.addf %769, %770 : vector<8x32xf32>
    %772 = arith.mulf %766, %771 : vector<8x32xf32>
    %773 = arith.addf %768, %772 : vector<8x32xf32>
    %774 = math.tanh %773 : vector<8x32xf32>
    %775 = arith.subf %749, %774 : vector<8x32xf32>
    %776 = arith.mulf %767, %775 : vector<8x32xf32>
    %777 = arith.addf %774, %776 : vector<8x32xf32>
    %778 = arith.truncf %777 : vector<8x32xf32> to vector<8x32xbf16>
    %cst_229 = arith.constant dense<0.000000e+00> : vector<8x96xf32>
    %779 = tpu.matmul %778, %722, %cst_229 {dimension_numbers = #tpu.dot_dimension_numbers<[1], [0], [0], [1], [0, 0, 1, 1], [], []>} : vector<8x32xbf16>, vector<32x96xbf16>, vector<8x96xf32> -> vector<8x96xf32>
    %780 = vector.broadcast %725 : vector<1x96xf32> to vector<8x96xf32>
    %781 = arith.addf %779, %780 : vector<8x96xf32>
    %c8_230 = arith.constant 8 : index
    %c0_231 = arith.constant 0 : index
    %782 = vector.load %arg7[%c8_230, %c0_231] : memref<64x96xf32, #tpu.memory_space<vmem>>, vector<8x96xf32>
    tpu.vector_store %arg7[%c8_230, %c0_231], %781 {strides = array<i32>} : memref<64x96xf32, #tpu.memory_space<vmem>>, vector<8x96xf32>,
    %c16_232 = arith.constant 16 : index
    %c0_233 = arith.constant 0 : index
    %783 = vector.load %arg8[%c16_232, %c0_233] : memref<64x96xf32, #tpu.memory_space<vmem>>, vector<8x96xf32>
    %784 = arith.truncf %777 : vector<8x32xf32> to vector<8x32xbf16>
    %cst_234 = arith.constant dense<0.000000e+00> : vector<8x96xf32>
    %785 = tpu.matmul %784, %717, %cst_234 {dimension_numbers = #tpu.dot_dimension_numbers<[1], [0], [0], [1], [0, 0, 1, 1], [], []>} : vector<8x32xbf16>, vector<32x96xbf16>, vector<8x96xf32> -> vector<8x96xf32>
    %786 = vector.extract_strided_slice %783 {offsets = [0, 0], sizes = [8, 64], strides = [1, 1]} : vector<8x96xf32> to vector<8x64xf32>
    %787 = vector.extract_strided_slice %785 {offsets = [0, 0], sizes = [8, 64], strides = [1, 1]} : vector<8x96xf32> to vector<8x64xf32>
    %788 = arith.addf %786, %787 : vector<8x64xf32>
    %789 = arith.negf %788 : vector<8x64xf32>
    %790 = math.exp %789 : vector<8x64xf32>
    %cst_235 = arith.constant 1.000000e+00 : f32
    %791 = vector.broadcast %cst_235 : f32 to vector<8x64xf32>
    %792 = arith.addf %791, %790 : vector<8x64xf32>
    %793 = arith.divf %791, %792 : vector<8x64xf32>
    %794 = vector.extract_strided_slice %793 {offsets = [0, 0], sizes = [8, 32], strides = [1, 1]} : vector<8x64xf32> to vector<8x32xf32>
    %795 = vector.extract_strided_slice %793 {offsets = [0, 32], sizes = [8, 32], strides = [1, 1]} : vector<8x64xf32> to vector<8x32xf32>
    %796 = vector.extract_strided_slice %783 {offsets = [0, 64], sizes = [8, 32], strides = [1, 1]} : vector<8x96xf32> to vector<8x32xf32>
    %797 = vector.extract_strided_slice %785 {offsets = [0, 64], sizes = [8, 32], strides = [1, 1]} : vector<8x96xf32> to vector<8x32xf32>
    %798 = vector.broadcast %720 : vector<1x32xf32> to vector<8x32xf32>
    %799 = arith.addf %797, %798 : vector<8x32xf32>
    %800 = arith.mulf %794, %799 : vector<8x32xf32>
    %801 = arith.addf %796, %800 : vector<8x32xf32>
    %802 = math.tanh %801 : vector<8x32xf32>
    %803 = arith.subf %777, %802 : vector<8x32xf32>
    %804 = arith.mulf %795, %803 : vector<8x32xf32>
    %805 = arith.addf %802, %804 : vector<8x32xf32>
    %806 = arith.truncf %805 : vector<8x32xf32> to vector<8x32xbf16>
    %cst_236 = arith.constant dense<0.000000e+00> : vector<8x96xf32>
    %807 = tpu.matmul %806, %722, %cst_236 {dimension_numbers = #tpu.dot_dimension_numbers<[1], [0], [0], [1], [0, 0, 1, 1], [], []>} : vector<8x32xbf16>, vector<32x96xbf16>, vector<8x96xf32> -> vector<8x96xf32>
    %808 = vector.broadcast %725 : vector<1x96xf32> to vector<8x96xf32>
    %809 = arith.addf %807, %808 : vector<8x96xf32>
    %c16_237 = arith.constant 16 : index
    %c0_238 = arith.constant 0 : index
    %810 = vector.load %arg7[%c16_237, %c0_238] : memref<64x96xf32, #tpu.memory_space<vmem>>, vector<8x96xf32>
    tpu.vector_store %arg7[%c16_237, %c0_238], %809 {strides = array<i32>} : memref<64x96xf32, #tpu.memory_space<vmem>>, vector<8x96xf32>,
    %c24_239 = arith.constant 24 : index
    %c0_240 = arith.constant 0 : index
    %811 = vector.load %arg8[%c24_239, %c0_240] : memref<64x96xf32, #tpu.memory_space<vmem>>, vector<8x96xf32>
    %812 = arith.truncf %805 : vector<8x32xf32> to vector<8x32xbf16>
    %cst_241 = arith.constant dense<0.000000e+00> : vector<8x96xf32>
    %813 = tpu.matmul %812, %717, %cst_241 {dimension_numbers = #tpu.dot_dimension_numbers<[1], [0], [0], [1], [0, 0, 1, 1], [], []>} : vector<8x32xbf16>, vector<32x96xbf16>, vector<8x96xf32> -> vector<8x96xf32>
    %814 = vector.extract_strided_slice %811 {offsets = [0, 0], sizes = [8, 64], strides = [1, 1]} : vector<8x96xf32> to vector<8x64xf32>
    %815 = vector.extract_strided_slice %813 {offsets = [0, 0], sizes = [8, 64], strides = [1, 1]} : vector<8x96xf32> to vector<8x64xf32>
    %816 = arith.addf %814, %815 : vector<8x64xf32>
    %817 = arith.negf %816 : vector<8x64xf32>
    %818 = math.exp %817 : vector<8x64xf32>
    %cst_242 = arith.constant 1.000000e+00 : f32
    %819 = vector.broadcast %cst_242 : f32 to vector<8x64xf32>
    %820 = arith.addf %819, %818 : vector<8x64xf32>
    %821 = arith.divf %819, %820 : vector<8x64xf32>
    %822 = vector.extract_strided_slice %821 {offsets = [0, 0], sizes = [8, 32], strides = [1, 1]} : vector<8x64xf32> to vector<8x32xf32>
    %823 = vector.extract_strided_slice %821 {offsets = [0, 32], sizes = [8, 32], strides = [1, 1]} : vector<8x64xf32> to vector<8x32xf32>
    %824 = vector.extract_strided_slice %811 {offsets = [0, 64], sizes = [8, 32], strides = [1, 1]} : vector<8x96xf32> to vector<8x32xf32>
    %825 = vector.extract_strided_slice %813 {offsets = [0, 64], sizes = [8, 32], strides = [1, 1]} : vector<8x96xf32> to vector<8x32xf32>
    %826 = vector.broadcast %720 : vector<1x32xf32> to vector<8x32xf32>
    %827 = arith.addf %825, %826 : vector<8x32xf32>
    %828 = arith.mulf %822, %827 : vector<8x32xf32>
    %829 = arith.addf %824, %828 : vector<8x32xf32>
    %830 = math.tanh %829 : vector<8x32xf32>
    %831 = arith.subf %805, %830 : vector<8x32xf32>
    %832 = arith.mulf %823, %831 : vector<8x32xf32>
    %833 = arith.addf %830, %832 : vector<8x32xf32>
    %834 = arith.truncf %833 : vector<8x32xf32> to vector<8x32xbf16>
    %cst_243 = arith.constant dense<0.000000e+00> : vector<8x96xf32>
    %835 = tpu.matmul %834, %722, %cst_243 {dimension_numbers = #tpu.dot_dimension_numbers<[1], [0], [0], [1], [0, 0, 1, 1], [], []>} : vector<8x32xbf16>, vector<32x96xbf16>, vector<8x96xf32> -> vector<8x96xf32>
    %836 = vector.broadcast %725 : vector<1x96xf32> to vector<8x96xf32>
    %837 = arith.addf %835, %836 : vector<8x96xf32>
    %c24_244 = arith.constant 24 : index
    %c0_245 = arith.constant 0 : index
    %838 = vector.load %arg7[%c24_244, %c0_245] : memref<64x96xf32, #tpu.memory_space<vmem>>, vector<8x96xf32>
    tpu.vector_store %arg7[%c24_244, %c0_245], %837 {strides = array<i32>} : memref<64x96xf32, #tpu.memory_space<vmem>>, vector<8x96xf32>,
    %c32_246 = arith.constant 32 : index
    %c0_247 = arith.constant 0 : index
    %839 = vector.load %arg8[%c32_246, %c0_247] : memref<64x96xf32, #tpu.memory_space<vmem>>, vector<8x96xf32>
    %840 = arith.truncf %833 : vector<8x32xf32> to vector<8x32xbf16>
    %cst_248 = arith.constant dense<0.000000e+00> : vector<8x96xf32>
    %841 = tpu.matmul %840, %717, %cst_248 {dimension_numbers = #tpu.dot_dimension_numbers<[1], [0], [0], [1], [0, 0, 1, 1], [], []>} : vector<8x32xbf16>, vector<32x96xbf16>, vector<8x96xf32> -> vector<8x96xf32>
    %842 = vector.extract_strided_slice %839 {offsets = [0, 0], sizes = [8, 64], strides = [1, 1]} : vector<8x96xf32> to vector<8x64xf32>
    %843 = vector.extract_strided_slice %841 {offsets = [0, 0], sizes = [8, 64], strides = [1, 1]} : vector<8x96xf32> to vector<8x64xf32>
    %844 = arith.addf %842, %843 : vector<8x64xf32>
    %845 = arith.negf %844 : vector<8x64xf32>
    %846 = math.exp %845 : vector<8x64xf32>
    %cst_249 = arith.constant 1.000000e+00 : f32
    %847 = vector.broadcast %cst_249 : f32 to vector<8x64xf32>
    %848 = arith.addf %847, %846 : vector<8x64xf32>
    %849 = arith.divf %847, %848 : vector<8x64xf32>
    %850 = vector.extract_strided_slice %849 {offsets = [0, 0], sizes = [8, 32], strides = [1, 1]} : vector<8x64xf32> to vector<8x32xf32>
    %851 = vector.extract_strided_slice %849 {offsets = [0, 32], sizes = [8, 32], strides = [1, 1]} : vector<8x64xf32> to vector<8x32xf32>
    %852 = vector.extract_strided_slice %839 {offsets = [0, 64], sizes = [8, 32], strides = [1, 1]} : vector<8x96xf32> to vector<8x32xf32>
    %853 = vector.extract_strided_slice %841 {offsets = [0, 64], sizes = [8, 32], strides = [1, 1]} : vector<8x96xf32> to vector<8x32xf32>
    %854 = vector.broadcast %720 : vector<1x32xf32> to vector<8x32xf32>
    %855 = arith.addf %853, %854 : vector<8x32xf32>
    %856 = arith.mulf %850, %855 : vector<8x32xf32>
    %857 = arith.addf %852, %856 : vector<8x32xf32>
    %858 = math.tanh %857 : vector<8x32xf32>
    %859 = arith.subf %833, %858 : vector<8x32xf32>
    %860 = arith.mulf %851, %859 : vector<8x32xf32>
    %861 = arith.addf %858, %860 : vector<8x32xf32>
    %862 = arith.truncf %861 : vector<8x32xf32> to vector<8x32xbf16>
    %cst_250 = arith.constant dense<0.000000e+00> : vector<8x96xf32>
    %863 = tpu.matmul %862, %722, %cst_250 {dimension_numbers = #tpu.dot_dimension_numbers<[1], [0], [0], [1], [0, 0, 1, 1], [], []>} : vector<8x32xbf16>, vector<32x96xbf16>, vector<8x96xf32> -> vector<8x96xf32>
    %864 = vector.broadcast %725 : vector<1x96xf32> to vector<8x96xf32>
    %865 = arith.addf %863, %864 : vector<8x96xf32>
    %c32_251 = arith.constant 32 : index
    %c0_252 = arith.constant 0 : index
    %866 = vector.load %arg7[%c32_251, %c0_252] : memref<64x96xf32, #tpu.memory_space<vmem>>, vector<8x96xf32>
    tpu.vector_store %arg7[%c32_251, %c0_252], %865 {strides = array<i32>} : memref<64x96xf32, #tpu.memory_space<vmem>>, vector<8x96xf32>,
    %c40_253 = arith.constant 40 : index
    %c0_254 = arith.constant 0 : index
    %867 = vector.load %arg8[%c40_253, %c0_254] : memref<64x96xf32, #tpu.memory_space<vmem>>, vector<8x96xf32>
    %868 = arith.truncf %861 : vector<8x32xf32> to vector<8x32xbf16>
    %cst_255 = arith.constant dense<0.000000e+00> : vector<8x96xf32>
    %869 = tpu.matmul %868, %717, %cst_255 {dimension_numbers = #tpu.dot_dimension_numbers<[1], [0], [0], [1], [0, 0, 1, 1], [], []>} : vector<8x32xbf16>, vector<32x96xbf16>, vector<8x96xf32> -> vector<8x96xf32>
    %870 = vector.extract_strided_slice %867 {offsets = [0, 0], sizes = [8, 64], strides = [1, 1]} : vector<8x96xf32> to vector<8x64xf32>
    %871 = vector.extract_strided_slice %869 {offsets = [0, 0], sizes = [8, 64], strides = [1, 1]} : vector<8x96xf32> to vector<8x64xf32>
    %872 = arith.addf %870, %871 : vector<8x64xf32>
    %873 = arith.negf %872 : vector<8x64xf32>
    %874 = math.exp %873 : vector<8x64xf32>
    %cst_256 = arith.constant 1.000000e+00 : f32
    %875 = vector.broadcast %cst_256 : f32 to vector<8x64xf32>
    %876 = arith.addf %875, %874 : vector<8x64xf32>
    %877 = arith.divf %875, %876 : vector<8x64xf32>
    %878 = vector.extract_strided_slice %877 {offsets = [0, 0], sizes = [8, 32], strides = [1, 1]} : vector<8x64xf32> to vector<8x32xf32>
    %879 = vector.extract_strided_slice %877 {offsets = [0, 32], sizes = [8, 32], strides = [1, 1]} : vector<8x64xf32> to vector<8x32xf32>
    %880 = vector.extract_strided_slice %867 {offsets = [0, 64], sizes = [8, 32], strides = [1, 1]} : vector<8x96xf32> to vector<8x32xf32>
    %881 = vector.extract_strided_slice %869 {offsets = [0, 64], sizes = [8, 32], strides = [1, 1]} : vector<8x96xf32> to vector<8x32xf32>
    %882 = vector.broadcast %720 : vector<1x32xf32> to vector<8x32xf32>
    %883 = arith.addf %881, %882 : vector<8x32xf32>
    %884 = arith.mulf %878, %883 : vector<8x32xf32>
    %885 = arith.addf %880, %884 : vector<8x32xf32>
    %886 = math.tanh %885 : vector<8x32xf32>
    %887 = arith.subf %861, %886 : vector<8x32xf32>
    %888 = arith.mulf %879, %887 : vector<8x32xf32>
    %889 = arith.addf %886, %888 : vector<8x32xf32>
    %890 = arith.truncf %889 : vector<8x32xf32> to vector<8x32xbf16>
    %cst_257 = arith.constant dense<0.000000e+00> : vector<8x96xf32>
    %891 = tpu.matmul %890, %722, %cst_257 {dimension_numbers = #tpu.dot_dimension_numbers<[1], [0], [0], [1], [0, 0, 1, 1], [], []>} : vector<8x32xbf16>, vector<32x96xbf16>, vector<8x96xf32> -> vector<8x96xf32>
    %892 = vector.broadcast %725 : vector<1x96xf32> to vector<8x96xf32>
    %893 = arith.addf %891, %892 : vector<8x96xf32>
    %c40_258 = arith.constant 40 : index
    %c0_259 = arith.constant 0 : index
    %894 = vector.load %arg7[%c40_258, %c0_259] : memref<64x96xf32, #tpu.memory_space<vmem>>, vector<8x96xf32>
    tpu.vector_store %arg7[%c40_258, %c0_259], %893 {strides = array<i32>} : memref<64x96xf32, #tpu.memory_space<vmem>>, vector<8x96xf32>,
    %c48_260 = arith.constant 48 : index
    %c0_261 = arith.constant 0 : index
    %895 = vector.load %arg8[%c48_260, %c0_261] : memref<64x96xf32, #tpu.memory_space<vmem>>, vector<8x96xf32>
    %896 = arith.truncf %889 : vector<8x32xf32> to vector<8x32xbf16>
    %cst_262 = arith.constant dense<0.000000e+00> : vector<8x96xf32>
    %897 = tpu.matmul %896, %717, %cst_262 {dimension_numbers = #tpu.dot_dimension_numbers<[1], [0], [0], [1], [0, 0, 1, 1], [], []>} : vector<8x32xbf16>, vector<32x96xbf16>, vector<8x96xf32> -> vector<8x96xf32>
    %898 = vector.extract_strided_slice %895 {offsets = [0, 0], sizes = [8, 64], strides = [1, 1]} : vector<8x96xf32> to vector<8x64xf32>
    %899 = vector.extract_strided_slice %897 {offsets = [0, 0], sizes = [8, 64], strides = [1, 1]} : vector<8x96xf32> to vector<8x64xf32>
    %900 = arith.addf %898, %899 : vector<8x64xf32>
    %901 = arith.negf %900 : vector<8x64xf32>
    %902 = math.exp %901 : vector<8x64xf32>
    %cst_263 = arith.constant 1.000000e+00 : f32
    %903 = vector.broadcast %cst_263 : f32 to vector<8x64xf32>
    %904 = arith.addf %903, %902 : vector<8x64xf32>
    %905 = arith.divf %903, %904 : vector<8x64xf32>
    %906 = vector.extract_strided_slice %905 {offsets = [0, 0], sizes = [8, 32], strides = [1, 1]} : vector<8x64xf32> to vector<8x32xf32>
    %907 = vector.extract_strided_slice %905 {offsets = [0, 32], sizes = [8, 32], strides = [1, 1]} : vector<8x64xf32> to vector<8x32xf32>
    %908 = vector.extract_strided_slice %895 {offsets = [0, 64], sizes = [8, 32], strides = [1, 1]} : vector<8x96xf32> to vector<8x32xf32>
    %909 = vector.extract_strided_slice %897 {offsets = [0, 64], sizes = [8, 32], strides = [1, 1]} : vector<8x96xf32> to vector<8x32xf32>
    %910 = vector.broadcast %720 : vector<1x32xf32> to vector<8x32xf32>
    %911 = arith.addf %909, %910 : vector<8x32xf32>
    %912 = arith.mulf %906, %911 : vector<8x32xf32>
    %913 = arith.addf %908, %912 : vector<8x32xf32>
    %914 = math.tanh %913 : vector<8x32xf32>
    %915 = arith.subf %889, %914 : vector<8x32xf32>
    %916 = arith.mulf %907, %915 : vector<8x32xf32>
    %917 = arith.addf %914, %916 : vector<8x32xf32>
    %918 = arith.truncf %917 : vector<8x32xf32> to vector<8x32xbf16>
    %cst_264 = arith.constant dense<0.000000e+00> : vector<8x96xf32>
    %919 = tpu.matmul %918, %722, %cst_264 {dimension_numbers = #tpu.dot_dimension_numbers<[1], [0], [0], [1], [0, 0, 1, 1], [], []>} : vector<8x32xbf16>, vector<32x96xbf16>, vector<8x96xf32> -> vector<8x96xf32>
    %920 = vector.broadcast %725 : vector<1x96xf32> to vector<8x96xf32>
    %921 = arith.addf %919, %920 : vector<8x96xf32>
    %c48_265 = arith.constant 48 : index
    %c0_266 = arith.constant 0 : index
    %922 = vector.load %arg7[%c48_265, %c0_266] : memref<64x96xf32, #tpu.memory_space<vmem>>, vector<8x96xf32>
    tpu.vector_store %arg7[%c48_265, %c0_266], %921 {strides = array<i32>} : memref<64x96xf32, #tpu.memory_space<vmem>>, vector<8x96xf32>,
    %c56_267 = arith.constant 56 : index
    %c0_268 = arith.constant 0 : index
    %923 = vector.load %arg8[%c56_267, %c0_268] : memref<64x96xf32, #tpu.memory_space<vmem>>, vector<8x96xf32>
    %924 = arith.truncf %917 : vector<8x32xf32> to vector<8x32xbf16>
    %cst_269 = arith.constant dense<0.000000e+00> : vector<8x96xf32>
    %925 = tpu.matmul %924, %717, %cst_269 {dimension_numbers = #tpu.dot_dimension_numbers<[1], [0], [0], [1], [0, 0, 1, 1], [], []>} : vector<8x32xbf16>, vector<32x96xbf16>, vector<8x96xf32> -> vector<8x96xf32>
    %926 = vector.extract_strided_slice %923 {offsets = [0, 0], sizes = [8, 64], strides = [1, 1]} : vector<8x96xf32> to vector<8x64xf32>
    %927 = vector.extract_strided_slice %925 {offsets = [0, 0], sizes = [8, 64], strides = [1, 1]} : vector<8x96xf32> to vector<8x64xf32>
    %928 = arith.addf %926, %927 : vector<8x64xf32>
    %929 = arith.negf %928 : vector<8x64xf32>
    %930 = math.exp %929 : vector<8x64xf32>
    %cst_270 = arith.constant 1.000000e+00 : f32
    %931 = vector.broadcast %cst_270 : f32 to vector<8x64xf32>
    %932 = arith.addf %931, %930 : vector<8x64xf32>
    %933 = arith.divf %931, %932 : vector<8x64xf32>
    %934 = vector.extract_strided_slice %933 {offsets = [0, 0], sizes = [8, 32], strides = [1, 1]} : vector<8x64xf32> to vector<8x32xf32>
    %935 = vector.extract_strided_slice %933 {offsets = [0, 32], sizes = [8, 32], strides = [1, 1]} : vector<8x64xf32> to vector<8x32xf32>
    %936 = vector.extract_strided_slice %923 {offsets = [0, 64], sizes = [8, 32], strides = [1, 1]} : vector<8x96xf32> to vector<8x32xf32>
    %937 = vector.extract_strided_slice %925 {offsets = [0, 64], sizes = [8, 32], strides = [1, 1]} : vector<8x96xf32> to vector<8x32xf32>
    %938 = vector.broadcast %720 : vector<1x32xf32> to vector<8x32xf32>
    %939 = arith.addf %937, %938 : vector<8x32xf32>
    %940 = arith.mulf %934, %939 : vector<8x32xf32>
    %941 = arith.addf %936, %940 : vector<8x32xf32>
    %942 = math.tanh %941 : vector<8x32xf32>
    %943 = arith.subf %917, %942 : vector<8x32xf32>
    %944 = arith.mulf %935, %943 : vector<8x32xf32>
    %945 = arith.addf %942, %944 : vector<8x32xf32>
    %946 = arith.truncf %945 : vector<8x32xf32> to vector<8x32xbf16>
    %cst_271 = arith.constant dense<0.000000e+00> : vector<8x96xf32>
    %947 = tpu.matmul %946, %722, %cst_271 {dimension_numbers = #tpu.dot_dimension_numbers<[1], [0], [0], [1], [0, 0, 1, 1], [], []>} : vector<8x32xbf16>, vector<32x96xbf16>, vector<8x96xf32> -> vector<8x96xf32>
    %948 = vector.broadcast %725 : vector<1x96xf32> to vector<8x96xf32>
    %949 = arith.addf %947, %948 : vector<8x96xf32>
    %c56_272 = arith.constant 56 : index
    %c0_273 = arith.constant 0 : index
    %950 = vector.load %arg7[%c56_272, %c0_273] : memref<64x96xf32, #tpu.memory_space<vmem>>, vector<8x96xf32>
    tpu.vector_store %arg7[%c56_272, %c0_273], %949 {strides = array<i32>} : memref<64x96xf32, #tpu.memory_space<vmem>>, vector<8x96xf32>,
    %c4_274 = arith.constant 4 : index
    %c0_275 = arith.constant 0 : index
    %c0_276 = arith.constant 0 : index
    %951 = vector.load %arg2[%c4_274, %c0_275, %c0_276] : memref<5x32x96xbf16, #tpu.memory_space<vmem>>, vector<1x32x96xbf16>
    %952 = vector.shape_cast %951 : vector<1x32x96xbf16> to vector<32x96xbf16>
    %c4_277 = arith.constant 4 : index
    %c0_278 = arith.constant 0 : index
    %c0_279 = arith.constant 0 : index
    %953 = vector.load %arg3[%c4_277, %c0_278, %c0_279] : memref<5x2x96xf32, #tpu.memory_space<vmem>>, vector<1x2x96xf32>
    %954 = vector.shape_cast %953 : vector<1x2x96xf32> to vector<2x96xf32>
    %955 = vector.extract_strided_slice %954 {offsets = [1, 0], sizes = [1, 32], strides = [1, 1]} : vector<2x96xf32> to vector<1x32xf32>
    %cst_280 = arith.constant 0.000000e+00 : f32
    %956 = vector.broadcast %cst_280 : f32 to vector<8x32xf32>
    %c0_281 = arith.constant 0 : index
    %c0_282 = arith.constant 0 : index
    %957 = vector.load %arg7[%c0_281, %c0_282] : memref<64x96xf32, #tpu.memory_space<vmem>>, vector<8x96xf32>
    %958 = arith.truncf %956 : vector<8x32xf32> to vector<8x32xbf16>
    %cst_283 = arith.constant dense<0.000000e+00> : vector<8x96xf32>
    %959 = tpu.matmul %958, %952, %cst_283 {dimension_numbers = #tpu.dot_dimension_numbers<[1], [0], [0], [1], [0, 0, 1, 1], [], []>} : vector<8x32xbf16>, vector<32x96xbf16>, vector<8x96xf32> -> vector<8x96xf32>
    %960 = vector.extract_strided_slice %957 {offsets = [0, 0], sizes = [8, 64], strides = [1, 1]} : vector<8x96xf32> to vector<8x64xf32>
    %961 = vector.extract_strided_slice %959 {offsets = [0, 0], sizes = [8, 64], strides = [1, 1]} : vector<8x96xf32> to vector<8x64xf32>
    %962 = arith.addf %960, %961 : vector<8x64xf32>
    %963 = arith.negf %962 : vector<8x64xf32>
    %964 = math.exp %963 : vector<8x64xf32>
    %cst_284 = arith.constant 1.000000e+00 : f32
    %965 = vector.broadcast %cst_284 : f32 to vector<8x64xf32>
    %966 = arith.addf %965, %964 : vector<8x64xf32>
    %967 = arith.divf %965, %966 : vector<8x64xf32>
    %968 = vector.extract_strided_slice %967 {offsets = [0, 0], sizes = [8, 32], strides = [1, 1]} : vector<8x64xf32> to vector<8x32xf32>
    %969 = vector.extract_strided_slice %967 {offsets = [0, 32], sizes = [8, 32], strides = [1, 1]} : vector<8x64xf32> to vector<8x32xf32>
    %970 = vector.extract_strided_slice %957 {offsets = [0, 64], sizes = [8, 32], strides = [1, 1]} : vector<8x96xf32> to vector<8x32xf32>
    %971 = vector.extract_strided_slice %959 {offsets = [0, 64], sizes = [8, 32], strides = [1, 1]} : vector<8x96xf32> to vector<8x32xf32>
    %972 = vector.broadcast %955 : vector<1x32xf32> to vector<8x32xf32>
    %973 = arith.addf %971, %972 : vector<8x32xf32>
    %974 = arith.mulf %968, %973 : vector<8x32xf32>
    %975 = arith.addf %970, %974 : vector<8x32xf32>
    %976 = math.tanh %975 : vector<8x32xf32>
    %977 = arith.subf %956, %976 : vector<8x32xf32>
    %978 = arith.mulf %969, %977 : vector<8x32xf32>
    %979 = arith.addf %976, %978 : vector<8x32xf32>
    %c8_285 = arith.constant 8 : index
    %c0_286 = arith.constant 0 : index
    %980 = vector.load %arg7[%c8_285, %c0_286] : memref<64x96xf32, #tpu.memory_space<vmem>>, vector<8x96xf32>
    %981 = arith.truncf %979 : vector<8x32xf32> to vector<8x32xbf16>
    %cst_287 = arith.constant dense<0.000000e+00> : vector<8x96xf32>
    %982 = tpu.matmul %981, %952, %cst_287 {dimension_numbers = #tpu.dot_dimension_numbers<[1], [0], [0], [1], [0, 0, 1, 1], [], []>} : vector<8x32xbf16>, vector<32x96xbf16>, vector<8x96xf32> -> vector<8x96xf32>
    %983 = vector.extract_strided_slice %980 {offsets = [0, 0], sizes = [8, 64], strides = [1, 1]} : vector<8x96xf32> to vector<8x64xf32>
    %984 = vector.extract_strided_slice %982 {offsets = [0, 0], sizes = [8, 64], strides = [1, 1]} : vector<8x96xf32> to vector<8x64xf32>
    %985 = arith.addf %983, %984 : vector<8x64xf32>
    %986 = arith.negf %985 : vector<8x64xf32>
    %987 = math.exp %986 : vector<8x64xf32>
    %cst_288 = arith.constant 1.000000e+00 : f32
    %988 = vector.broadcast %cst_288 : f32 to vector<8x64xf32>
    %989 = arith.addf %988, %987 : vector<8x64xf32>
    %990 = arith.divf %988, %989 : vector<8x64xf32>
    %991 = vector.extract_strided_slice %990 {offsets = [0, 0], sizes = [8, 32], strides = [1, 1]} : vector<8x64xf32> to vector<8x32xf32>
    %992 = vector.extract_strided_slice %990 {offsets = [0, 32], sizes = [8, 32], strides = [1, 1]} : vector<8x64xf32> to vector<8x32xf32>
    %993 = vector.extract_strided_slice %980 {offsets = [0, 64], sizes = [8, 32], strides = [1, 1]} : vector<8x96xf32> to vector<8x32xf32>
    %994 = vector.extract_strided_slice %982 {offsets = [0, 64], sizes = [8, 32], strides = [1, 1]} : vector<8x96xf32> to vector<8x32xf32>
    %995 = vector.broadcast %955 : vector<1x32xf32> to vector<8x32xf32>
    %996 = arith.addf %994, %995 : vector<8x32xf32>
    %997 = arith.mulf %991, %996 : vector<8x32xf32>
    %998 = arith.addf %993, %997 : vector<8x32xf32>
    %999 = math.tanh %998 : vector<8x32xf32>
    %1000 = arith.subf %979, %999 : vector<8x32xf32>
    %1001 = arith.mulf %992, %1000 : vector<8x32xf32>
    %1002 = arith.addf %999, %1001 : vector<8x32xf32>
    %c16_289 = arith.constant 16 : index
    %c0_290 = arith.constant 0 : index
    %1003 = vector.load %arg7[%c16_289, %c0_290] : memref<64x96xf32, #tpu.memory_space<vmem>>, vector<8x96xf32>
    %1004 = arith.truncf %1002 : vector<8x32xf32> to vector<8x32xbf16>
    %cst_291 = arith.constant dense<0.000000e+00> : vector<8x96xf32>
    %1005 = tpu.matmul %1004, %952, %cst_291 {dimension_numbers = #tpu.dot_dimension_numbers<[1], [0], [0], [1], [0, 0, 1, 1], [], []>} : vector<8x32xbf16>, vector<32x96xbf16>, vector<8x96xf32> -> vector<8x96xf32>
    %1006 = vector.extract_strided_slice %1003 {offsets = [0, 0], sizes = [8, 64], strides = [1, 1]} : vector<8x96xf32> to vector<8x64xf32>
    %1007 = vector.extract_strided_slice %1005 {offsets = [0, 0], sizes = [8, 64], strides = [1, 1]} : vector<8x96xf32> to vector<8x64xf32>
    %1008 = arith.addf %1006, %1007 : vector<8x64xf32>
    %1009 = arith.negf %1008 : vector<8x64xf32>
    %1010 = math.exp %1009 : vector<8x64xf32>
    %cst_292 = arith.constant 1.000000e+00 : f32
    %1011 = vector.broadcast %cst_292 : f32 to vector<8x64xf32>
    %1012 = arith.addf %1011, %1010 : vector<8x64xf32>
    %1013 = arith.divf %1011, %1012 : vector<8x64xf32>
    %1014 = vector.extract_strided_slice %1013 {offsets = [0, 0], sizes = [8, 32], strides = [1, 1]} : vector<8x64xf32> to vector<8x32xf32>
    %1015 = vector.extract_strided_slice %1013 {offsets = [0, 32], sizes = [8, 32], strides = [1, 1]} : vector<8x64xf32> to vector<8x32xf32>
    %1016 = vector.extract_strided_slice %1003 {offsets = [0, 64], sizes = [8, 32], strides = [1, 1]} : vector<8x96xf32> to vector<8x32xf32>
    %1017 = vector.extract_strided_slice %1005 {offsets = [0, 64], sizes = [8, 32], strides = [1, 1]} : vector<8x96xf32> to vector<8x32xf32>
    %1018 = vector.broadcast %955 : vector<1x32xf32> to vector<8x32xf32>
    %1019 = arith.addf %1017, %1018 : vector<8x32xf32>
    %1020 = arith.mulf %1014, %1019 : vector<8x32xf32>
    %1021 = arith.addf %1016, %1020 : vector<8x32xf32>
    %1022 = math.tanh %1021 : vector<8x32xf32>
    %1023 = arith.subf %1002, %1022 : vector<8x32xf32>
    %1024 = arith.mulf %1015, %1023 : vector<8x32xf32>
    %1025 = arith.addf %1022, %1024 : vector<8x32xf32>
    %c24_293 = arith.constant 24 : index
    %c0_294 = arith.constant 0 : index
    %1026 = vector.load %arg7[%c24_293, %c0_294] : memref<64x96xf32, #tpu.memory_space<vmem>>, vector<8x96xf32>
    %1027 = arith.truncf %1025 : vector<8x32xf32> to vector<8x32xbf16>
    %cst_295 = arith.constant dense<0.000000e+00> : vector<8x96xf32>
    %1028 = tpu.matmul %1027, %952, %cst_295 {dimension_numbers = #tpu.dot_dimension_numbers<[1], [0], [0], [1], [0, 0, 1, 1], [], []>} : vector<8x32xbf16>, vector<32x96xbf16>, vector<8x96xf32> -> vector<8x96xf32>
    %1029 = vector.extract_strided_slice %1026 {offsets = [0, 0], sizes = [8, 64], strides = [1, 1]} : vector<8x96xf32> to vector<8x64xf32>
    %1030 = vector.extract_strided_slice %1028 {offsets = [0, 0], sizes = [8, 64], strides = [1, 1]} : vector<8x96xf32> to vector<8x64xf32>
    %1031 = arith.addf %1029, %1030 : vector<8x64xf32>
    %1032 = arith.negf %1031 : vector<8x64xf32>
    %1033 = math.exp %1032 : vector<8x64xf32>
    %cst_296 = arith.constant 1.000000e+00 : f32
    %1034 = vector.broadcast %cst_296 : f32 to vector<8x64xf32>
    %1035 = arith.addf %1034, %1033 : vector<8x64xf32>
    %1036 = arith.divf %1034, %1035 : vector<8x64xf32>
    %1037 = vector.extract_strided_slice %1036 {offsets = [0, 0], sizes = [8, 32], strides = [1, 1]} : vector<8x64xf32> to vector<8x32xf32>
    %1038 = vector.extract_strided_slice %1036 {offsets = [0, 32], sizes = [8, 32], strides = [1, 1]} : vector<8x64xf32> to vector<8x32xf32>
    %1039 = vector.extract_strided_slice %1026 {offsets = [0, 64], sizes = [8, 32], strides = [1, 1]} : vector<8x96xf32> to vector<8x32xf32>
    %1040 = vector.extract_strided_slice %1028 {offsets = [0, 64], sizes = [8, 32], strides = [1, 1]} : vector<8x96xf32> to vector<8x32xf32>
    %1041 = vector.broadcast %955 : vector<1x32xf32> to vector<8x32xf32>
    %1042 = arith.addf %1040, %1041 : vector<8x32xf32>
    %1043 = arith.mulf %1037, %1042 : vector<8x32xf32>
    %1044 = arith.addf %1039, %1043 : vector<8x32xf32>
    %1045 = math.tanh %1044 : vector<8x32xf32>
    %1046 = arith.subf %1025, %1045 : vector<8x32xf32>
    %1047 = arith.mulf %1038, %1046 : vector<8x32xf32>
    %1048 = arith.addf %1045, %1047 : vector<8x32xf32>
    %c32_297 = arith.constant 32 : index
    %c0_298 = arith.constant 0 : index
    %1049 = vector.load %arg7[%c32_297, %c0_298] : memref<64x96xf32, #tpu.memory_space<vmem>>, vector<8x96xf32>
    %1050 = arith.truncf %1048 : vector<8x32xf32> to vector<8x32xbf16>
    %cst_299 = arith.constant dense<0.000000e+00> : vector<8x96xf32>
    %1051 = tpu.matmul %1050, %952, %cst_299 {dimension_numbers = #tpu.dot_dimension_numbers<[1], [0], [0], [1], [0, 0, 1, 1], [], []>} : vector<8x32xbf16>, vector<32x96xbf16>, vector<8x96xf32> -> vector<8x96xf32>
    %1052 = vector.extract_strided_slice %1049 {offsets = [0, 0], sizes = [8, 64], strides = [1, 1]} : vector<8x96xf32> to vector<8x64xf32>
    %1053 = vector.extract_strided_slice %1051 {offsets = [0, 0], sizes = [8, 64], strides = [1, 1]} : vector<8x96xf32> to vector<8x64xf32>
    %1054 = arith.addf %1052, %1053 : vector<8x64xf32>
    %1055 = arith.negf %1054 : vector<8x64xf32>
    %1056 = math.exp %1055 : vector<8x64xf32>
    %cst_300 = arith.constant 1.000000e+00 : f32
    %1057 = vector.broadcast %cst_300 : f32 to vector<8x64xf32>
    %1058 = arith.addf %1057, %1056 : vector<8x64xf32>
    %1059 = arith.divf %1057, %1058 : vector<8x64xf32>
    %1060 = vector.extract_strided_slice %1059 {offsets = [0, 0], sizes = [8, 32], strides = [1, 1]} : vector<8x64xf32> to vector<8x32xf32>
    %1061 = vector.extract_strided_slice %1059 {offsets = [0, 32], sizes = [8, 32], strides = [1, 1]} : vector<8x64xf32> to vector<8x32xf32>
    %1062 = vector.extract_strided_slice %1049 {offsets = [0, 64], sizes = [8, 32], strides = [1, 1]} : vector<8x96xf32> to vector<8x32xf32>
    %1063 = vector.extract_strided_slice %1051 {offsets = [0, 64], sizes = [8, 32], strides = [1, 1]} : vector<8x96xf32> to vector<8x32xf32>
    %1064 = vector.broadcast %955 : vector<1x32xf32> to vector<8x32xf32>
    %1065 = arith.addf %1063, %1064 : vector<8x32xf32>
    %1066 = arith.mulf %1060, %1065 : vector<8x32xf32>
    %1067 = arith.addf %1062, %1066 : vector<8x32xf32>
    %1068 = math.tanh %1067 : vector<8x32xf32>
    %1069 = arith.subf %1048, %1068 : vector<8x32xf32>
    %1070 = arith.mulf %1061, %1069 : vector<8x32xf32>
    %1071 = arith.addf %1068, %1070 : vector<8x32xf32>
    %c40_301 = arith.constant 40 : index
    %c0_302 = arith.constant 0 : index
    %1072 = vector.load %arg7[%c40_301, %c0_302] : memref<64x96xf32, #tpu.memory_space<vmem>>, vector<8x96xf32>
    %1073 = arith.truncf %1071 : vector<8x32xf32> to vector<8x32xbf16>
    %cst_303 = arith.constant dense<0.000000e+00> : vector<8x96xf32>
    %1074 = tpu.matmul %1073, %952, %cst_303 {dimension_numbers = #tpu.dot_dimension_numbers<[1], [0], [0], [1], [0, 0, 1, 1], [], []>} : vector<8x32xbf16>, vector<32x96xbf16>, vector<8x96xf32> -> vector<8x96xf32>
    %1075 = vector.extract_strided_slice %1072 {offsets = [0, 0], sizes = [8, 64], strides = [1, 1]} : vector<8x96xf32> to vector<8x64xf32>
    %1076 = vector.extract_strided_slice %1074 {offsets = [0, 0], sizes = [8, 64], strides = [1, 1]} : vector<8x96xf32> to vector<8x64xf32>
    %1077 = arith.addf %1075, %1076 : vector<8x64xf32>
    %1078 = arith.negf %1077 : vector<8x64xf32>
    %1079 = math.exp %1078 : vector<8x64xf32>
    %cst_304 = arith.constant 1.000000e+00 : f32
    %1080 = vector.broadcast %cst_304 : f32 to vector<8x64xf32>
    %1081 = arith.addf %1080, %1079 : vector<8x64xf32>
    %1082 = arith.divf %1080, %1081 : vector<8x64xf32>
    %1083 = vector.extract_strided_slice %1082 {offsets = [0, 0], sizes = [8, 32], strides = [1, 1]} : vector<8x64xf32> to vector<8x32xf32>
    %1084 = vector.extract_strided_slice %1082 {offsets = [0, 32], sizes = [8, 32], strides = [1, 1]} : vector<8x64xf32> to vector<8x32xf32>
    %1085 = vector.extract_strided_slice %1072 {offsets = [0, 64], sizes = [8, 32], strides = [1, 1]} : vector<8x96xf32> to vector<8x32xf32>
    %1086 = vector.extract_strided_slice %1074 {offsets = [0, 64], sizes = [8, 32], strides = [1, 1]} : vector<8x96xf32> to vector<8x32xf32>
    %1087 = vector.broadcast %955 : vector<1x32xf32> to vector<8x32xf32>
    %1088 = arith.addf %1086, %1087 : vector<8x32xf32>
    %1089 = arith.mulf %1083, %1088 : vector<8x32xf32>
    %1090 = arith.addf %1085, %1089 : vector<8x32xf32>
    %1091 = math.tanh %1090 : vector<8x32xf32>
    %1092 = arith.subf %1071, %1091 : vector<8x32xf32>
    %1093 = arith.mulf %1084, %1092 : vector<8x32xf32>
    %1094 = arith.addf %1091, %1093 : vector<8x32xf32>
    %c48_305 = arith.constant 48 : index
    %c0_306 = arith.constant 0 : index
    %1095 = vector.load %arg7[%c48_305, %c0_306] : memref<64x96xf32, #tpu.memory_space<vmem>>, vector<8x96xf32>
    %1096 = arith.truncf %1094 : vector<8x32xf32> to vector<8x32xbf16>
    %cst_307 = arith.constant dense<0.000000e+00> : vector<8x96xf32>
    %1097 = tpu.matmul %1096, %952, %cst_307 {dimension_numbers = #tpu.dot_dimension_numbers<[1], [0], [0], [1], [0, 0, 1, 1], [], []>} : vector<8x32xbf16>, vector<32x96xbf16>, vector<8x96xf32> -> vector<8x96xf32>
    %1098 = vector.extract_strided_slice %1095 {offsets = [0, 0], sizes = [8, 64], strides = [1, 1]} : vector<8x96xf32> to vector<8x64xf32>
    %1099 = vector.extract_strided_slice %1097 {offsets = [0, 0], sizes = [8, 64], strides = [1, 1]} : vector<8x96xf32> to vector<8x64xf32>
    %1100 = arith.addf %1098, %1099 : vector<8x64xf32>
    %1101 = arith.negf %1100 : vector<8x64xf32>
    %1102 = math.exp %1101 : vector<8x64xf32>
    %cst_308 = arith.constant 1.000000e+00 : f32
    %1103 = vector.broadcast %cst_308 : f32 to vector<8x64xf32>
    %1104 = arith.addf %1103, %1102 : vector<8x64xf32>
    %1105 = arith.divf %1103, %1104 : vector<8x64xf32>
    %1106 = vector.extract_strided_slice %1105 {offsets = [0, 0], sizes = [8, 32], strides = [1, 1]} : vector<8x64xf32> to vector<8x32xf32>
    %1107 = vector.extract_strided_slice %1105 {offsets = [0, 32], sizes = [8, 32], strides = [1, 1]} : vector<8x64xf32> to vector<8x32xf32>
    %1108 = vector.extract_strided_slice %1095 {offsets = [0, 64], sizes = [8, 32], strides = [1, 1]} : vector<8x96xf32> to vector<8x32xf32>
    %1109 = vector.extract_strided_slice %1097 {offsets = [0, 64], sizes = [8, 32], strides = [1, 1]} : vector<8x96xf32> to vector<8x32xf32>
    %1110 = vector.broadcast %955 : vector<1x32xf32> to vector<8x32xf32>
    %1111 = arith.addf %1109, %1110 : vector<8x32xf32>
    %1112 = arith.mulf %1106, %1111 : vector<8x32xf32>
    %1113 = arith.addf %1108, %1112 : vector<8x32xf32>
    %1114 = math.tanh %1113 : vector<8x32xf32>
    %1115 = arith.subf %1094, %1114 : vector<8x32xf32>
    %1116 = arith.mulf %1107, %1115 : vector<8x32xf32>
    %1117 = arith.addf %1114, %1116 : vector<8x32xf32>
    %c56_309 = arith.constant 56 : index
    %c0_310 = arith.constant 0 : index
    %1118 = vector.load %arg7[%c56_309, %c0_310] : memref<64x96xf32, #tpu.memory_space<vmem>>, vector<8x96xf32>
    %1119 = arith.truncf %1117 : vector<8x32xf32> to vector<8x32xbf16>
    %cst_311 = arith.constant dense<0.000000e+00> : vector<8x96xf32>
    %1120 = tpu.matmul %1119, %952, %cst_311 {dimension_numbers = #tpu.dot_dimension_numbers<[1], [0], [0], [1], [0, 0, 1, 1], [], []>} : vector<8x32xbf16>, vector<32x96xbf16>, vector<8x96xf32> -> vector<8x96xf32>
    %1121 = vector.extract_strided_slice %1118 {offsets = [0, 0], sizes = [8, 64], strides = [1, 1]} : vector<8x96xf32> to vector<8x64xf32>
    %1122 = vector.extract_strided_slice %1120 {offsets = [0, 0], sizes = [8, 64], strides = [1, 1]} : vector<8x96xf32> to vector<8x64xf32>
    %1123 = arith.addf %1121, %1122 : vector<8x64xf32>
    %1124 = arith.negf %1123 : vector<8x64xf32>
    %1125 = math.exp %1124 : vector<8x64xf32>
    %cst_312 = arith.constant 1.000000e+00 : f32
    %1126 = vector.broadcast %cst_312 : f32 to vector<8x64xf32>
    %1127 = arith.addf %1126, %1125 : vector<8x64xf32>
    %1128 = arith.divf %1126, %1127 : vector<8x64xf32>
    %1129 = vector.extract_strided_slice %1128 {offsets = [0, 0], sizes = [8, 32], strides = [1, 1]} : vector<8x64xf32> to vector<8x32xf32>
    %1130 = vector.extract_strided_slice %1128 {offsets = [0, 32], sizes = [8, 32], strides = [1, 1]} : vector<8x64xf32> to vector<8x32xf32>
    %1131 = vector.extract_strided_slice %1118 {offsets = [0, 64], sizes = [8, 32], strides = [1, 1]} : vector<8x96xf32> to vector<8x32xf32>
    %1132 = vector.extract_strided_slice %1120 {offsets = [0, 64], sizes = [8, 32], strides = [1, 1]} : vector<8x96xf32> to vector<8x32xf32>
    %1133 = vector.broadcast %955 : vector<1x32xf32> to vector<8x32xf32>
    %1134 = arith.addf %1132, %1133 : vector<8x32xf32>
    %1135 = arith.mulf %1129, %1134 : vector<8x32xf32>
    %1136 = arith.addf %1131, %1135 : vector<8x32xf32>
    %1137 = math.tanh %1136 : vector<8x32xf32>
    %1138 = arith.subf %1117, %1137 : vector<8x32xf32>
    %1139 = arith.mulf %1130, %1138 : vector<8x32xf32>
    %1140 = arith.addf %1137, %1139 : vector<8x32xf32>
    %1141 = arith.truncf %1140 : vector<8x32xf32> to vector<8x32xbf16>
    %c0_313 = arith.constant 0 : index
    %c0_314 = arith.constant 0 : index
    %1142 = vector.load %arg4[%c0_313, %c0_314] : memref<32x2xbf16, #tpu.memory_space<vmem>>, vector<32x2xbf16>
    %cst_315 = arith.constant dense<0.000000e+00> : vector<8x2xf32>
    %1143 = tpu.matmul %1141, %1142, %cst_315 {dimension_numbers = #tpu.dot_dimension_numbers<[1], [0], [0], [1], [0, 0, 1, 1], [], []>} : vector<8x32xbf16>, vector<32x2xbf16>, vector<8x2xf32> -> vector<8x2xf32>
    %c0_316 = arith.constant 0 : index
    %c0_317 = arith.constant 0 : index
    %1144 = vector.load %arg5[%c0_316, %c0_317] : memref<1x2xf32, #tpu.memory_space<vmem>>, vector<1x2xf32>
    %1145 = vector.broadcast %1144 : vector<1x2xf32> to vector<8x2xf32>
    %1146 = arith.addf %1143, %1145 : vector<8x2xf32>
    %1147 = vector.extract_strided_slice %1146 {offsets = [0, 0], sizes = [2, 2], strides = [1, 1]} : vector<8x2xf32> to vector<2x2xf32>
    %c0_318 = arith.constant 0 : index
    %c0_319 = arith.constant 0 : index
    %1148 = vector.load %arg6[%c0_318, %c0_319] : memref<2x2xf32, #tpu.memory_space<vmem>>, vector<2x2xf32>
    tpu.vector_store %arg6[%c0_318, %c0_319], %1147 {strides = array<i32>} : memref<2x2xf32, #tpu.memory_space<vmem>>, vector<2x2xf32>,
    return
  }
}

</mosaic_0001>

<llo_original>
// kernel: gru_model_forward.1
$region0: #{gru_model_forward.1}
  #allocation0 [shape = 'u32[]', space=smem, size = 0x4, offset = 0x4, fixed_abs, tag = 'smem constant byte address 0x4 - core index']
  #allocation1 [shape = 'u32[144,128]{1,0:T(1,128)}', space=vmem, size = 0x12000, scoped, tag = 'internal scratch']
  #allocation2 [shape = 'f32[64,96]{1,0:T(8,128)}', space=vmem, size = 0x8000, scoped, tag = 'scratch operand']
  #allocation3 [shape = 'f32[64,96]{1,0:T(8,128)}', space=vmem, size = 0x8000, scoped, tag = 'scratch operand']
  %s0 = inlined_call_operand.vmem [shape: f32[64,32], index: 0, kind: input, shape index: {}]
  %s1 = inlined_call_operand.vmem [shape: bf16[5,32,96], index: 1, kind: input, shape index: {}]
  %s2 = inlined_call_operand.hbm [shape: bf16[5,32,96], index: 2, kind: input, shape index: {}]
  %s3 = inlined_call_operand.vmem [shape: f32[5,2,96], index: 3, kind: input, shape index: {}]
  %s4 = inlined_call_operand.vmem [shape: bf16[32,2], index: 4, kind: input, shape index: {}]
  %s5 = inlined_call_operand.vmem [shape: f32[1,2], index: 5, kind: input, shape index: {}]
  %s6 = inlined_call_operand.hbm [shape: f32[2,2], index: 6, kind: output, shape index: {}]
  %s7 = sld [smem:[#allocation0]]
  $region38: #{gru_model_forward.1} parent=0
    _
  %s9 = ssub.s32 1, %s7
  %s10 = scalar_select 0, %s9, %s7
  $region1: #{gru_model_forward.1} parent=0
    #allocation4 [shape = 'u8[40960]{0}', space=vmem, size = 0xa000, scoped, tag = 'input window, operand 2, single buffered']
    #allocation5 [shape = 's32[1]{0}', space=sflag, size = 0x4, scoped, tag = 'scoped memory for gru_model_forward.1']
    #allocation6 [shape = 's32[1]{0}', space=sflag, size = 0x4, scoped, tag = 'scoped memory for gru_model_forward.1']
    #allocation7 [shape = 'u8[1024]{0}', space=vmem, size = 0x400, scoped, tag = 'output window, operand 0, single buffered']
    %11 = vsyncpa [#allocation5], 0
    %12 = vsyncpa [#allocation6], 0
    // Predicated region
    $region2: #{gru_model_forward.1} parent=1 // pred_check
      _
    $region3: #{gru_model_forward.1} parent=1 // pred_check_branch
      %14 = sbr.rel (0) target = $region5
    $region4: #{gru_model_forward.1} parent=1 // pred_region
      _
    $region5: #{gru_model_forward.1} parent=1 // pred_fallthru
      _
    // Predicated region
    $region6: #{gru_model_forward.1} parent=1 // pred_check
      _
    $region7: #{gru_model_forward.1} parent=1 // pred_check_branch
      %16 = sbr.rel (0) target = $region9
    $region8: #{gru_model_forward.1} parent=1 // pred_region
      _
    $region9: #{gru_model_forward.1} parent=1 // pred_fallthru
      _
    // Predicated region
    $region10: #{gru_model_forward.1} parent=1 // pred_check
      _
    $region11: #{gru_model_forward.1} parent=1 // pred_check_branch
      %18 = sbr.rel (0) target = $region13
    $region12: #{gru_model_forward.1} parent=1 // pred_region
      %s20 = ssub.s32 1280, 1280
      %21 = vsyncadd [#allocation5], %s20
      %s22 = sshll.u32 [#allocation4], 4
      %s23 = int_to_ptr.vmem [resolvable:$true] %s22
      %28 = dma.hbm_to_vmem [thread:$0]  %s2, 1280, %s23, [#allocation5], 64, 64, 4
    $region13: #{gru_model_forward.1} parent=1 // pred_fallthru
      _
    // Predicated region
    $region14: #{gru_model_forward.1} parent=1 // pred_check
      _
    $region15: #{gru_model_forward.1} parent=1 // pred_check_branch
      %30 = sbr.rel (0) target = $region17
    $region16: #{gru_model_forward.1} parent=1 // pred_region
      _
    $region17: #{gru_model_forward.1} parent=1 // pred_fallthru
      _
    // Predicated region
    $region18: #{gru_model_forward.1} parent=1 // pred_check
      _
    $region19: #{gru_model_forward.1} parent=1 // pred_check_branch
      %32 = sbr.rel (0) target = $region21
    $region20: #{gru_model_forward.1} parent=1 // pred_region
      _
    $region21: #{gru_model_forward.1} parent=1 // pred_fallthru
      _
    // Predicated region
    $region22: #{gru_model_forward.1} parent=1 // pred_check
      _
    $region23: #{gru_model_forward.1} parent=1 // pred_check_branch
      %34 = sbr.rel (0) target = $region25
    $region24: #{gru_model_forward.1} parent=1 // pred_region
      _
    $region25: #{gru_model_forward.1} parent=1 // pred_fallthru
      _
    // Predicated region
    $region26: #{gru_model_forward.1} parent=1 // pred_check
      _
    $region27: #{gru_model_forward.1} parent=1 // pred_check_branch
      %36 = sbr.rel (0) target = $region29
    $region28: #{gru_model_forward.1} parent=1 // pred_region
      %37 = dma.done [#allocation5], 1280
    $region29: #{gru_model_forward.1} parent=1 // pred_fallthru
      _
    %v39 = vld [vmem:[%s0] sm:$0xff]
    %v40 = vld [vmem:[%s0 + $0x8] sm:$0xff]
    %v41 = vld [vmem:[%s0 + $0x10] sm:$0xff]
    %v42 = vld [vmem:[%s0 + $0x18] sm:$0xff]
    %v43 = vld [vmem:[%s0 + $0x20] sm:$0xff]
    %v44 = vld [vmem:[%s0 + $0x28] sm:$0xff]
    %v45 = vld [vmem:[%s0 + $0x30] sm:$0xff]
    %v46 = vld [vmem:[%s0 + $0x38] sm:$0xff]
    %v47 = vpack.c.bf16 %v40, %v39
    %v48 = vpack.c.bf16 %v42, %v41
    %v49 = vpack.c.bf16 %v44, %v43
    %v50 = vpack.c.bf16 %v46, %v45
    %v51 = vld [vmem:[%s3] sm:$0x3]
    %v52 = vld [vmem:[%s1] sm:$0xf]
    %v53 = vld [vmem:[%s1 + $0x4] sm:$0xf]
    %v54 = vld [vmem:[%s1 + $0x8] sm:$0xf]
    %v55 = vld [vmem:[%s1 + $0xc] sm:$0xf]
    %v56 = vlaneseq
    %v57 = vshrl.u32 %v56, 7
    %v58 = vsub.s32 0, %v57
    %v59 = vrot.slane %v51, %v58
    %v64 = vunpack.c.l.b16 %v52
    %v65 = vunpack.c.l.b16 %v53
    %v66 = vunpack.c.l.b16 %v54
    %v67 = vunpack.c.l.b16 %v55
    %v68 = vpack.c.b16 %v65, %v64
    %v69 = vpack.c.b16 %v67, %v66
    %vm72 = vcmask 261120
    %v74 = vsel %vm72, %v47, 0
    %v77 = vsel %vm72, %v48, 0
    %v80 = vsel %vm72, %v49, 0
    %v83 = vsel %vm72, %v50, 0
    %85 = vmatprep.subr.bf16.mxu0 0
    %86 = vmatpush1.bf16.msra.mxu0 %v68
    %87 = vmatprep.subr.bf16.mxu0 0
    %88 = vmatpush1.bf16.msra.mxu0 %v69
    %89 = vmatprep.subr.bf16.mxu0 0
    %90 = vmatpush1.bf16.msra.mxu0 0
    %91 = vmatprep.subr.bf16.mxu0 0
    %92 = vmatpush1.bf16.msra.mxu0 0
    %93 = vmatprep.subr.bf16.mxu0 0
    %94 = vmatpush1.bf16.msra.mxu0 0
    %95 = vmatprep.subr.bf16.mxu0 0
    %96 = vmatpush1.bf16.msra.mxu0 0
    %97 = vmatprep.subr.bf16.mxu0 0
    %98 = vmatpush1.bf16.msra.mxu0 0
    %99 = vmatprep.subr.bf16.mxu0 0
    %100 = vmatpush1.bf16.msra.mxu0 0
    %101 = vmatprep.subr.bf16.mxu0 0
    %102 = vmatpush1.bf16.msra.mxu0 0
    %103 = vmatprep.subr.bf16.mxu0 0
    %104 = vmatpush1.bf16.msra.mxu0 0
    %105 = vmatprep.subr.bf16.mxu0 0
    %106 = vmatpush1.bf16.msra.mxu0 0
    %107 = vmatprep.subr.bf16.mxu0 0
    %108 = vmatpush1.bf16.msra.mxu0 0
    %109 = vmatprep.subr.bf16.mxu0 0
    %110 = vmatpush1.bf16.msra.mxu0 0
    %111 = vmatprep.subr.bf16.mxu0 0
    %112 = vmatpush1.bf16.msra.mxu0 0
    %113 = vmatprep.subr.bf16.mxu0 0
    %114 = vmatpush1.bf16.msra.mxu0 0
    %115 = vmatprep.subr.bf16.mxu0 0
    %116 = vmatpush1.bf16.msra.mxu0 0
    %117 = vmatprep.mubr.bf16.mxu0 0
    %118 = vmatmul.mubr.bf16.gmra.mrb[0].mxu0 %v74
    %v119 = vpop.f32.mrb[0].mxu0
    %v120 = vadd.f32 %v59, %v119
    %v121 = vpop.f32.mrb[0].mxu0
    %v122 = vpop.f32.mrb[0].mxu0
    %v123 = vadd.f32 %v59, %v122
    %v124 = vpop.f32.mrb[0].mxu0
    %125 = vmatprep.mubr.bf16.mxu0 0
    %126 = vmatmul.mubr.bf16.gmra.mrb[0].mxu0 %v77
    %v127 = vpop.f32.mrb[0].mxu0
    %v128 = vadd.f32 %v59, %v127
    %v129 = vpop.f32.mrb[0].mxu0
    %v130 = vpop.f32.mrb[0].mxu0
    %v131 = vadd.f32 %v59, %v130
    %v132 = vpop.f32.mrb[0].mxu0
    %133 = vmatprep.mubr.bf16.mxu0 0
    %134 = vmatmul.mubr.bf16.gmra.mrb[0].mxu0 %v80
    %v135 = vpop.f32.mrb[0].mxu0
    %v136 = vadd.f32 %v59, %v135
    %v137 = vpop.f32.mrb[0].mxu0
    %v138 = vpop.f32.mrb[0].mxu0
    %v139 = vadd.f32 %v59, %v138
    %v140 = vpop.f32.mrb[0].mxu0
    %141 = vmatprep.mubr.bf16.mxu0 0
    %142 = vmatmul.mubr.bf16.gmra.mrb[0].mxu0 %v83
    %v143 = vpop.f32.mrb[0].mxu0
    %v144 = vadd.f32 %v59, %v143
    %v145 = vpop.f32.mrb[0].mxu0
    %v146 = vpop.f32.mrb[0].mxu0
    %v147 = vadd.f32 %v59, %v146
    %v148 = vpop.f32.mrb[0].mxu0
    %149 = vdwg.mxu0
    %vm150 = vcmask 785408
    %151 = vst.msk [vmem:[#allocation2] sm:$0xff] %vm150, %v120
    %152 = vst.msk [vmem:[#allocation2 + $0x8] sm:$0xff] %vm150, %v123
    %153 = vst.msk [vmem:[#allocation2 + $0x10] sm:$0xff] %vm150, %v128
    %154 = vst.msk [vmem:[#allocation2 + $0x18] sm:$0xff] %vm150, %v131
    %155 = vst.msk [vmem:[#allocation2 + $0x20] sm:$0xff] %vm150, %v136
    %156 = vst.msk [vmem:[#allocation2 + $0x28] sm:$0xff] %vm150, %v139
    %157 = vst.msk [vmem:[#allocation2 + $0x30] sm:$0xff] %vm150, %v144
    %158 = vst.msk [vmem:[#allocation2 + $0x38] sm:$0xff] %vm150, %v147
    %v159 = vld [vmem:[#allocation4] sm:$0xf]
    %v160 = vld [vmem:[#allocation4 + $0x4] sm:$0xf]
    %v161 = vld [vmem:[#allocation4 + $0x8] sm:$0xf]
    %v162 = vld [vmem:[#allocation4 + $0xc] sm:$0xf]
    %v163 = vld [vmem:[%s3] sm:$0x3]
    %s164 = scalar_lea.vmem %s1, 16
    %v165 = vld [vmem:[%s164] sm:$0xf]
    %v166 = vld [vmem:[%s164 + $0x4] sm:$0xf]
    %v167 = vld [vmem:[%s164 + $0x8] sm:$0xf]
    %v168 = vld [vmem:[%s164 + $0xc] sm:$0xf]
    %s169 = scalar_lea.vmem %s3, 2
    %v170 = vld [vmem:[%s169] sm:$0x3]
    %v171 = vld [vmem:[#allocation2] sm:$0xff]
    %v176 = vunpack.c.l.b16 %v159
    %v177 = vunpack.c.l.b16 %v160
    %v178 = vunpack.c.l.b16 %v161
    %v179 = vunpack.c.l.b16 %v162
    %v180 = vpack.c.b16 %v177, %v176
    %v181 = vpack.c.b16 %v179, %v178
    %v185 = vsel %vm72, 0, 0
    %187 = vmatprep.subr.bf16.mxu0 0
    %188 = vmatpush1.bf16.msra.mxu0 %v180
    %189 = vmatprep.subr.bf16.mxu0 0
    %190 = vmatpush1.bf16.msra.mxu0 %v181
    %191 = vmatprep.subr.bf16.mxu0 0
    %192 = vmatpush1.bf16.msra.mxu0 0
    %193 = vmatprep.subr.bf16.mxu0 0
    %194 = vmatpush1.bf16.msra.mxu0 0
    %195 = vmatprep.subr.bf16.mxu0 0
    %196 = vmatpush1.bf16.msra.mxu0 0
    %197 = vmatprep.subr.bf16.mxu0 0
    %198 = vmatpush1.bf16.msra.mxu0 0
    %199 = vmatprep.subr.bf16.mxu0 0
    %200 = vmatpush1.bf16.msra.mxu0 0
    %201 = vmatprep.subr.bf16.mxu0 0
    %202 = vmatpush1.bf16.msra.mxu0 0
    %203 = vmatprep.subr.bf16.mxu0 0
    %204 = vmatpush1.bf16.msra.mxu0 0
    %205 = vmatprep.subr.bf16.mxu0 0
    %206 = vmatpush1.bf16.msra.mxu0 0
    %207 = vmatprep.subr.bf16.mxu0 0
    %208 = vmatpush1.bf16.msra.mxu0 0
    %209 = vmatprep.subr.bf16.mxu0 0
    %210 = vmatpush1.bf16.msra.mxu0 0
    %211 = vmatprep.subr.bf16.mxu0 0
    %212 = vmatpush1.bf16.msra.mxu0 0
    %213 = vmatprep.subr.bf16.mxu0 0
    %214 = vmatpush1.bf16.msra.mxu0 0
    %215 = vmatprep.subr.bf16.mxu0 0
    %216 = vmatpush1.bf16.msra.mxu0 0
    %217 = vmatprep.subr.bf16.mxu0 0
    %218 = vmatpush1.bf16.msra.mxu0 0
    %219 = vmatprep.mubr.bf16.mxu0 0
    %220 = vmatmul.mubr.bf16.gmra.mrb[0].mxu0 %v185
    %v221 = vpop.f32.mrb[0].mxu0
    %v222 = vadd.f32 0.0, %v221
    %v223 = vpop.f32.mrb[0].mxu0
    %v224 = vpop.f32.mrb[0].mxu0
    %v225 = vpop.f32.mrb[0].mxu0
    %226 = vdwg.mxu0
    %v227 = vadd.f32 %v171, %v222
    %v228 = vxor.u32 %v227, 2147483648
    %v229 = vmul.f32 %v228, 1.442695
    %v230 = vpow.pop %v229
    %v231 = vadd.f32 %v230, 1.0
    %v232 = vrcp.pop %v231
    %v233 = vmul.f32 1.0, %v232
    %v234 = vlaneseq
    %v235 = vshrl.u32 %v234, 7
    %v236 = vsub.s32 1, %v235
    %v237 = vrot.slane %v163, %v236
    %239 = vrot.lane.b32.xlu0 %v237, 64
    %v240 = vpop.permute.xlu0 %239
    %v242 = vadd.f32 %v222, %v240
    %244 = vrot.lane.b32.xlu0 %v242, 64
    %v245 = vpop.permute.xlu0 %244
    %v247 = vmul.f32 %v233, %v245
    %249 = vrot.lane.b32.xlu0 %v247, 64
    %v250 = vpop.permute.xlu0 %249
    %v252 = vadd.f32 %v171, %v250
    %v253 = vtanh.pop %v252
    %v254 = vsub.f32 0.0, %v253
    %256 = vrot.lane.b32.xlu0 %v254, 96
    %v257 = vpop.permute.xlu0 %256
    %v259 = vmul.f32 %v233, %v257
    %261 = vrot.lane.b32.xlu0 %v259, 32
    %v262 = vpop.permute.xlu0 %261
    %v264 = vadd.f32 %v253, %v262
    %v265 = vpack.c.bf16 %v264, %v264
    %v266 = vlaneseq
    %v267 = vshrl.u32 %v266, 7
    %v268 = vsub.s32 0, %v267
    %v269 = vrot.slane %v170, %v268
    %271 = vrot.lane.b32.xlu0 %v265, 64
    %v272 = vpop.permute.xlu0 %271
    %v277 = vunpack.c.l.b16 %v165
    %v278 = vunpack.c.l.b16 %v166
    %v279 = vunpack.c.l.b16 %v167
    %v280 = vunpack.c.l.b16 %v168
    %v281 = vpack.c.b16 %v278, %v277
    %v282 = vpack.c.b16 %v280, %v279
    %v286 = vsel %vm72, %v272, 0
    %288 = vmatprep.subr.bf16.mxu0 0
    %289 = vmatpush1.bf16.msra.mxu0 %v281
    %290 = vmatprep.subr.bf16.mxu0 0
    %291 = vmatpush1.bf16.msra.mxu0 %v282
    %292 = vmatprep.subr.bf16.mxu0 0
    %293 = vmatpush1.bf16.msra.mxu0 0
    %294 = vmatprep.subr.bf16.mxu0 0
    %295 = vmatpush1.bf16.msra.mxu0 0
    %296 = vmatprep.subr.bf16.mxu0 0
    %297 = vmatpush1.bf16.msra.mxu0 0
    %298 = vmatprep.subr.bf16.mxu0 0
    %299 = vmatpush1.bf16.msra.mxu0 0
    %300 = vmatprep.subr.bf16.mxu0 0
    %301 = vmatpush1.bf16.msra.mxu0 0
    %302 = vmatprep.subr.bf16.mxu0 0
    %303 = vmatpush1.bf16.msra.mxu0 0
    %304 = vmatprep.subr.bf16.mxu0 0
    %305 = vmatpush1.bf16.msra.mxu0 0
    %306 = vmatprep.subr.bf16.mxu0 0
    %307 = vmatpush1.bf16.msra.mxu0 0
    %308 = vmatprep.subr.bf16.mxu0 0
    %309 = vmatpush1.bf16.msra.mxu0 0
    %310 = vmatprep.subr.bf16.mxu0 0
    %311 = vmatpush1.bf16.msra.mxu0 0
    %312 = vmatprep.subr.bf16.mxu0 0
    %313 = vmatpush1.bf16.msra.mxu0 0
    %314 = vmatprep.subr.bf16.mxu0 0
    %315 = vmatpush1.bf16.msra.mxu0 0
    %316 = vmatprep.subr.bf16.mxu0 0
    %317 = vmatpush1.bf16.msra.mxu0 0
    %318 = vmatprep.subr.bf16.mxu0 0
    %319 = vmatpush1.bf16.msra.mxu0 0
    %320 = vmatprep.mubr.bf16.mxu0 0
    %321 = vmatmul.mubr.bf16.gmra.mrb[0].mxu0 %v286
    %v322 = vpop.f32.mrb[0].mxu0
    %v323 = vadd.f32 %v269, %v322
    %v324 = vpop.f32.mrb[0].mxu0
    %v325 = vpop.f32.mrb[0].mxu0
    %v326 = vpop.f32.mrb[0].mxu0
    %327 = vdwg.mxu0
    %328 = vst.msk [vmem:[#allocation3] sm:$0xff] %vm150, %v323
    %v329 = vld [vmem:[#allocation2 + $0x8] sm:$0xff]
    %330 = vmatprep.subr.bf16.mxu0 0
    %331 = vmatpush1.bf16.msra.mxu0 %v180
    %332 = vmatprep.subr.bf16.mxu0 0
    %333 = vmatpush1.bf16.msra.mxu0 %v181
    %334 = vmatprep.subr.bf16.mxu0 0
    %335 = vmatpush1.bf16.msra.mxu0 0
    %336 = vmatprep.subr.bf16.mxu0 0
    %337 = vmatpush1.bf16.msra.mxu0 0
    %338 = vmatprep.subr.bf16.mxu0 0
    %339 = vmatpush1.bf16.msra.mxu0 0
    %340 = vmatprep.subr.bf16.mxu0 0
    %341 = vmatpush1.bf16.msra.mxu0 0
    %342 = vmatprep.subr.bf16.mxu0 0
    %343 = vmatpush1.bf16.msra.mxu0 0
    %344 = vmatprep.subr.bf16.mxu0 0
    %345 = vmatpush1.bf16.msra.mxu0 0
    %346 = vmatprep.subr.bf16.mxu0 0
    %347 = vmatpush1.bf16.msra.mxu0 0
    %348 = vmatprep.subr.bf16.mxu0 0
    %349 = vmatpush1.bf16.msra.mxu0 0
    %350 = vmatprep.subr.bf16.mxu0 0
    %351 = vmatpush1.bf16.msra.mxu0 0
    %352 = vmatprep.subr.bf16.mxu0 0
    %353 = vmatpush1.bf16.msra.mxu0 0
    %354 = vmatprep.subr.bf16.mxu0 0
    %355 = vmatpush1.bf16.msra.mxu0 0
    %356 = vmatprep.subr.bf16.mxu0 0
    %357 = vmatpush1.bf16.msra.mxu0 0
    %358 = vmatprep.subr.bf16.mxu0 0
    %359 = vmatpush1.bf16.msra.mxu0 0
    %360 = vmatprep.subr.bf16.mxu0 0
    %361 = vmatpush1.bf16.msra.mxu0 0
    %362 = vmatprep.mubr.bf16.mxu0 0
    %363 = vmatmul.mubr.bf16.gmra.mrb[0].mxu0 %v286
    %v364 = vpop.f32.mrb[0].mxu0
    %v365 = vadd.f32 0.0, %v364
    %v366 = vpop.f32.mrb[0].mxu0
    %v367 = vpop.f32.mrb[0].mxu0
    %v368 = vpop.f32.mrb[0].mxu0
    %369 = vdwg.mxu0
    %v370 = vadd.f32 %v329, %v365
    %v371 = vxor.u32 %v370, 2147483648
    %v372 = vmul.f32 %v371, 1.442695
    %v373 = vpow.pop %v372
    %v374 = vadd.f32 %v373, 1.0
    %v375 = vrcp.pop %v374
    %v376 = vmul.f32 1.0, %v375
    %v377 = vadd.f32 %v365, %v240
    %379 = vrot.lane.b32.xlu0 %v377, 64
    %v380 = vpop.permute.xlu0 %379
    %v382 = vmul.f32 %v376, %v380
    %384 = vrot.lane.b32.xlu0 %v382, 64
    %v385 = vpop.permute.xlu0 %384
    %v387 = vadd.f32 %v329, %v385
    %v388 = vtanh.pop %v387
    %v389 = vsub.f32 %v264, %v388
    %391 = vrot.lane.b32.xlu0 %v389, 96
    %v392 = vpop.permute.xlu0 %391
    %v394 = vmul.f32 %v376, %v392
    %396 = vrot.lane.b32.xlu0 %v394, 32
    %v397 = vpop.permute.xlu0 %396
    %v399 = vadd.f32 %v388, %v397
    %v400 = vpack.c.bf16 %v399, %v399
    %402 = vrot.lane.b32.xlu0 %v400, 64
    %v403 = vpop.permute.xlu0 %402
    %v405 = vsel %vm72, %v403, 0
    %407 = vmatprep.subr.bf16.mxu0 0
    %408 = vmatpush1.bf16.msra.mxu0 %v281
    %409 = vmatprep.subr.bf16.mxu0 0
    %410 = vmatpush1.bf16.msra.mxu0 %v282
    %411 = vmatprep.subr.bf16.mxu0 0
    %412 = vmatpush1.bf16.msra.mxu0 0
    %413 = vmatprep.subr.bf16.mxu0 0
    %414 = vmatpush1.bf16.msra.mxu0 0
    %415 = vmatprep.subr.bf16.mxu0 0
    %416 = vmatpush1.bf16.msra.mxu0 0
    %417 = vmatprep.subr.bf16.mxu0 0
    %418 = vmatpush1.bf16.msra.mxu0 0
    %419 = vmatprep.subr.bf16.mxu0 0
    %420 = vmatpush1.bf16.msra.mxu0 0
    %421 = vmatprep.subr.bf16.mxu0 0
    %422 = vmatpush1.bf16.msra.mxu0 0
    %423 = vmatprep.subr.bf16.mxu0 0
    %424 = vmatpush1.bf16.msra.mxu0 0
    %425 = vmatprep.subr.bf16.mxu0 0
    %426 = vmatpush1.bf16.msra.mxu0 0
    %427 = vmatprep.subr.bf16.mxu0 0
    %428 = vmatpush1.bf16.msra.mxu0 0
    %429 = vmatprep.subr.bf16.mxu0 0
    %430 = vmatpush1.bf16.msra.mxu0 0
    %431 = vmatprep.subr.bf16.mxu0 0
    %432 = vmatpush1.bf16.msra.mxu0 0
    %433 = vmatprep.subr.bf16.mxu0 0
    %434 = vmatpush1.bf16.msra.mxu0 0
    %435 = vmatprep.subr.bf16.mxu0 0
    %436 = vmatpush1.bf16.msra.mxu0 0
    %437 = vmatprep.subr.bf16.mxu0 0
    %438 = vmatpush1.bf16.msra.mxu0 0
    %439 = vmatprep.mubr.bf16.mxu0 0
    %440 = vmatmul.mubr.bf16.gmra.mrb[0].mxu0 %v405
    %v441 = vpop.f32.mrb[0].mxu0
    %v442 = vadd.f32 %v269, %v441
    %v443 = vpop.f32.mrb[0].mxu0
    %v444 = vpop.f32.mrb[0].mxu0
    %v445 = vpop.f32.mrb[0].mxu0
    %446 = vdwg.mxu0
    %447 = vst.msk [vmem:[#allocation3 + $0x8] sm:$0xff] %vm150, %v442
    %v448 = vld [vmem:[#allocation2 + $0x10] sm:$0xff]
    %449 = vmatprep.subr.bf16.mxu0 0
    %450 = vmatpush1.bf16.msra.mxu0 %v180
    %451 = vmatprep.subr.bf16.mxu0 0
    %452 = vmatpush1.bf16.msra.mxu0 %v181
    %453 = vmatprep.subr.bf16.mxu0 0
    %454 = vmatpush1.bf16.msra.mxu0 0
    %455 = vmatprep.subr.bf16.mxu0 0
    %456 = vmatpush1.bf16.msra.mxu0 0
    %457 = vmatprep.subr.bf16.mxu0 0
    %458 = vmatpush1.bf16.msra.mxu0 0
    %459 = vmatprep.subr.bf16.mxu0 0
    %460 = vmatpush1.bf16.msra.mxu0 0
    %461 = vmatprep.subr.bf16.mxu0 0
    %462 = vmatpush1.bf16.msra.mxu0 0
    %463 = vmatprep.subr.bf16.mxu0 0
    %464 = vmatpush1.bf16.msra.mxu0 0
    %465 = vmatprep.subr.bf16.mxu0 0
    %466 = vmatpush1.bf16.msra.mxu0 0
    %467 = vmatprep.subr.bf16.mxu0 0
    %468 = vmatpush1.bf16.msra.mxu0 0
    %469 = vmatprep.subr.bf16.mxu0 0
    %470 = vmatpush1.bf16.msra.mxu0 0
    %471 = vmatprep.subr.bf16.mxu0 0
    %472 = vmatpush1.bf16.msra.mxu0 0
    %473 = vmatprep.subr.bf16.mxu0 0
    %474 = vmatpush1.bf16.msra.mxu0 0
    %475 = vmatprep.subr.bf16.mxu0 0
    %476 = vmatpush1.bf16.msra.mxu0 0
    %477 = vmatprep.subr.bf16.mxu0 0
    %478 = vmatpush1.bf16.msra.mxu0 0
    %479 = vmatprep.subr.bf16.mxu0 0
    %480 = vmatpush1.bf16.msra.mxu0 0
    %481 = vmatprep.mubr.bf16.mxu0 0
    %482 = vmatmul.mubr.bf16.gmra.mrb[0].mxu0 %v405
    %v483 = vpop.f32.mrb[0].mxu0
    %v484 = vadd.f32 0.0, %v483
    %v485 = vpop.f32.mrb[0].mxu0
    %v486 = vpop.f32.mrb[0].mxu0
    %v487 = vpop.f32.mrb[0].mxu0
    %488 = vdwg.mxu0
    %v489 = vadd.f32 %v448, %v484
    %v490 = vxor.u32 %v489, 2147483648
    %v491 = vmul.f32 %v490, 1.442695
    %v492 = vpow.pop %v491
    %v493 = vadd.f32 %v492, 1.0
    %v494 = vrcp.pop %v493
    %v495 = vmul.f32 1.0, %v494
    %v496 = vadd.f32 %v484, %v240
    %498 = vrot.lane.b32.xlu0 %v496, 64
    %v499 = vpop.permute.xlu0 %498
    %v501 = vmul.f32 %v495, %v499
    %503 = vrot.lane.b32.xlu0 %v501, 64
    %v504 = vpop.permute.xlu0 %503
    %v506 = vadd.f32 %v448, %v504
    %v507 = vtanh.pop %v506
    %v508 = vsub.f32 %v399, %v507
    %510 = vrot.lane.b32.xlu0 %v508, 96
    %v511 = vpop.permute.xlu0 %510
    %v513 = vmul.f32 %v495, %v511
    %515 = vrot.lane.b32.xlu0 %v513, 32
    %v516 = vpop.permute.xlu0 %515
    %v518 = vadd.f32 %v507, %v516
    %v519 = vpack.c.bf16 %v518, %v518
    %521 = vrot.lane.b32.xlu0 %v519, 64
    %v522 = vpop.permute.xlu0 %521
    %v524 = vsel %vm72, %v522, 0
    %526 = vmatprep.subr.bf16.mxu0 0
    %527 = vmatpush1.bf16.msra.mxu0 %v281
    %528 = vmatprep.subr.bf16.mxu0 0
    %529 = vmatpush1.bf16.msra.mxu0 %v282
    %530 = vmatprep.subr.bf16.mxu0 0
    %531 = vmatpush1.bf16.msra.mxu0 0
    %532 = vmatprep.subr.bf16.mxu0 0
    %533 = vmatpush1.bf16.msra.mxu0 0
    %534 = vmatprep.subr.bf16.mxu0 0
    %535 = vmatpush1.bf16.msra.mxu0 0
    %536 = vmatprep.subr.bf16.mxu0 0
    %537 = vmatpush1.bf16.msra.mxu0 0
    %538 = vmatprep.subr.bf16.mxu0 0
    %539 = vmatpush1.bf16.msra.mxu0 0
    %540 = vmatprep.subr.bf16.mxu0 0
    %541 = vmatpush1.bf16.msra.mxu0 0
    %542 = vmatprep.subr.bf16.mxu0 0
    %543 = vmatpush1.bf16.msra.mxu0 0
    %544 = vmatprep.subr.bf16.mxu0 0
    %545 = vmatpush1.bf16.msra.mxu0 0
    %546 = vmatprep.subr.bf16.mxu0 0
    %547 = vmatpush1.bf16.msra.mxu0 0
    %548 = vmatprep.subr.bf16.mxu0 0
    %549 = vmatpush1.bf16.msra.mxu0 0
    %550 = vmatprep.subr.bf16.mxu0 0
    %551 = vmatpush1.bf16.msra.mxu0 0
    %552 = vmatprep.subr.bf16.mxu0 0
    %553 = vmatpush1.bf16.msra.mxu0 0
    %554 = vmatprep.subr.bf16.mxu0 0
    %555 = vmatpush1.bf16.msra.mxu0 0
    %556 = vmatprep.subr.bf16.mxu0 0
    %557 = vmatpush1.bf16.msra.mxu0 0
    %558 = vmatprep.mubr.bf16.mxu0 0
    %559 = vmatmul.mubr.bf16.gmra.mrb[0].mxu0 %v524
    %v560 = vpop.f32.mrb[0].mxu0
    %v561 = vadd.f32 %v269, %v560
    %v562 = vpop.f32.mrb[0].mxu0
    %v563 = vpop.f32.mrb[0].mxu0
    %v564 = vpop.f32.mrb[0].mxu0
    %565 = vdwg.mxu0
    %566 = vst.msk [vmem:[#allocation3 + $0x10] sm:$0xff] %vm150, %v561
    %v567 = vld [vmem:[#allocation2 + $0x18] sm:$0xff]
    %568 = vmatprep.subr.bf16.mxu0 0
    %569 = vmatpush1.bf16.msra.mxu0 %v180
    %570 = vmatprep.subr.bf16.mxu0 0
    %571 = vmatpush1.bf16.msra.mxu0 %v181
    %572 = vmatprep.subr.bf16.mxu0 0
    %573 = vmatpush1.bf16.msra.mxu0 0
    %574 = vmatprep.subr.bf16.mxu0 0
    %575 = vmatpush1.bf16.msra.mxu0 0
    %576 = vmatprep.subr.bf16.mxu0 0
    %577 = vmatpush1.bf16.msra.mxu0 0
    %578 = vmatprep.subr.bf16.mxu0 0
    %579 = vmatpush1.bf16.msra.mxu0 0
    %580 = vmatprep.subr.bf16.mxu0 0
    %581 = vmatpush1.bf16.msra.mxu0 0
    %582 = vmatprep.subr.bf16.mxu0 0
    %583 = vmatpush1.bf16.msra.mxu0 0
    %584 = vmatprep.subr.bf16.mxu0 0
    %585 = vmatpush1.bf16.msra.mxu0 0
    %586 = vmatprep.subr.bf16.mxu0 0
    %587 = vmatpush1.bf16.msra.mxu0 0
    %588 = vmatprep.subr.bf16.mxu0 0
    %589 = vmatpush1.bf16.msra.mxu0 0
    %590 = vmatprep.subr.bf16.mxu0 0
    %591 = vmatpush1.bf16.msra.mxu0 0
    %592 = vmatprep.subr.bf16.mxu0 0
    %593 = vmatpush1.bf16.msra.mxu0 0
    %594 = vmatprep.subr.bf16.mxu0 0
    %595 = vmatpush1.bf16.msra.mxu0 0
    %596 = vmatprep.subr.bf16.mxu0 0
    %597 = vmatpush1.bf16.msra.mxu0 0
    %598 = vmatprep.subr.bf16.mxu0 0
    %599 = vmatpush1.bf16.msra.mxu0 0
    %600 = vmatprep.mubr.bf16.mxu0 0
    %601 = vmatmul.mubr.bf16.gmra.mrb[0].mxu0 %v524
    %v602 = vpop.f32.mrb[0].mxu0
    %v603 = vadd.f32 0.0, %v602
    %v604 = vpop.f32.mrb[0].mxu0
    %v605 = vpop.f32.mrb[0].mxu0
    %v606 = vpop.f32.mrb[0].mxu0
    %607 = vdwg.mxu0
    %v608 = vadd.f32 %v567, %v603
    %v609 = vxor.u32 %v608, 2147483648
    %v610 = vmul.f32 %v609, 1.442695
    %v611 = vpow.pop %v610
    %v612 = vadd.f32 %v611, 1.0
    %v613 = vrcp.pop %v612
    %v614 = vmul.f32 1.0, %v613
    %v615 = vadd.f32 %v603, %v240
    %617 = vrot.lane.b32.xlu0 %v615, 64
    %v618 = vpop.permute.xlu0 %617
    %v620 = vmul.f32 %v614, %v618
    %622 = vrot.lane.b32.xlu0 %v620, 64
    %v623 = vpop.permute.xlu0 %622
    %v625 = vadd.f32 %v567, %v623
    %v626 = vtanh.pop %v625
    %v627 = vsub.f32 %v518, %v626
    %629 = vrot.lane.b32.xlu0 %v627, 96
    %v630 = vpop.permute.xlu0 %629
    %v632 = vmul.f32 %v614, %v630
    %634 = vrot.lane.b32.xlu0 %v632, 32
    %v635 = vpop.permute.xlu0 %634
    %v637 = vadd.f32 %v626, %v635
    %v638 = vpack.c.bf16 %v637, %v637
    %640 = vrot.lane.b32.xlu0 %v638, 64
    %v641 = vpop.permute.xlu0 %640
    %v643 = vsel %vm72, %v641, 0
    %645 = vmatprep.subr.bf16.mxu0 0
    %646 = vmatpush1.bf16.msra.mxu0 %v281
    %647 = vmatprep.subr.bf16.mxu0 0
    %648 = vmatpush1.bf16.msra.mxu0 %v282
    %649 = vmatprep.subr.bf16.mxu0 0
    %650 = vmatpush1.bf16.msra.mxu0 0
    %651 = vmatprep.subr.bf16.mxu0 0
    %652 = vmatpush1.bf16.msra.mxu0 0
    %653 = vmatprep.subr.bf16.mxu0 0
    %654 = vmatpush1.bf16.msra.mxu0 0
    %655 = vmatprep.subr.bf16.mxu0 0
    %656 = vmatpush1.bf16.msra.mxu0 0
    %657 = vmatprep.subr.bf16.mxu0 0
    %658 = vmatpush1.bf16.msra.mxu0 0
    %659 = vmatprep.subr.bf16.mxu0 0
    %660 = vmatpush1.bf16.msra.mxu0 0
    %661 = vmatprep.subr.bf16.mxu0 0
    %662 = vmatpush1.bf16.msra.mxu0 0
    %663 = vmatprep.subr.bf16.mxu0 0
    %664 = vmatpush1.bf16.msra.mxu0 0
    %665 = vmatprep.subr.bf16.mxu0 0
    %666 = vmatpush1.bf16.msra.mxu0 0
    %667 = vmatprep.subr.bf16.mxu0 0
    %668 = vmatpush1.bf16.msra.mxu0 0
    %669 = vmatprep.subr.bf16.mxu0 0
    %670 = vmatpush1.bf16.msra.mxu0 0
    %671 = vmatprep.subr.bf16.mxu0 0
    %672 = vmatpush1.bf16.msra.mxu0 0
    %673 = vmatprep.subr.bf16.mxu0 0
    %674 = vmatpush1.bf16.msra.mxu0 0
    %675 = vmatprep.subr.bf16.mxu0 0
    %676 = vmatpush1.bf16.msra.mxu0 0
    %677 = vmatprep.mubr.bf16.mxu0 0
    %678 = vmatmul.mubr.bf16.gmra.mrb[0].mxu0 %v643
    %v679 = vpop.f32.mrb[0].mxu0
    %v680 = vadd.f32 %v269, %v679
    %v681 = vpop.f32.mrb[0].mxu0
    %v682 = vpop.f32.mrb[0].mxu0
    %v683 = vpop.f32.mrb[0].mxu0
    %684 = vdwg.mxu0
    %685 = vst.msk [vmem:[#allocation3 + $0x18] sm:$0xff] %vm150, %v680
    %v686 = vld [vmem:[#allocation2 + $0x20] sm:$0xff]
    %687 = vmatprep.subr.bf16.mxu0 0
    %688 = vmatpush1.bf16.msra.mxu0 %v180
    %689 = vmatprep.subr.bf16.mxu0 0
    %690 = vmatpush1.bf16.msra.mxu0 %v181
    %691 = vmatprep.subr.bf16.mxu0 0
    %692 = vmatpush1.bf16.msra.mxu0 0
    %693 = vmatprep.subr.bf16.mxu0 0
    %694 = vmatpush1.bf16.msra.mxu0 0
    %695 = vmatprep.subr.bf16.mxu0 0
    %696 = vmatpush1.bf16.msra.mxu0 0
    %697 = vmatprep.subr.bf16.mxu0 0
    %698 = vmatpush1.bf16.msra.mxu0 0
    %699 = vmatprep.subr.bf16.mxu0 0
    %700 = vmatpush1.bf16.msra.mxu0 0
    %701 = vmatprep.subr.bf16.mxu0 0
    %702 = vmatpush1.bf16.msra.mxu0 0
    %703 = vmatprep.subr.bf16.mxu0 0
    %704 = vmatpush1.bf16.msra.mxu0 0
    %705 = vmatprep.subr.bf16.mxu0 0
    %706 = vmatpush1.bf16.msra.mxu0 0
    %707 = vmatprep.subr.bf16.mxu0 0
    %708 = vmatpush1.bf16.msra.mxu0 0
    %709 = vmatprep.subr.bf16.mxu0 0
    %710 = vmatpush1.bf16.msra.mxu0 0
    %711 = vmatprep.subr.bf16.mxu0 0
    %712 = vmatpush1.bf16.msra.mxu0 0
    %713 = vmatprep.subr.bf16.mxu0 0
    %714 = vmatpush1.bf16.msra.mxu0 0
    %715 = vmatprep.subr.bf16.mxu0 0
    %716 = vmatpush1.bf16.msra.mxu0 0
    %717 = vmatprep.subr.bf16.mxu0 0
    %718 = vmatpush1.bf16.msra.mxu0 0
    %719 = vmatprep.mubr.bf16.mxu0 0
    %720 = vmatmul.mubr.bf16.gmra.mrb[0].mxu0 %v643
    %v721 = vpop.f32.mrb[0].mxu0
    %v722 = vadd.f32 0.0, %v721
    %v723 = vpop.f32.mrb[0].mxu0
    %v724 = vpop.f32.mrb[0].mxu0
    %v725 = vpop.f32.mrb[0].mxu0
    %726 = vdwg.mxu0
    %v727 = vadd.f32 %v686, %v722
    %v728 = vxor.u32 %v727, 2147483648
    %v729 = vmul.f32 %v728, 1.442695
    %v730 = vpow.pop %v729
    %v731 = vadd.f32 %v730, 1.0
    %v732 = vrcp.pop %v731
    %v733 = vmul.f32 1.0, %v732
    %v734 = vadd.f32 %v722, %v240
    %736 = vrot.lane.b32.xlu0 %v734, 64
    %v737 = vpop.permute.xlu0 %736
    %v739 = vmul.f32 %v733, %v737
    %741 = vrot.lane.b32.xlu0 %v739, 64
    %v742 = vpop.permute.xlu0 %741
    %v744 = vadd.f32 %v686, %v742
    %v745 = vtanh.pop %v744
    %v746 = vsub.f32 %v637, %v745
    %748 = vrot.lane.b32.xlu0 %v746, 96
    %v749 = vpop.permute.xlu0 %748
    %v751 = vmul.f32 %v733, %v749
    %753 = vrot.lane.b32.xlu0 %v751, 32
    %v754 = vpop.permute.xlu0 %753
    %v756 = vadd.f32 %v745, %v754
    %v757 = vpack.c.bf16 %v756, %v756
    %759 = vrot.lane.b32.xlu0 %v757, 64
    %v760 = vpop.permute.xlu0 %759
    %v762 = vsel %vm72, %v760, 0
    %764 = vmatprep.subr.bf16.mxu0 0
    %765 = vmatpush1.bf16.msra.mxu0 %v281
    %766 = vmatprep.subr.bf16.mxu0 0
    %767 = vmatpush1.bf16.msra.mxu0 %v282
    %768 = vmatprep.subr.bf16.mxu0 0
    %769 = vmatpush1.bf16.msra.mxu0 0
    %770 = vmatprep.subr.bf16.mxu0 0
    %771 = vmatpush1.bf16.msra.mxu0 0
    %772 = vmatprep.subr.bf16.mxu0 0
    %773 = vmatpush1.bf16.msra.mxu0 0
    %774 = vmatprep.subr.bf16.mxu0 0
    %775 = vmatpush1.bf16.msra.mxu0 0
    %776 = vmatprep.subr.bf16.mxu0 0
    %777 = vmatpush1.bf16.msra.mxu0 0
    %778 = vmatprep.subr.bf16.mxu0 0
    %779 = vmatpush1.bf16.msra.mxu0 0
    %780 = vmatprep.subr.bf16.mxu0 0
    %781 = vmatpush1.bf16.msra.mxu0 0
    %782 = vmatprep.subr.bf16.mxu0 0
    %783 = vmatpush1.bf16.msra.mxu0 0
    %784 = vmatprep.subr.bf16.mxu0 0
    %785 = vmatpush1.bf16.msra.mxu0 0
    %786 = vmatprep.subr.bf16.mxu0 0
    %787 = vmatpush1.bf16.msra.mxu0 0
    %788 = vmatprep.subr.bf16.mxu0 0
    %789 = vmatpush1.bf16.msra.mxu0 0
    %790 = vmatprep.subr.bf16.mxu0 0
    %791 = vmatpush1.bf16.msra.mxu0 0
    %792 = vmatprep.subr.bf16.mxu0 0
    %793 = vmatpush1.bf16.msra.mxu0 0
    %794 = vmatprep.subr.bf16.mxu0 0
    %795 = vmatpush1.bf16.msra.mxu0 0
    %796 = vmatprep.mubr.bf16.mxu0 0
    %797 = vmatmul.mubr.bf16.gmra.mrb[0].mxu0 %v762
    %v798 = vpop.f32.mrb[0].mxu0
    %v799 = vadd.f32 %v269, %v798
    %v800 = vpop.f32.mrb[0].mxu0
    %v801 = vpop.f32.mrb[0].mxu0
    %v802 = vpop.f32.mrb[0].mxu0
    %803 = vdwg.mxu0
    %804 = vst.msk [vmem:[#allocation3 + $0x20] sm:$0xff] %vm150, %v799
    %v805 = vld [vmem:[#allocation2 + $0x28] sm:$0xff]
    %806 = vmatprep.subr.bf16.mxu0 0
    %807 = vmatpush1.bf16.msra.mxu0 %v180
    %808 = vmatprep.subr.bf16.mxu0 0
    %809 = vmatpush1.bf16.msra.mxu0 %v181
    %810 = vmatprep.subr.bf16.mxu0 0
    %811 = vmatpush1.bf16.msra.mxu0 0
    %812 = vmatprep.subr.bf16.mxu0 0
    %813 = vmatpush1.bf16.msra.mxu0 0
    %814 = vmatprep.subr.bf16.mxu0 0
    %815 = vmatpush1.bf16.msra.mxu0 0
    %816 = vmatprep.subr.bf16.mxu0 0
    %817 = vmatpush1.bf16.msra.mxu0 0
    %818 = vmatprep.subr.bf16.mxu0 0
    %819 = vmatpush1.bf16.msra.mxu0 0
    %820 = vmatprep.subr.bf16.mxu0 0
    %821 = vmatpush1.bf16.msra.mxu0 0
    %822 = vmatprep.subr.bf16.mxu0 0
    %823 = vmatpush1.bf16.msra.mxu0 0
    %824 = vmatprep.subr.bf16.mxu0 0
    %825 = vmatpush1.bf16.msra.mxu0 0
    %826 = vmatprep.subr.bf16.mxu0 0
    %827 = vmatpush1.bf16.msra.mxu0 0
    %828 = vmatprep.subr.bf16.mxu0 0
    %829 = vmatpush1.bf16.msra.mxu0 0
    %830 = vmatprep.subr.bf16.mxu0 0
    %831 = vmatpush1.bf16.msra.mxu0 0
    %832 = vmatprep.subr.bf16.mxu0 0
    %833 = vmatpush1.bf16.msra.mxu0 0
    %834 = vmatprep.subr.bf16.mxu0 0
    %835 = vmatpush1.bf16.msra.mxu0 0
    %836 = vmatprep.subr.bf16.mxu0 0
    %837 = vmatpush1.bf16.msra.mxu0 0
    %838 = vmatprep.mubr.bf16.mxu0 0
    %839 = vmatmul.mubr.bf16.gmra.mrb[0].mxu0 %v762
    %v840 = vpop.f32.mrb[0].mxu0
    %v841 = vadd.f32 0.0, %v840
    %v842 = vpop.f32.mrb[0].mxu0
    %v843 = vpop.f32.mrb[0].mxu0
    %v844 = vpop.f32.mrb[0].mxu0
    %845 = vdwg.mxu0
    %v846 = vadd.f32 %v805, %v841
    %v847 = vxor.u32 %v846, 2147483648
    %v848 = vmul.f32 %v847, 1.442695
    %v849 = vpow.pop %v848
    %v850 = vadd.f32 %v849, 1.0
    %v851 = vrcp.pop %v850
    %v852 = vmul.f32 1.0, %v851
    %v853 = vadd.f32 %v841, %v240
    %855 = vrot.lane.b32.xlu0 %v853, 64
    %v856 = vpop.permute.xlu0 %855
    %v858 = vmul.f32 %v852, %v856
    %860 = vrot.lane.b32.xlu0 %v858, 64
    %v861 = vpop.permute.xlu0 %860
    %v863 = vadd.f32 %v805, %v861
    %v864 = vtanh.pop %v863
    %v865 = vsub.f32 %v756, %v864
    %867 = vrot.lane.b32.xlu0 %v865, 96
    %v868 = vpop.permute.xlu0 %867
    %v870 = vmul.f32 %v852, %v868
    %872 = vrot.lane.b32.xlu0 %v870, 32
    %v873 = vpop.permute.xlu0 %872
    %v875 = vadd.f32 %v864, %v873
    %v876 = vpack.c.bf16 %v875, %v875
    %878 = vrot.lane.b32.xlu0 %v876, 64
    %v879 = vpop.permute.xlu0 %878
    %v881 = vsel %vm72, %v879, 0
    %883 = vmatprep.subr.bf16.mxu0 0
    %884 = vmatpush1.bf16.msra.mxu0 %v281
    %885 = vmatprep.subr.bf16.mxu0 0
    %886 = vmatpush1.bf16.msra.mxu0 %v282
    %887 = vmatprep.subr.bf16.mxu0 0
    %888 = vmatpush1.bf16.msra.mxu0 0
    %889 = vmatprep.subr.bf16.mxu0 0
    %890 = vmatpush1.bf16.msra.mxu0 0
    %891 = vmatprep.subr.bf16.mxu0 0
    %892 = vmatpush1.bf16.msra.mxu0 0
    %893 = vmatprep.subr.bf16.mxu0 0
    %894 = vmatpush1.bf16.msra.mxu0 0
    %895 = vmatprep.subr.bf16.mxu0 0
    %896 = vmatpush1.bf16.msra.mxu0 0
    %897 = vmatprep.subr.bf16.mxu0 0
    %898 = vmatpush1.bf16.msra.mxu0 0
    %899 = vmatprep.subr.bf16.mxu0 0
    %900 = vmatpush1.bf16.msra.mxu0 0
    %901 = vmatprep.subr.bf16.mxu0 0
    %902 = vmatpush1.bf16.msra.mxu0 0
    %903 = vmatprep.subr.bf16.mxu0 0
    %904 = vmatpush1.bf16.msra.mxu0 0
    %905 = vmatprep.subr.bf16.mxu0 0
    %906 = vmatpush1.bf16.msra.mxu0 0
    %907 = vmatprep.subr.bf16.mxu0 0
    %908 = vmatpush1.bf16.msra.mxu0 0
    %909 = vmatprep.subr.bf16.mxu0 0
    %910 = vmatpush1.bf16.msra.mxu0 0
    %911 = vmatprep.subr.bf16.mxu0 0
    %912 = vmatpush1.bf16.msra.mxu0 0
    %913 = vmatprep.subr.bf16.mxu0 0
    %914 = vmatpush1.bf16.msra.mxu0 0
    %915 = vmatprep.mubr.bf16.mxu0 0
    %916 = vmatmul.mubr.bf16.gmra.mrb[0].mxu0 %v881
    %v917 = vpop.f32.mrb[0].mxu0
    %v918 = vadd.f32 %v269, %v917
    %v919 = vpop.f32.mrb[0].mxu0
    %v920 = vpop.f32.mrb[0].mxu0
    %v921 = vpop.f32.mrb[0].mxu0
    %922 = vdwg.mxu0
    %923 = vst.msk [vmem:[#allocation3 + $0x28] sm:$0xff] %vm150, %v918
    %v924 = vld [vmem:[#allocation2 + $0x30] sm:$0xff]
    %925 = vmatprep.subr.bf16.mxu0 0
    %926 = vmatpush1.bf16.msra.mxu0 %v180
    %927 = vmatprep.subr.bf16.mxu0 0
    %928 = vmatpush1.bf16.msra.mxu0 %v181
    %929 = vmatprep.subr.bf16.mxu0 0
    %930 = vmatpush1.bf16.msra.mxu0 0
    %931 = vmatprep.subr.bf16.mxu0 0
    %932 = vmatpush1.bf16.msra.mxu0 0
    %933 = vmatprep.subr.bf16.mxu0 0
    %934 = vmatpush1.bf16.msra.mxu0 0
    %935 = vmatprep.subr.bf16.mxu0 0
    %936 = vmatpush1.bf16.msra.mxu0 0
    %937 = vmatprep.subr.bf16.mxu0 0
    %938 = vmatpush1.bf16.msra.mxu0 0
    %939 = vmatprep.subr.bf16.mxu0 0
    %940 = vmatpush1.bf16.msra.mxu0 0
    %941 = vmatprep.subr.bf16.mxu0 0
    %942 = vmatpush1.bf16.msra.mxu0 0
    %943 = vmatprep.subr.bf16.mxu0 0
    %944 = vmatpush1.bf16.msra.mxu0 0
    %945 = vmatprep.subr.bf16.mxu0 0
    %946 = vmatpush1.bf16.msra.mxu0 0
    %947 = vmatprep.subr.bf16.mxu0 0
    %948 = vmatpush1.bf16.msra.mxu0 0
    %949 = vmatprep.subr.bf16.mxu0 0
    %950 = vmatpush1.bf16.msra.mxu0 0
    %951 = vmatprep.subr.bf16.mxu0 0
    %952 = vmatpush1.bf16.msra.mxu0 0
    %953 = vmatprep.subr.bf16.mxu0 0
    %954 = vmatpush1.bf16.msra.mxu0 0
    %955 = vmatprep.subr.bf16.mxu0 0
    %956 = vmatpush1.bf16.msra.mxu0 0
    %957 = vmatprep.mubr.bf16.mxu0 0
    %958 = vmatmul.mubr.bf16.gmra.mrb[0].mxu0 %v881
    %v959 = vpop.f32.mrb[0].mxu0
    %v960 = vadd.f32 0.0, %v959
    %v961 = vpop.f32.mrb[0].mxu0
    %v962 = vpop.f32.mrb[0].mxu0
    %v963 = vpop.f32.mrb[0].mxu0
    %964 = vdwg.mxu0
    %v965 = vadd.f32 %v924, %v960
    %v966 = vxor.u32 %v965, 2147483648
    %v967 = vmul.f32 %v966, 1.442695
    %v968 = vpow.pop %v967
    %v969 = vadd.f32 %v968, 1.0
    %v970 = vrcp.pop %v969
    %v971 = vmul.f32 1.0, %v970
    %v972 = vadd.f32 %v960, %v240
    %974 = vrot.lane.b32.xlu0 %v972, 64
    %v975 = vpop.permute.xlu0 %974
    %v977 = vmul.f32 %v971, %v975
    %979 = vrot.lane.b32.xlu0 %v977, 64
    %v980 = vpop.permute.xlu0 %979
    %v982 = vadd.f32 %v924, %v980
    %v983 = vtanh.pop %v982
    %v984 = vsub.f32 %v875, %v983
    %986 = vrot.lane.b32.xlu0 %v984, 96
    %v987 = vpop.permute.xlu0 %986
    %v989 = vmul.f32 %v971, %v987
    %991 = vrot.lane.b32.xlu0 %v989, 32
    %v992 = vpop.permute.xlu0 %991
    %v994 = vadd.f32 %v983, %v992
    %v995 = vpack.c.bf16 %v994, %v994
    %997 = vrot.lane.b32.xlu0 %v995, 64
    %v998 = vpop.permute.xlu0 %997
    %v1000 = vsel %vm72, %v998, 0
    %1002 = vmatprep.subr.bf16.mxu0 0
    %1003 = vmatpush1.bf16.msra.mxu0 %v281
    %1004 = vmatprep.subr.bf16.mxu0 0
    %1005 = vmatpush1.bf16.msra.mxu0 %v282
    %1006 = vmatprep.subr.bf16.mxu0 0
    %1007 = vmatpush1.bf16.msra.mxu0 0
    %1008 = vmatprep.subr.bf16.mxu0 0
    %1009 = vmatpush1.bf16.msra.mxu0 0
    %1010 = vmatprep.subr.bf16.mxu0 0
    %1011 = vmatpush1.bf16.msra.mxu0 0
    %1012 = vmatprep.subr.bf16.mxu0 0
    %1013 = vmatpush1.bf16.msra.mxu0 0
    %1014 = vmatprep.subr.bf16.mxu0 0
    %1015 = vmatpush1.bf16.msra.mxu0 0
    %1016 = vmatprep.subr.bf16.mxu0 0
    %1017 = vmatpush1.bf16.msra.mxu0 0
    %1018 = vmatprep.subr.bf16.mxu0 0
    %1019 = vmatpush1.bf16.msra.mxu0 0
    %1020 = vmatprep.subr.bf16.mxu0 0
    %1021 = vmatpush1.bf16.msra.mxu0 0
    %1022 = vmatprep.subr.bf16.mxu0 0
    %1023 = vmatpush1.bf16.msra.mxu0 0
    %1024 = vmatprep.subr.bf16.mxu0 0
    %1025 = vmatpush1.bf16.msra.mxu0 0
    %1026 = vmatprep.subr.bf16.mxu0 0
    %1027 = vmatpush1.bf16.msra.mxu0 0
    %1028 = vmatprep.subr.bf16.mxu0 0
    %1029 = vmatpush1.bf16.msra.mxu0 0
    %1030 = vmatprep.subr.bf16.mxu0 0
    %1031 = vmatpush1.bf16.msra.mxu0 0
    %1032 = vmatprep.subr.bf16.mxu0 0
    %1033 = vmatpush1.bf16.msra.mxu0 0
    %1034 = vmatprep.mubr.bf16.mxu0 0
    %1035 = vmatmul.mubr.bf16.gmra.mrb[0].mxu0 %v1000
    %v1036 = vpop.f32.mrb[0].mxu0
    %v1037 = vadd.f32 %v269, %v1036
    %v1038 = vpop.f32.mrb[0].mxu0
    %v1039 = vpop.f32.mrb[0].mxu0
    %v1040 = vpop.f32.mrb[0].mxu0
    %1041 = vdwg.mxu0
    %1042 = vst.msk [vmem:[#allocation3 + $0x30] sm:$0xff] %vm150, %v1037
    %v1043 = vld [vmem:[#allocation2 + $0x38] sm:$0xff]
    %1044 = vmatprep.subr.bf16.mxu0 0
    %1045 = vmatpush1.bf16.msra.mxu0 %v180
    %1046 = vmatprep.subr.bf16.mxu0 0
    %1047 = vmatpush1.bf16.msra.mxu0 %v181
    %1048 = vmatprep.subr.bf16.mxu0 0
    %1049 = vmatpush1.bf16.msra.mxu0 0
    %1050 = vmatprep.subr.bf16.mxu0 0
    %1051 = vmatpush1.bf16.msra.mxu0 0
    %1052 = vmatprep.subr.bf16.mxu0 0
    %1053 = vmatpush1.bf16.msra.mxu0 0
    %1054 = vmatprep.subr.bf16.mxu0 0
    %1055 = vmatpush1.bf16.msra.mxu0 0
    %1056 = vmatprep.subr.bf16.mxu0 0
    %1057 = vmatpush1.bf16.msra.mxu0 0
    %1058 = vmatprep.subr.bf16.mxu0 0
    %1059 = vmatpush1.bf16.msra.mxu0 0
    %1060 = vmatprep.subr.bf16.mxu0 0
    %1061 = vmatpush1.bf16.msra.mxu0 0
    %1062 = vmatprep.subr.bf16.mxu0 0
    %1063 = vmatpush1.bf16.msra.mxu0 0
    %1064 = vmatprep.subr.bf16.mxu0 0
    %1065 = vmatpush1.bf16.msra.mxu0 0
    %1066 = vmatprep.subr.bf16.mxu0 0
    %1067 = vmatpush1.bf16.msra.mxu0 0
    %1068 = vmatprep.subr.bf16.mxu0 0
    %1069 = vmatpush1.bf16.msra.mxu0 0
    %1070 = vmatprep.subr.bf16.mxu0 0
    %1071 = vmatpush1.bf16.msra.mxu0 0
    %1072 = vmatprep.subr.bf16.mxu0 0
    %1073 = vmatpush1.bf16.msra.mxu0 0
    %1074 = vmatprep.subr.bf16.mxu0 0
    %1075 = vmatpush1.bf16.msra.mxu0 0
    %1076 = vmatprep.mubr.bf16.mxu0 0
    %1077 = vmatmul.mubr.bf16.gmra.mrb[0].mxu0 %v1000
    %v1078 = vpop.f32.mrb[0].mxu0
    %v1079 = vadd.f32 0.0, %v1078
    %v1080 = vpop.f32.mrb[0].mxu0
    %v1081 = vpop.f32.mrb[0].mxu0
    %v1082 = vpop.f32.mrb[0].mxu0
    %1083 = vdwg.mxu0
    %v1084 = vadd.f32 %v1043, %v1079
    %v1085 = vxor.u32 %v1084, 2147483648
    %v1086 = vmul.f32 %v1085, 1.442695
    %v1087 = vpow.pop %v1086
    %v1088 = vadd.f32 %v1087, 1.0
    %v1089 = vrcp.pop %v1088
    %v1090 = vmul.f32 1.0, %v1089
    %v1091 = vadd.f32 %v1079, %v240
    %1093 = vrot.lane.b32.xlu0 %v1091, 64
    %v1094 = vpop.permute.xlu0 %1093
    %v1096 = vmul.f32 %v1090, %v1094
    %1098 = vrot.lane.b32.xlu0 %v1096, 64
    %v1099 = vpop.permute.xlu0 %1098
    %v1101 = vadd.f32 %v1043, %v1099
    %v1102 = vtanh.pop %v1101
    %v1103 = vsub.f32 %v994, %v1102
    %1105 = vrot.lane.b32.xlu0 %v1103, 96
    %v1106 = vpop.permute.xlu0 %1105
    %v1108 = vmul.f32 %v1090, %v1106
    %1110 = vrot.lane.b32.xlu0 %v1108, 32
    %v1111 = vpop.permute.xlu0 %1110
    %v1113 = vadd.f32 %v1102, %v1111
    %v1114 = vpack.c.bf16 %v1113, %v1113
    %1116 = vrot.lane.b32.xlu0 %v1114, 64
    %v1117 = vpop.permute.xlu0 %1116
    %v1119 = vsel %vm72, %v1117, 0
    %1121 = vmatprep.subr.bf16.mxu0 0
    %1122 = vmatpush1.bf16.msra.mxu0 %v281
    %1123 = vmatprep.subr.bf16.mxu0 0
    %1124 = vmatpush1.bf16.msra.mxu0 %v282
    %1125 = vmatprep.subr.bf16.mxu0 0
    %1126 = vmatpush1.bf16.msra.mxu0 0
    %1127 = vmatprep.subr.bf16.mxu0 0
    %1128 = vmatpush1.bf16.msra.mxu0 0
    %1129 = vmatprep.subr.bf16.mxu0 0
    %1130 = vmatpush1.bf16.msra.mxu0 0
    %1131 = vmatprep.subr.bf16.mxu0 0
    %1132 = vmatpush1.bf16.msra.mxu0 0
    %1133 = vmatprep.subr.bf16.mxu0 0
    %1134 = vmatpush1.bf16.msra.mxu0 0
    %1135 = vmatprep.subr.bf16.mxu0 0
    %1136 = vmatpush1.bf16.msra.mxu0 0
    %1137 = vmatprep.subr.bf16.mxu0 0
    %1138 = vmatpush1.bf16.msra.mxu0 0
    %1139 = vmatprep.subr.bf16.mxu0 0
    %1140 = vmatpush1.bf16.msra.mxu0 0
    %1141 = vmatprep.subr.bf16.mxu0 0
    %1142 = vmatpush1.bf16.msra.mxu0 0
    %1143 = vmatprep.subr.bf16.mxu0 0
    %1144 = vmatpush1.bf16.msra.mxu0 0
    %1145 = vmatprep.subr.bf16.mxu0 0
    %1146 = vmatpush1.bf16.msra.mxu0 0
    %1147 = vmatprep.subr.bf16.mxu0 0
    %1148 = vmatpush1.bf16.msra.mxu0 0
    %1149 = vmatprep.subr.bf16.mxu0 0
    %1150 = vmatpush1.bf16.msra.mxu0 0
    %1151 = vmatprep.subr.bf16.mxu0 0
    %1152 = vmatpush1.bf16.msra.mxu0 0
    %1153 = vmatprep.mubr.bf16.mxu0 0
    %1154 = vmatmul.mubr.bf16.gmra.mrb[0].mxu0 %v1119
    %v1155 = vpop.f32.mrb[0].mxu0
    %v1156 = vadd.f32 %v269, %v1155
    %v1157 = vpop.f32.mrb[0].mxu0
    %v1158 = vpop.f32.mrb[0].mxu0
    %v1159 = vpop.f32.mrb[0].mxu0
    %1160 = vdwg.mxu0
    %1161 = vst.msk [vmem:[#allocation3 + $0x38] sm:$0xff] %vm150, %v1156
    %s1162 = scalar_lea.vmem [#allocation4], 16
    %v1163 = vld [vmem:[%s1162] sm:$0xf]
    %v1164 = vld [vmem:[%s1162 + $0x4] sm:$0xf]
    %v1165 = vld [vmem:[%s1162 + $0x8] sm:$0xf]
    %v1166 = vld [vmem:[%s1162 + $0xc] sm:$0xf]
    %v1167 = vld [vmem:[%s169] sm:$0x3]
    %s1168 = scalar_lea.vmem %s1, 32
    %v1169 = vld [vmem:[%s1168] sm:$0xf]
    %v1170 = vld [vmem:[%s1168 + $0x4] sm:$0xf]
    %v1171 = vld [vmem:[%s1168 + $0x8] sm:$0xf]
    %v1172 = vld [vmem:[%s1168 + $0xc] sm:$0xf]
    %s1173 = scalar_lea.vmem %s3, 4
    %v1174 = vld [vmem:[%s1173] sm:$0x3]
    %v1175 = vld [vmem:[#allocation3] sm:$0xff]
    %v1180 = vunpack.c.l.b16 %v1163
    %v1181 = vunpack.c.l.b16 %v1164
    %v1182 = vunpack.c.l.b16 %v1165
    %v1183 = vunpack.c.l.b16 %v1166
    %v1184 = vpack.c.b16 %v1181, %v1180
    %v1185 = vpack.c.b16 %v1183, %v1182
    %1188 = vmatprep.subr.bf16.mxu0 0
    %1189 = vmatpush1.bf16.msra.mxu0 %v1184
    %1190 = vmatprep.subr.bf16.mxu0 0
    %1191 = vmatpush1.bf16.msra.mxu0 %v1185
    %1192 = vmatprep.subr.bf16.mxu0 0
    %1193 = vmatpush1.bf16.msra.mxu0 0
    %1194 = vmatprep.subr.bf16.mxu0 0
    %1195 = vmatpush1.bf16.msra.mxu0 0
    %1196 = vmatprep.subr.bf16.mxu0 0
    %1197 = vmatpush1.bf16.msra.mxu0 0
    %1198 = vmatprep.subr.bf16.mxu0 0
    %1199 = vmatpush1.bf16.msra.mxu0 0
    %1200 = vmatprep.subr.bf16.mxu0 0
    %1201 = vmatpush1.bf16.msra.mxu0 0
    %1202 = vmatprep.subr.bf16.mxu0 0
    %1203 = vmatpush1.bf16.msra.mxu0 0
    %1204 = vmatprep.subr.bf16.mxu0 0
    %1205 = vmatpush1.bf16.msra.mxu0 0
    %1206 = vmatprep.subr.bf16.mxu0 0
    %1207 = vmatpush1.bf16.msra.mxu0 0
    %1208 = vmatprep.subr.bf16.mxu0 0
    %1209 = vmatpush1.bf16.msra.mxu0 0
    %1210 = vmatprep.subr.bf16.mxu0 0
    %1211 = vmatpush1.bf16.msra.mxu0 0
    %1212 = vmatprep.subr.bf16.mxu0 0
    %1213 = vmatpush1.bf16.msra.mxu0 0
    %1214 = vmatprep.subr.bf16.mxu0 0
    %1215 = vmatpush1.bf16.msra.mxu0 0
    %1216 = vmatprep.subr.bf16.mxu0 0
    %1217 = vmatpush1.bf16.msra.mxu0 0
    %1218 = vmatprep.subr.bf16.mxu0 0
    %1219 = vmatpush1.bf16.msra.mxu0 0
    %1220 = vmatprep.mubr.bf16.mxu0 0
    %1221 = vmatmul.mubr.bf16.gmra.mrb[0].mxu0 %v185
    %v1222 = vpop.f32.mrb[0].mxu0
    %v1223 = vadd.f32 0.0, %v1222
    %v1224 = vpop.f32.mrb[0].mxu0
    %v1225 = vpop.f32.mrb[0].mxu0
    %v1226 = vpop.f32.mrb[0].mxu0
    %1227 = vdwg.mxu0
    %v1228 = vadd.f32 %v1175, %v1223
    %v1229 = vxor.u32 %v1228, 2147483648
    %v1230 = vmul.f32 %v1229, 1.442695
    %v1231 = vpow.pop %v1230
    %v1232 = vadd.f32 %v1231, 1.0
    %v1233 = vrcp.pop %v1232
    %v1234 = vmul.f32 1.0, %v1233
    %v1235 = vlaneseq
    %v1236 = vshrl.u32 %v1235, 7
    %v1237 = vsub.s32 1, %v1236
    %v1238 = vrot.slane %v1167, %v1237
    %1240 = vrot.lane.b32.xlu0 %v1238, 64
    %v1241 = vpop.permute.xlu0 %1240
    %v1243 = vadd.f32 %v1223, %v1241
    %1245 = vrot.lane.b32.xlu0 %v1243, 64
    %v1246 = vpop.permute.xlu0 %1245
    %v1248 = vmul.f32 %v1234, %v1246
    %1250 = vrot.lane.b32.xlu0 %v1248, 64
    %v1251 = vpop.permute.xlu0 %1250
    %v1253 = vadd.f32 %v1175, %v1251
    %v1254 = vtanh.pop %v1253
    %v1255 = vsub.f32 0.0, %v1254
    %1257 = vrot.lane.b32.xlu0 %v1255, 96
    %v1258 = vpop.permute.xlu0 %1257
    %v1260 = vmul.f32 %v1234, %v1258
    %1262 = vrot.lane.b32.xlu0 %v1260, 32
    %v1263 = vpop.permute.xlu0 %1262
    %v1265 = vadd.f32 %v1254, %v1263
    %v1266 = vpack.c.bf16 %v1265, %v1265
    %v1267 = vlaneseq
    %v1268 = vshrl.u32 %v1267, 7
    %v1269 = vsub.s32 0, %v1268
    %v1270 = vrot.slane %v1174, %v1269
    %1272 = vrot.lane.b32.xlu0 %v1266, 64
    %v1273 = vpop.permute.xlu0 %1272
    %v1278 = vunpack.c.l.b16 %v1169
    %v1279 = vunpack.c.l.b16 %v1170
    %v1280 = vunpack.c.l.b16 %v1171
    %v1281 = vunpack.c.l.b16 %v1172
    %v1282 = vpack.c.b16 %v1279, %v1278
    %v1283 = vpack.c.b16 %v1281, %v1280
    %v1287 = vsel %vm72, %v1273, 0
    %1289 = vmatprep.subr.bf16.mxu0 0
    %1290 = vmatpush1.bf16.msra.mxu0 %v1282
    %1291 = vmatprep.subr.bf16.mxu0 0
    %1292 = vmatpush1.bf16.msra.mxu0 %v1283
    %1293 = vmatprep.subr.bf16.mxu0 0
    %1294 = vmatpush1.bf16.msra.mxu0 0
    %1295 = vmatprep.subr.bf16.mxu0 0
    %1296 = vmatpush1.bf16.msra.mxu0 0
    %1297 = vmatprep.subr.bf16.mxu0 0
    %1298 = vmatpush1.bf16.msra.mxu0 0
    %1299 = vmatprep.subr.bf16.mxu0 0
    %1300 = vmatpush1.bf16.msra.mxu0 0
    %1301 = vmatprep.subr.bf16.mxu0 0
    %1302 = vmatpush1.bf16.msra.mxu0 0
    %1303 = vmatprep.subr.bf16.mxu0 0
    %1304 = vmatpush1.bf16.msra.mxu0 0
    %1305 = vmatprep.subr.bf16.mxu0 0
    %1306 = vmatpush1.bf16.msra.mxu0 0
    %1307 = vmatprep.subr.bf16.mxu0 0
    %1308 = vmatpush1.bf16.msra.mxu0 0
    %1309 = vmatprep.subr.bf16.mxu0 0
    %1310 = vmatpush1.bf16.msra.mxu0 0
    %1311 = vmatprep.subr.bf16.mxu0 0
    %1312 = vmatpush1.bf16.msra.mxu0 0
    %1313 = vmatprep.subr.bf16.mxu0 0
    %1314 = vmatpush1.bf16.msra.mxu0 0
    %1315 = vmatprep.subr.bf16.mxu0 0
    %1316 = vmatpush1.bf16.msra.mxu0 0
    %1317 = vmatprep.subr.bf16.mxu0 0
    %1318 = vmatpush1.bf16.msra.mxu0 0
    %1319 = vmatprep.subr.bf16.mxu0 0
    %1320 = vmatpush1.bf16.msra.mxu0 0
    %1321 = vmatprep.mubr.bf16.mxu0 0
    %1322 = vmatmul.mubr.bf16.gmra.mrb[0].mxu0 %v1287
    %v1323 = vpop.f32.mrb[0].mxu0
    %v1324 = vadd.f32 %v1270, %v1323
    %v1325 = vpop.f32.mrb[0].mxu0
    %v1326 = vpop.f32.mrb[0].mxu0
    %v1327 = vpop.f32.mrb[0].mxu0
    %1328 = vdwg.mxu0
    %1329 = vst.msk [vmem:[#allocation2] sm:$0xff] %vm150, %v1324
    %v1330 = vld [vmem:[#allocation3 + $0x8] sm:$0xff]
    %1331 = vmatprep.subr.bf16.mxu0 0
    %1332 = vmatpush1.bf16.msra.mxu0 %v1184
    %1333 = vmatprep.subr.bf16.mxu0 0
    %1334 = vmatpush1.bf16.msra.mxu0 %v1185
    %1335 = vmatprep.subr.bf16.mxu0 0
    %1336 = vmatpush1.bf16.msra.mxu0 0
    %1337 = vmatprep.subr.bf16.mxu0 0
    %1338 = vmatpush1.bf16.msra.mxu0 0
    %1339 = vmatprep.subr.bf16.mxu0 0
    %1340 = vmatpush1.bf16.msra.mxu0 0
    %1341 = vmatprep.subr.bf16.mxu0 0
    %1342 = vmatpush1.bf16.msra.mxu0 0
    %1343 = vmatprep.subr.bf16.mxu0 0
    %1344 = vmatpush1.bf16.msra.mxu0 0
    %1345 = vmatprep.subr.bf16.mxu0 0
    %1346 = vmatpush1.bf16.msra.mxu0 0
    %1347 = vmatprep.subr.bf16.mxu0 0
    %1348 = vmatpush1.bf16.msra.mxu0 0
    %1349 = vmatprep.subr.bf16.mxu0 0
    %1350 = vmatpush1.bf16.msra.mxu0 0
    %1351 = vmatprep.subr.bf16.mxu0 0
    %1352 = vmatpush1.bf16.msra.mxu0 0
    %1353 = vmatprep.subr.bf16.mxu0 0
    %1354 = vmatpush1.bf16.msra.mxu0 0
    %1355 = vmatprep.subr.bf16.mxu0 0
    %1356 = vmatpush1.bf16.msra.mxu0 0
    %1357 = vmatprep.subr.bf16.mxu0 0
    %1358 = vmatpush1.bf16.msra.mxu0 0
    %1359 = vmatprep.subr.bf16.mxu0 0
    %1360 = vmatpush1.bf16.msra.mxu0 0
    %1361 = vmatprep.subr.bf16.mxu0 0
    %1362 = vmatpush1.bf16.msra.mxu0 0
    %1363 = vmatprep.mubr.bf16.mxu0 0
    %1364 = vmatmul.mubr.bf16.gmra.mrb[0].mxu0 %v1287
    %v1365 = vpop.f32.mrb[0].mxu0
    %v1366 = vadd.f32 0.0, %v1365
    %v1367 = vpop.f32.mrb[0].mxu0
    %v1368 = vpop.f32.mrb[0].mxu0
    %v1369 = vpop.f32.mrb[0].mxu0
    %1370 = vdwg.mxu0
    %v1371 = vadd.f32 %v1330, %v1366
    %v1372 = vxor.u32 %v1371, 2147483648
    %v1373 = vmul.f32 %v1372, 1.442695
    %v1374 = vpow.pop %v1373
    %v1375 = vadd.f32 %v1374, 1.0
    %v1376 = vrcp.pop %v1375
    %v1377 = vmul.f32 1.0, %v1376
    %v1378 = vadd.f32 %v1366, %v1241
    %1380 = vrot.lane.b32.xlu0 %v1378, 64
    %v1381 = vpop.permute.xlu0 %1380
    %v1383 = vmul.f32 %v1377, %v1381
    %1385 = vrot.lane.b32.xlu0 %v1383, 64
    %v1386 = vpop.permute.xlu0 %1385
    %v1388 = vadd.f32 %v1330, %v1386
    %v1389 = vtanh.pop %v1388
    %v1390 = vsub.f32 %v1265, %v1389
    %1392 = vrot.lane.b32.xlu0 %v1390, 96
    %v1393 = vpop.permute.xlu0 %1392
    %v1395 = vmul.f32 %v1377, %v1393
    %1397 = vrot.lane.b32.xlu0 %v1395, 32
    %v1398 = vpop.permute.xlu0 %1397
    %v1400 = vadd.f32 %v1389, %v1398
    %v1401 = vpack.c.bf16 %v1400, %v1400
    %1403 = vrot.lane.b32.xlu0 %v1401, 64
    %v1404 = vpop.permute.xlu0 %1403
    %v1406 = vsel %vm72, %v1404, 0
    %1408 = vmatprep.subr.bf16.mxu0 0
    %1409 = vmatpush1.bf16.msra.mxu0 %v1282
    %1410 = vmatprep.subr.bf16.mxu0 0
    %1411 = vmatpush1.bf16.msra.mxu0 %v1283
    %1412 = vmatprep.subr.bf16.mxu0 0
    %1413 = vmatpush1.bf16.msra.mxu0 0
    %1414 = vmatprep.subr.bf16.mxu0 0
    %1415 = vmatpush1.bf16.msra.mxu0 0
    %1416 = vmatprep.subr.bf16.mxu0 0
    %1417 = vmatpush1.bf16.msra.mxu0 0
    %1418 = vmatprep.subr.bf16.mxu0 0
    %1419 = vmatpush1.bf16.msra.mxu0 0
    %1420 = vmatprep.subr.bf16.mxu0 0
    %1421 = vmatpush1.bf16.msra.mxu0 0
    %1422 = vmatprep.subr.bf16.mxu0 0
    %1423 = vmatpush1.bf16.msra.mxu0 0
    %1424 = vmatprep.subr.bf16.mxu0 0
    %1425 = vmatpush1.bf16.msra.mxu0 0
    %1426 = vmatprep.subr.bf16.mxu0 0
    %1427 = vmatpush1.bf16.msra.mxu0 0
    %1428 = vmatprep.subr.bf16.mxu0 0
    %1429 = vmatpush1.bf16.msra.mxu0 0
    %1430 = vmatprep.subr.bf16.mxu0 0
    %1431 = vmatpush1.bf16.msra.mxu0 0
    %1432 = vmatprep.subr.bf16.mxu0 0
    %1433 = vmatpush1.bf16.msra.mxu0 0
    %1434 = vmatprep.subr.bf16.mxu0 0
    %1435 = vmatpush1.bf16.msra.mxu0 0
    %1436 = vmatprep.subr.bf16.mxu0 0
    %1437 = vmatpush1.bf16.msra.mxu0 0
    %1438 = vmatprep.subr.bf16.mxu0 0
    %1439 = vmatpush1.bf16.msra.mxu0 0
    %1440 = vmatprep.mubr.bf16.mxu0 0
    %1441 = vmatmul.mubr.bf16.gmra.mrb[0].mxu0 %v1406
    %v1442 = vpop.f32.mrb[0].mxu0
    %v1443 = vadd.f32 %v1270, %v1442
    %v1444 = vpop.f32.mrb[0].mxu0
    %v1445 = vpop.f32.mrb[0].mxu0
    %v1446 = vpop.f32.mrb[0].mxu0
    %1447 = vdwg.mxu0
    %1448 = vst.msk [vmem:[#allocation2 + $0x8] sm:$0xff] %vm150, %v1443
    %v1449 = vld [vmem:[#allocation3 + $0x10] sm:$0xff]
    %1450 = vmatprep.subr.bf16.mxu0 0
    %1451 = vmatpush1.bf16.msra.mxu0 %v1184
    %1452 = vmatprep.subr.bf16.mxu0 0
    %1453 = vmatpush1.bf16.msra.mxu0 %v1185
    %1454 = vmatprep.subr.bf16.mxu0 0
    %1455 = vmatpush1.bf16.msra.mxu0 0
    %1456 = vmatprep.subr.bf16.mxu0 0
    %1457 = vmatpush1.bf16.msra.mxu0 0
    %1458 = vmatprep.subr.bf16.mxu0 0
    %1459 = vmatpush1.bf16.msra.mxu0 0
    %1460 = vmatprep.subr.bf16.mxu0 0
    %1461 = vmatpush1.bf16.msra.mxu0 0
    %1462 = vmatprep.subr.bf16.mxu0 0
    %1463 = vmatpush1.bf16.msra.mxu0 0
    %1464 = vmatprep.subr.bf16.mxu0 0
    %1465 = vmatpush1.bf16.msra.mxu0 0
    %1466 = vmatprep.subr.bf16.mxu0 0
    %1467 = vmatpush1.bf16.msra.mxu0 0
    %1468 = vmatprep.subr.bf16.mxu0 0
    %1469 = vmatpush1.bf16.msra.mxu0 0
    %1470 = vmatprep.subr.bf16.mxu0 0
    %1471 = vmatpush1.bf16.msra.mxu0 0
    %1472 = vmatprep.subr.bf16.mxu0 0
    %1473 = vmatpush1.bf16.msra.mxu0 0
    %1474 = vmatprep.subr.bf16.mxu0 0
    %1475 = vmatpush1.bf16.msra.mxu0 0
    %1476 = vmatprep.subr.bf16.mxu0 0
    %1477 = vmatpush1.bf16.msra.mxu0 0
    %1478 = vmatprep.subr.bf16.mxu0 0
    %1479 = vmatpush1.bf16.msra.mxu0 0
    %1480 = vmatprep.subr.bf16.mxu0 0
    %1481 = vmatpush1.bf16.msra.mxu0 0
    %1482 = vmatprep.mubr.bf16.mxu0 0
    %1483 = vmatmul.mubr.bf16.gmra.mrb[0].mxu0 %v1406
    %v1484 = vpop.f32.mrb[0].mxu0
    %v1485 = vadd.f32 0.0, %v1484
    %v1486 = vpop.f32.mrb[0].mxu0
    %v1487 = vpop.f32.mrb[0].mxu0
    %v1488 = vpop.f32.mrb[0].mxu0
    %1489 = vdwg.mxu0
    %v1490 = vadd.f32 %v1449, %v1485
    %v1491 = vxor.u32 %v1490, 2147483648
    %v1492 = vmul.f32 %v1491, 1.442695
    %v1493 = vpow.pop %v1492
    %v1494 = vadd.f32 %v1493, 1.0
    %v1495 = vrcp.pop %v1494
    %v1496 = vmul.f32 1.0, %v1495
    %v1497 = vadd.f32 %v1485, %v1241
    %1499 = vrot.lane.b32.xlu0 %v1497, 64
    %v1500 = vpop.permute.xlu0 %1499
    %v1502 = vmul.f32 %v1496, %v1500
    %1504 = vrot.lane.b32.xlu0 %v1502, 64
    %v1505 = vpop.permute.xlu0 %1504
    %v1507 = vadd.f32 %v1449, %v1505
    %v1508 = vtanh.pop %v1507
    %v1509 = vsub.f32 %v1400, %v1508
    %1511 = vrot.lane.b32.xlu0 %v1509, 96
    %v1512 = vpop.permute.xlu0 %1511
    %v1514 = vmul.f32 %v1496, %v1512
    %1516 = vrot.lane.b32.xlu0 %v1514, 32
    %v1517 = vpop.permute.xlu0 %1516
    %v1519 = vadd.f32 %v1508, %v1517
    %v1520 = vpack.c.bf16 %v1519, %v1519
    %1522 = vrot.lane.b32.xlu0 %v1520, 64
    %v1523 = vpop.permute.xlu0 %1522
    %v1525 = vsel %vm72, %v1523, 0
    %1527 = vmatprep.subr.bf16.mxu0 0
    %1528 = vmatpush1.bf16.msra.mxu0 %v1282
    %1529 = vmatprep.subr.bf16.mxu0 0
    %1530 = vmatpush1.bf16.msra.mxu0 %v1283
    %1531 = vmatprep.subr.bf16.mxu0 0
    %1532 = vmatpush1.bf16.msra.mxu0 0
    %1533 = vmatprep.subr.bf16.mxu0 0
    %1534 = vmatpush1.bf16.msra.mxu0 0
    %1535 = vmatprep.subr.bf16.mxu0 0
    %1536 = vmatpush1.bf16.msra.mxu0 0
    %1537 = vmatprep.subr.bf16.mxu0 0
    %1538 = vmatpush1.bf16.msra.mxu0 0
    %1539 = vmatprep.subr.bf16.mxu0 0
    %1540 = vmatpush1.bf16.msra.mxu0 0
    %1541 = vmatprep.subr.bf16.mxu0 0
    %1542 = vmatpush1.bf16.msra.mxu0 0
    %1543 = vmatprep.subr.bf16.mxu0 0
    %1544 = vmatpush1.bf16.msra.mxu0 0
    %1545 = vmatprep.subr.bf16.mxu0 0
    %1546 = vmatpush1.bf16.msra.mxu0 0
    %1547 = vmatprep.subr.bf16.mxu0 0
    %1548 = vmatpush1.bf16.msra.mxu0 0
    %1549 = vmatprep.subr.bf16.mxu0 0
    %1550 = vmatpush1.bf16.msra.mxu0 0
    %1551 = vmatprep.subr.bf16.mxu0 0
    %1552 = vmatpush1.bf16.msra.mxu0 0
    %1553 = vmatprep.subr.bf16.mxu0 0
    %1554 = vmatpush1.bf16.msra.mxu0 0
    %1555 = vmatprep.subr.bf16.mxu0 0
    %1556 = vmatpush1.bf16.msra.mxu0 0
    %1557 = vmatprep.subr.bf16.mxu0 0
    %1558 = vmatpush1.bf16.msra.mxu0 0
    %1559 = vmatprep.mubr.bf16.mxu0 0
    %1560 = vmatmul.mubr.bf16.gmra.mrb[0].mxu0 %v1525
    %v1561 = vpop.f32.mrb[0].mxu0
    %v1562 = vadd.f32 %v1270, %v1561
    %v1563 = vpop.f32.mrb[0].mxu0
    %v1564 = vpop.f32.mrb[0].mxu0
    %v1565 = vpop.f32.mrb[0].mxu0
    %1566 = vdwg.mxu0
    %1567 = vst.msk [vmem:[#allocation2 + $0x10] sm:$0xff] %vm150, %v1562
    %v1568 = vld [vmem:[#allocation3 + $0x18] sm:$0xff]
    %1569 = vmatprep.subr.bf16.mxu0 0
    %1570 = vmatpush1.bf16.msra.mxu0 %v1184
    %1571 = vmatprep.subr.bf16.mxu0 0
    %1572 = vmatpush1.bf16.msra.mxu0 %v1185
    %1573 = vmatprep.subr.bf16.mxu0 0
    %1574 = vmatpush1.bf16.msra.mxu0 0
    %1575 = vmatprep.subr.bf16.mxu0 0
    %1576 = vmatpush1.bf16.msra.mxu0 0
    %1577 = vmatprep.subr.bf16.mxu0 0
    %1578 = vmatpush1.bf16.msra.mxu0 0
    %1579 = vmatprep.subr.bf16.mxu0 0
    %1580 = vmatpush1.bf16.msra.mxu0 0
    %1581 = vmatprep.subr.bf16.mxu0 0
    %1582 = vmatpush1.bf16.msra.mxu0 0
    %1583 = vmatprep.subr.bf16.mxu0 0
    %1584 = vmatpush1.bf16.msra.mxu0 0
    %1585 = vmatprep.subr.bf16.mxu0 0
    %1586 = vmatpush1.bf16.msra.mxu0 0
    %1587 = vmatprep.subr.bf16.mxu0 0
    %1588 = vmatpush1.bf16.msra.mxu0 0
    %1589 = vmatprep.subr.bf16.mxu0 0
    %1590 = vmatpush1.bf16.msra.mxu0 0
    %1591 = vmatprep.subr.bf16.mxu0 0
    %1592 = vmatpush1.bf16.msra.mxu0 0
    %1593 = vmatprep.subr.bf16.mxu0 0
    %1594 = vmatpush1.bf16.msra.mxu0 0
    %1595 = vmatprep.subr.bf16.mxu0 0
    %1596 = vmatpush1.bf16.msra.mxu0 0
    %1597 = vmatprep.subr.bf16.mxu0 0
    %1598 = vmatpush1.bf16.msra.mxu0 0
    %1599 = vmatprep.subr.bf16.mxu0 0
    %1600 = vmatpush1.bf16.msra.mxu0 0
    %1601 = vmatprep.mubr.bf16.mxu0 0
    %1602 = vmatmul.mubr.bf16.gmra.mrb[0].mxu0 %v1525
    %v1603 = vpop.f32.mrb[0].mxu0
    %v1604 = vadd.f32 0.0, %v1603
    %v1605 = vpop.f32.mrb[0].mxu0
    %v1606 = vpop.f32.mrb[0].mxu0
    %v1607 = vpop.f32.mrb[0].mxu0
    %1608 = vdwg.mxu0
    %v1609 = vadd.f32 %v1568, %v1604
    %v1610 = vxor.u32 %v1609, 2147483648
    %v1611 = vmul.f32 %v1610, 1.442695
    %v1612 = vpow.pop %v1611
    %v1613 = vadd.f32 %v1612, 1.0
    %v1614 = vrcp.pop %v1613
    %v1615 = vmul.f32 1.0, %v1614
    %v1616 = vadd.f32 %v1604, %v1241
    %1618 = vrot.lane.b32.xlu0 %v1616, 64
    %v1619 = vpop.permute.xlu0 %1618
    %v1621 = vmul.f32 %v1615, %v1619
    %1623 = vrot.lane.b32.xlu0 %v1621, 64
    %v1624 = vpop.permute.xlu0 %1623
    %v1626 = vadd.f32 %v1568, %v1624
    %v1627 = vtanh.pop %v1626
    %v1628 = vsub.f32 %v1519, %v1627
    %1630 = vrot.lane.b32.xlu0 %v1628, 96
    %v1631 = vpop.permute.xlu0 %1630
    %v1633 = vmul.f32 %v1615, %v1631
    %1635 = vrot.lane.b32.xlu0 %v1633, 32
    %v1636 = vpop.permute.xlu0 %1635
    %v1638 = vadd.f32 %v1627, %v1636
    %v1639 = vpack.c.bf16 %v1638, %v1638
    %1641 = vrot.lane.b32.xlu0 %v1639, 64
    %v1642 = vpop.permute.xlu0 %1641
    %v1644 = vsel %vm72, %v1642, 0
    %1646 = vmatprep.subr.bf16.mxu0 0
    %1647 = vmatpush1.bf16.msra.mxu0 %v1282
    %1648 = vmatprep.subr.bf16.mxu0 0
    %1649 = vmatpush1.bf16.msra.mxu0 %v1283
    %1650 = vmatprep.subr.bf16.mxu0 0
    %1651 = vmatpush1.bf16.msra.mxu0 0
    %1652 = vmatprep.subr.bf16.mxu0 0
    %1653 = vmatpush1.bf16.msra.mxu0 0
    %1654 = vmatprep.subr.bf16.mxu0 0
    %1655 = vmatpush1.bf16.msra.mxu0 0
    %1656 = vmatprep.subr.bf16.mxu0 0
    %1657 = vmatpush1.bf16.msra.mxu0 0
    %1658 = vmatprep.subr.bf16.mxu0 0
    %1659 = vmatpush1.bf16.msra.mxu0 0
    %1660 = vmatprep.subr.bf16.mxu0 0
    %1661 = vmatpush1.bf16.msra.mxu0 0
    %1662 = vmatprep.subr.bf16.mxu0 0
    %1663 = vmatpush1.bf16.msra.mxu0 0
    %1664 = vmatprep.subr.bf16.mxu0 0
    %1665 = vmatpush1.bf16.msra.mxu0 0
    %1666 = vmatprep.subr.bf16.mxu0 0
    %1667 = vmatpush1.bf16.msra.mxu0 0
    %1668 = vmatprep.subr.bf16.mxu0 0
    %1669 = vmatpush1.bf16.msra.mxu0 0
    %1670 = vmatprep.subr.bf16.mxu0 0
    %1671 = vmatpush1.bf16.msra.mxu0 0
    %1672 = vmatprep.subr.bf16.mxu0 0
    %1673 = vmatpush1.bf16.msra.mxu0 0
    %1674 = vmatprep.subr.bf16.mxu0 0
    %1675 = vmatpush1.bf16.msra.mxu0 0
    %1676 = vmatprep.subr.bf16.mxu0 0
    %1677 = vmatpush1.bf16.msra.mxu0 0
    %1678 = vmatprep.mubr.bf16.mxu0 0
    %1679 = vmatmul.mubr.bf16.gmra.mrb[0].mxu0 %v1644
    %v1680 = vpop.f32.mrb[0].mxu0
    %v1681 = vadd.f32 %v1270, %v1680
    %v1682 = vpop.f32.mrb[0].mxu0
    %v1683 = vpop.f32.mrb[0].mxu0
    %v1684 = vpop.f32.mrb[0].mxu0
    %1685 = vdwg.mxu0
    %1686 = vst.msk [vmem:[#allocation2 + $0x18] sm:$0xff] %vm150, %v1681
    %v1687 = vld [vmem:[#allocation3 + $0x20] sm:$0xff]
    %1688 = vmatprep.subr.bf16.mxu0 0
    %1689 = vmatpush1.bf16.msra.mxu0 %v1184
    %1690 = vmatprep.subr.bf16.mxu0 0
    %1691 = vmatpush1.bf16.msra.mxu0 %v1185
    %1692 = vmatprep.subr.bf16.mxu0 0
    %1693 = vmatpush1.bf16.msra.mxu0 0
    %1694 = vmatprep.subr.bf16.mxu0 0
    %1695 = vmatpush1.bf16.msra.mxu0 0
    %1696 = vmatprep.subr.bf16.mxu0 0
    %1697 = vmatpush1.bf16.msra.mxu0 0
    %1698 = vmatprep.subr.bf16.mxu0 0
    %1699 = vmatpush1.bf16.msra.mxu0 0
    %1700 = vmatprep.subr.bf16.mxu0 0
    %1701 = vmatpush1.bf16.msra.mxu0 0
    %1702 = vmatprep.subr.bf16.mxu0 0
    %1703 = vmatpush1.bf16.msra.mxu0 0
    %1704 = vmatprep.subr.bf16.mxu0 0
    %1705 = vmatpush1.bf16.msra.mxu0 0
    %1706 = vmatprep.subr.bf16.mxu0 0
    %1707 = vmatpush1.bf16.msra.mxu0 0
    %1708 = vmatprep.subr.bf16.mxu0 0
    %1709 = vmatpush1.bf16.msra.mxu0 0
    %1710 = vmatprep.subr.bf16.mxu0 0
    %1711 = vmatpush1.bf16.msra.mxu0 0
    %1712 = vmatprep.subr.bf16.mxu0 0
    %1713 = vmatpush1.bf16.msra.mxu0 0
    %1714 = vmatprep.subr.bf16.mxu0 0
    %1715 = vmatpush1.bf16.msra.mxu0 0
    %1716 = vmatprep.subr.bf16.mxu0 0
    %1717 = vmatpush1.bf16.msra.mxu0 0
    %1718 = vmatprep.subr.bf16.mxu0 0
    %1719 = vmatpush1.bf16.msra.mxu0 0
    %1720 = vmatprep.mubr.bf16.mxu0 0
    %1721 = vmatmul.mubr.bf16.gmra.mrb[0].mxu0 %v1644
    %v1722 = vpop.f32.mrb[0].mxu0
    %v1723 = vadd.f32 0.0, %v1722
    %v1724 = vpop.f32.mrb[0].mxu0
    %v1725 = vpop.f32.mrb[0].mxu0
    %v1726 = vpop.f32.mrb[0].mxu0
    %1727 = vdwg.mxu0
    %v1728 = vadd.f32 %v1687, %v1723
    %v1729 = vxor.u32 %v1728, 2147483648
    %v1730 = vmul.f32 %v1729, 1.442695
    %v1731 = vpow.pop %v1730
    %v1732 = vadd.f32 %v1731, 1.0
    %v1733 = vrcp.pop %v1732
    %v1734 = vmul.f32 1.0, %v1733
    %v1735 = vadd.f32 %v1723, %v1241
    %1737 = vrot.lane.b32.xlu0 %v1735, 64
    %v1738 = vpop.permute.xlu0 %1737
    %v1740 = vmul.f32 %v1734, %v1738
    %1742 = vrot.lane.b32.xlu0 %v1740, 64
    %v1743 = vpop.permute.xlu0 %1742
    %v1745 = vadd.f32 %v1687, %v1743
    %v1746 = vtanh.pop %v1745
    %v1747 = vsub.f32 %v1638, %v1746
    %1749 = vrot.lane.b32.xlu0 %v1747, 96
    %v1750 = vpop.permute.xlu0 %1749
    %v1752 = vmul.f32 %v1734, %v1750
    %1754 = vrot.lane.b32.xlu0 %v1752, 32
    %v1755 = vpop.permute.xlu0 %1754
    %v1757 = vadd.f32 %v1746, %v1755
    %v1758 = vpack.c.bf16 %v1757, %v1757
    %1760 = vrot.lane.b32.xlu0 %v1758, 64
    %v1761 = vpop.permute.xlu0 %1760
    %v1763 = vsel %vm72, %v1761, 0
    %1765 = vmatprep.subr.bf16.mxu0 0
    %1766 = vmatpush1.bf16.msra.mxu0 %v1282
    %1767 = vmatprep.subr.bf16.mxu0 0
    %1768 = vmatpush1.bf16.msra.mxu0 %v1283
    %1769 = vmatprep.subr.bf16.mxu0 0
    %1770 = vmatpush1.bf16.msra.mxu0 0
    %1771 = vmatprep.subr.bf16.mxu0 0
    %1772 = vmatpush1.bf16.msra.mxu0 0
    %1773 = vmatprep.subr.bf16.mxu0 0
    %1774 = vmatpush1.bf16.msra.mxu0 0
    %1775 = vmatprep.subr.bf16.mxu0 0
    %1776 = vmatpush1.bf16.msra.mxu0 0
    %1777 = vmatprep.subr.bf16.mxu0 0
    %1778 = vmatpush1.bf16.msra.mxu0 0
    %1779 = vmatprep.subr.bf16.mxu0 0
    %1780 = vmatpush1.bf16.msra.mxu0 0
    %1781 = vmatprep.subr.bf16.mxu0 0
    %1782 = vmatpush1.bf16.msra.mxu0 0
    %1783 = vmatprep.subr.bf16.mxu0 0
    %1784 = vmatpush1.bf16.msra.mxu0 0
    %1785 = vmatprep.subr.bf16.mxu0 0
    %1786 = vmatpush1.bf16.msra.mxu0 0
    %1787 = vmatprep.subr.bf16.mxu0 0
    %1788 = vmatpush1.bf16.msra.mxu0 0
    %1789 = vmatprep.subr.bf16.mxu0 0
    %1790 = vmatpush1.bf16.msra.mxu0 0
    %1791 = vmatprep.subr.bf16.mxu0 0
    %1792 = vmatpush1.bf16.msra.mxu0 0
    %1793 = vmatprep.subr.bf16.mxu0 0
    %1794 = vmatpush1.bf16.msra.mxu0 0
    %1795 = vmatprep.subr.bf16.mxu0 0
    %1796 = vmatpush1.bf16.msra.mxu0 0
    %1797 = vmatprep.mubr.bf16.mxu0 0
    %1798 = vmatmul.mubr.bf16.gmra.mrb[0].mxu0 %v1763
    %v1799 = vpop.f32.mrb[0].mxu0
    %v1800 = vadd.f32 %v1270, %v1799
    %v1801 = vpop.f32.mrb[0].mxu0
    %v1802 = vpop.f32.mrb[0].mxu0
    %v1803 = vpop.f32.mrb[0].mxu0
    %1804 = vdwg.mxu0
    %1805 = vst.msk [vmem:[#allocation2 + $0x20] sm:$0xff] %vm150, %v1800
    %v1806 = vld [vmem:[#allocation3 + $0x28] sm:$0xff]
    %1807 = vmatprep.subr.bf16.mxu0 0
    %1808 = vmatpush1.bf16.msra.mxu0 %v1184
    %1809 = vmatprep.subr.bf16.mxu0 0
    %1810 = vmatpush1.bf16.msra.mxu0 %v1185
    %1811 = vmatprep.subr.bf16.mxu0 0
    %1812 = vmatpush1.bf16.msra.mxu0 0
    %1813 = vmatprep.subr.bf16.mxu0 0
    %1814 = vmatpush1.bf16.msra.mxu0 0
    %1815 = vmatprep.subr.bf16.mxu0 0
    %1816 = vmatpush1.bf16.msra.mxu0 0
    %1817 = vmatprep.subr.bf16.mxu0 0
    %1818 = vmatpush1.bf16.msra.mxu0 0
    %1819 = vmatprep.subr.bf16.mxu0 0
    %1820 = vmatpush1.bf16.msra.mxu0 0
    %1821 = vmatprep.subr.bf16.mxu0 0
    %1822 = vmatpush1.bf16.msra.mxu0 0
    %1823 = vmatprep.subr.bf16.mxu0 0
    %1824 = vmatpush1.bf16.msra.mxu0 0
    %1825 = vmatprep.subr.bf16.mxu0 0
    %1826 = vmatpush1.bf16.msra.mxu0 0
    %1827 = vmatprep.subr.bf16.mxu0 0
    %1828 = vmatpush1.bf16.msra.mxu0 0
    %1829 = vmatprep.subr.bf16.mxu0 0
    %1830 = vmatpush1.bf16.msra.mxu0 0
    %1831 = vmatprep.subr.bf16.mxu0 0
    %1832 = vmatpush1.bf16.msra.mxu0 0
    %1833 = vmatprep.subr.bf16.mxu0 0
    %1834 = vmatpush1.bf16.msra.mxu0 0
    %1835 = vmatprep.subr.bf16.mxu0 0
    %1836 = vmatpush1.bf16.msra.mxu0 0
    %1837 = vmatprep.subr.bf16.mxu0 0
    %1838 = vmatpush1.bf16.msra.mxu0 0
    %1839 = vmatprep.mubr.bf16.mxu0 0
    %1840 = vmatmul.mubr.bf16.gmra.mrb[0].mxu0 %v1763
    %v1841 = vpop.f32.mrb[0].mxu0
    %v1842 = vadd.f32 0.0, %v1841
    %v1843 = vpop.f32.mrb[0].mxu0
    %v1844 = vpop.f32.mrb[0].mxu0
    %v1845 = vpop.f32.mrb[0].mxu0
    %1846 = vdwg.mxu0
    %v1847 = vadd.f32 %v1806, %v1842
    %v1848 = vxor.u32 %v1847, 2147483648
    %v1849 = vmul.f32 %v1848, 1.442695
    %v1850 = vpow.pop %v1849
    %v1851 = vadd.f32 %v1850, 1.0
    %v1852 = vrcp.pop %v1851
    %v1853 = vmul.f32 1.0, %v1852
    %v1854 = vadd.f32 %v1842, %v1241
    %1856 = vrot.lane.b32.xlu0 %v1854, 64
    %v1857 = vpop.permute.xlu0 %1856
    %v1859 = vmul.f32 %v1853, %v1857
    %1861 = vrot.lane.b32.xlu0 %v1859, 64
    %v1862 = vpop.permute.xlu0 %1861
    %v1864 = vadd.f32 %v1806, %v1862
    %v1865 = vtanh.pop %v1864
    %v1866 = vsub.f32 %v1757, %v1865
    %1868 = vrot.lane.b32.xlu0 %v1866, 96
    %v1869 = vpop.permute.xlu0 %1868
    %v1871 = vmul.f32 %v1853, %v1869
    %1873 = vrot.lane.b32.xlu0 %v1871, 32
    %v1874 = vpop.permute.xlu0 %1873
    %v1876 = vadd.f32 %v1865, %v1874
    %v1877 = vpack.c.bf16 %v1876, %v1876
    %1879 = vrot.lane.b32.xlu0 %v1877, 64
    %v1880 = vpop.permute.xlu0 %1879
    %v1882 = vsel %vm72, %v1880, 0
    %1884 = vmatprep.subr.bf16.mxu0 0
    %1885 = vmatpush1.bf16.msra.mxu0 %v1282
    %1886 = vmatprep.subr.bf16.mxu0 0
    %1887 = vmatpush1.bf16.msra.mxu0 %v1283
    %1888 = vmatprep.subr.bf16.mxu0 0
    %1889 = vmatpush1.bf16.msra.mxu0 0
    %1890 = vmatprep.subr.bf16.mxu0 0
    %1891 = vmatpush1.bf16.msra.mxu0 0
    %1892 = vmatprep.subr.bf16.mxu0 0
    %1893 = vmatpush1.bf16.msra.mxu0 0
    %1894 = vmatprep.subr.bf16.mxu0 0
    %1895 = vmatpush1.bf16.msra.mxu0 0
    %1896 = vmatprep.subr.bf16.mxu0 0
    %1897 = vmatpush1.bf16.msra.mxu0 0
    %1898 = vmatprep.subr.bf16.mxu0 0
    %1899 = vmatpush1.bf16.msra.mxu0 0
    %1900 = vmatprep.subr.bf16.mxu0 0
    %1901 = vmatpush1.bf16.msra.mxu0 0
    %1902 = vmatprep.subr.bf16.mxu0 0
    %1903 = vmatpush1.bf16.msra.mxu0 0
    %1904 = vmatprep.subr.bf16.mxu0 0
    %1905 = vmatpush1.bf16.msra.mxu0 0
    %1906 = vmatprep.subr.bf16.mxu0 0
    %1907 = vmatpush1.bf16.msra.mxu0 0
    %1908 = vmatprep.subr.bf16.mxu0 0
    %1909 = vmatpush1.bf16.msra.mxu0 0
    %1910 = vmatprep.subr.bf16.mxu0 0
    %1911 = vmatpush1.bf16.msra.mxu0 0
    %1912 = vmatprep.subr.bf16.mxu0 0
    %1913 = vmatpush1.bf16.msra.mxu0 0
    %1914 = vmatprep.subr.bf16.mxu0 0
    %1915 = vmatpush1.bf16.msra.mxu0 0
    %1916 = vmatprep.mubr.bf16.mxu0 0
    %1917 = vmatmul.mubr.bf16.gmra.mrb[0].mxu0 %v1882
    %v1918 = vpop.f32.mrb[0].mxu0
    %v1919 = vadd.f32 %v1270, %v1918
    %v1920 = vpop.f32.mrb[0].mxu0
    %v1921 = vpop.f32.mrb[0].mxu0
    %v1922 = vpop.f32.mrb[0].mxu0
    %1923 = vdwg.mxu0
    %1924 = vst.msk [vmem:[#allocation2 + $0x28] sm:$0xff] %vm150, %v1919
    %v1925 = vld [vmem:[#allocation3 + $0x30] sm:$0xff]
    %1926 = vmatprep.subr.bf16.mxu0 0
    %1927 = vmatpush1.bf16.msra.mxu0 %v1184
    %1928 = vmatprep.subr.bf16.mxu0 0
    %1929 = vmatpush1.bf16.msra.mxu0 %v1185
    %1930 = vmatprep.subr.bf16.mxu0 0
    %1931 = vmatpush1.bf16.msra.mxu0 0
    %1932 = vmatprep.subr.bf16.mxu0 0
    %1933 = vmatpush1.bf16.msra.mxu0 0
    %1934 = vmatprep.subr.bf16.mxu0 0
    %1935 = vmatpush1.bf16.msra.mxu0 0
    %1936 = vmatprep.subr.bf16.mxu0 0
    %1937 = vmatpush1.bf16.msra.mxu0 0
    %1938 = vmatprep.subr.bf16.mxu0 0
    %1939 = vmatpush1.bf16.msra.mxu0 0
    %1940 = vmatprep.subr.bf16.mxu0 0
    %1941 = vmatpush1.bf16.msra.mxu0 0
    %1942 = vmatprep.subr.bf16.mxu0 0
    %1943 = vmatpush1.bf16.msra.mxu0 0
    %1944 = vmatprep.subr.bf16.mxu0 0
    %1945 = vmatpush1.bf16.msra.mxu0 0
    %1946 = vmatprep.subr.bf16.mxu0 0
    %1947 = vmatpush1.bf16.msra.mxu0 0
    %1948 = vmatprep.subr.bf16.mxu0 0
    %1949 = vmatpush1.bf16.msra.mxu0 0
    %1950 = vmatprep.subr.bf16.mxu0 0
    %1951 = vmatpush1.bf16.msra.mxu0 0
    %1952 = vmatprep.subr.bf16.mxu0 0
    %1953 = vmatpush1.bf16.msra.mxu0 0
    %1954 = vmatprep.subr.bf16.mxu0 0
    %1955 = vmatpush1.bf16.msra.mxu0 0
    %1956 = vmatprep.subr.bf16.mxu0 0
    %1957 = vmatpush1.bf16.msra.mxu0 0
    %1958 = vmatprep.mubr.bf16.mxu0 0
    %1959 = vmatmul.mubr.bf16.gmra.mrb[0].mxu0 %v1882
    %v1960 = vpop.f32.mrb[0].mxu0
    %v1961 = vadd.f32 0.0, %v1960
    %v1962 = vpop.f32.mrb[0].mxu0
    %v1963 = vpop.f32.mrb[0].mxu0
    %v1964 = vpop.f32.mrb[0].mxu0
    %1965 = vdwg.mxu0
    %v1966 = vadd.f32 %v1925, %v1961
    %v1967 = vxor.u32 %v1966, 2147483648
    %v1968 = vmul.f32 %v1967, 1.442695
    %v1969 = vpow.pop %v1968
    %v1970 = vadd.f32 %v1969, 1.0
    %v1971 = vrcp.pop %v1970
    %v1972 = vmul.f32 1.0, %v1971
    %v1973 = vadd.f32 %v1961, %v1241
    %1975 = vrot.lane.b32.xlu0 %v1973, 64
    %v1976 = vpop.permute.xlu0 %1975
    %v1978 = vmul.f32 %v1972, %v1976
    %1980 = vrot.lane.b32.xlu0 %v1978, 64
    %v1981 = vpop.permute.xlu0 %1980
    %v1983 = vadd.f32 %v1925, %v1981
    %v1984 = vtanh.pop %v1983
    %v1985 = vsub.f32 %v1876, %v1984
    %1987 = vrot.lane.b32.xlu0 %v1985, 96
    %v1988 = vpop.permute.xlu0 %1987
    %v1990 = vmul.f32 %v1972, %v1988
    %1992 = vrot.lane.b32.xlu0 %v1990, 32
    %v1993 = vpop.permute.xlu0 %1992
    %v1995 = vadd.f32 %v1984, %v1993
    %v1996 = vpack.c.bf16 %v1995, %v1995
    %1998 = vrot.lane.b32.xlu0 %v1996, 64
    %v1999 = vpop.permute.xlu0 %1998
    %v2001 = vsel %vm72, %v1999, 0
    %2003 = vmatprep.subr.bf16.mxu0 0
    %2004 = vmatpush1.bf16.msra.mxu0 %v1282
    %2005 = vmatprep.subr.bf16.mxu0 0
    %2006 = vmatpush1.bf16.msra.mxu0 %v1283
    %2007 = vmatprep.subr.bf16.mxu0 0
    %2008 = vmatpush1.bf16.msra.mxu0 0
    %2009 = vmatprep.subr.bf16.mxu0 0
    %2010 = vmatpush1.bf16.msra.mxu0 0
    %2011 = vmatprep.subr.bf16.mxu0 0
    %2012 = vmatpush1.bf16.msra.mxu0 0
    %2013 = vmatprep.subr.bf16.mxu0 0
    %2014 = vmatpush1.bf16.msra.mxu0 0
    %2015 = vmatprep.subr.bf16.mxu0 0
    %2016 = vmatpush1.bf16.msra.mxu0 0
    %2017 = vmatprep.subr.bf16.mxu0 0
    %2018 = vmatpush1.bf16.msra.mxu0 0
    %2019 = vmatprep.subr.bf16.mxu0 0
    %2020 = vmatpush1.bf16.msra.mxu0 0
    %2021 = vmatprep.subr.bf16.mxu0 0
    %2022 = vmatpush1.bf16.msra.mxu0 0
    %2023 = vmatprep.subr.bf16.mxu0 0
    %2024 = vmatpush1.bf16.msra.mxu0 0
    %2025 = vmatprep.subr.bf16.mxu0 0
    %2026 = vmatpush1.bf16.msra.mxu0 0
    %2027 = vmatprep.subr.bf16.mxu0 0
    %2028 = vmatpush1.bf16.msra.mxu0 0
    %2029 = vmatprep.subr.bf16.mxu0 0
    %2030 = vmatpush1.bf16.msra.mxu0 0
    %2031 = vmatprep.subr.bf16.mxu0 0
    %2032 = vmatpush1.bf16.msra.mxu0 0
    %2033 = vmatprep.subr.bf16.mxu0 0
    %2034 = vmatpush1.bf16.msra.mxu0 0
    %2035 = vmatprep.mubr.bf16.mxu0 0
    %2036 = vmatmul.mubr.bf16.gmra.mrb[0].mxu0 %v2001
    %v2037 = vpop.f32.mrb[0].mxu0
    %v2038 = vadd.f32 %v1270, %v2037
    %v2039 = vpop.f32.mrb[0].mxu0
    %v2040 = vpop.f32.mrb[0].mxu0
    %v2041 = vpop.f32.mrb[0].mxu0
    %2042 = vdwg.mxu0
    %2043 = vst.msk [vmem:[#allocation2 + $0x30] sm:$0xff] %vm150, %v2038
    %v2044 = vld [vmem:[#allocation3 + $0x38] sm:$0xff]
    %2045 = vmatprep.subr.bf16.mxu0 0
    %2046 = vmatpush1.bf16.msra.mxu0 %v1184
    %2047 = vmatprep.subr.bf16.mxu0 0
    %2048 = vmatpush1.bf16.msra.mxu0 %v1185
    %2049 = vmatprep.subr.bf16.mxu0 0
    %2050 = vmatpush1.bf16.msra.mxu0 0
    %2051 = vmatprep.subr.bf16.mxu0 0
    %2052 = vmatpush1.bf16.msra.mxu0 0
    %2053 = vmatprep.subr.bf16.mxu0 0
    %2054 = vmatpush1.bf16.msra.mxu0 0
    %2055 = vmatprep.subr.bf16.mxu0 0
    %2056 = vmatpush1.bf16.msra.mxu0 0
    %2057 = vmatprep.subr.bf16.mxu0 0
    %2058 = vmatpush1.bf16.msra.mxu0 0
    %2059 = vmatprep.subr.bf16.mxu0 0
    %2060 = vmatpush1.bf16.msra.mxu0 0
    %2061 = vmatprep.subr.bf16.mxu0 0
    %2062 = vmatpush1.bf16.msra.mxu0 0
    %2063 = vmatprep.subr.bf16.mxu0 0
    %2064 = vmatpush1.bf16.msra.mxu0 0
    %2065 = vmatprep.subr.bf16.mxu0 0
    %2066 = vmatpush1.bf16.msra.mxu0 0
    %2067 = vmatprep.subr.bf16.mxu0 0
    %2068 = vmatpush1.bf16.msra.mxu0 0
    %2069 = vmatprep.subr.bf16.mxu0 0
    %2070 = vmatpush1.bf16.msra.mxu0 0
    %2071 = vmatprep.subr.bf16.mxu0 0
    %2072 = vmatpush1.bf16.msra.mxu0 0
    %2073 = vmatprep.subr.bf16.mxu0 0
    %2074 = vmatpush1.bf16.msra.mxu0 0
    %2075 = vmatprep.subr.bf16.mxu0 0
    %2076 = vmatpush1.bf16.msra.mxu0 0
    %2077 = vmatprep.mubr.bf16.mxu0 0
    %2078 = vmatmul.mubr.bf16.gmra.mrb[0].mxu0 %v2001
    %v2079 = vpop.f32.mrb[0].mxu0
    %v2080 = vadd.f32 0.0, %v2079
    %v2081 = vpop.f32.mrb[0].mxu0
    %v2082 = vpop.f32.mrb[0].mxu0
    %v2083 = vpop.f32.mrb[0].mxu0
    %2084 = vdwg.mxu0
    %v2085 = vadd.f32 %v2044, %v2080
    %v2086 = vxor.u32 %v2085, 2147483648
    %v2087 = vmul.f32 %v2086, 1.442695
    %v2088 = vpow.pop %v2087
    %v2089 = vadd.f32 %v2088, 1.0
    %v2090 = vrcp.pop %v2089
    %v2091 = vmul.f32 1.0, %v2090
    %v2092 = vadd.f32 %v2080, %v1241
    %2094 = vrot.lane.b32.xlu0 %v2092, 64
    %v2095 = vpop.permute.xlu0 %2094
    %v2097 = vmul.f32 %v2091, %v2095
    %2099 = vrot.lane.b32.xlu0 %v2097, 64
    %v2100 = vpop.permute.xlu0 %2099
    %v2102 = vadd.f32 %v2044, %v2100
    %v2103 = vtanh.pop %v2102
    %v2104 = vsub.f32 %v1995, %v2103
    %2106 = vrot.lane.b32.xlu0 %v2104, 96
    %v2107 = vpop.permute.xlu0 %2106
    %v2109 = vmul.f32 %v2091, %v2107
    %2111 = vrot.lane.b32.xlu0 %v2109, 32
    %v2112 = vpop.permute.xlu0 %2111
    %v2114 = vadd.f32 %v2103, %v2112
    %v2115 = vpack.c.bf16 %v2114, %v2114
    %2117 = vrot.lane.b32.xlu0 %v2115, 64
    %v2118 = vpop.permute.xlu0 %2117
    %v2120 = vsel %vm72, %v2118, 0
    %2122 = vmatprep.subr.bf16.mxu0 0
    %2123 = vmatpush1.bf16.msra.mxu0 %v1282
    %2124 = vmatprep.subr.bf16.mxu0 0
    %2125 = vmatpush1.bf16.msra.mxu0 %v1283
    %2126 = vmatprep.subr.bf16.mxu0 0
    %2127 = vmatpush1.bf16.msra.mxu0 0
    %2128 = vmatprep.subr.bf16.mxu0 0
    %2129 = vmatpush1.bf16.msra.mxu0 0
    %2130 = vmatprep.subr.bf16.mxu0 0
    %2131 = vmatpush1.bf16.msra.mxu0 0
    %2132 = vmatprep.subr.bf16.mxu0 0
    %2133 = vmatpush1.bf16.msra.mxu0 0
    %2134 = vmatprep.subr.bf16.mxu0 0
    %2135 = vmatpush1.bf16.msra.mxu0 0
    %2136 = vmatprep.subr.bf16.mxu0 0
    %2137 = vmatpush1.bf16.msra.mxu0 0
    %2138 = vmatprep.subr.bf16.mxu0 0
    %2139 = vmatpush1.bf16.msra.mxu0 0
    %2140 = vmatprep.subr.bf16.mxu0 0
    %2141 = vmatpush1.bf16.msra.mxu0 0
    %2142 = vmatprep.subr.bf16.mxu0 0
    %2143 = vmatpush1.bf16.msra.mxu0 0
    %2144 = vmatprep.subr.bf16.mxu0 0
    %2145 = vmatpush1.bf16.msra.mxu0 0
    %2146 = vmatprep.subr.bf16.mxu0 0
    %2147 = vmatpush1.bf16.msra.mxu0 0
    %2148 = vmatprep.subr.bf16.mxu0 0
    %2149 = vmatpush1.bf16.msra.mxu0 0
    %2150 = vmatprep.subr.bf16.mxu0 0
    %2151 = vmatpush1.bf16.msra.mxu0 0
    %2152 = vmatprep.subr.bf16.mxu0 0
    %2153 = vmatpush1.bf16.msra.mxu0 0
    %2154 = vmatprep.mubr.bf16.mxu0 0
    %2155 = vmatmul.mubr.bf16.gmra.mrb[0].mxu0 %v2120
    %v2156 = vpop.f32.mrb[0].mxu0
    %v2157 = vadd.f32 %v1270, %v2156
    %v2158 = vpop.f32.mrb[0].mxu0
    %v2159 = vpop.f32.mrb[0].mxu0
    %v2160 = vpop.f32.mrb[0].mxu0
    %2161 = vdwg.mxu0
    %2162 = vst.msk [vmem:[#allocation2 + $0x38] sm:$0xff] %vm150, %v2157
    %s2163 = scalar_lea.vmem [#allocation4], 32
    %v2164 = vld [vmem:[%s2163] sm:$0xf]
    %v2165 = vld [vmem:[%s2163 + $0x4] sm:$0xf]
    %v2166 = vld [vmem:[%s2163 + $0x8] sm:$0xf]
    %v2167 = vld [vmem:[%s2163 + $0xc] sm:$0xf]
    %v2168 = vld [vmem:[%s1173] sm:$0x3]
    %s2169 = scalar_lea.vmem %s1, 48
    %v2170 = vld [vmem:[%s2169] sm:$0xf]
    %v2171 = vld [vmem:[%s2169 + $0x4] sm:$0xf]
    %v2172 = vld [vmem:[%s2169 + $0x8] sm:$0xf]
    %v2173 = vld [vmem:[%s2169 + $0xc] sm:$0xf]
    %s2174 = scalar_lea.vmem %s3, 6
    %v2175 = vld [vmem:[%s2174] sm:$0x3]
    %v2176 = vld [vmem:[#allocation2] sm:$0xff]
    %v2181 = vunpack.c.l.b16 %v2164
    %v2182 = vunpack.c.l.b16 %v2165
    %v2183 = vunpack.c.l.b16 %v2166
    %v2184 = vunpack.c.l.b16 %v2167
    %v2185 = vpack.c.b16 %v2182, %v2181
    %v2186 = vpack.c.b16 %v2184, %v2183
    %2189 = vmatprep.subr.bf16.mxu0 0
    %2190 = vmatpush1.bf16.msra.mxu0 %v2185
    %2191 = vmatprep.subr.bf16.mxu0 0
    %2192 = vmatpush1.bf16.msra.mxu0 %v2186
    %2193 = vmatprep.subr.bf16.mxu0 0
    %2194 = vmatpush1.bf16.msra.mxu0 0
    %2195 = vmatprep.subr.bf16.mxu0 0
    %2196 = vmatpush1.bf16.msra.mxu0 0
    %2197 = vmatprep.subr.bf16.mxu0 0
    %2198 = vmatpush1.bf16.msra.mxu0 0
    %2199 = vmatprep.subr.bf16.mxu0 0
    %2200 = vmatpush1.bf16.msra.mxu0 0
    %2201 = vmatprep.subr.bf16.mxu0 0
    %2202 = vmatpush1.bf16.msra.mxu0 0
    %2203 = vmatprep.subr.bf16.mxu0 0
    %2204 = vmatpush1.bf16.msra.mxu0 0
    %2205 = vmatprep.subr.bf16.mxu0 0
    %2206 = vmatpush1.bf16.msra.mxu0 0
    %2207 = vmatprep.subr.bf16.mxu0 0
    %2208 = vmatpush1.bf16.msra.mxu0 0
    %2209 = vmatprep.subr.bf16.mxu0 0
    %2210 = vmatpush1.bf16.msra.mxu0 0
    %2211 = vmatprep.subr.bf16.mxu0 0
    %2212 = vmatpush1.bf16.msra.mxu0 0
    %2213 = vmatprep.subr.bf16.mxu0 0
    %2214 = vmatpush1.bf16.msra.mxu0 0
    %2215 = vmatprep.subr.bf16.mxu0 0
    %2216 = vmatpush1.bf16.msra.mxu0 0
    %2217 = vmatprep.subr.bf16.mxu0 0
    %2218 = vmatpush1.bf16.msra.mxu0 0
    %2219 = vmatprep.subr.bf16.mxu0 0
    %2220 = vmatpush1.bf16.msra.mxu0 0
    %2221 = vmatprep.mubr.bf16.mxu0 0
    %2222 = vmatmul.mubr.bf16.gmra.mrb[0].mxu0 %v185
    %v2223 = vpop.f32.mrb[0].mxu0
    %v2224 = vadd.f32 0.0, %v2223
    %v2225 = vpop.f32.mrb[0].mxu0
    %v2226 = vpop.f32.mrb[0].mxu0
    %v2227 = vpop.f32.mrb[0].mxu0
    %2228 = vdwg.mxu0
    %v2229 = vadd.f32 %v2176, %v2224
    %v2230 = vxor.u32 %v2229, 2147483648
    %v2231 = vmul.f32 %v2230, 1.442695
    %v2232 = vpow.pop %v2231
    %v2233 = vadd.f32 %v2232, 1.0
    %v2234 = vrcp.pop %v2233
    %v2235 = vmul.f32 1.0, %v2234
    %v2236 = vlaneseq
    %v2237 = vshrl.u32 %v2236, 7
    %v2238 = vsub.s32 1, %v2237
    %v2239 = vrot.slane %v2168, %v2238
    %2241 = vrot.lane.b32.xlu0 %v2239, 64
    %v2242 = vpop.permute.xlu0 %2241
    %v2244 = vadd.f32 %v2224, %v2242
    %2246 = vrot.lane.b32.xlu0 %v2244, 64
    %v2247 = vpop.permute.xlu0 %2246
    %v2249 = vmul.f32 %v2235, %v2247
    %2251 = vrot.lane.b32.xlu0 %v2249, 64
    %v2252 = vpop.permute.xlu0 %2251
    %v2254 = vadd.f32 %v2176, %v2252
    %v2255 = vtanh.pop %v2254
    %v2256 = vsub.f32 0.0, %v2255
    %2258 = vrot.lane.b32.xlu0 %v2256, 96
    %v2259 = vpop.permute.xlu0 %2258
    %v2261 = vmul.f32 %v2235, %v2259
    %2263 = vrot.lane.b32.xlu0 %v2261, 32
    %v2264 = vpop.permute.xlu0 %2263
    %v2266 = vadd.f32 %v2255, %v2264
    %v2267 = vpack.c.bf16 %v2266, %v2266
    %v2268 = vlaneseq
    %v2269 = vshrl.u32 %v2268, 7
    %v2270 = vsub.s32 0, %v2269
    %v2271 = vrot.slane %v2175, %v2270
    %2273 = vrot.lane.b32.xlu0 %v2267, 64
    %v2274 = vpop.permute.xlu0 %2273
    %v2279 = vunpack.c.l.b16 %v2170
    %v2280 = vunpack.c.l.b16 %v2171
    %v2281 = vunpack.c.l.b16 %v2172
    %v2282 = vunpack.c.l.b16 %v2173
    %v2283 = vpack.c.b16 %v2280, %v2279
    %v2284 = vpack.c.b16 %v2282, %v2281
    %v2288 = vsel %vm72, %v2274, 0
    %2290 = vmatprep.subr.bf16.mxu0 0
    %2291 = vmatpush1.bf16.msra.mxu0 %v2283
    %2292 = vmatprep.subr.bf16.mxu0 0
    %2293 = vmatpush1.bf16.msra.mxu0 %v2284
    %2294 = vmatprep.subr.bf16.mxu0 0
    %2295 = vmatpush1.bf16.msra.mxu0 0
    %2296 = vmatprep.subr.bf16.mxu0 0
    %2297 = vmatpush1.bf16.msra.mxu0 0
    %2298 = vmatprep.subr.bf16.mxu0 0
    %2299 = vmatpush1.bf16.msra.mxu0 0
    %2300 = vmatprep.subr.bf16.mxu0 0
    %2301 = vmatpush1.bf16.msra.mxu0 0
    %2302 = vmatprep.subr.bf16.mxu0 0
    %2303 = vmatpush1.bf16.msra.mxu0 0
    %2304 = vmatprep.subr.bf16.mxu0 0
    %2305 = vmatpush1.bf16.msra.mxu0 0
    %2306 = vmatprep.subr.bf16.mxu0 0
    %2307 = vmatpush1.bf16.msra.mxu0 0
    %2308 = vmatprep.subr.bf16.mxu0 0
    %2309 = vmatpush1.bf16.msra.mxu0 0
    %2310 = vmatprep.subr.bf16.mxu0 0
    %2311 = vmatpush1.bf16.msra.mxu0 0
    %2312 = vmatprep.subr.bf16.mxu0 0
    %2313 = vmatpush1.bf16.msra.mxu0 0
    %2314 = vmatprep.subr.bf16.mxu0 0
    %2315 = vmatpush1.bf16.msra.mxu0 0
    %2316 = vmatprep.subr.bf16.mxu0 0
    %2317 = vmatpush1.bf16.msra.mxu0 0
    %2318 = vmatprep.subr.bf16.mxu0 0
    %2319 = vmatpush1.bf16.msra.mxu0 0
    %2320 = vmatprep.subr.bf16.mxu0 0
    %2321 = vmatpush1.bf16.msra.mxu0 0
    %2322 = vmatprep.mubr.bf16.mxu0 0
    %2323 = vmatmul.mubr.bf16.gmra.mrb[0].mxu0 %v2288
    %v2324 = vpop.f32.mrb[0].mxu0
    %v2325 = vadd.f32 %v2271, %v2324
    %v2326 = vpop.f32.mrb[0].mxu0
    %v2327 = vpop.f32.mrb[0].mxu0
    %v2328 = vpop.f32.mrb[0].mxu0
    %2329 = vdwg.mxu0
    %2330 = vst.msk [vmem:[#allocation3] sm:$0xff] %vm150, %v2325
    %v2331 = vld [vmem:[#allocation2 + $0x8] sm:$0xff]
    %2332 = vmatprep.subr.bf16.mxu0 0
    %2333 = vmatpush1.bf16.msra.mxu0 %v2185
    %2334 = vmatprep.subr.bf16.mxu0 0
    %2335 = vmatpush1.bf16.msra.mxu0 %v2186
    %2336 = vmatprep.subr.bf16.mxu0 0
    %2337 = vmatpush1.bf16.msra.mxu0 0
    %2338 = vmatprep.subr.bf16.mxu0 0
    %2339 = vmatpush1.bf16.msra.mxu0 0
    %2340 = vmatprep.subr.bf16.mxu0 0
    %2341 = vmatpush1.bf16.msra.mxu0 0
    %2342 = vmatprep.subr.bf16.mxu0 0
    %2343 = vmatpush1.bf16.msra.mxu0 0
    %2344 = vmatprep.subr.bf16.mxu0 0
    %2345 = vmatpush1.bf16.msra.mxu0 0
    %2346 = vmatprep.subr.bf16.mxu0 0
    %2347 = vmatpush1.bf16.msra.mxu0 0
    %2348 = vmatprep.subr.bf16.mxu0 0
    %2349 = vmatpush1.bf16.msra.mxu0 0
    %2350 = vmatprep.subr.bf16.mxu0 0
    %2351 = vmatpush1.bf16.msra.mxu0 0
    %2352 = vmatprep.subr.bf16.mxu0 0
    %2353 = vmatpush1.bf16.msra.mxu0 0
    %2354 = vmatprep.subr.bf16.mxu0 0
    %2355 = vmatpush1.bf16.msra.mxu0 0
    %2356 = vmatprep.subr.bf16.mxu0 0
    %2357 = vmatpush1.bf16.msra.mxu0 0
    %2358 = vmatprep.subr.bf16.mxu0 0
    %2359 = vmatpush1.bf16.msra.mxu0 0
    %2360 = vmatprep.subr.bf16.mxu0 0
    %2361 = vmatpush1.bf16.msra.mxu0 0
    %2362 = vmatprep.subr.bf16.mxu0 0
    %2363 = vmatpush1.bf16.msra.mxu0 0
    %2364 = vmatprep.mubr.bf16.mxu0 0
    %2365 = vmatmul.mubr.bf16.gmra.mrb[0].mxu0 %v2288
    %v2366 = vpop.f32.mrb[0].mxu0
    %v2367 = vadd.f32 0.0, %v2366
    %v2368 = vpop.f32.mrb[0].mxu0
    %v2369 = vpop.f32.mrb[0].mxu0
    %v2370 = vpop.f32.mrb[0].mxu0
    %2371 = vdwg.mxu0
    %v2372 = vadd.f32 %v2331, %v2367
    %v2373 = vxor.u32 %v2372, 2147483648
    %v2374 = vmul.f32 %v2373, 1.442695
    %v2375 = vpow.pop %v2374
    %v2376 = vadd.f32 %v2375, 1.0
    %v2377 = vrcp.pop %v2376
    %v2378 = vmul.f32 1.0, %v2377
    %v2379 = vadd.f32 %v2367, %v2242
    %2381 = vrot.lane.b32.xlu0 %v2379, 64
    %v2382 = vpop.permute.xlu0 %2381
    %v2384 = vmul.f32 %v2378, %v2382
    %2386 = vrot.lane.b32.xlu0 %v2384, 64
    %v2387 = vpop.permute.xlu0 %2386
    %v2389 = vadd.f32 %v2331, %v2387
    %v2390 = vtanh.pop %v2389
    %v2391 = vsub.f32 %v2266, %v2390
    %2393 = vrot.lane.b32.xlu0 %v2391, 96
    %v2394 = vpop.permute.xlu0 %2393
    %v2396 = vmul.f32 %v2378, %v2394
    %2398 = vrot.lane.b32.xlu0 %v2396, 32
    %v2399 = vpop.permute.xlu0 %2398
    %v2401 = vadd.f32 %v2390, %v2399
    %v2402 = vpack.c.bf16 %v2401, %v2401
    %2404 = vrot.lane.b32.xlu0 %v2402, 64
    %v2405 = vpop.permute.xlu0 %2404
    %v2407 = vsel %vm72, %v2405, 0
    %2409 = vmatprep.subr.bf16.mxu0 0
    %2410 = vmatpush1.bf16.msra.mxu0 %v2283
    %2411 = vmatprep.subr.bf16.mxu0 0
    %2412 = vmatpush1.bf16.msra.mxu0 %v2284
    %2413 = vmatprep.subr.bf16.mxu0 0
    %2414 = vmatpush1.bf16.msra.mxu0 0
    %2415 = vmatprep.subr.bf16.mxu0 0
    %2416 = vmatpush1.bf16.msra.mxu0 0
    %2417 = vmatprep.subr.bf16.mxu0 0
    %2418 = vmatpush1.bf16.msra.mxu0 0
    %2419 = vmatprep.subr.bf16.mxu0 0
    %2420 = vmatpush1.bf16.msra.mxu0 0
    %2421 = vmatprep.subr.bf16.mxu0 0
    %2422 = vmatpush1.bf16.msra.mxu0 0
    %2423 = vmatprep.subr.bf16.mxu0 0
    %2424 = vmatpush1.bf16.msra.mxu0 0
    %2425 = vmatprep.subr.bf16.mxu0 0
    %2426 = vmatpush1.bf16.msra.mxu0 0
    %2427 = vmatprep.subr.bf16.mxu0 0
    %2428 = vmatpush1.bf16.msra.mxu0 0
    %2429 = vmatprep.subr.bf16.mxu0 0
    %2430 = vmatpush1.bf16.msra.mxu0 0
    %2431 = vmatprep.subr.bf16.mxu0 0
    %2432 = vmatpush1.bf16.msra.mxu0 0
    %2433 = vmatprep.subr.bf16.mxu0 0
    %2434 = vmatpush1.bf16.msra.mxu0 0
    %2435 = vmatprep.subr.bf16.mxu0 0
    %2436 = vmatpush1.bf16.msra.mxu0 0
    %2437 = vmatprep.subr.bf16.mxu0 0
    %2438 = vmatpush1.bf16.msra.mxu0 0
    %2439 = vmatprep.subr.bf16.mxu0 0
    %2440 = vmatpush1.bf16.msra.mxu0 0
    %2441 = vmatprep.mubr.bf16.mxu0 0
    %2442 = vmatmul.mubr.bf16.gmra.mrb[0].mxu0 %v2407
    %v2443 = vpop.f32.mrb[0].mxu0
    %v2444 = vadd.f32 %v2271, %v2443
    %v2445 = vpop.f32.mrb[0].mxu0
    %v2446 = vpop.f32.mrb[0].mxu0
    %v2447 = vpop.f32.mrb[0].mxu0
    %2448 = vdwg.mxu0
    %2449 = vst.msk [vmem:[#allocation3 + $0x8] sm:$0xff] %vm150, %v2444
    %v2450 = vld [vmem:[#allocation2 + $0x10] sm:$0xff]
    %2451 = vmatprep.subr.bf16.mxu0 0
    %2452 = vmatpush1.bf16.msra.mxu0 %v2185
    %2453 = vmatprep.subr.bf16.mxu0 0
    %2454 = vmatpush1.bf16.msra.mxu0 %v2186
    %2455 = vmatprep.subr.bf16.mxu0 0
    %2456 = vmatpush1.bf16.msra.mxu0 0
    %2457 = vmatprep.subr.bf16.mxu0 0
    %2458 = vmatpush1.bf16.msra.mxu0 0
    %2459 = vmatprep.subr.bf16.mxu0 0
    %2460 = vmatpush1.bf16.msra.mxu0 0
    %2461 = vmatprep.subr.bf16.mxu0 0
    %2462 = vmatpush1.bf16.msra.mxu0 0
    %2463 = vmatprep.subr.bf16.mxu0 0
    %2464 = vmatpush1.bf16.msra.mxu0 0
    %2465 = vmatprep.subr.bf16.mxu0 0
    %2466 = vmatpush1.bf16.msra.mxu0 0
    %2467 = vmatprep.subr.bf16.mxu0 0
    %2468 = vmatpush1.bf16.msra.mxu0 0
    %2469 = vmatprep.subr.bf16.mxu0 0
    %2470 = vmatpush1.bf16.msra.mxu0 0
    %2471 = vmatprep.subr.bf16.mxu0 0
    %2472 = vmatpush1.bf16.msra.mxu0 0
    %2473 = vmatprep.subr.bf16.mxu0 0
    %2474 = vmatpush1.bf16.msra.mxu0 0
    %2475 = vmatprep.subr.bf16.mxu0 0
    %2476 = vmatpush1.bf16.msra.mxu0 0
    %2477 = vmatprep.subr.bf16.mxu0 0
    %2478 = vmatpush1.bf16.msra.mxu0 0
    %2479 = vmatprep.subr.bf16.mxu0 0
    %2480 = vmatpush1.bf16.msra.mxu0 0
    %2481 = vmatprep.subr.bf16.mxu0 0
    %2482 = vmatpush1.bf16.msra.mxu0 0
    %2483 = vmatprep.mubr.bf16.mxu0 0
    %2484 = vmatmul.mubr.bf16.gmra.mrb[0].mxu0 %v2407
    %v2485 = vpop.f32.mrb[0].mxu0
    %v2486 = vadd.f32 0.0, %v2485
    %v2487 = vpop.f32.mrb[0].mxu0
    %v2488 = vpop.f32.mrb[0].mxu0
    %v2489 = vpop.f32.mrb[0].mxu0
    %2490 = vdwg.mxu0
    %v2491 = vadd.f32 %v2450, %v2486
    %v2492 = vxor.u32 %v2491, 2147483648
    %v2493 = vmul.f32 %v2492, 1.442695
    %v2494 = vpow.pop %v2493
    %v2495 = vadd.f32 %v2494, 1.0
    %v2496 = vrcp.pop %v2495
    %v2497 = vmul.f32 1.0, %v2496
    %v2498 = vadd.f32 %v2486, %v2242
    %2500 = vrot.lane.b32.xlu0 %v2498, 64
    %v2501 = vpop.permute.xlu0 %2500
    %v2503 = vmul.f32 %v2497, %v2501
    %2505 = vrot.lane.b32.xlu0 %v2503, 64
    %v2506 = vpop.permute.xlu0 %2505
    %v2508 = vadd.f32 %v2450, %v2506
    %v2509 = vtanh.pop %v2508
    %v2510 = vsub.f32 %v2401, %v2509
    %2512 = vrot.lane.b32.xlu0 %v2510, 96
    %v2513 = vpop.permute.xlu0 %2512
    %v2515 = vmul.f32 %v2497, %v2513
    %2517 = vrot.lane.b32.xlu0 %v2515, 32
    %v2518 = vpop.permute.xlu0 %2517
    %v2520 = vadd.f32 %v2509, %v2518
    %v2521 = vpack.c.bf16 %v2520, %v2520
    %2523 = vrot.lane.b32.xlu0 %v2521, 64
    %v2524 = vpop.permute.xlu0 %2523
    %v2526 = vsel %vm72, %v2524, 0
    %2528 = vmatprep.subr.bf16.mxu0 0
    %2529 = vmatpush1.bf16.msra.mxu0 %v2283
    %2530 = vmatprep.subr.bf16.mxu0 0
    %2531 = vmatpush1.bf16.msra.mxu0 %v2284
    %2532 = vmatprep.subr.bf16.mxu0 0
    %2533 = vmatpush1.bf16.msra.mxu0 0
    %2534 = vmatprep.subr.bf16.mxu0 0
    %2535 = vmatpush1.bf16.msra.mxu0 0
    %2536 = vmatprep.subr.bf16.mxu0 0
    %2537 = vmatpush1.bf16.msra.mxu0 0
    %2538 = vmatprep.subr.bf16.mxu0 0
    %2539 = vmatpush1.bf16.msra.mxu0 0
    %2540 = vmatprep.subr.bf16.mxu0 0
    %2541 = vmatpush1.bf16.msra.mxu0 0
    %2542 = vmatprep.subr.bf16.mxu0 0
    %2543 = vmatpush1.bf16.msra.mxu0 0
    %2544 = vmatprep.subr.bf16.mxu0 0
    %2545 = vmatpush1.bf16.msra.mxu0 0
    %2546 = vmatprep.subr.bf16.mxu0 0
    %2547 = vmatpush1.bf16.msra.mxu0 0
    %2548 = vmatprep.subr.bf16.mxu0 0
    %2549 = vmatpush1.bf16.msra.mxu0 0
    %2550 = vmatprep.subr.bf16.mxu0 0
    %2551 = vmatpush1.bf16.msra.mxu0 0
    %2552 = vmatprep.subr.bf16.mxu0 0
    %2553 = vmatpush1.bf16.msra.mxu0 0
    %2554 = vmatprep.subr.bf16.mxu0 0
    %2555 = vmatpush1.bf16.msra.mxu0 0
    %2556 = vmatprep.subr.bf16.mxu0 0
    %2557 = vmatpush1.bf16.msra.mxu0 0
    %2558 = vmatprep.subr.bf16.mxu0 0
    %2559 = vmatpush1.bf16.msra.mxu0 0
    %2560 = vmatprep.mubr.bf16.mxu0 0
    %2561 = vmatmul.mubr.bf16.gmra.mrb[0].mxu0 %v2526
    %v2562 = vpop.f32.mrb[0].mxu0
    %v2563 = vadd.f32 %v2271, %v2562
    %v2564 = vpop.f32.mrb[0].mxu0
    %v2565 = vpop.f32.mrb[0].mxu0
    %v2566 = vpop.f32.mrb[0].mxu0
    %2567 = vdwg.mxu0
    %2568 = vst.msk [vmem:[#allocation3 + $0x10] sm:$0xff] %vm150, %v2563
    %v2569 = vld [vmem:[#allocation2 + $0x18] sm:$0xff]
    %2570 = vmatprep.subr.bf16.mxu0 0
    %2571 = vmatpush1.bf16.msra.mxu0 %v2185
    %2572 = vmatprep.subr.bf16.mxu0 0
    %2573 = vmatpush1.bf16.msra.mxu0 %v2186
    %2574 = vmatprep.subr.bf16.mxu0 0
    %2575 = vmatpush1.bf16.msra.mxu0 0
    %2576 = vmatprep.subr.bf16.mxu0 0
    %2577 = vmatpush1.bf16.msra.mxu0 0
    %2578 = vmatprep.subr.bf16.mxu0 0
    %2579 = vmatpush1.bf16.msra.mxu0 0
    %2580 = vmatprep.subr.bf16.mxu0 0
    %2581 = vmatpush1.bf16.msra.mxu0 0
    %2582 = vmatprep.subr.bf16.mxu0 0
    %2583 = vmatpush1.bf16.msra.mxu0 0
    %2584 = vmatprep.subr.bf16.mxu0 0
    %2585 = vmatpush1.bf16.msra.mxu0 0
    %2586 = vmatprep.subr.bf16.mxu0 0
    %2587 = vmatpush1.bf16.msra.mxu0 0
    %2588 = vmatprep.subr.bf16.mxu0 0
    %2589 = vmatpush1.bf16.msra.mxu0 0
    %2590 = vmatprep.subr.bf16.mxu0 0
    %2591 = vmatpush1.bf16.msra.mxu0 0
    %2592 = vmatprep.subr.bf16.mxu0 0
    %2593 = vmatpush1.bf16.msra.mxu0 0
    %2594 = vmatprep.subr.bf16.mxu0 0
    %2595 = vmatpush1.bf16.msra.mxu0 0
    %2596 = vmatprep.subr.bf16.mxu0 0
    %2597 = vmatpush1.bf16.msra.mxu0 0
    %2598 = vmatprep.subr.bf16.mxu0 0
    %2599 = vmatpush1.bf16.msra.mxu0 0
    %2600 = vmatprep.subr.bf16.mxu0 0
    %2601 = vmatpush1.bf16.msra.mxu0 0
    %2602 = vmatprep.mubr.bf16.mxu0 0
    %2603 = vmatmul.mubr.bf16.gmra.mrb[0].mxu0 %v2526
    %v2604 = vpop.f32.mrb[0].mxu0
    %v2605 = vadd.f32 0.0, %v2604
    %v2606 = vpop.f32.mrb[0].mxu0
    %v2607 = vpop.f32.mrb[0].mxu0
    %v2608 = vpop.f32.mrb[0].mxu0
    %2609 = vdwg.mxu0
    %v2610 = vadd.f32 %v2569, %v2605
    %v2611 = vxor.u32 %v2610, 2147483648
    %v2612 = vmul.f32 %v2611, 1.442695
    %v2613 = vpow.pop %v2612
    %v2614 = vadd.f32 %v2613, 1.0
    %v2615 = vrcp.pop %v2614
    %v2616 = vmul.f32 1.0, %v2615
    %v2617 = vadd.f32 %v2605, %v2242
    %2619 = vrot.lane.b32.xlu0 %v2617, 64
    %v2620 = vpop.permute.xlu0 %2619
    %v2622 = vmul.f32 %v2616, %v2620
    %2624 = vrot.lane.b32.xlu0 %v2622, 64
    %v2625 = vpop.permute.xlu0 %2624
    %v2627 = vadd.f32 %v2569, %v2625
    %v2628 = vtanh.pop %v2627
    %v2629 = vsub.f32 %v2520, %v2628
    %2631 = vrot.lane.b32.xlu0 %v2629, 96
    %v2632 = vpop.permute.xlu0 %2631
    %v2634 = vmul.f32 %v2616, %v2632
    %2636 = vrot.lane.b32.xlu0 %v2634, 32
    %v2637 = vpop.permute.xlu0 %2636
    %v2639 = vadd.f32 %v2628, %v2637
    %v2640 = vpack.c.bf16 %v2639, %v2639
    %2642 = vrot.lane.b32.xlu0 %v2640, 64
    %v2643 = vpop.permute.xlu0 %2642
    %v2645 = vsel %vm72, %v2643, 0
    %2647 = vmatprep.subr.bf16.mxu0 0
    %2648 = vmatpush1.bf16.msra.mxu0 %v2283
    %2649 = vmatprep.subr.bf16.mxu0 0
    %2650 = vmatpush1.bf16.msra.mxu0 %v2284
    %2651 = vmatprep.subr.bf16.mxu0 0
    %2652 = vmatpush1.bf16.msra.mxu0 0
    %2653 = vmatprep.subr.bf16.mxu0 0
    %2654 = vmatpush1.bf16.msra.mxu0 0
    %2655 = vmatprep.subr.bf16.mxu0 0
    %2656 = vmatpush1.bf16.msra.mxu0 0
    %2657 = vmatprep.subr.bf16.mxu0 0
    %2658 = vmatpush1.bf16.msra.mxu0 0
    %2659 = vmatprep.subr.bf16.mxu0 0
    %2660 = vmatpush1.bf16.msra.mxu0 0
    %2661 = vmatprep.subr.bf16.mxu0 0
    %2662 = vmatpush1.bf16.msra.mxu0 0
    %2663 = vmatprep.subr.bf16.mxu0 0
    %2664 = vmatpush1.bf16.msra.mxu0 0
    %2665 = vmatprep.subr.bf16.mxu0 0
    %2666 = vmatpush1.bf16.msra.mxu0 0
    %2667 = vmatprep.subr.bf16.mxu0 0
    %2668 = vmatpush1.bf16.msra.mxu0 0
    %2669 = vmatprep.subr.bf16.mxu0 0
    %2670 = vmatpush1.bf16.msra.mxu0 0
    %2671 = vmatprep.subr.bf16.mxu0 0
    %2672 = vmatpush1.bf16.msra.mxu0 0
    %2673 = vmatprep.subr.bf16.mxu0 0
    %2674 = vmatpush1.bf16.msra.mxu0 0
    %2675 = vmatprep.subr.bf16.mxu0 0
    %2676 = vmatpush1.bf16.msra.mxu0 0
    %2677 = vmatprep.subr.bf16.mxu0 0
    %2678 = vmatpush1.bf16.msra.mxu0 0
    %2679 = vmatprep.mubr.bf16.mxu0 0
    %2680 = vmatmul.mubr.bf16.gmra.mrb[0].mxu0 %v2645
    %v2681 = vpop.f32.mrb[0].mxu0
    %v2682 = vadd.f32 %v2271, %v2681
    %v2683 = vpop.f32.mrb[0].mxu0
    %v2684 = vpop.f32.mrb[0].mxu0
    %v2685 = vpop.f32.mrb[0].mxu0
    %2686 = vdwg.mxu0
    %2687 = vst.msk [vmem:[#allocation3 + $0x18] sm:$0xff] %vm150, %v2682
    %v2688 = vld [vmem:[#allocation2 + $0x20] sm:$0xff]
    %2689 = vmatprep.subr.bf16.mxu0 0
    %2690 = vmatpush1.bf16.msra.mxu0 %v2185
    %2691 = vmatprep.subr.bf16.mxu0 0
    %2692 = vmatpush1.bf16.msra.mxu0 %v2186
    %2693 = vmatprep.subr.bf16.mxu0 0
    %2694 = vmatpush1.bf16.msra.mxu0 0
    %2695 = vmatprep.subr.bf16.mxu0 0
    %2696 = vmatpush1.bf16.msra.mxu0 0
    %2697 = vmatprep.subr.bf16.mxu0 0
    %2698 = vmatpush1.bf16.msra.mxu0 0
    %2699 = vmatprep.subr.bf16.mxu0 0
    %2700 = vmatpush1.bf16.msra.mxu0 0
    %2701 = vmatprep.subr.bf16.mxu0 0
    %2702 = vmatpush1.bf16.msra.mxu0 0
    %2703 = vmatprep.subr.bf16.mxu0 0
    %2704 = vmatpush1.bf16.msra.mxu0 0
    %2705 = vmatprep.subr.bf16.mxu0 0
    %2706 = vmatpush1.bf16.msra.mxu0 0
    %2707 = vmatprep.subr.bf16.mxu0 0
    %2708 = vmatpush1.bf16.msra.mxu0 0
    %2709 = vmatprep.subr.bf16.mxu0 0
    %2710 = vmatpush1.bf16.msra.mxu0 0
    %2711 = vmatprep.subr.bf16.mxu0 0
    %2712 = vmatpush1.bf16.msra.mxu0 0
    %2713 = vmatprep.subr.bf16.mxu0 0
    %2714 = vmatpush1.bf16.msra.mxu0 0
    %2715 = vmatprep.subr.bf16.mxu0 0
    %2716 = vmatpush1.bf16.msra.mxu0 0
    %2717 = vmatprep.subr.bf16.mxu0 0
    %2718 = vmatpush1.bf16.msra.mxu0 0
    %2719 = vmatprep.subr.bf16.mxu0 0
    %2720 = vmatpush1.bf16.msra.mxu0 0
    %2721 = vmatprep.mubr.bf16.mxu0 0
    %2722 = vmatmul.mubr.bf16.gmra.mrb[0].mxu0 %v2645
    %v2723 = vpop.f32.mrb[0].mxu0
    %v2724 = vadd.f32 0.0, %v2723
    %v2725 = vpop.f32.mrb[0].mxu0
    %v2726 = vpop.f32.mrb[0].mxu0
    %v2727 = vpop.f32.mrb[0].mxu0
    %2728 = vdwg.mxu0
    %v2729 = vadd.f32 %v2688, %v2724
    %v2730 = vxor.u32 %v2729, 2147483648
    %v2731 = vmul.f32 %v2730, 1.442695
    %v2732 = vpow.pop %v2731
    %v2733 = vadd.f32 %v2732, 1.0
    %v2734 = vrcp.pop %v2733
    %v2735 = vmul.f32 1.0, %v2734
    %v2736 = vadd.f32 %v2724, %v2242
    %2738 = vrot.lane.b32.xlu0 %v2736, 64
    %v2739 = vpop.permute.xlu0 %2738
    %v2741 = vmul.f32 %v2735, %v2739
    %2743 = vrot.lane.b32.xlu0 %v2741, 64
    %v2744 = vpop.permute.xlu0 %2743
    %v2746 = vadd.f32 %v2688, %v2744
    %v2747 = vtanh.pop %v2746
    %v2748 = vsub.f32 %v2639, %v2747
    %2750 = vrot.lane.b32.xlu0 %v2748, 96
    %v2751 = vpop.permute.xlu0 %2750
    %v2753 = vmul.f32 %v2735, %v2751
    %2755 = vrot.lane.b32.xlu0 %v2753, 32
    %v2756 = vpop.permute.xlu0 %2755
    %v2758 = vadd.f32 %v2747, %v2756
    %v2759 = vpack.c.bf16 %v2758, %v2758
    %2761 = vrot.lane.b32.xlu0 %v2759, 64
    %v2762 = vpop.permute.xlu0 %2761
    %v2764 = vsel %vm72, %v2762, 0
    %2766 = vmatprep.subr.bf16.mxu0 0
    %2767 = vmatpush1.bf16.msra.mxu0 %v2283
    %2768 = vmatprep.subr.bf16.mxu0 0
    %2769 = vmatpush1.bf16.msra.mxu0 %v2284
    %2770 = vmatprep.subr.bf16.mxu0 0
    %2771 = vmatpush1.bf16.msra.mxu0 0
    %2772 = vmatprep.subr.bf16.mxu0 0
    %2773 = vmatpush1.bf16.msra.mxu0 0
    %2774 = vmatprep.subr.bf16.mxu0 0
    %2775 = vmatpush1.bf16.msra.mxu0 0
    %2776 = vmatprep.subr.bf16.mxu0 0
    %2777 = vmatpush1.bf16.msra.mxu0 0
    %2778 = vmatprep.subr.bf16.mxu0 0
    %2779 = vmatpush1.bf16.msra.mxu0 0
    %2780 = vmatprep.subr.bf16.mxu0 0
    %2781 = vmatpush1.bf16.msra.mxu0 0
    %2782 = vmatprep.subr.bf16.mxu0 0
    %2783 = vmatpush1.bf16.msra.mxu0 0
    %2784 = vmatprep.subr.bf16.mxu0 0
    %2785 = vmatpush1.bf16.msra.mxu0 0
    %2786 = vmatprep.subr.bf16.mxu0 0
    %2787 = vmatpush1.bf16.msra.mxu0 0
    %2788 = vmatprep.subr.bf16.mxu0 0
    %2789 = vmatpush1.bf16.msra.mxu0 0
    %2790 = vmatprep.subr.bf16.mxu0 0
    %2791 = vmatpush1.bf16.msra.mxu0 0
    %2792 = vmatprep.subr.bf16.mxu0 0
    %2793 = vmatpush1.bf16.msra.mxu0 0
    %2794 = vmatprep.subr.bf16.mxu0 0
    %2795 = vmatpush1.bf16.msra.mxu0 0
    %2796 = vmatprep.subr.bf16.mxu0 0
    %2797 = vmatpush1.bf16.msra.mxu0 0
    %2798 = vmatprep.mubr.bf16.mxu0 0
    %2799 = vmatmul.mubr.bf16.gmra.mrb[0].mxu0 %v2764
    %v2800 = vpop.f32.mrb[0].mxu0
    %v2801 = vadd.f32 %v2271, %v2800
    %v2802 = vpop.f32.mrb[0].mxu0
    %v2803 = vpop.f32.mrb[0].mxu0
    %v2804 = vpop.f32.mrb[0].mxu0
    %2805 = vdwg.mxu0
    %2806 = vst.msk [vmem:[#allocation3 + $0x20] sm:$0xff] %vm150, %v2801
    %v2807 = vld [vmem:[#allocation2 + $0x28] sm:$0xff]
    %2808 = vmatprep.subr.bf16.mxu0 0
    %2809 = vmatpush1.bf16.msra.mxu0 %v2185
    %2810 = vmatprep.subr.bf16.mxu0 0
    %2811 = vmatpush1.bf16.msra.mxu0 %v2186
    %2812 = vmatprep.subr.bf16.mxu0 0
    %2813 = vmatpush1.bf16.msra.mxu0 0
    %2814 = vmatprep.subr.bf16.mxu0 0
    %2815 = vmatpush1.bf16.msra.mxu0 0
    %2816 = vmatprep.subr.bf16.mxu0 0
    %2817 = vmatpush1.bf16.msra.mxu0 0
    %2818 = vmatprep.subr.bf16.mxu0 0
    %2819 = vmatpush1.bf16.msra.mxu0 0
    %2820 = vmatprep.subr.bf16.mxu0 0
    %2821 = vmatpush1.bf16.msra.mxu0 0
    %2822 = vmatprep.subr.bf16.mxu0 0
    %2823 = vmatpush1.bf16.msra.mxu0 0
    %2824 = vmatprep.subr.bf16.mxu0 0
    %2825 = vmatpush1.bf16.msra.mxu0 0
    %2826 = vmatprep.subr.bf16.mxu0 0
    %2827 = vmatpush1.bf16.msra.mxu0 0
    %2828 = vmatprep.subr.bf16.mxu0 0
    %2829 = vmatpush1.bf16.msra.mxu0 0
    %2830 = vmatprep.subr.bf16.mxu0 0
    %2831 = vmatpush1.bf16.msra.mxu0 0
    %2832 = vmatprep.subr.bf16.mxu0 0
    %2833 = vmatpush1.bf16.msra.mxu0 0
    %2834 = vmatprep.subr.bf16.mxu0 0
    %2835 = vmatpush1.bf16.msra.mxu0 0
    %2836 = vmatprep.subr.bf16.mxu0 0
    %2837 = vmatpush1.bf16.msra.mxu0 0
    %2838 = vmatprep.subr.bf16.mxu0 0
    %2839 = vmatpush1.bf16.msra.mxu0 0
    %2840 = vmatprep.mubr.bf16.mxu0 0
    %2841 = vmatmul.mubr.bf16.gmra.mrb[0].mxu0 %v2764
    %v2842 = vpop.f32.mrb[0].mxu0
    %v2843 = vadd.f32 0.0, %v2842
    %v2844 = vpop.f32.mrb[0].mxu0
    %v2845 = vpop.f32.mrb[0].mxu0
    %v2846 = vpop.f32.mrb[0].mxu0
    %2847 = vdwg.mxu0
    %v2848 = vadd.f32 %v2807, %v2843
    %v2849 = vxor.u32 %v2848, 2147483648
    %v2850 = vmul.f32 %v2849, 1.442695
    %v2851 = vpow.pop %v2850
    %v2852 = vadd.f32 %v2851, 1.0
    %v2853 = vrcp.pop %v2852
    %v2854 = vmul.f32 1.0, %v2853
    %v2855 = vadd.f32 %v2843, %v2242
    %2857 = vrot.lane.b32.xlu0 %v2855, 64
    %v2858 = vpop.permute.xlu0 %2857
    %v2860 = vmul.f32 %v2854, %v2858
    %2862 = vrot.lane.b32.xlu0 %v2860, 64
    %v2863 = vpop.permute.xlu0 %2862
    %v2865 = vadd.f32 %v2807, %v2863
    %v2866 = vtanh.pop %v2865
    %v2867 = vsub.f32 %v2758, %v2866
    %2869 = vrot.lane.b32.xlu0 %v2867, 96
    %v2870 = vpop.permute.xlu0 %2869
    %v2872 = vmul.f32 %v2854, %v2870
    %2874 = vrot.lane.b32.xlu0 %v2872, 32
    %v2875 = vpop.permute.xlu0 %2874
    %v2877 = vadd.f32 %v2866, %v2875
    %v2878 = vpack.c.bf16 %v2877, %v2877
    %2880 = vrot.lane.b32.xlu0 %v2878, 64
    %v2881 = vpop.permute.xlu0 %2880
    %v2883 = vsel %vm72, %v2881, 0
    %2885 = vmatprep.subr.bf16.mxu0 0
    %2886 = vmatpush1.bf16.msra.mxu0 %v2283
    %2887 = vmatprep.subr.bf16.mxu0 0
    %2888 = vmatpush1.bf16.msra.mxu0 %v2284
    %2889 = vmatprep.subr.bf16.mxu0 0
    %2890 = vmatpush1.bf16.msra.mxu0 0
    %2891 = vmatprep.subr.bf16.mxu0 0
    %2892 = vmatpush1.bf16.msra.mxu0 0
    %2893 = vmatprep.subr.bf16.mxu0 0
    %2894 = vmatpush1.bf16.msra.mxu0 0
    %2895 = vmatprep.subr.bf16.mxu0 0
    %2896 = vmatpush1.bf16.msra.mxu0 0
    %2897 = vmatprep.subr.bf16.mxu0 0
    %2898 = vmatpush1.bf16.msra.mxu0 0
    %2899 = vmatprep.subr.bf16.mxu0 0
    %2900 = vmatpush1.bf16.msra.mxu0 0
    %2901 = vmatprep.subr.bf16.mxu0 0
    %2902 = vmatpush1.bf16.msra.mxu0 0
    %2903 = vmatprep.subr.bf16.mxu0 0
    %2904 = vmatpush1.bf16.msra.mxu0 0
    %2905 = vmatprep.subr.bf16.mxu0 0
    %2906 = vmatpush1.bf16.msra.mxu0 0
    %2907 = vmatprep.subr.bf16.mxu0 0
    %2908 = vmatpush1.bf16.msra.mxu0 0
    %2909 = vmatprep.subr.bf16.mxu0 0
    %2910 = vmatpush1.bf16.msra.mxu0 0
    %2911 = vmatprep.subr.bf16.mxu0 0
    %2912 = vmatpush1.bf16.msra.mxu0 0
    %2913 = vmatprep.subr.bf16.mxu0 0
    %2914 = vmatpush1.bf16.msra.mxu0 0
    %2915 = vmatprep.subr.bf16.mxu0 0
    %2916 = vmatpush1.bf16.msra.mxu0 0
    %2917 = vmatprep.mubr.bf16.mxu0 0
    %2918 = vmatmul.mubr.bf16.gmra.mrb[0].mxu0 %v2883
    %v2919 = vpop.f32.mrb[0].mxu0
    %v2920 = vadd.f32 %v2271, %v2919
    %v2921 = vpop.f32.mrb[0].mxu0
    %v2922 = vpop.f32.mrb[0].mxu0
    %v2923 = vpop.f32.mrb[0].mxu0
    %2924 = vdwg.mxu0
    %2925 = vst.msk [vmem:[#allocation3 + $0x28] sm:$0xff] %vm150, %v2920
    %v2926 = vld [vmem:[#allocation2 + $0x30] sm:$0xff]
    %2927 = vmatprep.subr.bf16.mxu0 0
    %2928 = vmatpush1.bf16.msra.mxu0 %v2185
    %2929 = vmatprep.subr.bf16.mxu0 0
    %2930 = vmatpush1.bf16.msra.mxu0 %v2186
    %2931 = vmatprep.subr.bf16.mxu0 0
    %2932 = vmatpush1.bf16.msra.mxu0 0
    %2933 = vmatprep.subr.bf16.mxu0 0
    %2934 = vmatpush1.bf16.msra.mxu0 0
    %2935 = vmatprep.subr.bf16.mxu0 0
    %2936 = vmatpush1.bf16.msra.mxu0 0
    %2937 = vmatprep.subr.bf16.mxu0 0
    %2938 = vmatpush1.bf16.msra.mxu0 0
    %2939 = vmatprep.subr.bf16.mxu0 0
    %2940 = vmatpush1.bf16.msra.mxu0 0
    %2941 = vmatprep.subr.bf16.mxu0 0
    %2942 = vmatpush1.bf16.msra.mxu0 0
    %2943 = vmatprep.subr.bf16.mxu0 0
    %2944 = vmatpush1.bf16.msra.mxu0 0
    %2945 = vmatprep.subr.bf16.mxu0 0
    %2946 = vmatpush1.bf16.msra.mxu0 0
    %2947 = vmatprep.subr.bf16.mxu0 0
    %2948 = vmatpush1.bf16.msra.mxu0 0
    %2949 = vmatprep.subr.bf16.mxu0 0
    %2950 = vmatpush1.bf16.msra.mxu0 0
    %2951 = vmatprep.subr.bf16.mxu0 0
    %2952 = vmatpush1.bf16.msra.mxu0 0
    %2953 = vmatprep.subr.bf16.mxu0 0
    %2954 = vmatpush1.bf16.msra.mxu0 0
    %2955 = vmatprep.subr.bf16.mxu0 0
    %2956 = vmatpush1.bf16.msra.mxu0 0
    %2957 = vmatprep.subr.bf16.mxu0 0
    %2958 = vmatpush1.bf16.msra.mxu0 0
    %2959 = vmatprep.mubr.bf16.mxu0 0
    %2960 = vmatmul.mubr.bf16.gmra.mrb[0].mxu0 %v2883
    %v2961 = vpop.f32.mrb[0].mxu0
    %v2962 = vadd.f32 0.0, %v2961
    %v2963 = vpop.f32.mrb[0].mxu0
    %v2964 = vpop.f32.mrb[0].mxu0
    %v2965 = vpop.f32.mrb[0].mxu0
    %2966 = vdwg.mxu0
    %v2967 = vadd.f32 %v2926, %v2962
    %v2968 = vxor.u32 %v2967, 2147483648
    %v2969 = vmul.f32 %v2968, 1.442695
    %v2970 = vpow.pop %v2969
    %v2971 = vadd.f32 %v2970, 1.0
    %v2972 = vrcp.pop %v2971
    %v2973 = vmul.f32 1.0, %v2972
    %v2974 = vadd.f32 %v2962, %v2242
    %2976 = vrot.lane.b32.xlu0 %v2974, 64
    %v2977 = vpop.permute.xlu0 %2976
    %v2979 = vmul.f32 %v2973, %v2977
    %2981 = vrot.lane.b32.xlu0 %v2979, 64
    %v2982 = vpop.permute.xlu0 %2981
    %v2984 = vadd.f32 %v2926, %v2982
    %v2985 = vtanh.pop %v2984
    %v2986 = vsub.f32 %v2877, %v2985
    %2988 = vrot.lane.b32.xlu0 %v2986, 96
    %v2989 = vpop.permute.xlu0 %2988
    %v2991 = vmul.f32 %v2973, %v2989
    %2993 = vrot.lane.b32.xlu0 %v2991, 32
    %v2994 = vpop.permute.xlu0 %2993
    %v2996 = vadd.f32 %v2985, %v2994
    %v2997 = vpack.c.bf16 %v2996, %v2996
    %2999 = vrot.lane.b32.xlu0 %v2997, 64
    %v3000 = vpop.permute.xlu0 %2999
    %v3002 = vsel %vm72, %v3000, 0
    %3004 = vmatprep.subr.bf16.mxu0 0
    %3005 = vmatpush1.bf16.msra.mxu0 %v2283
    %3006 = vmatprep.subr.bf16.mxu0 0
    %3007 = vmatpush1.bf16.msra.mxu0 %v2284
    %3008 = vmatprep.subr.bf16.mxu0 0
    %3009 = vmatpush1.bf16.msra.mxu0 0
    %3010 = vmatprep.subr.bf16.mxu0 0
    %3011 = vmatpush1.bf16.msra.mxu0 0
    %3012 = vmatprep.subr.bf16.mxu0 0
    %3013 = vmatpush1.bf16.msra.mxu0 0
    %3014 = vmatprep.subr.bf16.mxu0 0
    %3015 = vmatpush1.bf16.msra.mxu0 0
    %3016 = vmatprep.subr.bf16.mxu0 0
    %3017 = vmatpush1.bf16.msra.mxu0 0
    %3018 = vmatprep.subr.bf16.mxu0 0
    %3019 = vmatpush1.bf16.msra.mxu0 0
    %3020 = vmatprep.subr.bf16.mxu0 0
    %3021 = vmatpush1.bf16.msra.mxu0 0
    %3022 = vmatprep.subr.bf16.mxu0 0
    %3023 = vmatpush1.bf16.msra.mxu0 0
    %3024 = vmatprep.subr.bf16.mxu0 0
    %3025 = vmatpush1.bf16.msra.mxu0 0
    %3026 = vmatprep.subr.bf16.mxu0 0
    %3027 = vmatpush1.bf16.msra.mxu0 0
    %3028 = vmatprep.subr.bf16.mxu0 0
    %3029 = vmatpush1.bf16.msra.mxu0 0
    %3030 = vmatprep.subr.bf16.mxu0 0
    %3031 = vmatpush1.bf16.msra.mxu0 0
    %3032 = vmatprep.subr.bf16.mxu0 0
    %3033 = vmatpush1.bf16.msra.mxu0 0
    %3034 = vmatprep.subr.bf16.mxu0 0
    %3035 = vmatpush1.bf16.msra.mxu0 0
    %3036 = vmatprep.mubr.bf16.mxu0 0
    %3037 = vmatmul.mubr.bf16.gmra.mrb[0].mxu0 %v3002
    %v3038 = vpop.f32.mrb[0].mxu0
    %v3039 = vadd.f32 %v2271, %v3038
    %v3040 = vpop.f32.mrb[0].mxu0
    %v3041 = vpop.f32.mrb[0].mxu0
    %v3042 = vpop.f32.mrb[0].mxu0
    %3043 = vdwg.mxu0
    %3044 = vst.msk [vmem:[#allocation3 + $0x30] sm:$0xff] %vm150, %v3039
    %v3045 = vld [vmem:[#allocation2 + $0x38] sm:$0xff]
    %3046 = vmatprep.subr.bf16.mxu0 0
    %3047 = vmatpush1.bf16.msra.mxu0 %v2185
    %3048 = vmatprep.subr.bf16.mxu0 0
    %3049 = vmatpush1.bf16.msra.mxu0 %v2186
    %3050 = vmatprep.subr.bf16.mxu0 0
    %3051 = vmatpush1.bf16.msra.mxu0 0
    %3052 = vmatprep.subr.bf16.mxu0 0
    %3053 = vmatpush1.bf16.msra.mxu0 0
    %3054 = vmatprep.subr.bf16.mxu0 0
    %3055 = vmatpush1.bf16.msra.mxu0 0
    %3056 = vmatprep.subr.bf16.mxu0 0
    %3057 = vmatpush1.bf16.msra.mxu0 0
    %3058 = vmatprep.subr.bf16.mxu0 0
    %3059 = vmatpush1.bf16.msra.mxu0 0
    %3060 = vmatprep.subr.bf16.mxu0 0
    %3061 = vmatpush1.bf16.msra.mxu0 0
    %3062 = vmatprep.subr.bf16.mxu0 0
    %3063 = vmatpush1.bf16.msra.mxu0 0
    %3064 = vmatprep.subr.bf16.mxu0 0
    %3065 = vmatpush1.bf16.msra.mxu0 0
    %3066 = vmatprep.subr.bf16.mxu0 0
    %3067 = vmatpush1.bf16.msra.mxu0 0
    %3068 = vmatprep.subr.bf16.mxu0 0
    %3069 = vmatpush1.bf16.msra.mxu0 0
    %3070 = vmatprep.subr.bf16.mxu0 0
    %3071 = vmatpush1.bf16.msra.mxu0 0
    %3072 = vmatprep.subr.bf16.mxu0 0
    %3073 = vmatpush1.bf16.msra.mxu0 0
    %3074 = vmatprep.subr.bf16.mxu0 0
    %3075 = vmatpush1.bf16.msra.mxu0 0
    %3076 = vmatprep.subr.bf16.mxu0 0
    %3077 = vmatpush1.bf16.msra.mxu0 0
    %3078 = vmatprep.mubr.bf16.mxu0 0
    %3079 = vmatmul.mubr.bf16.gmra.mrb[0].mxu0 %v3002
    %v3080 = vpop.f32.mrb[0].mxu0
    %v3081 = vadd.f32 0.0, %v3080
    %v3082 = vpop.f32.mrb[0].mxu0
    %v3083 = vpop.f32.mrb[0].mxu0
    %v3084 = vpop.f32.mrb[0].mxu0
    %3085 = vdwg.mxu0
    %v3086 = vadd.f32 %v3045, %v3081
    %v3087 = vxor.u32 %v3086, 2147483648
    %v3088 = vmul.f32 %v3087, 1.442695
    %v3089 = vpow.pop %v3088
    %v3090 = vadd.f32 %v3089, 1.0
    %v3091 = vrcp.pop %v3090
    %v3092 = vmul.f32 1.0, %v3091
    %v3093 = vadd.f32 %v3081, %v2242
    %3095 = vrot.lane.b32.xlu0 %v3093, 64
    %v3096 = vpop.permute.xlu0 %3095
    %v3098 = vmul.f32 %v3092, %v3096
    %3100 = vrot.lane.b32.xlu0 %v3098, 64
    %v3101 = vpop.permute.xlu0 %3100
    %v3103 = vadd.f32 %v3045, %v3101
    %v3104 = vtanh.pop %v3103
    %v3105 = vsub.f32 %v2996, %v3104
    %3107 = vrot.lane.b32.xlu0 %v3105, 96
    %v3108 = vpop.permute.xlu0 %3107
    %v3110 = vmul.f32 %v3092, %v3108
    %3112 = vrot.lane.b32.xlu0 %v3110, 32
    %v3113 = vpop.permute.xlu0 %3112
    %v3115 = vadd.f32 %v3104, %v3113
    %v3116 = vpack.c.bf16 %v3115, %v3115
    %3118 = vrot.lane.b32.xlu0 %v3116, 64
    %v3119 = vpop.permute.xlu0 %3118
    %v3121 = vsel %vm72, %v3119, 0
    %3123 = vmatprep.subr.bf16.mxu0 0
    %3124 = vmatpush1.bf16.msra.mxu0 %v2283
    %3125 = vmatprep.subr.bf16.mxu0 0
    %3126 = vmatpush1.bf16.msra.mxu0 %v2284
    %3127 = vmatprep.subr.bf16.mxu0 0
    %3128 = vmatpush1.bf16.msra.mxu0 0
    %3129 = vmatprep.subr.bf16.mxu0 0
    %3130 = vmatpush1.bf16.msra.mxu0 0
    %3131 = vmatprep.subr.bf16.mxu0 0
    %3132 = vmatpush1.bf16.msra.mxu0 0
    %3133 = vmatprep.subr.bf16.mxu0 0
    %3134 = vmatpush1.bf16.msra.mxu0 0
    %3135 = vmatprep.subr.bf16.mxu0 0
    %3136 = vmatpush1.bf16.msra.mxu0 0
    %3137 = vmatprep.subr.bf16.mxu0 0
    %3138 = vmatpush1.bf16.msra.mxu0 0
    %3139 = vmatprep.subr.bf16.mxu0 0
    %3140 = vmatpush1.bf16.msra.mxu0 0
    %3141 = vmatprep.subr.bf16.mxu0 0
    %3142 = vmatpush1.bf16.msra.mxu0 0
    %3143 = vmatprep.subr.bf16.mxu0 0
    %3144 = vmatpush1.bf16.msra.mxu0 0
    %3145 = vmatprep.subr.bf16.mxu0 0
    %3146 = vmatpush1.bf16.msra.mxu0 0
    %3147 = vmatprep.subr.bf16.mxu0 0
    %3148 = vmatpush1.bf16.msra.mxu0 0
    %3149 = vmatprep.subr.bf16.mxu0 0
    %3150 = vmatpush1.bf16.msra.mxu0 0
    %3151 = vmatprep.subr.bf16.mxu0 0
    %3152 = vmatpush1.bf16.msra.mxu0 0
    %3153 = vmatprep.subr.bf16.mxu0 0
    %3154 = vmatpush1.bf16.msra.mxu0 0
    %3155 = vmatprep.mubr.bf16.mxu0 0
    %3156 = vmatmul.mubr.bf16.gmra.mrb[0].mxu0 %v3121
    %v3157 = vpop.f32.mrb[0].mxu0
    %v3158 = vadd.f32 %v2271, %v3157
    %v3159 = vpop.f32.mrb[0].mxu0
    %v3160 = vpop.f32.mrb[0].mxu0
    %v3161 = vpop.f32.mrb[0].mxu0
    %3162 = vdwg.mxu0
    %3163 = vst.msk [vmem:[#allocation3 + $0x38] sm:$0xff] %vm150, %v3158
    %s3164 = scalar_lea.vmem [#allocation4], 48
    %v3165 = vld [vmem:[%s3164] sm:$0xf]
    %v3166 = vld [vmem:[%s3164 + $0x4] sm:$0xf]
    %v3167 = vld [vmem:[%s3164 + $0x8] sm:$0xf]
    %v3168 = vld [vmem:[%s3164 + $0xc] sm:$0xf]
    %v3169 = vld [vmem:[%s2174] sm:$0x3]
    %s3170 = scalar_lea.vmem %s1, 64
    %v3171 = vld [vmem:[%s3170] sm:$0xf]
    %v3172 = vld [vmem:[%s3170 + $0x4] sm:$0xf]
    %v3173 = vld [vmem:[%s3170 + $0x8] sm:$0xf]
    %v3174 = vld [vmem:[%s3170 + $0xc] sm:$0xf]
    %s3175 = scalar_lea.vmem %s3, 8
    %v3176 = vld [vmem:[%s3175] sm:$0x3]
    %v3177 = vld [vmem:[#allocation3] sm:$0xff]
    %v3182 = vunpack.c.l.b16 %v3165
    %v3183 = vunpack.c.l.b16 %v3166
    %v3184 = vunpack.c.l.b16 %v3167
    %v3185 = vunpack.c.l.b16 %v3168
    %v3186 = vpack.c.b16 %v3183, %v3182
    %v3187 = vpack.c.b16 %v3185, %v3184
    %3190 = vmatprep.subr.bf16.mxu0 0
    %3191 = vmatpush1.bf16.msra.mxu0 %v3186
    %3192 = vmatprep.subr.bf16.mxu0 0
    %3193 = vmatpush1.bf16.msra.mxu0 %v3187
    %3194 = vmatprep.subr.bf16.mxu0 0
    %3195 = vmatpush1.bf16.msra.mxu0 0
    %3196 = vmatprep.subr.bf16.mxu0 0
    %3197 = vmatpush1.bf16.msra.mxu0 0
    %3198 = vmatprep.subr.bf16.mxu0 0
    %3199 = vmatpush1.bf16.msra.mxu0 0
    %3200 = vmatprep.subr.bf16.mxu0 0
    %3201 = vmatpush1.bf16.msra.mxu0 0
    %3202 = vmatprep.subr.bf16.mxu0 0
    %3203 = vmatpush1.bf16.msra.mxu0 0
    %3204 = vmatprep.subr.bf16.mxu0 0
    %3205 = vmatpush1.bf16.msra.mxu0 0
    %3206 = vmatprep.subr.bf16.mxu0 0
    %3207 = vmatpush1.bf16.msra.mxu0 0
    %3208 = vmatprep.subr.bf16.mxu0 0
    %3209 = vmatpush1.bf16.msra.mxu0 0
    %3210 = vmatprep.subr.bf16.mxu0 0
    %3211 = vmatpush1.bf16.msra.mxu0 0
    %3212 = vmatprep.subr.bf16.mxu0 0
    %3213 = vmatpush1.bf16.msra.mxu0 0
    %3214 = vmatprep.subr.bf16.mxu0 0
    %3215 = vmatpush1.bf16.msra.mxu0 0
    %3216 = vmatprep.subr.bf16.mxu0 0
    %3217 = vmatpush1.bf16.msra.mxu0 0
    %3218 = vmatprep.subr.bf16.mxu0 0
    %3219 = vmatpush1.bf16.msra.mxu0 0
    %3220 = vmatprep.subr.bf16.mxu0 0
    %3221 = vmatpush1.bf16.msra.mxu0 0
    %3222 = vmatprep.mubr.bf16.mxu0 0
    %3223 = vmatmul.mubr.bf16.gmra.mrb[0].mxu0 %v185
    %v3224 = vpop.f32.mrb[0].mxu0
    %v3225 = vadd.f32 0.0, %v3224
    %v3226 = vpop.f32.mrb[0].mxu0
    %v3227 = vpop.f32.mrb[0].mxu0
    %v3228 = vpop.f32.mrb[0].mxu0
    %3229 = vdwg.mxu0
    %v3230 = vadd.f32 %v3177, %v3225
    %v3231 = vxor.u32 %v3230, 2147483648
    %v3232 = vmul.f32 %v3231, 1.442695
    %v3233 = vpow.pop %v3232
    %v3234 = vadd.f32 %v3233, 1.0
    %v3235 = vrcp.pop %v3234
    %v3236 = vmul.f32 1.0, %v3235
    %v3237 = vlaneseq
    %v3238 = vshrl.u32 %v3237, 7
    %v3239 = vsub.s32 1, %v3238
    %v3240 = vrot.slane %v3169, %v3239
    %3242 = vrot.lane.b32.xlu0 %v3240, 64
    %v3243 = vpop.permute.xlu0 %3242
    %v3245 = vadd.f32 %v3225, %v3243
    %3247 = vrot.lane.b32.xlu0 %v3245, 64
    %v3248 = vpop.permute.xlu0 %3247
    %v3250 = vmul.f32 %v3236, %v3248
    %3252 = vrot.lane.b32.xlu0 %v3250, 64
    %v3253 = vpop.permute.xlu0 %3252
    %v3255 = vadd.f32 %v3177, %v3253
    %v3256 = vtanh.pop %v3255
    %v3257 = vsub.f32 0.0, %v3256
    %3259 = vrot.lane.b32.xlu0 %v3257, 96
    %v3260 = vpop.permute.xlu0 %3259
    %v3262 = vmul.f32 %v3236, %v3260
    %3264 = vrot.lane.b32.xlu0 %v3262, 32
    %v3265 = vpop.permute.xlu0 %3264
    %v3267 = vadd.f32 %v3256, %v3265
    %v3268 = vpack.c.bf16 %v3267, %v3267
    %v3269 = vlaneseq
    %v3270 = vshrl.u32 %v3269, 7
    %v3271 = vsub.s32 0, %v3270
    %v3272 = vrot.slane %v3176, %v3271
    %3274 = vrot.lane.b32.xlu0 %v3268, 64
    %v3275 = vpop.permute.xlu0 %3274
    %v3280 = vunpack.c.l.b16 %v3171
    %v3281 = vunpack.c.l.b16 %v3172
    %v3282 = vunpack.c.l.b16 %v3173
    %v3283 = vunpack.c.l.b16 %v3174
    %v3284 = vpack.c.b16 %v3281, %v3280
    %v3285 = vpack.c.b16 %v3283, %v3282
    %v3289 = vsel %vm72, %v3275, 0
    %3291 = vmatprep.subr.bf16.mxu0 0
    %3292 = vmatpush1.bf16.msra.mxu0 %v3284
    %3293 = vmatprep.subr.bf16.mxu0 0
    %3294 = vmatpush1.bf16.msra.mxu0 %v3285
    %3295 = vmatprep.subr.bf16.mxu0 0
    %3296 = vmatpush1.bf16.msra.mxu0 0
    %3297 = vmatprep.subr.bf16.mxu0 0
    %3298 = vmatpush1.bf16.msra.mxu0 0
    %3299 = vmatprep.subr.bf16.mxu0 0
    %3300 = vmatpush1.bf16.msra.mxu0 0
    %3301 = vmatprep.subr.bf16.mxu0 0
    %3302 = vmatpush1.bf16.msra.mxu0 0
    %3303 = vmatprep.subr.bf16.mxu0 0
    %3304 = vmatpush1.bf16.msra.mxu0 0
    %3305 = vmatprep.subr.bf16.mxu0 0
    %3306 = vmatpush1.bf16.msra.mxu0 0
    %3307 = vmatprep.subr.bf16.mxu0 0
    %3308 = vmatpush1.bf16.msra.mxu0 0
    %3309 = vmatprep.subr.bf16.mxu0 0
    %3310 = vmatpush1.bf16.msra.mxu0 0
    %3311 = vmatprep.subr.bf16.mxu0 0
    %3312 = vmatpush1.bf16.msra.mxu0 0
    %3313 = vmatprep.subr.bf16.mxu0 0
    %3314 = vmatpush1.bf16.msra.mxu0 0
    %3315 = vmatprep.subr.bf16.mxu0 0
    %3316 = vmatpush1.bf16.msra.mxu0 0
    %3317 = vmatprep.subr.bf16.mxu0 0
    %3318 = vmatpush1.bf16.msra.mxu0 0
    %3319 = vmatprep.subr.bf16.mxu0 0
    %3320 = vmatpush1.bf16.msra.mxu0 0
    %3321 = vmatprep.subr.bf16.mxu0 0
    %3322 = vmatpush1.bf16.msra.mxu0 0
    %3323 = vmatprep.mubr.bf16.mxu0 0
    %3324 = vmatmul.mubr.bf16.gmra.mrb[0].mxu0 %v3289
    %v3325 = vpop.f32.mrb[0].mxu0
    %v3326 = vadd.f32 %v3272, %v3325
    %v3327 = vpop.f32.mrb[0].mxu0
    %v3328 = vpop.f32.mrb[0].mxu0
    %v3329 = vpop.f32.mrb[0].mxu0
    %3330 = vdwg.mxu0
    %3331 = vst.msk [vmem:[#allocation2] sm:$0xff] %vm150, %v3326
    %v3332 = vld [vmem:[#allocation3 + $0x8] sm:$0xff]
    %3333 = vmatprep.subr.bf16.mxu0 0
    %3334 = vmatpush1.bf16.msra.mxu0 %v3186
    %3335 = vmatprep.subr.bf16.mxu0 0
    %3336 = vmatpush1.bf16.msra.mxu0 %v3187
    %3337 = vmatprep.subr.bf16.mxu0 0
    %3338 = vmatpush1.bf16.msra.mxu0 0
    %3339 = vmatprep.subr.bf16.mxu0 0
    %3340 = vmatpush1.bf16.msra.mxu0 0
    %3341 = vmatprep.subr.bf16.mxu0 0
    %3342 = vmatpush1.bf16.msra.mxu0 0
    %3343 = vmatprep.subr.bf16.mxu0 0
    %3344 = vmatpush1.bf16.msra.mxu0 0
    %3345 = vmatprep.subr.bf16.mxu0 0
    %3346 = vmatpush1.bf16.msra.mxu0 0
    %3347 = vmatprep.subr.bf16.mxu0 0
    %3348 = vmatpush1.bf16.msra.mxu0 0
    %3349 = vmatprep.subr.bf16.mxu0 0
    %3350 = vmatpush1.bf16.msra.mxu0 0
    %3351 = vmatprep.subr.bf16.mxu0 0
    %3352 = vmatpush1.bf16.msra.mxu0 0
    %3353 = vmatprep.subr.bf16.mxu0 0
    %3354 = vmatpush1.bf16.msra.mxu0 0
    %3355 = vmatprep.subr.bf16.mxu0 0
    %3356 = vmatpush1.bf16.msra.mxu0 0
    %3357 = vmatprep.subr.bf16.mxu0 0
    %3358 = vmatpush1.bf16.msra.mxu0 0
    %3359 = vmatprep.subr.bf16.mxu0 0
    %3360 = vmatpush1.bf16.msra.mxu0 0
    %3361 = vmatprep.subr.bf16.mxu0 0
    %3362 = vmatpush1.bf16.msra.mxu0 0
    %3363 = vmatprep.subr.bf16.mxu0 0
    %3364 = vmatpush1.bf16.msra.mxu0 0
    %3365 = vmatprep.mubr.bf16.mxu0 0
    %3366 = vmatmul.mubr.bf16.gmra.mrb[0].mxu0 %v3289
    %v3367 = vpop.f32.mrb[0].mxu0
    %v3368 = vadd.f32 0.0, %v3367
    %v3369 = vpop.f32.mrb[0].mxu0
    %v3370 = vpop.f32.mrb[0].mxu0
    %v3371 = vpop.f32.mrb[0].mxu0
    %3372 = vdwg.mxu0
    %v3373 = vadd.f32 %v3332, %v3368
    %v3374 = vxor.u32 %v3373, 2147483648
    %v3375 = vmul.f32 %v3374, 1.442695
    %v3376 = vpow.pop %v3375
    %v3377 = vadd.f32 %v3376, 1.0
    %v3378 = vrcp.pop %v3377
    %v3379 = vmul.f32 1.0, %v3378
    %v3380 = vadd.f32 %v3368, %v3243
    %3382 = vrot.lane.b32.xlu0 %v3380, 64
    %v3383 = vpop.permute.xlu0 %3382
    %v3385 = vmul.f32 %v3379, %v3383
    %3387 = vrot.lane.b32.xlu0 %v3385, 64
    %v3388 = vpop.permute.xlu0 %3387
    %v3390 = vadd.f32 %v3332, %v3388
    %v3391 = vtanh.pop %v3390
    %v3392 = vsub.f32 %v3267, %v3391
    %3394 = vrot.lane.b32.xlu0 %v3392, 96
    %v3395 = vpop.permute.xlu0 %3394
    %v3397 = vmul.f32 %v3379, %v3395
    %3399 = vrot.lane.b32.xlu0 %v3397, 32
    %v3400 = vpop.permute.xlu0 %3399
    %v3402 = vadd.f32 %v3391, %v3400
    %v3403 = vpack.c.bf16 %v3402, %v3402
    %3405 = vrot.lane.b32.xlu0 %v3403, 64
    %v3406 = vpop.permute.xlu0 %3405
    %v3408 = vsel %vm72, %v3406, 0
    %3410 = vmatprep.subr.bf16.mxu0 0
    %3411 = vmatpush1.bf16.msra.mxu0 %v3284
    %3412 = vmatprep.subr.bf16.mxu0 0
    %3413 = vmatpush1.bf16.msra.mxu0 %v3285
    %3414 = vmatprep.subr.bf16.mxu0 0
    %3415 = vmatpush1.bf16.msra.mxu0 0
    %3416 = vmatprep.subr.bf16.mxu0 0
    %3417 = vmatpush1.bf16.msra.mxu0 0
    %3418 = vmatprep.subr.bf16.mxu0 0
    %3419 = vmatpush1.bf16.msra.mxu0 0
    %3420 = vmatprep.subr.bf16.mxu0 0
    %3421 = vmatpush1.bf16.msra.mxu0 0
    %3422 = vmatprep.subr.bf16.mxu0 0
    %3423 = vmatpush1.bf16.msra.mxu0 0
    %3424 = vmatprep.subr.bf16.mxu0 0
    %3425 = vmatpush1.bf16.msra.mxu0 0
    %3426 = vmatprep.subr.bf16.mxu0 0
    %3427 = vmatpush1.bf16.msra.mxu0 0
    %3428 = vmatprep.subr.bf16.mxu0 0
    %3429 = vmatpush1.bf16.msra.mxu0 0
    %3430 = vmatprep.subr.bf16.mxu0 0
    %3431 = vmatpush1.bf16.msra.mxu0 0
    %3432 = vmatprep.subr.bf16.mxu0 0
    %3433 = vmatpush1.bf16.msra.mxu0 0
    %3434 = vmatprep.subr.bf16.mxu0 0
    %3435 = vmatpush1.bf16.msra.mxu0 0
    %3436 = vmatprep.subr.bf16.mxu0 0
    %3437 = vmatpush1.bf16.msra.mxu0 0
    %3438 = vmatprep.subr.bf16.mxu0 0
    %3439 = vmatpush1.bf16.msra.mxu0 0
    %3440 = vmatprep.subr.bf16.mxu0 0
    %3441 = vmatpush1.bf16.msra.mxu0 0
    %3442 = vmatprep.mubr.bf16.mxu0 0
    %3443 = vmatmul.mubr.bf16.gmra.mrb[0].mxu0 %v3408
    %v3444 = vpop.f32.mrb[0].mxu0
    %v3445 = vadd.f32 %v3272, %v3444
    %v3446 = vpop.f32.mrb[0].mxu0
    %v3447 = vpop.f32.mrb[0].mxu0
    %v3448 = vpop.f32.mrb[0].mxu0
    %3449 = vdwg.mxu0
    %3450 = vst.msk [vmem:[#allocation2 + $0x8] sm:$0xff] %vm150, %v3445
    %v3451 = vld [vmem:[#allocation3 + $0x10] sm:$0xff]
    %3452 = vmatprep.subr.bf16.mxu0 0
    %3453 = vmatpush1.bf16.msra.mxu0 %v3186
    %3454 = vmatprep.subr.bf16.mxu0 0
    %3455 = vmatpush1.bf16.msra.mxu0 %v3187
    %3456 = vmatprep.subr.bf16.mxu0 0
    %3457 = vmatpush1.bf16.msra.mxu0 0
    %3458 = vmatprep.subr.bf16.mxu0 0
    %3459 = vmatpush1.bf16.msra.mxu0 0
    %3460 = vmatprep.subr.bf16.mxu0 0
    %3461 = vmatpush1.bf16.msra.mxu0 0
    %3462 = vmatprep.subr.bf16.mxu0 0
    %3463 = vmatpush1.bf16.msra.mxu0 0
    %3464 = vmatprep.subr.bf16.mxu0 0
    %3465 = vmatpush1.bf16.msra.mxu0 0
    %3466 = vmatprep.subr.bf16.mxu0 0
    %3467 = vmatpush1.bf16.msra.mxu0 0
    %3468 = vmatprep.subr.bf16.mxu0 0
    %3469 = vmatpush1.bf16.msra.mxu0 0
    %3470 = vmatprep.subr.bf16.mxu0 0
    %3471 = vmatpush1.bf16.msra.mxu0 0
    %3472 = vmatprep.subr.bf16.mxu0 0
    %3473 = vmatpush1.bf16.msra.mxu0 0
    %3474 = vmatprep.subr.bf16.mxu0 0
    %3475 = vmatpush1.bf16.msra.mxu0 0
    %3476 = vmatprep.subr.bf16.mxu0 0
    %3477 = vmatpush1.bf16.msra.mxu0 0
    %3478 = vmatprep.subr.bf16.mxu0 0
    %3479 = vmatpush1.bf16.msra.mxu0 0
    %3480 = vmatprep.subr.bf16.mxu0 0
    %3481 = vmatpush1.bf16.msra.mxu0 0
    %3482 = vmatprep.subr.bf16.mxu0 0
    %3483 = vmatpush1.bf16.msra.mxu0 0
    %3484 = vmatprep.mubr.bf16.mxu0 0
    %3485 = vmatmul.mubr.bf16.gmra.mrb[0].mxu0 %v3408
    %v3486 = vpop.f32.mrb[0].mxu0
    %v3487 = vadd.f32 0.0, %v3486
    %v3488 = vpop.f32.mrb[0].mxu0
    %v3489 = vpop.f32.mrb[0].mxu0
    %v3490 = vpop.f32.mrb[0].mxu0
    %3491 = vdwg.mxu0
    %v3492 = vadd.f32 %v3451, %v3487
    %v3493 = vxor.u32 %v3492, 2147483648
    %v3494 = vmul.f32 %v3493, 1.442695
    %v3495 = vpow.pop %v3494
    %v3496 = vadd.f32 %v3495, 1.0
    %v3497 = vrcp.pop %v3496
    %v3498 = vmul.f32 1.0, %v3497
    %v3499 = vadd.f32 %v3487, %v3243
    %3501 = vrot.lane.b32.xlu0 %v3499, 64
    %v3502 = vpop.permute.xlu0 %3501
    %v3504 = vmul.f32 %v3498, %v3502
    %3506 = vrot.lane.b32.xlu0 %v3504, 64
    %v3507 = vpop.permute.xlu0 %3506
    %v3509 = vadd.f32 %v3451, %v3507
    %v3510 = vtanh.pop %v3509
    %v3511 = vsub.f32 %v3402, %v3510
    %3513 = vrot.lane.b32.xlu0 %v3511, 96
    %v3514 = vpop.permute.xlu0 %3513
    %v3516 = vmul.f32 %v3498, %v3514
    %3518 = vrot.lane.b32.xlu0 %v3516, 32
    %v3519 = vpop.permute.xlu0 %3518
    %v3521 = vadd.f32 %v3510, %v3519
    %v3522 = vpack.c.bf16 %v3521, %v3521
    %3524 = vrot.lane.b32.xlu0 %v3522, 64
    %v3525 = vpop.permute.xlu0 %3524
    %v3527 = vsel %vm72, %v3525, 0
    %3529 = vmatprep.subr.bf16.mxu0 0
    %3530 = vmatpush1.bf16.msra.mxu0 %v3284
    %3531 = vmatprep.subr.bf16.mxu0 0
    %3532 = vmatpush1.bf16.msra.mxu0 %v3285
    %3533 = vmatprep.subr.bf16.mxu0 0
    %3534 = vmatpush1.bf16.msra.mxu0 0
    %3535 = vmatprep.subr.bf16.mxu0 0
    %3536 = vmatpush1.bf16.msra.mxu0 0
    %3537 = vmatprep.subr.bf16.mxu0 0
    %3538 = vmatpush1.bf16.msra.mxu0 0
    %3539 = vmatprep.subr.bf16.mxu0 0
    %3540 = vmatpush1.bf16.msra.mxu0 0
    %3541 = vmatprep.subr.bf16.mxu0 0
    %3542 = vmatpush1.bf16.msra.mxu0 0
    %3543 = vmatprep.subr.bf16.mxu0 0
    %3544 = vmatpush1.bf16.msra.mxu0 0
    %3545 = vmatprep.subr.bf16.mxu0 0
    %3546 = vmatpush1.bf16.msra.mxu0 0
    %3547 = vmatprep.subr.bf16.mxu0 0
    %3548 = vmatpush1.bf16.msra.mxu0 0
    %3549 = vmatprep.subr.bf16.mxu0 0
    %3550 = vmatpush1.bf16.msra.mxu0 0
    %3551 = vmatprep.subr.bf16.mxu0 0
    %3552 = vmatpush1.bf16.msra.mxu0 0
    %3553 = vmatprep.subr.bf16.mxu0 0
    %3554 = vmatpush1.bf16.msra.mxu0 0
    %3555 = vmatprep.subr.bf16.mxu0 0
    %3556 = vmatpush1.bf16.msra.mxu0 0
    %3557 = vmatprep.subr.bf16.mxu0 0
    %3558 = vmatpush1.bf16.msra.mxu0 0
    %3559 = vmatprep.subr.bf16.mxu0 0
    %3560 = vmatpush1.bf16.msra.mxu0 0
    %3561 = vmatprep.mubr.bf16.mxu0 0
    %3562 = vmatmul.mubr.bf16.gmra.mrb[0].mxu0 %v3527
    %v3563 = vpop.f32.mrb[0].mxu0
    %v3564 = vadd.f32 %v3272, %v3563
    %v3565 = vpop.f32.mrb[0].mxu0
    %v3566 = vpop.f32.mrb[0].mxu0
    %v3567 = vpop.f32.mrb[0].mxu0
    %3568 = vdwg.mxu0
    %3569 = vst.msk [vmem:[#allocation2 + $0x10] sm:$0xff] %vm150, %v3564
    %v3570 = vld [vmem:[#allocation3 + $0x18] sm:$0xff]
    %3571 = vmatprep.subr.bf16.mxu0 0
    %3572 = vmatpush1.bf16.msra.mxu0 %v3186
    %3573 = vmatprep.subr.bf16.mxu0 0
    %3574 = vmatpush1.bf16.msra.mxu0 %v3187
    %3575 = vmatprep.subr.bf16.mxu0 0
    %3576 = vmatpush1.bf16.msra.mxu0 0
    %3577 = vmatprep.subr.bf16.mxu0 0
    %3578 = vmatpush1.bf16.msra.mxu0 0
    %3579 = vmatprep.subr.bf16.mxu0 0
    %3580 = vmatpush1.bf16.msra.mxu0 0
    %3581 = vmatprep.subr.bf16.mxu0 0
    %3582 = vmatpush1.bf16.msra.mxu0 0
    %3583 = vmatprep.subr.bf16.mxu0 0
    %3584 = vmatpush1.bf16.msra.mxu0 0
    %3585 = vmatprep.subr.bf16.mxu0 0
    %3586 = vmatpush1.bf16.msra.mxu0 0
    %3587 = vmatprep.subr.bf16.mxu0 0
    %3588 = vmatpush1.bf16.msra.mxu0 0
    %3589 = vmatprep.subr.bf16.mxu0 0
    %3590 = vmatpush1.bf16.msra.mxu0 0
    %3591 = vmatprep.subr.bf16.mxu0 0
    %3592 = vmatpush1.bf16.msra.mxu0 0
    %3593 = vmatprep.subr.bf16.mxu0 0
    %3594 = vmatpush1.bf16.msra.mxu0 0
    %3595 = vmatprep.subr.bf16.mxu0 0
    %3596 = vmatpush1.bf16.msra.mxu0 0
    %3597 = vmatprep.subr.bf16.mxu0 0
    %3598 = vmatpush1.bf16.msra.mxu0 0
    %3599 = vmatprep.subr.bf16.mxu0 0
    %3600 = vmatpush1.bf16.msra.mxu0 0
    %3601 = vmatprep.subr.bf16.mxu0 0
    %3602 = vmatpush1.bf16.msra.mxu0 0
    %3603 = vmatprep.mubr.bf16.mxu0 0
    %3604 = vmatmul.mubr.bf16.gmra.mrb[0].mxu0 %v3527
    %v3605 = vpop.f32.mrb[0].mxu0
    %v3606 = vadd.f32 0.0, %v3605
    %v3607 = vpop.f32.mrb[0].mxu0
    %v3608 = vpop.f32.mrb[0].mxu0
    %v3609 = vpop.f32.mrb[0].mxu0
    %3610 = vdwg.mxu0
    %v3611 = vadd.f32 %v3570, %v3606
    %v3612 = vxor.u32 %v3611, 2147483648
    %v3613 = vmul.f32 %v3612, 1.442695
    %v3614 = vpow.pop %v3613
    %v3615 = vadd.f32 %v3614, 1.0
    %v3616 = vrcp.pop %v3615
    %v3617 = vmul.f32 1.0, %v3616
    %v3618 = vadd.f32 %v3606, %v3243
    %3620 = vrot.lane.b32.xlu0 %v3618, 64
    %v3621 = vpop.permute.xlu0 %3620
    %v3623 = vmul.f32 %v3617, %v3621
    %3625 = vrot.lane.b32.xlu0 %v3623, 64
    %v3626 = vpop.permute.xlu0 %3625
    %v3628 = vadd.f32 %v3570, %v3626
    %v3629 = vtanh.pop %v3628
    %v3630 = vsub.f32 %v3521, %v3629
    %3632 = vrot.lane.b32.xlu0 %v3630, 96
    %v3633 = vpop.permute.xlu0 %3632
    %v3635 = vmul.f32 %v3617, %v3633
    %3637 = vrot.lane.b32.xlu0 %v3635, 32
    %v3638 = vpop.permute.xlu0 %3637
    %v3640 = vadd.f32 %v3629, %v3638
    %v3641 = vpack.c.bf16 %v3640, %v3640
    %3643 = vrot.lane.b32.xlu0 %v3641, 64
    %v3644 = vpop.permute.xlu0 %3643
    %v3646 = vsel %vm72, %v3644, 0
    %3648 = vmatprep.subr.bf16.mxu0 0
    %3649 = vmatpush1.bf16.msra.mxu0 %v3284
    %3650 = vmatprep.subr.bf16.mxu0 0
    %3651 = vmatpush1.bf16.msra.mxu0 %v3285
    %3652 = vmatprep.subr.bf16.mxu0 0
    %3653 = vmatpush1.bf16.msra.mxu0 0
    %3654 = vmatprep.subr.bf16.mxu0 0
    %3655 = vmatpush1.bf16.msra.mxu0 0
    %3656 = vmatprep.subr.bf16.mxu0 0
    %3657 = vmatpush1.bf16.msra.mxu0 0
    %3658 = vmatprep.subr.bf16.mxu0 0
    %3659 = vmatpush1.bf16.msra.mxu0 0
    %3660 = vmatprep.subr.bf16.mxu0 0
    %3661 = vmatpush1.bf16.msra.mxu0 0
    %3662 = vmatprep.subr.bf16.mxu0 0
    %3663 = vmatpush1.bf16.msra.mxu0 0
    %3664 = vmatprep.subr.bf16.mxu0 0
    %3665 = vmatpush1.bf16.msra.mxu0 0
    %3666 = vmatprep.subr.bf16.mxu0 0
    %3667 = vmatpush1.bf16.msra.mxu0 0
    %3668 = vmatprep.subr.bf16.mxu0 0
    %3669 = vmatpush1.bf16.msra.mxu0 0
    %3670 = vmatprep.subr.bf16.mxu0 0
    %3671 = vmatpush1.bf16.msra.mxu0 0
    %3672 = vmatprep.subr.bf16.mxu0 0
    %3673 = vmatpush1.bf16.msra.mxu0 0
    %3674 = vmatprep.subr.bf16.mxu0 0
    %3675 = vmatpush1.bf16.msra.mxu0 0
    %3676 = vmatprep.subr.bf16.mxu0 0
    %3677 = vmatpush1.bf16.msra.mxu0 0
    %3678 = vmatprep.subr.bf16.mxu0 0
    %3679 = vmatpush1.bf16.msra.mxu0 0
    %3680 = vmatprep.mubr.bf16.mxu0 0
    %3681 = vmatmul.mubr.bf16.gmra.mrb[0].mxu0 %v3646
    %v3682 = vpop.f32.mrb[0].mxu0
    %v3683 = vadd.f32 %v3272, %v3682
    %v3684 = vpop.f32.mrb[0].mxu0
    %v3685 = vpop.f32.mrb[0].mxu0
    %v3686 = vpop.f32.mrb[0].mxu0
    %3687 = vdwg.mxu0
    %3688 = vst.msk [vmem:[#allocation2 + $0x18] sm:$0xff] %vm150, %v3683
    %v3689 = vld [vmem:[#allocation3 + $0x20] sm:$0xff]
    %3690 = vmatprep.subr.bf16.mxu0 0
    %3691 = vmatpush1.bf16.msra.mxu0 %v3186
    %3692 = vmatprep.subr.bf16.mxu0 0
    %3693 = vmatpush1.bf16.msra.mxu0 %v3187
    %3694 = vmatprep.subr.bf16.mxu0 0
    %3695 = vmatpush1.bf16.msra.mxu0 0
    %3696 = vmatprep.subr.bf16.mxu0 0
    %3697 = vmatpush1.bf16.msra.mxu0 0
    %3698 = vmatprep.subr.bf16.mxu0 0
    %3699 = vmatpush1.bf16.msra.mxu0 0
    %3700 = vmatprep.subr.bf16.mxu0 0
    %3701 = vmatpush1.bf16.msra.mxu0 0
    %3702 = vmatprep.subr.bf16.mxu0 0
    %3703 = vmatpush1.bf16.msra.mxu0 0
    %3704 = vmatprep.subr.bf16.mxu0 0
    %3705 = vmatpush1.bf16.msra.mxu0 0
    %3706 = vmatprep.subr.bf16.mxu0 0
    %3707 = vmatpush1.bf16.msra.mxu0 0
    %3708 = vmatprep.subr.bf16.mxu0 0
    %3709 = vmatpush1.bf16.msra.mxu0 0
    %3710 = vmatprep.subr.bf16.mxu0 0
    %3711 = vmatpush1.bf16.msra.mxu0 0
    %3712 = vmatprep.subr.bf16.mxu0 0
    %3713 = vmatpush1.bf16.msra.mxu0 0
    %3714 = vmatprep.subr.bf16.mxu0 0
    %3715 = vmatpush1.bf16.msra.mxu0 0
    %3716 = vmatprep.subr.bf16.mxu0 0
    %3717 = vmatpush1.bf16.msra.mxu0 0
    %3718 = vmatprep.subr.bf16.mxu0 0
    %3719 = vmatpush1.bf16.msra.mxu0 0
    %3720 = vmatprep.subr.bf16.mxu0 0
    %3721 = vmatpush1.bf16.msra.mxu0 0
    %3722 = vmatprep.mubr.bf16.mxu0 0
    %3723 = vmatmul.mubr.bf16.gmra.mrb[0].mxu0 %v3646
    %v3724 = vpop.f32.mrb[0].mxu0
    %v3725 = vadd.f32 0.0, %v3724
    %v3726 = vpop.f32.mrb[0].mxu0
    %v3727 = vpop.f32.mrb[0].mxu0
    %v3728 = vpop.f32.mrb[0].mxu0
    %3729 = vdwg.mxu0
    %v3730 = vadd.f32 %v3689, %v3725
    %v3731 = vxor.u32 %v3730, 2147483648
    %v3732 = vmul.f32 %v3731, 1.442695
    %v3733 = vpow.pop %v3732
    %v3734 = vadd.f32 %v3733, 1.0
    %v3735 = vrcp.pop %v3734
    %v3736 = vmul.f32 1.0, %v3735
    %v3737 = vadd.f32 %v3725, %v3243
    %3739 = vrot.lane.b32.xlu0 %v3737, 64
    %v3740 = vpop.permute.xlu0 %3739
    %v3742 = vmul.f32 %v3736, %v3740
    %3744 = vrot.lane.b32.xlu0 %v3742, 64
    %v3745 = vpop.permute.xlu0 %3744
    %v3747 = vadd.f32 %v3689, %v3745
    %v3748 = vtanh.pop %v3747
    %v3749 = vsub.f32 %v3640, %v3748
    %3751 = vrot.lane.b32.xlu0 %v3749, 96
    %v3752 = vpop.permute.xlu0 %3751
    %v3754 = vmul.f32 %v3736, %v3752
    %3756 = vrot.lane.b32.xlu0 %v3754, 32
    %v3757 = vpop.permute.xlu0 %3756
    %v3759 = vadd.f32 %v3748, %v3757
    %v3760 = vpack.c.bf16 %v3759, %v3759
    %3762 = vrot.lane.b32.xlu0 %v3760, 64
    %v3763 = vpop.permute.xlu0 %3762
    %v3765 = vsel %vm72, %v3763, 0
    %3767 = vmatprep.subr.bf16.mxu0 0
    %3768 = vmatpush1.bf16.msra.mxu0 %v3284
    %3769 = vmatprep.subr.bf16.mxu0 0
    %3770 = vmatpush1.bf16.msra.mxu0 %v3285
    %3771 = vmatprep.subr.bf16.mxu0 0
    %3772 = vmatpush1.bf16.msra.mxu0 0
    %3773 = vmatprep.subr.bf16.mxu0 0
    %3774 = vmatpush1.bf16.msra.mxu0 0
    %3775 = vmatprep.subr.bf16.mxu0 0
    %3776 = vmatpush1.bf16.msra.mxu0 0
    %3777 = vmatprep.subr.bf16.mxu0 0
    %3778 = vmatpush1.bf16.msra.mxu0 0
    %3779 = vmatprep.subr.bf16.mxu0 0
    %3780 = vmatpush1.bf16.msra.mxu0 0
    %3781 = vmatprep.subr.bf16.mxu0 0
    %3782 = vmatpush1.bf16.msra.mxu0 0
    %3783 = vmatprep.subr.bf16.mxu0 0
    %3784 = vmatpush1.bf16.msra.mxu0 0
    %3785 = vmatprep.subr.bf16.mxu0 0
    %3786 = vmatpush1.bf16.msra.mxu0 0
    %3787 = vmatprep.subr.bf16.mxu0 0
    %3788 = vmatpush1.bf16.msra.mxu0 0
    %3789 = vmatprep.subr.bf16.mxu0 0
    %3790 = vmatpush1.bf16.msra.mxu0 0
    %3791 = vmatprep.subr.bf16.mxu0 0
    %3792 = vmatpush1.bf16.msra.mxu0 0
    %3793 = vmatprep.subr.bf16.mxu0 0
    %3794 = vmatpush1.bf16.msra.mxu0 0
    %3795 = vmatprep.subr.bf16.mxu0 0
    %3796 = vmatpush1.bf16.msra.mxu0 0
    %3797 = vmatprep.subr.bf16.mxu0 0
    %3798 = vmatpush1.bf16.msra.mxu0 0
    %3799 = vmatprep.mubr.bf16.mxu0 0
    %3800 = vmatmul.mubr.bf16.gmra.mrb[0].mxu0 %v3765
    %v3801 = vpop.f32.mrb[0].mxu0
    %v3802 = vadd.f32 %v3272, %v3801
    %v3803 = vpop.f32.mrb[0].mxu0
    %v3804 = vpop.f32.mrb[0].mxu0
    %v3805 = vpop.f32.mrb[0].mxu0
    %3806 = vdwg.mxu0
    %3807 = vst.msk [vmem:[#allocation2 + $0x20] sm:$0xff] %vm150, %v3802
    %v3808 = vld [vmem:[#allocation3 + $0x28] sm:$0xff]
    %3809 = vmatprep.subr.bf16.mxu0 0
    %3810 = vmatpush1.bf16.msra.mxu0 %v3186
    %3811 = vmatprep.subr.bf16.mxu0 0
    %3812 = vmatpush1.bf16.msra.mxu0 %v3187
    %3813 = vmatprep.subr.bf16.mxu0 0
    %3814 = vmatpush1.bf16.msra.mxu0 0
    %3815 = vmatprep.subr.bf16.mxu0 0
    %3816 = vmatpush1.bf16.msra.mxu0 0
    %3817 = vmatprep.subr.bf16.mxu0 0
    %3818 = vmatpush1.bf16.msra.mxu0 0
    %3819 = vmatprep.subr.bf16.mxu0 0
    %3820 = vmatpush1.bf16.msra.mxu0 0
    %3821 = vmatprep.subr.bf16.mxu0 0
    %3822 = vmatpush1.bf16.msra.mxu0 0
    %3823 = vmatprep.subr.bf16.mxu0 0
    %3824 = vmatpush1.bf16.msra.mxu0 0
    %3825 = vmatprep.subr.bf16.mxu0 0
    %3826 = vmatpush1.bf16.msra.mxu0 0
    %3827 = vmatprep.subr.bf16.mxu0 0
    %3828 = vmatpush1.bf16.msra.mxu0 0
    %3829 = vmatprep.subr.bf16.mxu0 0
    %3830 = vmatpush1.bf16.msra.mxu0 0
    %3831 = vmatprep.subr.bf16.mxu0 0
    %3832 = vmatpush1.bf16.msra.mxu0 0
    %3833 = vmatprep.subr.bf16.mxu0 0
    %3834 = vmatpush1.bf16.msra.mxu0 0
    %3835 = vmatprep.subr.bf16.mxu0 0
    %3836 = vmatpush1.bf16.msra.mxu0 0
    %3837 = vmatprep.subr.bf16.mxu0 0
    %3838 = vmatpush1.bf16.msra.mxu0 0
    %3839 = vmatprep.subr.bf16.mxu0 0
    %3840 = vmatpush1.bf16.msra.mxu0 0
    %3841 = vmatprep.mubr.bf16.mxu0 0
    %3842 = vmatmul.mubr.bf16.gmra.mrb[0].mxu0 %v3765
    %v3843 = vpop.f32.mrb[0].mxu0
    %v3844 = vadd.f32 0.0, %v3843
    %v3845 = vpop.f32.mrb[0].mxu0
    %v3846 = vpop.f32.mrb[0].mxu0
    %v3847 = vpop.f32.mrb[0].mxu0
    %3848 = vdwg.mxu0
    %v3849 = vadd.f32 %v3808, %v3844
    %v3850 = vxor.u32 %v3849, 2147483648
    %v3851 = vmul.f32 %v3850, 1.442695
    %v3852 = vpow.pop %v3851
    %v3853 = vadd.f32 %v3852, 1.0
    %v3854 = vrcp.pop %v3853
    %v3855 = vmul.f32 1.0, %v3854
    %v3856 = vadd.f32 %v3844, %v3243
    %3858 = vrot.lane.b32.xlu0 %v3856, 64
    %v3859 = vpop.permute.xlu0 %3858
    %v3861 = vmul.f32 %v3855, %v3859
    %3863 = vrot.lane.b32.xlu0 %v3861, 64
    %v3864 = vpop.permute.xlu0 %3863
    %v3866 = vadd.f32 %v3808, %v3864
    %v3867 = vtanh.pop %v3866
    %v3868 = vsub.f32 %v3759, %v3867
    %3870 = vrot.lane.b32.xlu0 %v3868, 96
    %v3871 = vpop.permute.xlu0 %3870
    %v3873 = vmul.f32 %v3855, %v3871
    %3875 = vrot.lane.b32.xlu0 %v3873, 32
    %v3876 = vpop.permute.xlu0 %3875
    %v3878 = vadd.f32 %v3867, %v3876
    %v3879 = vpack.c.bf16 %v3878, %v3878
    %3881 = vrot.lane.b32.xlu0 %v3879, 64
    %v3882 = vpop.permute.xlu0 %3881
    %v3884 = vsel %vm72, %v3882, 0
    %3886 = vmatprep.subr.bf16.mxu0 0
    %3887 = vmatpush1.bf16.msra.mxu0 %v3284
    %3888 = vmatprep.subr.bf16.mxu0 0
    %3889 = vmatpush1.bf16.msra.mxu0 %v3285
    %3890 = vmatprep.subr.bf16.mxu0 0
    %3891 = vmatpush1.bf16.msra.mxu0 0
    %3892 = vmatprep.subr.bf16.mxu0 0
    %3893 = vmatpush1.bf16.msra.mxu0 0
    %3894 = vmatprep.subr.bf16.mxu0 0
    %3895 = vmatpush1.bf16.msra.mxu0 0
    %3896 = vmatprep.subr.bf16.mxu0 0
    %3897 = vmatpush1.bf16.msra.mxu0 0
    %3898 = vmatprep.subr.bf16.mxu0 0
    %3899 = vmatpush1.bf16.msra.mxu0 0
    %3900 = vmatprep.subr.bf16.mxu0 0
    %3901 = vmatpush1.bf16.msra.mxu0 0
    %3902 = vmatprep.subr.bf16.mxu0 0
    %3903 = vmatpush1.bf16.msra.mxu0 0
    %3904 = vmatprep.subr.bf16.mxu0 0
    %3905 = vmatpush1.bf16.msra.mxu0 0
    %3906 = vmatprep.subr.bf16.mxu0 0
    %3907 = vmatpush1.bf16.msra.mxu0 0
    %3908 = vmatprep.subr.bf16.mxu0 0
    %3909 = vmatpush1.bf16.msra.mxu0 0
    %3910 = vmatprep.subr.bf16.mxu0 0
    %3911 = vmatpush1.bf16.msra.mxu0 0
    %3912 = vmatprep.subr.bf16.mxu0 0
    %3913 = vmatpush1.bf16.msra.mxu0 0
    %3914 = vmatprep.subr.bf16.mxu0 0
    %3915 = vmatpush1.bf16.msra.mxu0 0
    %3916 = vmatprep.subr.bf16.mxu0 0
    %3917 = vmatpush1.bf16.msra.mxu0 0
    %3918 = vmatprep.mubr.bf16.mxu0 0
    %3919 = vmatmul.mubr.bf16.gmra.mrb[0].mxu0 %v3884
    %v3920 = vpop.f32.mrb[0].mxu0
    %v3921 = vadd.f32 %v3272, %v3920
    %v3922 = vpop.f32.mrb[0].mxu0
    %v3923 = vpop.f32.mrb[0].mxu0
    %v3924 = vpop.f32.mrb[0].mxu0
    %3925 = vdwg.mxu0
    %3926 = vst.msk [vmem:[#allocation2 + $0x28] sm:$0xff] %vm150, %v3921
    %v3927 = vld [vmem:[#allocation3 + $0x30] sm:$0xff]
    %3928 = vmatprep.subr.bf16.mxu0 0
    %3929 = vmatpush1.bf16.msra.mxu0 %v3186
    %3930 = vmatprep.subr.bf16.mxu0 0
    %3931 = vmatpush1.bf16.msra.mxu0 %v3187
    %3932 = vmatprep.subr.bf16.mxu0 0
    %3933 = vmatpush1.bf16.msra.mxu0 0
    %3934 = vmatprep.subr.bf16.mxu0 0
    %3935 = vmatpush1.bf16.msra.mxu0 0
    %3936 = vmatprep.subr.bf16.mxu0 0
    %3937 = vmatpush1.bf16.msra.mxu0 0
    %3938 = vmatprep.subr.bf16.mxu0 0
    %3939 = vmatpush1.bf16.msra.mxu0 0
    %3940 = vmatprep.subr.bf16.mxu0 0
    %3941 = vmatpush1.bf16.msra.mxu0 0
    %3942 = vmatprep.subr.bf16.mxu0 0
    %3943 = vmatpush1.bf16.msra.mxu0 0
    %3944 = vmatprep.subr.bf16.mxu0 0
    %3945 = vmatpush1.bf16.msra.mxu0 0
    %3946 = vmatprep.subr.bf16.mxu0 0
    %3947 = vmatpush1.bf16.msra.mxu0 0
    %3948 = vmatprep.subr.bf16.mxu0 0
    %3949 = vmatpush1.bf16.msra.mxu0 0
    %3950 = vmatprep.subr.bf16.mxu0 0
    %3951 = vmatpush1.bf16.msra.mxu0 0
    %3952 = vmatprep.subr.bf16.mxu0 0
    %3953 = vmatpush1.bf16.msra.mxu0 0
    %3954 = vmatprep.subr.bf16.mxu0 0
    %3955 = vmatpush1.bf16.msra.mxu0 0
    %3956 = vmatprep.subr.bf16.mxu0 0
    %3957 = vmatpush1.bf16.msra.mxu0 0
    %3958 = vmatprep.subr.bf16.mxu0 0
    %3959 = vmatpush1.bf16.msra.mxu0 0
    %3960 = vmatprep.mubr.bf16.mxu0 0
    %3961 = vmatmul.mubr.bf16.gmra.mrb[0].mxu0 %v3884
    %v3962 = vpop.f32.mrb[0].mxu0
    %v3963 = vadd.f32 0.0, %v3962
    %v3964 = vpop.f32.mrb[0].mxu0
    %v3965 = vpop.f32.mrb[0].mxu0
    %v3966 = vpop.f32.mrb[0].mxu0
    %3967 = vdwg.mxu0
    %v3968 = vadd.f32 %v3927, %v3963
    %v3969 = vxor.u32 %v3968, 2147483648
    %v3970 = vmul.f32 %v3969, 1.442695
    %v3971 = vpow.pop %v3970
    %v3972 = vadd.f32 %v3971, 1.0
    %v3973 = vrcp.pop %v3972
    %v3974 = vmul.f32 1.0, %v3973
    %v3975 = vadd.f32 %v3963, %v3243
    %3977 = vrot.lane.b32.xlu0 %v3975, 64
    %v3978 = vpop.permute.xlu0 %3977
    %v3980 = vmul.f32 %v3974, %v3978
    %3982 = vrot.lane.b32.xlu0 %v3980, 64
    %v3983 = vpop.permute.xlu0 %3982
    %v3985 = vadd.f32 %v3927, %v3983
    %v3986 = vtanh.pop %v3985
    %v3987 = vsub.f32 %v3878, %v3986
    %3989 = vrot.lane.b32.xlu0 %v3987, 96
    %v3990 = vpop.permute.xlu0 %3989
    %v3992 = vmul.f32 %v3974, %v3990
    %3994 = vrot.lane.b32.xlu0 %v3992, 32
    %v3995 = vpop.permute.xlu0 %3994
    %v3997 = vadd.f32 %v3986, %v3995
    %v3998 = vpack.c.bf16 %v3997, %v3997
    %4000 = vrot.lane.b32.xlu0 %v3998, 64
    %v4001 = vpop.permute.xlu0 %4000
    %v4003 = vsel %vm72, %v4001, 0
    %4005 = vmatprep.subr.bf16.mxu0 0
    %4006 = vmatpush1.bf16.msra.mxu0 %v3284
    %4007 = vmatprep.subr.bf16.mxu0 0
    %4008 = vmatpush1.bf16.msra.mxu0 %v3285
    %4009 = vmatprep.subr.bf16.mxu0 0
    %4010 = vmatpush1.bf16.msra.mxu0 0
    %4011 = vmatprep.subr.bf16.mxu0 0
    %4012 = vmatpush1.bf16.msra.mxu0 0
    %4013 = vmatprep.subr.bf16.mxu0 0
    %4014 = vmatpush1.bf16.msra.mxu0 0
    %4015 = vmatprep.subr.bf16.mxu0 0
    %4016 = vmatpush1.bf16.msra.mxu0 0
    %4017 = vmatprep.subr.bf16.mxu0 0
    %4018 = vmatpush1.bf16.msra.mxu0 0
    %4019 = vmatprep.subr.bf16.mxu0 0
    %4020 = vmatpush1.bf16.msra.mxu0 0
    %4021 = vmatprep.subr.bf16.mxu0 0
    %4022 = vmatpush1.bf16.msra.mxu0 0
    %4023 = vmatprep.subr.bf16.mxu0 0
    %4024 = vmatpush1.bf16.msra.mxu0 0
    %4025 = vmatprep.subr.bf16.mxu0 0
    %4026 = vmatpush1.bf16.msra.mxu0 0
    %4027 = vmatprep.subr.bf16.mxu0 0
    %4028 = vmatpush1.bf16.msra.mxu0 0
    %4029 = vmatprep.subr.bf16.mxu0 0
    %4030 = vmatpush1.bf16.msra.mxu0 0
    %4031 = vmatprep.subr.bf16.mxu0 0
    %4032 = vmatpush1.bf16.msra.mxu0 0
    %4033 = vmatprep.subr.bf16.mxu0 0
    %4034 = vmatpush1.bf16.msra.mxu0 0
    %4035 = vmatprep.subr.bf16.mxu0 0
    %4036 = vmatpush1.bf16.msra.mxu0 0
    %4037 = vmatprep.mubr.bf16.mxu0 0
    %4038 = vmatmul.mubr.bf16.gmra.mrb[0].mxu0 %v4003
    %v4039 = vpop.f32.mrb[0].mxu0
    %v4040 = vadd.f32 %v3272, %v4039
    %v4041 = vpop.f32.mrb[0].mxu0
    %v4042 = vpop.f32.mrb[0].mxu0
    %v4043 = vpop.f32.mrb[0].mxu0
    %4044 = vdwg.mxu0
    %4045 = vst.msk [vmem:[#allocation2 + $0x30] sm:$0xff] %vm150, %v4040
    %v4046 = vld [vmem:[#allocation3 + $0x38] sm:$0xff]
    %4047 = vmatprep.subr.bf16.mxu0 0
    %4048 = vmatpush1.bf16.msra.mxu0 %v3186
    %4049 = vmatprep.subr.bf16.mxu0 0
    %4050 = vmatpush1.bf16.msra.mxu0 %v3187
    %4051 = vmatprep.subr.bf16.mxu0 0
    %4052 = vmatpush1.bf16.msra.mxu0 0
    %4053 = vmatprep.subr.bf16.mxu0 0
    %4054 = vmatpush1.bf16.msra.mxu0 0
    %4055 = vmatprep.subr.bf16.mxu0 0
    %4056 = vmatpush1.bf16.msra.mxu0 0
    %4057 = vmatprep.subr.bf16.mxu0 0
    %4058 = vmatpush1.bf16.msra.mxu0 0
    %4059 = vmatprep.subr.bf16.mxu0 0
    %4060 = vmatpush1.bf16.msra.mxu0 0
    %4061 = vmatprep.subr.bf16.mxu0 0
    %4062 = vmatpush1.bf16.msra.mxu0 0
    %4063 = vmatprep.subr.bf16.mxu0 0
    %4064 = vmatpush1.bf16.msra.mxu0 0
    %4065 = vmatprep.subr.bf16.mxu0 0
    %4066 = vmatpush1.bf16.msra.mxu0 0
    %4067 = vmatprep.subr.bf16.mxu0 0
    %4068 = vmatpush1.bf16.msra.mxu0 0
    %4069 = vmatprep.subr.bf16.mxu0 0
    %4070 = vmatpush1.bf16.msra.mxu0 0
    %4071 = vmatprep.subr.bf16.mxu0 0
    %4072 = vmatpush1.bf16.msra.mxu0 0
    %4073 = vmatprep.subr.bf16.mxu0 0
    %4074 = vmatpush1.bf16.msra.mxu0 0
    %4075 = vmatprep.subr.bf16.mxu0 0
    %4076 = vmatpush1.bf16.msra.mxu0 0
    %4077 = vmatprep.subr.bf16.mxu0 0
    %4078 = vmatpush1.bf16.msra.mxu0 0
    %4079 = vmatprep.mubr.bf16.mxu0 0
    %4080 = vmatmul.mubr.bf16.gmra.mrb[0].mxu0 %v4003
    %v4081 = vpop.f32.mrb[0].mxu0
    %v4082 = vadd.f32 0.0, %v4081
    %v4083 = vpop.f32.mrb[0].mxu0
    %v4084 = vpop.f32.mrb[0].mxu0
    %v4085 = vpop.f32.mrb[0].mxu0
    %4086 = vdwg.mxu0
    %v4087 = vadd.f32 %v4046, %v4082
    %v4088 = vxor.u32 %v4087, 2147483648
    %v4089 = vmul.f32 %v4088, 1.442695
    %v4090 = vpow.pop %v4089
    %v4091 = vadd.f32 %v4090, 1.0
    %v4092 = vrcp.pop %v4091
    %v4093 = vmul.f32 1.0, %v4092
    %v4094 = vadd.f32 %v4082, %v3243
    %4096 = vrot.lane.b32.xlu0 %v4094, 64
    %v4097 = vpop.permute.xlu0 %4096
    %v4099 = vmul.f32 %v4093, %v4097
    %4101 = vrot.lane.b32.xlu0 %v4099, 64
    %v4102 = vpop.permute.xlu0 %4101
    %v4104 = vadd.f32 %v4046, %v4102
    %v4105 = vtanh.pop %v4104
    %v4106 = vsub.f32 %v3997, %v4105
    %4108 = vrot.lane.b32.xlu0 %v4106, 96
    %v4109 = vpop.permute.xlu0 %4108
    %v4111 = vmul.f32 %v4093, %v4109
    %4113 = vrot.lane.b32.xlu0 %v4111, 32
    %v4114 = vpop.permute.xlu0 %4113
    %v4116 = vadd.f32 %v4105, %v4114
    %v4117 = vpack.c.bf16 %v4116, %v4116
    %4119 = vrot.lane.b32.xlu0 %v4117, 64
    %v4120 = vpop.permute.xlu0 %4119
    %v4122 = vsel %vm72, %v4120, 0
    %4124 = vmatprep.subr.bf16.mxu0 0
    %4125 = vmatpush1.bf16.msra.mxu0 %v3284
    %4126 = vmatprep.subr.bf16.mxu0 0
    %4127 = vmatpush1.bf16.msra.mxu0 %v3285
    %4128 = vmatprep.subr.bf16.mxu0 0
    %4129 = vmatpush1.bf16.msra.mxu0 0
    %4130 = vmatprep.subr.bf16.mxu0 0
    %4131 = vmatpush1.bf16.msra.mxu0 0
    %4132 = vmatprep.subr.bf16.mxu0 0
    %4133 = vmatpush1.bf16.msra.mxu0 0
    %4134 = vmatprep.subr.bf16.mxu0 0
    %4135 = vmatpush1.bf16.msra.mxu0 0
    %4136 = vmatprep.subr.bf16.mxu0 0
    %4137 = vmatpush1.bf16.msra.mxu0 0
    %4138 = vmatprep.subr.bf16.mxu0 0
    %4139 = vmatpush1.bf16.msra.mxu0 0
    %4140 = vmatprep.subr.bf16.mxu0 0
    %4141 = vmatpush1.bf16.msra.mxu0 0
    %4142 = vmatprep.subr.bf16.mxu0 0
    %4143 = vmatpush1.bf16.msra.mxu0 0
    %4144 = vmatprep.subr.bf16.mxu0 0
    %4145 = vmatpush1.bf16.msra.mxu0 0
    %4146 = vmatprep.subr.bf16.mxu0 0
    %4147 = vmatpush1.bf16.msra.mxu0 0
    %4148 = vmatprep.subr.bf16.mxu0 0
    %4149 = vmatpush1.bf16.msra.mxu0 0
    %4150 = vmatprep.subr.bf16.mxu0 0
    %4151 = vmatpush1.bf16.msra.mxu0 0
    %4152 = vmatprep.subr.bf16.mxu0 0
    %4153 = vmatpush1.bf16.msra.mxu0 0
    %4154 = vmatprep.subr.bf16.mxu0 0
    %4155 = vmatpush1.bf16.msra.mxu0 0
    %4156 = vmatprep.mubr.bf16.mxu0 0
    %4157 = vmatmul.mubr.bf16.gmra.mrb[0].mxu0 %v4122
    %v4158 = vpop.f32.mrb[0].mxu0
    %v4159 = vadd.f32 %v3272, %v4158
    %v4160 = vpop.f32.mrb[0].mxu0
    %v4161 = vpop.f32.mrb[0].mxu0
    %v4162 = vpop.f32.mrb[0].mxu0
    %4163 = vdwg.mxu0
    %4164 = vst.msk [vmem:[#allocation2 + $0x38] sm:$0xff] %vm150, %v4159
    %s4165 = scalar_lea.vmem [#allocation4], 64
    %v4166 = vld [vmem:[%s4165] sm:$0xf]
    %v4167 = vld [vmem:[%s4165 + $0x4] sm:$0xf]
    %v4168 = vld [vmem:[%s4165 + $0x8] sm:$0xf]
    %v4169 = vld [vmem:[%s4165 + $0xc] sm:$0xf]
    %v4170 = vld [vmem:[%s3175] sm:$0x3]
    %v4171 = vld [vmem:[#allocation2] sm:$0xff]
    %v4176 = vunpack.c.l.b16 %v4166
    %v4177 = vunpack.c.l.b16 %v4167
    %v4178 = vunpack.c.l.b16 %v4168
    %v4179 = vunpack.c.l.b16 %v4169
    %v4180 = vpack.c.b16 %v4177, %v4176
    %v4181 = vpack.c.b16 %v4179, %v4178
    %4184 = vmatprep.subr.bf16.mxu0 0
    %4185 = vmatpush1.bf16.msra.mxu0 %v4180
    %4186 = vmatprep.subr.bf16.mxu0 0
    %4187 = vmatpush1.bf16.msra.mxu0 %v4181
    %4188 = vmatprep.subr.bf16.mxu0 0
    %4189 = vmatpush1.bf16.msra.mxu0 0
    %4190 = vmatprep.subr.bf16.mxu0 0
    %4191 = vmatpush1.bf16.msra.mxu0 0
    %4192 = vmatprep.subr.bf16.mxu0 0
    %4193 = vmatpush1.bf16.msra.mxu0 0
    %4194 = vmatprep.subr.bf16.mxu0 0
    %4195 = vmatpush1.bf16.msra.mxu0 0
    %4196 = vmatprep.subr.bf16.mxu0 0
    %4197 = vmatpush1.bf16.msra.mxu0 0
    %4198 = vmatprep.subr.bf16.mxu0 0
    %4199 = vmatpush1.bf16.msra.mxu0 0
    %4200 = vmatprep.subr.bf16.mxu0 0
    %4201 = vmatpush1.bf16.msra.mxu0 0
    %4202 = vmatprep.subr.bf16.mxu0 0
    %4203 = vmatpush1.bf16.msra.mxu0 0
    %4204 = vmatprep.subr.bf16.mxu0 0
    %4205 = vmatpush1.bf16.msra.mxu0 0
    %4206 = vmatprep.subr.bf16.mxu0 0
    %4207 = vmatpush1.bf16.msra.mxu0 0
    %4208 = vmatprep.subr.bf16.mxu0 0
    %4209 = vmatpush1.bf16.msra.mxu0 0
    %4210 = vmatprep.subr.bf16.mxu0 0
    %4211 = vmatpush1.bf16.msra.mxu0 0
    %4212 = vmatprep.subr.bf16.mxu0 0
    %4213 = vmatpush1.bf16.msra.mxu0 0
    %4214 = vmatprep.subr.bf16.mxu0 0
    %4215 = vmatpush1.bf16.msra.mxu0 0
    %4216 = vmatprep.mubr.bf16.mxu0 0
    %4217 = vmatmul.mubr.bf16.gmra.mrb[0].mxu0 %v185
    %v4218 = vpop.f32.mrb[0].mxu0
    %v4219 = vadd.f32 0.0, %v4218
    %v4220 = vpop.f32.mrb[0].mxu0
    %v4221 = vpop.f32.mrb[0].mxu0
    %v4222 = vpop.f32.mrb[0].mxu0
    %4223 = vdwg.mxu0
    %v4224 = vadd.f32 %v4171, %v4219
    %v4225 = vxor.u32 %v4224, 2147483648
    %v4226 = vmul.f32 %v4225, 1.442695
    %v4227 = vpow.pop %v4226
    %v4228 = vadd.f32 %v4227, 1.0
    %v4229 = vrcp.pop %v4228
    %v4230 = vmul.f32 1.0, %v4229
    %v4231 = vlaneseq
    %v4232 = vshrl.u32 %v4231, 7
    %v4233 = vsub.s32 1, %v4232
    %v4234 = vrot.slane %v4170, %v4233
    %4236 = vrot.lane.b32.xlu0 %v4234, 64
    %v4237 = vpop.permute.xlu0 %4236
    %v4239 = vadd.f32 %v4219, %v4237
    %4241 = vrot.lane.b32.xlu0 %v4239, 64
    %v4242 = vpop.permute.xlu0 %4241
    %v4244 = vmul.f32 %v4230, %v4242
    %4246 = vrot.lane.b32.xlu0 %v4244, 64
    %v4247 = vpop.permute.xlu0 %4246
    %v4249 = vadd.f32 %v4171, %v4247
    %v4250 = vtanh.pop %v4249
    %v4251 = vsub.f32 0.0, %v4250
    %4253 = vrot.lane.b32.xlu0 %v4251, 96
    %v4254 = vpop.permute.xlu0 %4253
    %v4256 = vmul.f32 %v4230, %v4254
    %4258 = vrot.lane.b32.xlu0 %v4256, 32
    %v4259 = vpop.permute.xlu0 %4258
    %v4261 = vadd.f32 %v4250, %v4259
    %v4262 = vld [vmem:[#allocation2 + $0x8] sm:$0xff]
    %v4263 = vpack.c.bf16 %v4261, %v4261
    %4265 = vrot.lane.b32.xlu0 %v4263, 64
    %v4266 = vpop.permute.xlu0 %4265
    %v4268 = vsel %vm72, %v4266, 0
    %4270 = vmatprep.subr.bf16.mxu0 0
    %4271 = vmatpush1.bf16.msra.mxu0 %v4180
    %4272 = vmatprep.subr.bf16.mxu0 0
    %4273 = vmatpush1.bf16.msra.mxu0 %v4181
    %4274 = vmatprep.subr.bf16.mxu0 0
    %4275 = vmatpush1.bf16.msra.mxu0 0
    %4276 = vmatprep.subr.bf16.mxu0 0
    %4277 = vmatpush1.bf16.msra.mxu0 0
    %4278 = vmatprep.subr.bf16.mxu0 0
    %4279 = vmatpush1.bf16.msra.mxu0 0
    %4280 = vmatprep.subr.bf16.mxu0 0
    %4281 = vmatpush1.bf16.msra.mxu0 0
    %4282 = vmatprep.subr.bf16.mxu0 0
    %4283 = vmatpush1.bf16.msra.mxu0 0
    %4284 = vmatprep.subr.bf16.mxu0 0
    %4285 = vmatpush1.bf16.msra.mxu0 0
    %4286 = vmatprep.subr.bf16.mxu0 0
    %4287 = vmatpush1.bf16.msra.mxu0 0
    %4288 = vmatprep.subr.bf16.mxu0 0
    %4289 = vmatpush1.bf16.msra.mxu0 0
    %4290 = vmatprep.subr.bf16.mxu0 0
    %4291 = vmatpush1.bf16.msra.mxu0 0
    %4292 = vmatprep.subr.bf16.mxu0 0
    %4293 = vmatpush1.bf16.msra.mxu0 0
    %4294 = vmatprep.subr.bf16.mxu0 0
    %4295 = vmatpush1.bf16.msra.mxu0 0
    %4296 = vmatprep.subr.bf16.mxu0 0
    %4297 = vmatpush1.bf16.msra.mxu0 0
    %4298 = vmatprep.subr.bf16.mxu0 0
    %4299 = vmatpush1.bf16.msra.mxu0 0
    %4300 = vmatprep.subr.bf16.mxu0 0
    %4301 = vmatpush1.bf16.msra.mxu0 0
    %4302 = vmatprep.mubr.bf16.mxu0 0
    %4303 = vmatmul.mubr.bf16.gmra.mrb[0].mxu0 %v4268
    %v4304 = vpop.f32.mrb[0].mxu0
    %v4305 = vadd.f32 0.0, %v4304
    %v4306 = vpop.f32.mrb[0].mxu0
    %v4307 = vpop.f32.mrb[0].mxu0
    %v4308 = vpop.f32.mrb[0].mxu0
    %4309 = vdwg.mxu0
    %v4310 = vadd.f32 %v4262, %v4305
    %v4311 = vxor.u32 %v4310, 2147483648
    %v4312 = vmul.f32 %v4311, 1.442695
    %v4313 = vpow.pop %v4312
    %v4314 = vadd.f32 %v4313, 1.0
    %v4315 = vrcp.pop %v4314
    %v4316 = vmul.f32 1.0, %v4315
    %v4317 = vadd.f32 %v4305, %v4237
    %4319 = vrot.lane.b32.xlu0 %v4317, 64
    %v4320 = vpop.permute.xlu0 %4319
    %v4322 = vmul.f32 %v4316, %v4320
    %4324 = vrot.lane.b32.xlu0 %v4322, 64
    %v4325 = vpop.permute.xlu0 %4324
    %v4327 = vadd.f32 %v4262, %v4325
    %v4328 = vtanh.pop %v4327
    %v4329 = vsub.f32 %v4261, %v4328
    %4331 = vrot.lane.b32.xlu0 %v4329, 96
    %v4332 = vpop.permute.xlu0 %4331
    %v4334 = vmul.f32 %v4316, %v4332
    %4336 = vrot.lane.b32.xlu0 %v4334, 32
    %v4337 = vpop.permute.xlu0 %4336
    %v4339 = vadd.f32 %v4328, %v4337
    %v4340 = vld [vmem:[#allocation2 + $0x10] sm:$0xff]
    %v4341 = vpack.c.bf16 %v4339, %v4339
    %4343 = vrot.lane.b32.xlu0 %v4341, 64
    %v4344 = vpop.permute.xlu0 %4343
    %v4346 = vsel %vm72, %v4344, 0
    %4348 = vmatprep.subr.bf16.mxu0 0
    %4349 = vmatpush1.bf16.msra.mxu0 %v4180
    %4350 = vmatprep.subr.bf16.mxu0 0
    %4351 = vmatpush1.bf16.msra.mxu0 %v4181
    %4352 = vmatprep.subr.bf16.mxu0 0
    %4353 = vmatpush1.bf16.msra.mxu0 0
    %4354 = vmatprep.subr.bf16.mxu0 0
    %4355 = vmatpush1.bf16.msra.mxu0 0
    %4356 = vmatprep.subr.bf16.mxu0 0
    %4357 = vmatpush1.bf16.msra.mxu0 0
    %4358 = vmatprep.subr.bf16.mxu0 0
    %4359 = vmatpush1.bf16.msra.mxu0 0
    %4360 = vmatprep.subr.bf16.mxu0 0
    %4361 = vmatpush1.bf16.msra.mxu0 0
    %4362 = vmatprep.subr.bf16.mxu0 0
    %4363 = vmatpush1.bf16.msra.mxu0 0
    %4364 = vmatprep.subr.bf16.mxu0 0
    %4365 = vmatpush1.bf16.msra.mxu0 0
    %4366 = vmatprep.subr.bf16.mxu0 0
    %4367 = vmatpush1.bf16.msra.mxu0 0
    %4368 = vmatprep.subr.bf16.mxu0 0
    %4369 = vmatpush1.bf16.msra.mxu0 0
    %4370 = vmatprep.subr.bf16.mxu0 0
    %4371 = vmatpush1.bf16.msra.mxu0 0
    %4372 = vmatprep.subr.bf16.mxu0 0
    %4373 = vmatpush1.bf16.msra.mxu0 0
    %4374 = vmatprep.subr.bf16.mxu0 0
    %4375 = vmatpush1.bf16.msra.mxu0 0
    %4376 = vmatprep.subr.bf16.mxu0 0
    %4377 = vmatpush1.bf16.msra.mxu0 0
    %4378 = vmatprep.subr.bf16.mxu0 0
    %4379 = vmatpush1.bf16.msra.mxu0 0
    %4380 = vmatprep.mubr.bf16.mxu0 0
    %4381 = vmatmul.mubr.bf16.gmra.mrb[0].mxu0 %v4346
    %v4382 = vpop.f32.mrb[0].mxu0
    %v4383 = vadd.f32 0.0, %v4382
    %v4384 = vpop.f32.mrb[0].mxu0
    %v4385 = vpop.f32.mrb[0].mxu0
    %v4386 = vpop.f32.mrb[0].mxu0
    %4387 = vdwg.mxu0
    %v4388 = vadd.f32 %v4340, %v4383
    %v4389 = vxor.u32 %v4388, 2147483648
    %v4390 = vmul.f32 %v4389, 1.442695
    %v4391 = vpow.pop %v4390
    %v4392 = vadd.f32 %v4391, 1.0
    %v4393 = vrcp.pop %v4392
    %v4394 = vmul.f32 1.0, %v4393
    %v4395 = vadd.f32 %v4383, %v4237
    %4397 = vrot.lane.b32.xlu0 %v4395, 64
    %v4398 = vpop.permute.xlu0 %4397
    %v4400 = vmul.f32 %v4394, %v4398
    %4402 = vrot.lane.b32.xlu0 %v4400, 64
    %v4403 = vpop.permute.xlu0 %4402
    %v4405 = vadd.f32 %v4340, %v4403
    %v4406 = vtanh.pop %v4405
    %v4407 = vsub.f32 %v4339, %v4406
    %4409 = vrot.lane.b32.xlu0 %v4407, 96
    %v4410 = vpop.permute.xlu0 %4409
    %v4412 = vmul.f32 %v4394, %v4410
    %4414 = vrot.lane.b32.xlu0 %v4412, 32
    %v4415 = vpop.permute.xlu0 %4414
    %v4417 = vadd.f32 %v4406, %v4415
    %v4418 = vld [vmem:[#allocation2 + $0x18] sm:$0xff]
    %v4419 = vpack.c.bf16 %v4417, %v4417
    %4421 = vrot.lane.b32.xlu0 %v4419, 64
    %v4422 = vpop.permute.xlu0 %4421
    %v4424 = vsel %vm72, %v4422, 0
    %4426 = vmatprep.subr.bf16.mxu0 0
    %4427 = vmatpush1.bf16.msra.mxu0 %v4180
    %4428 = vmatprep.subr.bf16.mxu0 0
    %4429 = vmatpush1.bf16.msra.mxu0 %v4181
    %4430 = vmatprep.subr.bf16.mxu0 0
    %4431 = vmatpush1.bf16.msra.mxu0 0
    %4432 = vmatprep.subr.bf16.mxu0 0
    %4433 = vmatpush1.bf16.msra.mxu0 0
    %4434 = vmatprep.subr.bf16.mxu0 0
    %4435 = vmatpush1.bf16.msra.mxu0 0
    %4436 = vmatprep.subr.bf16.mxu0 0
    %4437 = vmatpush1.bf16.msra.mxu0 0
    %4438 = vmatprep.subr.bf16.mxu0 0
    %4439 = vmatpush1.bf16.msra.mxu0 0
    %4440 = vmatprep.subr.bf16.mxu0 0
    %4441 = vmatpush1.bf16.msra.mxu0 0
    %4442 = vmatprep.subr.bf16.mxu0 0
    %4443 = vmatpush1.bf16.msra.mxu0 0
    %4444 = vmatprep.subr.bf16.mxu0 0
    %4445 = vmatpush1.bf16.msra.mxu0 0
    %4446 = vmatprep.subr.bf16.mxu0 0
    %4447 = vmatpush1.bf16.msra.mxu0 0
    %4448 = vmatprep.subr.bf16.mxu0 0
    %4449 = vmatpush1.bf16.msra.mxu0 0
    %4450 = vmatprep.subr.bf16.mxu0 0
    %4451 = vmatpush1.bf16.msra.mxu0 0
    %4452 = vmatprep.subr.bf16.mxu0 0
    %4453 = vmatpush1.bf16.msra.mxu0 0
    %4454 = vmatprep.subr.bf16.mxu0 0
    %4455 = vmatpush1.bf16.msra.mxu0 0
    %4456 = vmatprep.subr.bf16.mxu0 0
    %4457 = vmatpush1.bf16.msra.mxu0 0
    %4458 = vmatprep.mubr.bf16.mxu0 0
    %4459 = vmatmul.mubr.bf16.gmra.mrb[0].mxu0 %v4424
    %v4460 = vpop.f32.mrb[0].mxu0
    %v4461 = vadd.f32 0.0, %v4460
    %v4462 = vpop.f32.mrb[0].mxu0
    %v4463 = vpop.f32.mrb[0].mxu0
    %v4464 = vpop.f32.mrb[0].mxu0
    %4465 = vdwg.mxu0
    %v4466 = vadd.f32 %v4418, %v4461
    %v4467 = vxor.u32 %v4466, 2147483648
    %v4468 = vmul.f32 %v4467, 1.442695
    %v4469 = vpow.pop %v4468
    %v4470 = vadd.f32 %v4469, 1.0
    %v4471 = vrcp.pop %v4470
    %v4472 = vmul.f32 1.0, %v4471
    %v4473 = vadd.f32 %v4461, %v4237
    %4475 = vrot.lane.b32.xlu0 %v4473, 64
    %v4476 = vpop.permute.xlu0 %4475
    %v4478 = vmul.f32 %v4472, %v4476
    %4480 = vrot.lane.b32.xlu0 %v4478, 64
    %v4481 = vpop.permute.xlu0 %4480
    %v4483 = vadd.f32 %v4418, %v4481
    %v4484 = vtanh.pop %v4483
    %v4485 = vsub.f32 %v4417, %v4484
    %4487 = vrot.lane.b32.xlu0 %v4485, 96
    %v4488 = vpop.permute.xlu0 %4487
    %v4490 = vmul.f32 %v4472, %v4488
    %4492 = vrot.lane.b32.xlu0 %v4490, 32
    %v4493 = vpop.permute.xlu0 %4492
    %v4495 = vadd.f32 %v4484, %v4493
    %v4496 = vld [vmem:[#allocation2 + $0x20] sm:$0xff]
    %v4497 = vpack.c.bf16 %v4495, %v4495
    %4499 = vrot.lane.b32.xlu0 %v4497, 64
    %v4500 = vpop.permute.xlu0 %4499
    %v4502 = vsel %vm72, %v4500, 0
    %4504 = vmatprep.subr.bf16.mxu0 0
    %4505 = vmatpush1.bf16.msra.mxu0 %v4180
    %4506 = vmatprep.subr.bf16.mxu0 0
    %4507 = vmatpush1.bf16.msra.mxu0 %v4181
    %4508 = vmatprep.subr.bf16.mxu0 0
    %4509 = vmatpush1.bf16.msra.mxu0 0
    %4510 = vmatprep.subr.bf16.mxu0 0
    %4511 = vmatpush1.bf16.msra.mxu0 0
    %4512 = vmatprep.subr.bf16.mxu0 0
    %4513 = vmatpush1.bf16.msra.mxu0 0
    %4514 = vmatprep.subr.bf16.mxu0 0
    %4515 = vmatpush1.bf16.msra.mxu0 0
    %4516 = vmatprep.subr.bf16.mxu0 0
    %4517 = vmatpush1.bf16.msra.mxu0 0
    %4518 = vmatprep.subr.bf16.mxu0 0
    %4519 = vmatpush1.bf16.msra.mxu0 0
    %4520 = vmatprep.subr.bf16.mxu0 0
    %4521 = vmatpush1.bf16.msra.mxu0 0
    %4522 = vmatprep.subr.bf16.mxu0 0
    %4523 = vmatpush1.bf16.msra.mxu0 0
    %4524 = vmatprep.subr.bf16.mxu0 0
    %4525 = vmatpush1.bf16.msra.mxu0 0
    %4526 = vmatprep.subr.bf16.mxu0 0
    %4527 = vmatpush1.bf16.msra.mxu0 0
    %4528 = vmatprep.subr.bf16.mxu0 0
    %4529 = vmatpush1.bf16.msra.mxu0 0
    %4530 = vmatprep.subr.bf16.mxu0 0
    %4531 = vmatpush1.bf16.msra.mxu0 0
    %4532 = vmatprep.subr.bf16.mxu0 0
    %4533 = vmatpush1.bf16.msra.mxu0 0
    %4534 = vmatprep.subr.bf16.mxu0 0
    %4535 = vmatpush1.bf16.msra.mxu0 0
    %4536 = vmatprep.mubr.bf16.mxu0 0
    %4537 = vmatmul.mubr.bf16.gmra.mrb[0].mxu0 %v4502
    %v4538 = vpop.f32.mrb[0].mxu0
    %v4539 = vadd.f32 0.0, %v4538
    %v4540 = vpop.f32.mrb[0].mxu0
    %v4541 = vpop.f32.mrb[0].mxu0
    %v4542 = vpop.f32.mrb[0].mxu0
    %4543 = vdwg.mxu0
    %v4544 = vadd.f32 %v4496, %v4539
    %v4545 = vxor.u32 %v4544, 2147483648
    %v4546 = vmul.f32 %v4545, 1.442695
    %v4547 = vpow.pop %v4546
    %v4548 = vadd.f32 %v4547, 1.0
    %v4549 = vrcp.pop %v4548
    %v4550 = vmul.f32 1.0, %v4549
    %v4551 = vadd.f32 %v4539, %v4237
    %4553 = vrot.lane.b32.xlu0 %v4551, 64
    %v4554 = vpop.permute.xlu0 %4553
    %v4556 = vmul.f32 %v4550, %v4554
    %4558 = vrot.lane.b32.xlu0 %v4556, 64
    %v4559 = vpop.permute.xlu0 %4558
    %v4561 = vadd.f32 %v4496, %v4559
    %v4562 = vtanh.pop %v4561
    %v4563 = vsub.f32 %v4495, %v4562
    %4565 = vrot.lane.b32.xlu0 %v4563, 96
    %v4566 = vpop.permute.xlu0 %4565
    %v4568 = vmul.f32 %v4550, %v4566
    %4570 = vrot.lane.b32.xlu0 %v4568, 32
    %v4571 = vpop.permute.xlu0 %4570
    %v4573 = vadd.f32 %v4562, %v4571
    %v4574 = vld [vmem:[#allocation2 + $0x28] sm:$0xff]
    %v4575 = vpack.c.bf16 %v4573, %v4573
    %4577 = vrot.lane.b32.xlu0 %v4575, 64
    %v4578 = vpop.permute.xlu0 %4577
    %v4580 = vsel %vm72, %v4578, 0
    %4582 = vmatprep.subr.bf16.mxu0 0
    %4583 = vmatpush1.bf16.msra.mxu0 %v4180
    %4584 = vmatprep.subr.bf16.mxu0 0
    %4585 = vmatpush1.bf16.msra.mxu0 %v4181
    %4586 = vmatprep.subr.bf16.mxu0 0
    %4587 = vmatpush1.bf16.msra.mxu0 0
    %4588 = vmatprep.subr.bf16.mxu0 0
    %4589 = vmatpush1.bf16.msra.mxu0 0
    %4590 = vmatprep.subr.bf16.mxu0 0
    %4591 = vmatpush1.bf16.msra.mxu0 0
    %4592 = vmatprep.subr.bf16.mxu0 0
    %4593 = vmatpush1.bf16.msra.mxu0 0
    %4594 = vmatprep.subr.bf16.mxu0 0
    %4595 = vmatpush1.bf16.msra.mxu0 0
    %4596 = vmatprep.subr.bf16.mxu0 0
    %4597 = vmatpush1.bf16.msra.mxu0 0
    %4598 = vmatprep.subr.bf16.mxu0 0
    %4599 = vmatpush1.bf16.msra.mxu0 0
    %4600 = vmatprep.subr.bf16.mxu0 0
    %4601 = vmatpush1.bf16.msra.mxu0 0
    %4602 = vmatprep.subr.bf16.mxu0 0
    %4603 = vmatpush1.bf16.msra.mxu0 0
    %4604 = vmatprep.subr.bf16.mxu0 0
    %4605 = vmatpush1.bf16.msra.mxu0 0
    %4606 = vmatprep.subr.bf16.mxu0 0
    %4607 = vmatpush1.bf16.msra.mxu0 0
    %4608 = vmatprep.subr.bf16.mxu0 0
    %4609 = vmatpush1.bf16.msra.mxu0 0
    %4610 = vmatprep.subr.bf16.mxu0 0
    %4611 = vmatpush1.bf16.msra.mxu0 0
    %4612 = vmatprep.subr.bf16.mxu0 0
    %4613 = vmatpush1.bf16.msra.mxu0 0
    %4614 = vmatprep.mubr.bf16.mxu0 0
    %4615 = vmatmul.mubr.bf16.gmra.mrb[0].mxu0 %v4580
    %v4616 = vpop.f32.mrb[0].mxu0
    %v4617 = vadd.f32 0.0, %v4616
    %v4618 = vpop.f32.mrb[0].mxu0
    %v4619 = vpop.f32.mrb[0].mxu0
    %v4620 = vpop.f32.mrb[0].mxu0
    %4621 = vdwg.mxu0
    %v4622 = vadd.f32 %v4574, %v4617
    %v4623 = vxor.u32 %v4622, 2147483648
    %v4624 = vmul.f32 %v4623, 1.442695
    %v4625 = vpow.pop %v4624
    %v4626 = vadd.f32 %v4625, 1.0
    %v4627 = vrcp.pop %v4626
    %v4628 = vmul.f32 1.0, %v4627
    %v4629 = vadd.f32 %v4617, %v4237
    %4631 = vrot.lane.b32.xlu0 %v4629, 64
    %v4632 = vpop.permute.xlu0 %4631
    %v4634 = vmul.f32 %v4628, %v4632
    %4636 = vrot.lane.b32.xlu0 %v4634, 64
    %v4637 = vpop.permute.xlu0 %4636
    %v4639 = vadd.f32 %v4574, %v4637
    %v4640 = vtanh.pop %v4639
    %v4641 = vsub.f32 %v4573, %v4640
    %4643 = vrot.lane.b32.xlu0 %v4641, 96
    %v4644 = vpop.permute.xlu0 %4643
    %v4646 = vmul.f32 %v4628, %v4644
    %4648 = vrot.lane.b32.xlu0 %v4646, 32
    %v4649 = vpop.permute.xlu0 %4648
    %v4651 = vadd.f32 %v4640, %v4649
    %v4652 = vld [vmem:[#allocation2 + $0x30] sm:$0xff]
    %v4653 = vpack.c.bf16 %v4651, %v4651
    %4655 = vrot.lane.b32.xlu0 %v4653, 64
    %v4656 = vpop.permute.xlu0 %4655
    %v4658 = vsel %vm72, %v4656, 0
    %4660 = vmatprep.subr.bf16.mxu0 0
    %4661 = vmatpush1.bf16.msra.mxu0 %v4180
    %4662 = vmatprep.subr.bf16.mxu0 0
    %4663 = vmatpush1.bf16.msra.mxu0 %v4181
    %4664 = vmatprep.subr.bf16.mxu0 0
    %4665 = vmatpush1.bf16.msra.mxu0 0
    %4666 = vmatprep.subr.bf16.mxu0 0
    %4667 = vmatpush1.bf16.msra.mxu0 0
    %4668 = vmatprep.subr.bf16.mxu0 0
    %4669 = vmatpush1.bf16.msra.mxu0 0
    %4670 = vmatprep.subr.bf16.mxu0 0
    %4671 = vmatpush1.bf16.msra.mxu0 0
    %4672 = vmatprep.subr.bf16.mxu0 0
    %4673 = vmatpush1.bf16.msra.mxu0 0
    %4674 = vmatprep.subr.bf16.mxu0 0
    %4675 = vmatpush1.bf16.msra.mxu0 0
    %4676 = vmatprep.subr.bf16.mxu0 0
    %4677 = vmatpush1.bf16.msra.mxu0 0
    %4678 = vmatprep.subr.bf16.mxu0 0
    %4679 = vmatpush1.bf16.msra.mxu0 0
    %4680 = vmatprep.subr.bf16.mxu0 0
    %4681 = vmatpush1.bf16.msra.mxu0 0
    %4682 = vmatprep.subr.bf16.mxu0 0
    %4683 = vmatpush1.bf16.msra.mxu0 0
    %4684 = vmatprep.subr.bf16.mxu0 0
    %4685 = vmatpush1.bf16.msra.mxu0 0
    %4686 = vmatprep.subr.bf16.mxu0 0
    %4687 = vmatpush1.bf16.msra.mxu0 0
    %4688 = vmatprep.subr.bf16.mxu0 0
    %4689 = vmatpush1.bf16.msra.mxu0 0
    %4690 = vmatprep.subr.bf16.mxu0 0
    %4691 = vmatpush1.bf16.msra.mxu0 0
    %4692 = vmatprep.mubr.bf16.mxu0 0
    %4693 = vmatmul.mubr.bf16.gmra.mrb[0].mxu0 %v4658
    %v4694 = vpop.f32.mrb[0].mxu0
    %v4695 = vadd.f32 0.0, %v4694
    %v4696 = vpop.f32.mrb[0].mxu0
    %v4697 = vpop.f32.mrb[0].mxu0
    %v4698 = vpop.f32.mrb[0].mxu0
    %4699 = vdwg.mxu0
    %v4700 = vadd.f32 %v4652, %v4695
    %v4701 = vxor.u32 %v4700, 2147483648
    %v4702 = vmul.f32 %v4701, 1.442695
    %v4703 = vpow.pop %v4702
    %v4704 = vadd.f32 %v4703, 1.0
    %v4705 = vrcp.pop %v4704
    %v4706 = vmul.f32 1.0, %v4705
    %v4707 = vadd.f32 %v4695, %v4237
    %4709 = vrot.lane.b32.xlu0 %v4707, 64
    %v4710 = vpop.permute.xlu0 %4709
    %v4712 = vmul.f32 %v4706, %v4710
    %4714 = vrot.lane.b32.xlu0 %v4712, 64
    %v4715 = vpop.permute.xlu0 %4714
    %v4717 = vadd.f32 %v4652, %v4715
    %v4718 = vtanh.pop %v4717
    %v4719 = vsub.f32 %v4651, %v4718
    %4721 = vrot.lane.b32.xlu0 %v4719, 96
    %v4722 = vpop.permute.xlu0 %4721
    %v4724 = vmul.f32 %v4706, %v4722
    %4726 = vrot.lane.b32.xlu0 %v4724, 32
    %v4727 = vpop.permute.xlu0 %4726
    %v4729 = vadd.f32 %v4718, %v4727
    %v4730 = vld [vmem:[#allocation2 + $0x38] sm:$0xff]
    %v4731 = vpack.c.bf16 %v4729, %v4729
    %4733 = vrot.lane.b32.xlu0 %v4731, 64
    %v4734 = vpop.permute.xlu0 %4733
    %v4736 = vsel %vm72, %v4734, 0
    %4738 = vmatprep.subr.bf16.mxu0 0
    %4739 = vmatpush1.bf16.msra.mxu0 %v4180
    %4740 = vmatprep.subr.bf16.mxu0 0
    %4741 = vmatpush1.bf16.msra.mxu0 %v4181
    %4742 = vmatprep.subr.bf16.mxu0 0
    %4743 = vmatpush1.bf16.msra.mxu0 0
    %4744 = vmatprep.subr.bf16.mxu0 0
    %4745 = vmatpush1.bf16.msra.mxu0 0
    %4746 = vmatprep.subr.bf16.mxu0 0
    %4747 = vmatpush1.bf16.msra.mxu0 0
    %4748 = vmatprep.subr.bf16.mxu0 0
    %4749 = vmatpush1.bf16.msra.mxu0 0
    %4750 = vmatprep.subr.bf16.mxu0 0
    %4751 = vmatpush1.bf16.msra.mxu0 0
    %4752 = vmatprep.subr.bf16.mxu0 0
    %4753 = vmatpush1.bf16.msra.mxu0 0
    %4754 = vmatprep.subr.bf16.mxu0 0
    %4755 = vmatpush1.bf16.msra.mxu0 0
    %4756 = vmatprep.subr.bf16.mxu0 0
    %4757 = vmatpush1.bf16.msra.mxu0 0
    %4758 = vmatprep.subr.bf16.mxu0 0
    %4759 = vmatpush1.bf16.msra.mxu0 0
    %4760 = vmatprep.subr.bf16.mxu0 0
    %4761 = vmatpush1.bf16.msra.mxu0 0
    %4762 = vmatprep.subr.bf16.mxu0 0
    %4763 = vmatpush1.bf16.msra.mxu0 0
    %4764 = vmatprep.subr.bf16.mxu0 0
    %4765 = vmatpush1.bf16.msra.mxu0 0
    %4766 = vmatprep.subr.bf16.mxu0 0
    %4767 = vmatpush1.bf16.msra.mxu0 0
    %4768 = vmatprep.subr.bf16.mxu0 0
    %4769 = vmatpush1.bf16.msra.mxu0 0
    %4770 = vmatprep.mubr.bf16.mxu0 0
    %4771 = vmatmul.mubr.bf16.gmra.mrb[0].mxu0 %v4736
    %v4772 = vpop.f32.mrb[0].mxu0
    %v4773 = vadd.f32 0.0, %v4772
    %v4774 = vpop.f32.mrb[0].mxu0
    %v4775 = vpop.f32.mrb[0].mxu0
    %v4776 = vpop.f32.mrb[0].mxu0
    %4777 = vdwg.mxu0
    %v4778 = vadd.f32 %v4730, %v4773
    %v4779 = vxor.u32 %v4778, 2147483648
    %v4780 = vmul.f32 %v4779, 1.442695
    %v4781 = vpow.pop %v4780
    %v4782 = vadd.f32 %v4781, 1.0
    %v4783 = vrcp.pop %v4782
    %v4784 = vmul.f32 1.0, %v4783
    %v4785 = vadd.f32 %v4773, %v4237
    %4787 = vrot.lane.b32.xlu0 %v4785, 64
    %v4788 = vpop.permute.xlu0 %4787
    %v4790 = vmul.f32 %v4784, %v4788
    %4792 = vrot.lane.b32.xlu0 %v4790, 64
    %v4793 = vpop.permute.xlu0 %4792
    %v4795 = vadd.f32 %v4730, %v4793
    %v4796 = vtanh.pop %v4795
    %v4797 = vsub.f32 %v4729, %v4796
    %4799 = vrot.lane.b32.xlu0 %v4797, 96
    %v4800 = vpop.permute.xlu0 %4799
    %v4802 = vmul.f32 %v4784, %v4800
    %4804 = vrot.lane.b32.xlu0 %v4802, 32
    %v4805 = vpop.permute.xlu0 %4804
    %v4807 = vadd.f32 %v4796, %v4805
    %v4808 = vpack.c.bf16 %v4807, %v4807
    %v4809 = vld [vmem:[%s4] sm:$0xf]
    %v4810 = vld [vmem:[%s4 + $0x4] sm:$0xf]
    %v4811 = vld [vmem:[%s4 + $0x8] sm:$0xf]
    %v4812 = vld [vmem:[%s4 + $0xc] sm:$0xf]
    %v4813 = vld [vmem:[%s5] sm:$0x1]
    %v4815 = vlaneseq
    %v4816 = vshrl.u32 %v4815, 7
    %v4817 = vsub.s32 0, %v4816
    %v4818 = vrot.slane %v4813, %v4817
    %4821 = vrot.lane.b32.xlu0 %v4808, 64
    %v4822 = vpop.permute.xlu0 %4821
    %v4827 = vunpack.c.l.b16 %v4809
    %v4828 = vunpack.c.l.b16 %v4810
    %v4829 = vunpack.c.l.b16 %v4811
    %v4830 = vunpack.c.l.b16 %v4812
    %v4831 = vpack.c.b16 %v4828, %v4827
    %v4832 = vpack.c.b16 %v4830, %v4829
    %v4836 = vsel %vm72, %v4822, 0
    %4838 = vmatprep.subr.bf16.mxu0 0
    %4839 = vmatpush1.bf16.msra.mxu0 %v4831
    %4840 = vmatprep.subr.bf16.mxu0 0
    %4841 = vmatpush1.bf16.msra.mxu0 %v4832
    %4842 = vmatprep.subr.bf16.mxu0 0
    %4843 = vmatpush1.bf16.msra.mxu0 0
    %4844 = vmatprep.subr.bf16.mxu0 0
    %4845 = vmatpush1.bf16.msra.mxu0 0
    %4846 = vmatprep.subr.bf16.mxu0 0
    %4847 = vmatpush1.bf16.msra.mxu0 0
    %4848 = vmatprep.subr.bf16.mxu0 0
    %4849 = vmatpush1.bf16.msra.mxu0 0
    %4850 = vmatprep.subr.bf16.mxu0 0
    %4851 = vmatpush1.bf16.msra.mxu0 0
    %4852 = vmatprep.subr.bf16.mxu0 0
    %4853 = vmatpush1.bf16.msra.mxu0 0
    %4854 = vmatprep.subr.bf16.mxu0 0
    %4855 = vmatpush1.bf16.msra.mxu0 0
    %4856 = vmatprep.subr.bf16.mxu0 0
    %4857 = vmatpush1.bf16.msra.mxu0 0
    %4858 = vmatprep.subr.bf16.mxu0 0
    %4859 = vmatpush1.bf16.msra.mxu0 0
    %4860 = vmatprep.subr.bf16.mxu0 0
    %4861 = vmatpush1.bf16.msra.mxu0 0
    %4862 = vmatprep.subr.bf16.mxu0 0
    %4863 = vmatpush1.bf16.msra.mxu0 0
    %4864 = vmatprep.subr.bf16.mxu0 0
    %4865 = vmatpush1.bf16.msra.mxu0 0
    %4866 = vmatprep.subr.bf16.mxu0 0
    %4867 = vmatpush1.bf16.msra.mxu0 0
    %4868 = vmatprep.subr.bf16.mxu0 0
    %4869 = vmatpush1.bf16.msra.mxu0 0
    %4870 = vmatprep.mubr.bf16.mxu0 0
    %4871 = vmatmul.mubr.bf16.gmra.mrb[0].mxu0 %v4836
    %v4872 = vpop.f32.mrb[0].mxu0
    %v4873 = vadd.f32 %v4818, %v4872
    %v4874 = vpop.f32.mrb[0].mxu0
    %v4875 = vpop.f32.mrb[0].mxu0
    %v4876 = vpop.f32.mrb[0].mxu0
    %4877 = vdwg.mxu0
    %vm4878 = vcmask 9216
    %4879 = vst.msk [vmem:[#allocation7] sm:$0x3] %vm4878, %v4873
    // Predicated region
    $region30: #{gru_model_forward.1} parent=1 // pred_check
      _
    $region31: #{gru_model_forward.1} parent=1 // pred_check_branch
      %4881 = sbr.rel (0) target = $region33
    $region32: #{gru_model_forward.1} parent=1 // pred_region
      %s4883 = ssub.s32 32, 32
      %4884 = vsyncadd [#allocation6], %s4883
      %s4886 = sshll.u32 [#allocation7], 4
      %s4887 = int_to_ptr.vmem [resolvable:$true] %s4886
      %4889 = dma.vmem_to_hbm [thread:$0]  %s4887, 32, %s6, [#allocation6]
    $region33: #{gru_model_forward.1} parent=1 // pred_fallthru
      _
    // Predicated region
    $region34: #{gru_model_forward.1} parent=1 // pred_check
      _
    $region35: #{gru_model_forward.1} parent=1 // pred_check_branch
      %4891 = sbr.rel (0) target = $region37
    $region36: #{gru_model_forward.1} parent=1 // pred_region
      %4892 = dma.done [#allocation6], 32
    $region37: #{gru_model_forward.1} parent=1 // pred_fallthru
      _
    %4893 = vsyncpa [#allocation5], 1
    %4894 = vsyncpa [#allocation6], 1

</llo_original>
